<compile_context>
chip_gen: v7x
topology: tpu7x:2x2x1
jax: 0.10.0
libtpu: 0.0.40
codegen_flags: <defaults>
</compile_context>

<pallas_src>
import functools
import math

import jax
import jax.numpy as jnp
import numpy as np
from jax.experimental import pallas as pl
from jax.experimental.pallas import tpu as pltpu

_ALIGN = 128                      # lane-aligned base offset of the staging window
_LEAKY_SLOPE = 0.2
_CONV_OFF = (-2, -1, 0, 1, 2)     # Conv1d  k=5, pad=2         : x index = l + (k - 2)
_CONVT_OFF = (2, 1, 0, -1, -2)    # ConvT1d k=5, pad=2, s=4    : x_up index = o + (2 - k)
_MAX_ROWS = 5 * 32                # largest K*Cin staged by any tap conv


# ---------------------------------------------------------------------------
# The fused kernel: one grid step == one sample, everything resident in VMEM.
# ---------------------------------------------------------------------------
def _ved_kernel(names, x_ref, *rest):
    n = len(names)
    refs = dict(zip(names, rest[:n]))
    o_ref = rest[n]
    buf = rest[n + 1]                      # (_MAX_ROWS, _ALIGN + L1 + 8) f32 scratch
    f32, bf16 = jnp.float32, jnp.bfloat16
    A = _ALIGN

    def leaky(v):
        return jnp.where(v >= 0, v, _LEAKY_SLOPE * v)

    def bdot(a, b):                        # MXU path: bf16 x bf16, f32 accumulation
        return jnp.dot(a.astype(bf16), b.astype(bf16),
                       preferred_element_type=f32)

    def tap_conv(x, w_name, offsets):
        """out[:, l] = sum_k W_k @ x[:, l + offsets[k]]  (zeros outside [0, L)).

        The K shifted copies of x are staged contiguously on sublanes so the whole
        conv is a single (Cout, K*Cin) @ (K*Cin, L) matmul.  Only the +/-2-lane halo
        columns of the read window are cleared (no full-scratch zero fill)."""
        C, L = x.shape
        R = len(offsets) * C
        buf[0:R, A:A + 2] = jnp.zeros((R, 2), f32)
        buf[0:R, A + L - 2:A + L] = jnp.zeros((R, 2), f32)
        for k, off in enumerate(offsets):
            buf[k * C:(k + 1) * C, A - off:A - off + L] = x
        return bdot(refs[w_name][...], buf[0:R, A:A + L])

    def res_block(x, p, d_name):           # encoder ResidualBlock, stride 4
        D = refs[d_name][...]                # (L, L/4) 0/1 selector, bf16 (exact)
        x_ds = bdot(x, D)                    # shortcut input downsample
        sc = bdot(refs[p + "_wsc"][...], x_ds) + refs[p + "_bsc"][...]
        h = leaky(bdot(tap_conv(x, p + "_w1", _CONV_OFF), D) + refs[p + "_b1"][...])
        h = tap_conv(h, p + "_w2", _CONV_OFF) + refs[p + "_b2"][...]
        return leaky(h + sc)

    def res_block_t(x, p, u_name):          # decoder ResidualBlockTranspose, stride 4
        x_up = bdot(x, refs[u_name][...])    # zero-insertion upsample (0/1 selector)
        sc = bdot(refs[p + "_wsc"][...], x_up) + refs[p + "_bsc"][...]
        h = leaky(tap_conv(x_up, p + "_w1", _CONVT_OFF) + refs[p + "_b1"][...])
        h = tap_conv(h, p + "_w2", _CONV_OFF) + refs[p + "_b2"][...]
        return leaky(h + sc)

    xph = x_ref[0]                           # (4, L1): phase p holds x[4*o + p]
    L1 = xph.shape[1]
    L2, L3, L4 = L1 // 4, L1 // 16, L1 // 64

    # ---------------- encoder ----------------
    # Stem Conv1d(1,4,k=5,s=4,p=2) evaluated only at its L1 outputs via the phases:
    #   out[:, o] = W0*x[4o-2] + W1*x[4o-1] + W2*x[4o] + W3*x[4o+1] + W4*x[4o+2]
    buf[0:4, A - 2:A] = jnp.zeros((4, 2), f32)
    buf[0:4, A:A + L1] = xph
    w_stem = refs["stem_w"][...]             # (4, 5) f32
    h = refs["stem_b"][...]                  # (4, 1) f32 (BN+bias folded shift)
    stem_taps = ((2, -1), (3, -1), (0, 0), (1, 0), (2, 0))   # (phase row, lane shift)
    for t, (r, sh) in enumerate(stem_taps):
        h = h + w_stem[:, t:t + 1] * buf[r:r + 1, A + sh:A + sh + L1]
    h = leaky(h)                                             # (4,  L1)

    h = res_block(h, "rb1", f"D_{L1}_{L2}")                  # (8,  L2)
    h = res_block(h, "rb2", f"D_{L2}_{L3}")                  # (16, L3)
    h = res_block(h, "rb3", f"D_{L3}_{L4}")                  # (32, L4)

    # Flatten + Linear(32*L4 -> 256): stack the L4 columns on sublanes, one matmul.
    for l in range(L4):
        buf[32 * l:32 * (l + 1), A:A + 1] = h[:, l:l + 1]
    z = bdot(refs["encfc_w"][...], buf[0:32 * L4, A:A + 1]) + refs["encfc_b"][...]

    # ---------------- decoder ----------------
    # Linear(256 -> 32*L4) + Unflatten: one matmul, scatter the L4 chunks to columns.
    big = bdot(refs["decfc_w"][...], z) + refs["decfc_b"][...]     # (32*L4, 1)
    lane = jax.lax.broadcasted_iota(jnp.int32, (32, L4), 1)
    hd = jnp.zeros((32, L4), f32)
    for l in range(L4):
        hd = hd + jnp.where(lane == l, big[32 * l:32 * (l + 1), :], 0.0)

    h = res_block_t(hd, "rbt1", f"U_{L4}_{L3}")              # (16, L3)
    h = res_block_t(h, "rbt2", f"U_{L3}_{L2}")               # (8,  L2)
    h = res_block_t(h, "rbt3", f"U_{L2}_{L1}")               # (4,  L1)

    # Final ConvTranspose1d(4,1,k=4,s=4,p=0): output phase k = W[:,0,k]^T @ h.
    y = bdot(refs["final_w"][...], h) + refs["final_b"][...]       # (4, L1) phases
    o_ref[0, :, :] = jnp.tanh(y)


# ---------------------------------------------------------------------------
# Wrapper: one pallas_call for the whole network.
# ---------------------------------------------------------------------------
@jax.jit
def ved_forward(params, x):
    """x: (B, input_dim) f32 -> (B, input_dim) f32."""
    B, L = x.shape
    assert L % 256 == 0, "input_dim must be a multiple of 4**4"
    L1 = L // 4
    # Split the input into its 4 stride phases outside the kernel (tiny XLA transpose)
    # so the stride-4 stem needs no full-length conv / selector matmul in-kernel.
    xph = jnp.transpose(x.reshape(B, L1, 4), (0, 2, 1))            # (B, 4, L1)

    names = tuple(sorted(params.keys()))
    arrays = [params[k] for k in names]

    def const_spec(a):                      # whole array as one block, fetched once
        nd = a.ndim
        return pl.BlockSpec(a.shape, lambda b, _nd=nd: (0,) * _nd)

    out_ph = pl.pallas_call(
        functools.partial(_ved_kernel, names),
        out_shape=jax.ShapeDtypeStruct((B, 4, L1), jnp.float32),
        grid=(B,),
        in_specs=[pl.BlockSpec((1, 4, L1), lambda b: (b, 0, 0))]
        + [const_spec(a) for a in arrays],
        out_specs=pl.BlockSpec((1, 4, L1), lambda b: (b, 0, 0)),
        scratch_shapes=[pltpu.VMEM((_MAX_ROWS, _ALIGN + L1 + 8), jnp.float32)],
        compiler_params=pltpu.CompilerParams(
            dimension_semantics=("parallel",),
            vmem_limit_bytes=32 * 1024 * 1024,
        ),
    )(xph, *arrays)
    # Interleave the 4 output phases back to (B, L): out[:, 4*i + k] = out_ph[:, k, i].
    return jnp.transpose(out_ph, (0, 2, 1)).reshape(B, L)


# ---------------------------------------------------------------------------
# Parameter init (deterministic, synthetic), BN folding and weight prep.
# ---------------------------------------------------------------------------
def _downsample_matrix(lin, lout):
    j = np.arange(lin)[:, None]
    o = np.arange(lout)[None, :]
    return jnp.asarray(j == 4 * o, dtype=jnp.bfloat16)      # 0/1 -> exact in bf16


def _upsample_matrix(lin, lout):
    i = np.arange(lin)[:, None]
    o = np.arange(lout)[None, :]
    return jnp.asarray(o == 4 * i, dtype=jnp.bfloat16)


def init_params(key, input_dim=1024):
    flat_len = input_dim // 4 ** 4
    keys = iter(jax.random.split(key, 128))

    def conv_w(cout, cin, k):
        kw, kb = jax.random.split(next(keys))
        w = jax.random.normal(kw, (cout, cin, k), jnp.float32) * 0.1
        b = jax.random.normal(kb, (cout,), jnp.float32) * 0.05
        return w, b

    def convt_w(cin, cout, k):
        kw, kb = jax.random.split(next(keys))
        w = jax.random.normal(kw, (cin, cout, k), jnp.float32) * 0.1
        b = jax.random.normal(kb, (cout,), jnp.float32) * 0.05
        return w, b

    def bn_p(c):
        k1, k2, k3, k4 = jax.random.split(next(keys), 4)
        gamma = 1.0 + 0.1 * jax.random.normal(k1, (c,), jnp.float32)
        beta = 0.1 * jax.random.normal(k2, (c,), jnp.float32)
        mean = 0.1 * jax.random.normal(k3, (c,), jnp.float32)
        var = jax.random.uniform(k4, (c,), jnp.float32, minval=0.5, maxval=1.5)
        return gamma, beta, mean, var

    def linear_w(din, dout):                # torch layout: weight (dout, din)
        kw, kb = jax.random.split(next(keys))
        w = jax.random.normal(kw, (dout, din), jnp.float32) / math.sqrt(din)
        b = jax.random.normal(kb, (dout,), jnp.float32) * 0.05
        return w, b

    def bn_fold(bn, eps=1e-5):
        gamma, beta, mean, var = bn
        s = gamma / jnp.sqrt(var + eps)
        return s, beta - mean * s

    def prep_conv(w, b, bn):
        # torch Conv1d weight (Cout, Cin, K) -> merged-tap (Cout, K*Cin) bf16 with
        # eval-mode BN scale folded in; per-channel shift column stays f32.
        s, t = bn_fold(bn)
        cout, cin, k = w.shape
        wk = (w * s[:, None, None]).transpose(0, 2, 1).reshape(cout, k * cin)
        return wk.astype(jnp.bfloat16), (b * s + t)[:, None]

    def prep_convt(wt, b, bn):
        # torch ConvTranspose1d weight (Cin, Cout, K) -> merged-tap (Cout, K*Cin).
        s, t = bn_fold(bn)
        cin, cout, k = wt.shape
        wk = (wt.transpose(1, 2, 0) * s[:, None, None]).reshape(cout, k * cin)
        return wk.astype(jnp.bfloat16), (b * s + t)[:, None]

    def prep_conv1x1(w, b, bn):
        s, t = bn_fold(bn)
        return (w[:, :, 0] * s[:, None]).astype(jnp.bfloat16), (b * s + t)[:, None]

    def prep_convt1x1(wt, b, bn):
        s, t = bn_fold(bn)
        return (wt[:, :, 0].T * s[:, None]).astype(jnp.bfloat16), (b * s + t)[:, None]

    P = {}

    # Stem Conv1d(1, 4, k=5, s=4, p=2): per-tap (4, 5) f32 for the VPU broadcast path.
    w, b = conv_w(4, 1, 5)
    gs, gt = bn_fold(bn_p(4))
    P["stem_w"] = (w[:, 0, :] * gs[:, None]).astype(jnp.float32)
    P["stem_b"] = (b * gs + gt)[:, None]

    def rb(name, cin, cout):
        w1, b1 = conv_w(cout, cin, 5)
        P[name + "_w1"], P[name + "_b1"] = prep_conv(w1, b1, bn_p(cout))
        w2, b2 = conv_w(cout, cout, 5)
        P[name + "_w2"], P[name + "_b2"] = prep_conv(w2, b2, bn_p(cout))
        wsc, bsc = conv_w(cout, cin, 1)
        P[name + "_wsc"], P[name + "_bsc"] = prep_conv1x1(wsc, bsc, bn_p(cout))

    def rbt(name, cin, cout):
        w1, b1 = convt_w(cin, cout, 5)
        P[name + "_w1"], P[name + "_b1"] = prep_convt(w1, b1, bn_p(cout))
        w2, b2 = conv_w(cout, cout, 5)
        P[name + "_w2"], P[name + "_b2"] = prep_conv(w2, b2, bn_p(cout))
        wsc, bsc = convt_w(cin, cout, 1)
        P[name + "_wsc"], P[name + "_bsc"] = prep_convt1x1(wsc, bsc, bn_p(cout))

    rb("rb1", 4, 8)
    rb("rb2", 8, 16)
    rb("rb3", 16, 32)

    # Encoder Linear(32*flat_len -> 256): torch flat index = c*flat_len + l; the
    # kernel stacks the flattened vector as sublane index 32*l + c.
    wfc, bfc = linear_w(32 * flat_len, 256)
    P["encfc_w"] = (wfc.reshape(256, 32, flat_len).transpose(0, 2, 1)
                    .reshape(256, 32 * flat_len).astype(jnp.bfloat16))
    P["encfc_b"] = bfc[:, None]

    # Decoder Linear(256 -> 32*flat_len): rows reordered the same way.
    wdec, bdec = linear_w(256, 32 * flat_len)
    P["decfc_w"] = (wdec.reshape(32, flat_len, 256).transpose(1, 0, 2)
                    .reshape(32 * flat_len, 256).astype(jnp.bfloat16))
    P["decfc_b"] = bdec.reshape(32, flat_len).T.reshape(32 * flat_len, 1)

    rbt("rbt1", 32, 16)
    rbt("rbt2", 16, 8)
    rbt("rbt3", 8, 4)

    # Final ConvTranspose1d(4, 1, k=4, s=4): polyphase weight (k, cin) = W[cin, 0, k].
    wf, bf = convt_w(4, 1, 4)
    P["final_w"] = wf[:, 0, :].T.astype(jnp.bfloat16)              # (4, 4)
    P["final_b"] = jnp.full((4, 1), bf[0], jnp.float32)

    # Stride-4 selection matrices for the (small) middle layers only.
    lens = [input_dim // 4 ** i for i in range(1, 5)]              # [256, 64, 16, 4]
    for big_l, small_l in zip(lens[:-1], lens[1:]):
        P[f"D_{big_l}_{small_l}"] = _downsample_matrix(big_l, small_l)
        P[f"U_{small_l}_{big_l}"] = _upsample_matrix(small_l, big_l)
    return P


# ---------------------------------------------------------------------------
if __name__ == "__main__":
    B, input_dim = 2, 1024
    root = jax.random.PRNGKey(0)
    k_params, k_input = jax.random.split(root)

    params = init_params(k_params, input_dim=input_dim)
    x = jax.random.normal(k_input, (B, input_dim), jnp.float32)

    out = jax.block_until_ready(ved_forward(params, x))

    assert out.shape == (B, input_dim), out.shape
    assert bool(jnp.all(jnp.isfinite(out)))
    print("KERNEL_OK")
</pallas_src>

<mosaic_0001>
module attributes {stable_mosaic.version = 11 : i64} {
  func.func @_ved_kernel(%arg0: i32, %arg1: memref<1x4x256xf32, #tpu.memory_space<vmem>>, %arg2: memref<16x4xbf16, #tpu.memory_space<vmem>>, %arg3: memref<256x64xbf16, #tpu.memory_space<vmem>>, %arg4: memref<64x16xbf16, #tpu.memory_space<vmem>>, %arg5: memref<16x64xbf16, #tpu.memory_space<vmem>>, %arg6: memref<4x16xbf16, #tpu.memory_space<vmem>>, %arg7: memref<64x256xbf16, #tpu.memory_space<vmem>>, %arg8: memref<128x1xf32, #tpu.memory_space<vmem>>, %arg9: memref<128x256xbf16, #tpu.memory_space<vmem>>, %arg10: memref<256x1xf32, #tpu.memory_space<vmem>>, %arg11: memref<256x128xbf16, #tpu.memory_space<vmem>>, %arg12: memref<4x1xf32, #tpu.memory_space<vmem>>, %arg13: memref<4x4xbf16, #tpu.memory_space<vmem>>, %arg14: memref<8x1xf32, #tpu.memory_space<vmem>>, %arg15: memref<8x1xf32, #tpu.memory_space<vmem>>, %arg16: memref<8x1xf32, #tpu.memory_space<vmem>>, %arg17: memref<8x20xbf16, #tpu.memory_space<vmem>>, %arg18: memref<8x40xbf16, #tpu.memory_space<vmem>>, %arg19: memref<8x4xbf16, #tpu.memory_space<vmem>>, %arg20: memref<16x1xf32, #tpu.memory_space<vmem>>, %arg21: memref<16x1xf32, #tpu.memory_space<vmem>>, %arg22: memref<16x1xf32, #tpu.memory_space<vmem>>, %arg23: memref<16x40xbf16, #tpu.memory_space<vmem>>, %arg24: memref<16x80xbf16, #tpu.memory_space<vmem>>, %arg25: memref<16x8xbf16, #tpu.memory_space<vmem>>, %arg26: memref<32x1xf32, #tpu.memory_space<vmem>>, %arg27: memref<32x1xf32, #tpu.memory_space<vmem>>, %arg28: memref<32x1xf32, #tpu.memory_space<vmem>>, %arg29: memref<32x80xbf16, #tpu.memory_space<vmem>>, %arg30: memref<32x160xbf16, #tpu.memory_space<vmem>>, %arg31: memref<32x16xbf16, #tpu.memory_space<vmem>>, %arg32: memref<16x1xf32, #tpu.memory_space<vmem>>, %arg33: memref<16x1xf32, #tpu.memory_space<vmem>>, %arg34: memref<16x1xf32, #tpu.memory_space<vmem>>, %arg35: memref<16x160xbf16, #tpu.memory_space<vmem>>, %arg36: memref<16x80xbf16, #tpu.memory_space<vmem>>, %arg37: memref<16x32xbf16, #tpu.memory_space<vmem>>, %arg38: memref<8x1xf32, #tpu.memory_space<vmem>>, %arg39: memref<8x1xf32, #tpu.memory_space<vmem>>, %arg40: memref<8x1xf32, #tpu.memory_space<vmem>>, %arg41: memref<8x80xbf16, #tpu.memory_space<vmem>>, %arg42: memref<8x40xbf16, #tpu.memory_space<vmem>>, %arg43: memref<8x16xbf16, #tpu.memory_space<vmem>>, %arg44: memref<4x1xf32, #tpu.memory_space<vmem>>, %arg45: memref<4x1xf32, #tpu.memory_space<vmem>>, %arg46: memref<4x1xf32, #tpu.memory_space<vmem>>, %arg47: memref<4x40xbf16, #tpu.memory_space<vmem>>, %arg48: memref<4x20xbf16, #tpu.memory_space<vmem>>, %arg49: memref<4x8xbf16, #tpu.memory_space<vmem>>, %arg50: memref<4x1xf32, #tpu.memory_space<vmem>>, %arg51: memref<4x5xf32, #tpu.memory_space<vmem>>, %arg52: memref<1x4x256xf32, #tpu.memory_space<vmem>>, %arg53: memref<160x392xf32, #tpu.memory_space<vmem>>) attributes {dimension_semantics = [#tpu.dimension_semantics<parallel>], iteration_bounds = array<i64: 2>, scalar_prefetch = 0 : i64, scratch_operands = 1 : i64, tpu.core_type = #tpu.core_type<tc>, window_params = [{transform_indices = @transform_0, window_bounds = array<i64: 1, 4, 256>}, {pipeline_mode = #tpu.pipeline_mode<synchronous>, transform_indices = @transform_1, window_bounds = array<i64: 16, 4>}, {pipeline_mode = #tpu.pipeline_mode<synchronous>, transform_indices = @transform_2, window_bounds = array<i64: 256, 64>}, {pipeline_mode = #tpu.pipeline_mode<synchronous>, transform_indices = @transform_3, window_bounds = array<i64: 64, 16>}, {pipeline_mode = #tpu.pipeline_mode<synchronous>, transform_indices = @transform_4, window_bounds = array<i64: 16, 64>}, {pipeline_mode = #tpu.pipeline_mode<synchronous>, transform_indices = @transform_5, window_bounds = array<i64: 4, 16>}, {pipeline_mode = #tpu.pipeline_mode<synchronous>, transform_indices = @transform_6, window_bounds = array<i64: 64, 256>}, {pipeline_mode = #tpu.pipeline_mode<synchronous>, transform_indices = @transform_7, window_bounds = array<i64: 128, 1>}, {pipeline_mode = #tpu.pipeline_mode<synchronous>, transform_indices = @transform_8, window_bounds = array<i64: 128, 256>}, {pipeline_mode = #tpu.pipeline_mode<synchronous>, transform_indices = @transform_9, window_bounds = array<i64: 256, 1>}, {pipeline_mode = #tpu.pipeline_mode<synchronous>, transform_indices = @transform_10, window_bounds = array<i64: 256, 128>}, {pipeline_mode = #tpu.pipeline_mode<synchronous>, transform_indices = @transform_11, window_bounds = array<i64: 4, 1>}, {pipeline_mode = #tpu.pipeline_mode<synchronous>, transform_indices = @transform_12, window_bounds = array<i64: 4, 4>}, {pipeline_mode = #tpu.pipeline_mode<synchronous>, transform_indices = @transform_13, window_bounds = array<i64: 8, 1>}, {pipeline_mode = #tpu.pipeline_mode<synchronous>, transform_indices = @transform_14, window_bounds = array<i64: 8, 1>}, {pipeline_mode = #tpu.pipeline_mode<synchronous>, transform_indices = @transform_15, window_bounds = array<i64: 8, 1>}, {pipeline_mode = #tpu.pipeline_mode<synchronous>, transform_indices = @transform_16, window_bounds = array<i64: 8, 20>}, {pipeline_mode = #tpu.pipeline_mode<synchronous>, transform_indices = @transform_17, window_bounds = array<i64: 8, 40>}, {pipeline_mode = #tpu.pipeline_mode<synchronous>, transform_indices = @transform_18, window_bounds = array<i64: 8, 4>}, {pipeline_mode = #tpu.pipeline_mode<synchronous>, transform_indices = @transform_19, window_bounds = array<i64: 16, 1>}, {pipeline_mode = #tpu.pipeline_mode<synchronous>, transform_indices = @transform_20, window_bounds = array<i64: 16, 1>}, {pipeline_mode = #tpu.pipeline_mode<synchronous>, transform_indices = @transform_21, window_bounds = array<i64: 16, 1>}, {pipeline_mode = #tpu.pipeline_mode<synchronous>, transform_indices = @transform_22, window_bounds = array<i64: 16, 40>}, {pipeline_mode = #tpu.pipeline_mode<synchronous>, transform_indices = @transform_23, window_bounds = array<i64: 16, 80>}, {pipeline_mode = #tpu.pipeline_mode<synchronous>, transform_indices = @transform_24, window_bounds = array<i64: 16, 8>}, {pipeline_mode = #tpu.pipeline_mode<synchronous>, transform_indices = @transform_25, window_bounds = array<i64: 32, 1>}, {pipeline_mode = #tpu.pipeline_mode<synchronous>, transform_indices = @transform_26, window_bounds = array<i64: 32, 1>}, {pipeline_mode = #tpu.pipeline_mode<synchronous>, transform_indices = @transform_27, window_bounds = array<i64: 32, 1>}, {pipeline_mode = #tpu.pipeline_mode<synchronous>, transform_indices = @transform_28, window_bounds = array<i64: 32, 80>}, {pipeline_mode = #tpu.pipeline_mode<synchronous>, transform_indices = @transform_29, window_bounds = array<i64: 32, 160>}, {pipeline_mode = #tpu.pipeline_mode<synchronous>, transform_indices = @transform_30, window_bounds = array<i64: 32, 16>}, {pipeline_mode = #tpu.pipeline_mode<synchronous>, transform_indices = @transform_31, window_bounds = array<i64: 16, 1>}, {pipeline_mode = #tpu.pipeline_mode<synchronous>, transform_indices = @transform_32, window_bounds = array<i64: 16, 1>}, {pipeline_mode = #tpu.pipeline_mode<synchronous>, transform_indices = @transform_33, window_bounds = array<i64: 16, 1>}, {pipeline_mode = #tpu.pipeline_mode<synchronous>, transform_indices = @transform_34, window_bounds = array<i64: 16, 160>}, {pipeline_mode = #tpu.pipeline_mode<synchronous>, transform_indices = @transform_35, window_bounds = array<i64: 16, 80>}, {pipeline_mode = #tpu.pipeline_mode<synchronous>, transform_indices = @transform_36, window_bounds = array<i64: 16, 32>}, {pipeline_mode = #tpu.pipeline_mode<synchronous>, transform_indices = @transform_37, window_bounds = array<i64: 8, 1>}, {pipeline_mode = #tpu.pipeline_mode<synchronous>, transform_indices = @transform_38, window_bounds = array<i64: 8, 1>}, {pipeline_mode = #tpu.pipeline_mode<synchronous>, transform_indices = @transform_39, window_bounds = array<i64: 8, 1>}, {pipeline_mode = #tpu.pipeline_mode<synchronous>, transform_indices = @transform_40, window_bounds = array<i64: 8, 80>}, {pipeline_mode = #tpu.pipeline_mode<synchronous>, transform_indices = @transform_41, window_bounds = array<i64: 8, 40>}, {pipeline_mode = #tpu.pipeline_mode<synchronous>, transform_indices = @transform_42, window_bounds = array<i64: 8, 16>}, {pipeline_mode = #tpu.pipeline_mode<synchronous>, transform_indices = @transform_43, window_bounds = array<i64: 4, 1>}, {pipeline_mode = #tpu.pipeline_mode<synchronous>, transform_indices = @transform_44, window_bounds = array<i64: 4, 1>}, {pipeline_mode = #tpu.pipeline_mode<synchronous>, transform_indices = @transform_45, window_bounds = array<i64: 4, 1>}, {pipeline_mode = #tpu.pipeline_mode<synchronous>, transform_indices = @transform_46, window_bounds = array<i64: 4, 40>}, {pipeline_mode = #tpu.pipeline_mode<synchronous>, transform_indices = @transform_47, window_bounds = array<i64: 4, 20>}, {pipeline_mode = #tpu.pipeline_mode<synchronous>, transform_indices = @transform_48, window_bounds = array<i64: 4, 8>}, {pipeline_mode = #tpu.pipeline_mode<synchronous>, transform_indices = @transform_49, window_bounds = array<i64: 4, 1>}, {pipeline_mode = #tpu.pipeline_mode<synchronous>, transform_indices = @transform_50, window_bounds = array<i64: 4, 5>}, {transform_indices = @transform_51, window_bounds = array<i64: 1, 4, 256>}]} {
    %c0 = arith.constant 0 : index
    %c0_0 = arith.constant 0 : index
    %c0_1 = arith.constant 0 : index
    %0 = vector.load %arg1[%c0, %c0_0, %c0_1] : memref<1x4x256xf32, #tpu.memory_space<vmem>>, vector<1x4x256xf32>
    %1 = vector.shape_cast %0 : vector<1x4x256xf32> to vector<4x256xf32>
    %cst = arith.constant 0.000000e+00 : f32
    %2 = vector.broadcast %cst : f32 to vector<4x2xf32>
    %c0_2 = arith.constant 0 : index
    %c126 = arith.constant 126 : index
    %3 = vector.load %arg53[%c0_2, %c126] : memref<160x392xf32, #tpu.memory_space<vmem>>, vector<4x2xf32>
    tpu.vector_store %arg53[%c0_2, %c126], %2 {strides = array<i32>} : memref<160x392xf32, #tpu.memory_space<vmem>>, vector<4x2xf32>,
    %c0_3 = arith.constant 0 : index
    %c128 = arith.constant 128 : index
    %4 = vector.load %arg53[%c0_3, %c128] : memref<160x392xf32, #tpu.memory_space<vmem>>, vector<4x256xf32>
    tpu.vector_store %arg53[%c0_3, %c128], %1 {strides = array<i32>} : memref<160x392xf32, #tpu.memory_space<vmem>>, vector<4x256xf32>,
    %c0_4 = arith.constant 0 : index
    %c0_5 = arith.constant 0 : index
    %5 = vector.load %arg51[%c0_4, %c0_5] : memref<4x5xf32, #tpu.memory_space<vmem>>, vector<4x5xf32>
    %c0_6 = arith.constant 0 : index
    %c0_7 = arith.constant 0 : index
    %6 = vector.load %arg50[%c0_6, %c0_7] : memref<4x1xf32, #tpu.memory_space<vmem>>, vector<4x1xf32>
    %7 = vector.extract_strided_slice %5 {offsets = [0, 0], sizes = [4, 1], strides = [1, 1]} : vector<4x5xf32> to vector<4x1xf32>
    %c2 = arith.constant 2 : index
    %c127 = arith.constant 127 : index
    %8 = vector.load %arg53[%c2, %c127] : memref<160x392xf32, #tpu.memory_space<vmem>>, vector<1x256xf32>
    %9 = vector.broadcast %7 : vector<4x1xf32> to vector<4x256xf32>
    %10 = vector.broadcast %8 : vector<1x256xf32> to vector<4x256xf32>
    %11 = arith.mulf %9, %10 : vector<4x256xf32>
    %12 = vector.broadcast %6 : vector<4x1xf32> to vector<4x256xf32>
    %13 = arith.addf %12, %11 : vector<4x256xf32>
    %14 = vector.extract_strided_slice %5 {offsets = [0, 1], sizes = [4, 1], strides = [1, 1]} : vector<4x5xf32> to vector<4x1xf32>
    %c3 = arith.constant 3 : index
    %c127_8 = arith.constant 127 : index
    %15 = vector.load %arg53[%c3, %c127_8] : memref<160x392xf32, #tpu.memory_space<vmem>>, vector<1x256xf32>
    %16 = vector.broadcast %14 : vector<4x1xf32> to vector<4x256xf32>
    %17 = vector.broadcast %15 : vector<1x256xf32> to vector<4x256xf32>
    %18 = arith.mulf %16, %17 : vector<4x256xf32>
    %19 = arith.addf %13, %18 : vector<4x256xf32>
    %20 = vector.extract_strided_slice %5 {offsets = [0, 2], sizes = [4, 1], strides = [1, 1]} : vector<4x5xf32> to vector<4x1xf32>
    %c0_9 = arith.constant 0 : index
    %c128_10 = arith.constant 128 : index
    %21 = vector.load %arg53[%c0_9, %c128_10] : memref<160x392xf32, #tpu.memory_space<vmem>>, vector<1x256xf32>
    %22 = vector.broadcast %20 : vector<4x1xf32> to vector<4x256xf32>
    %23 = vector.broadcast %21 : vector<1x256xf32> to vector<4x256xf32>
    %24 = arith.mulf %22, %23 : vector<4x256xf32>
    %25 = arith.addf %19, %24 : vector<4x256xf32>
    %26 = vector.extract_strided_slice %5 {offsets = [0, 3], sizes = [4, 1], strides = [1, 1]} : vector<4x5xf32> to vector<4x1xf32>
    %c1 = arith.constant 1 : index
    %c128_11 = arith.constant 128 : index
    %27 = vector.load %arg53[%c1, %c128_11] : memref<160x392xf32, #tpu.memory_space<vmem>>, vector<1x256xf32>
    %28 = vector.broadcast %26 : vector<4x1xf32> to vector<4x256xf32>
    %29 = vector.broadcast %27 : vector<1x256xf32> to vector<4x256xf32>
    %30 = arith.mulf %28, %29 : vector<4x256xf32>
    %31 = arith.addf %25, %30 : vector<4x256xf32>
    %32 = vector.extract_strided_slice %5 {offsets = [0, 4], sizes = [4, 1], strides = [1, 1]} : vector<4x5xf32> to vector<4x1xf32>
    %c2_12 = arith.constant 2 : index
    %c128_13 = arith.constant 128 : index
    %33 = vector.load %arg53[%c2_12, %c128_13] : memref<160x392xf32, #tpu.memory_space<vmem>>, vector<1x256xf32>
    %34 = vector.broadcast %32 : vector<4x1xf32> to vector<4x256xf32>
    %35 = vector.broadcast %33 : vector<1x256xf32> to vector<4x256xf32>
    %36 = arith.mulf %34, %35 : vector<4x256xf32>
    %37 = arith.addf %31, %36 : vector<4x256xf32>
    %cst_14 = arith.constant 0.000000e+00 : f32
    %38 = vector.broadcast %cst_14 : f32 to vector<4x256xf32>
    %39 = arith.cmpf oge, %37, %38 : vector<4x256xf32>
    %cst_15 = arith.constant 2.000000e-01 : f32
    %40 = vector.broadcast %cst_15 : f32 to vector<4x256xf32>
    %41 = arith.mulf %40, %37 : vector<4x256xf32>
    %42 = arith.select %39, %37, %41 : vector<4x256xi1>, vector<4x256xf32>
    %c0_16 = arith.constant 0 : index
    %c0_17 = arith.constant 0 : index
    %43 = vector.load %arg3[%c0_16, %c0_17] : memref<256x64xbf16, #tpu.memory_space<vmem>>, vector<256x64xbf16>
    %44 = arith.truncf %42 : vector<4x256xf32> to vector<4x256xbf16>
    %cst_18 = arith.constant dense<0.000000e+00> : vector<4x64xf32>
    %45 = tpu.matmul %44, %43, %cst_18 {dimension_numbers = #tpu.dot_dimension_numbers<[1], [0], [0], [1], [0, 0, 1, 1], [], []>} : vector<4x256xbf16>, vector<256x64xbf16>, vector<4x64xf32> -> vector<4x64xf32>
    %c0_19 = arith.constant 0 : index
    %c0_20 = arith.constant 0 : index
    %46 = vector.load %arg19[%c0_19, %c0_20] : memref<8x4xbf16, #tpu.memory_space<vmem>>, vector<8x4xbf16>
    %47 = arith.truncf %45 : vector<4x64xf32> to vector<4x64xbf16>
    %cst_21 = arith.constant dense<0.000000e+00> : vector<8x64xf32>
    %48 = tpu.matmul %46, %47, %cst_21 {dimension_numbers = #tpu.dot_dimension_numbers<[1], [0], [0], [1], [0, 0, 1, 1], [], []>} : vector<8x4xbf16>, vector<4x64xbf16>, vector<8x64xf32> -> vector<8x64xf32>
    %c0_22 = arith.constant 0 : index
    %c0_23 = arith.constant 0 : index
    %49 = vector.load %arg16[%c0_22, %c0_23] : memref<8x1xf32, #tpu.memory_space<vmem>>, vector<8x1xf32>
    %50 = vector.broadcast %49 : vector<8x1xf32> to vector<8x64xf32>
    %51 = arith.addf %48, %50 : vector<8x64xf32>
    %cst_24 = arith.constant 0.000000e+00 : f32
    %52 = vector.broadcast %cst_24 : f32 to vector<20x2xf32>
    %c0_25 = arith.constant 0 : index
    %c128_26 = arith.constant 128 : index
    %53 = vector.load %arg53[%c0_25, %c128_26] : memref<160x392xf32, #tpu.memory_space<vmem>>, vector<20x2xf32>
    tpu.vector_store %arg53[%c0_25, %c128_26], %52 {strides = array<i32>} : memref<160x392xf32, #tpu.memory_space<vmem>>, vector<20x2xf32>,
    %cst_27 = arith.constant 0.000000e+00 : f32
    %54 = vector.broadcast %cst_27 : f32 to vector<20x2xf32>
    %c0_28 = arith.constant 0 : index
    %c382 = arith.constant 382 : index
    %55 = vector.load %arg53[%c0_28, %c382] : memref<160x392xf32, #tpu.memory_space<vmem>>, vector<20x2xf32>
    tpu.vector_store %arg53[%c0_28, %c382], %54 {strides = array<i32>} : memref<160x392xf32, #tpu.memory_space<vmem>>, vector<20x2xf32>,
    %c0_29 = arith.constant 0 : index
    %c130 = arith.constant 130 : index
    %56 = vector.load %arg53[%c0_29, %c130] : memref<160x392xf32, #tpu.memory_space<vmem>>, vector<4x256xf32>
    tpu.vector_store %arg53[%c0_29, %c130], %42 {strides = array<i32>} : memref<160x392xf32, #tpu.memory_space<vmem>>, vector<4x256xf32>,
    %c4 = arith.constant 4 : index
    %c129 = arith.constant 129 : index
    %57 = vector.load %arg53[%c4, %c129] : memref<160x392xf32, #tpu.memory_space<vmem>>, vector<4x256xf32>
    tpu.vector_store %arg53[%c4, %c129], %42 {strides = array<i32>} : memref<160x392xf32, #tpu.memory_space<vmem>>, vector<4x256xf32>,
    %c8 = arith.constant 8 : index
    %c128_30 = arith.constant 128 : index
    %58 = vector.load %arg53[%c8, %c128_30] : memref<160x392xf32, #tpu.memory_space<vmem>>, vector<4x256xf32>
    tpu.vector_store %arg53[%c8, %c128_30], %42 {strides = array<i32>} : memref<160x392xf32, #tpu.memory_space<vmem>>, vector<4x256xf32>,
    %c12 = arith.constant 12 : index
    %c127_31 = arith.constant 127 : index
    %59 = vector.load %arg53[%c12, %c127_31] : memref<160x392xf32, #tpu.memory_space<vmem>>, vector<4x256xf32>
    tpu.vector_store %arg53[%c12, %c127_31], %42 {strides = array<i32>} : memref<160x392xf32, #tpu.memory_space<vmem>>, vector<4x256xf32>,
    %c16 = arith.constant 16 : index
    %c126_32 = arith.constant 126 : index
    %60 = vector.load %arg53[%c16, %c126_32] : memref<160x392xf32, #tpu.memory_space<vmem>>, vector<4x256xf32>
    tpu.vector_store %arg53[%c16, %c126_32], %42 {strides = array<i32>} : memref<160x392xf32, #tpu.memory_space<vmem>>, vector<4x256xf32>,
    %c0_33 = arith.constant 0 : index
    %c0_34 = arith.constant 0 : index
    %61 = vector.load %arg17[%c0_33, %c0_34] : memref<8x20xbf16, #tpu.memory_space<vmem>>, vector<8x20xbf16>
    %c0_35 = arith.constant 0 : index
    %c128_36 = arith.constant 128 : index
    %62 = vector.load %arg53[%c0_35, %c128_36] : memref<160x392xf32, #tpu.memory_space<vmem>>, vector<20x256xf32>
    %63 = arith.truncf %62 : vector<20x256xf32> to vector<20x256xbf16>
    %cst_37 = arith.constant dense<0.000000e+00> : vector<8x256xf32>
    %64 = tpu.matmul %61, %63, %cst_37 {dimension_numbers = #tpu.dot_dimension_numbers<[1], [0], [0], [1], [0, 0, 1, 1], [], []>} : vector<8x20xbf16>, vector<20x256xbf16>, vector<8x256xf32> -> vector<8x256xf32>
    %65 = arith.truncf %64 : vector<8x256xf32> to vector<8x256xbf16>
    %cst_38 = arith.constant dense<0.000000e+00> : vector<8x64xf32>
    %66 = tpu.matmul %65, %43, %cst_38 {dimension_numbers = #tpu.dot_dimension_numbers<[1], [0], [0], [1], [0, 0, 1, 1], [], []>} : vector<8x256xbf16>, vector<256x64xbf16>, vector<8x64xf32> -> vector<8x64xf32>
    %c0_39 = arith.constant 0 : index
    %c0_40 = arith.constant 0 : index
    %67 = vector.load %arg14[%c0_39, %c0_40] : memref<8x1xf32, #tpu.memory_space<vmem>>, vector<8x1xf32>
    %68 = vector.broadcast %67 : vector<8x1xf32> to vector<8x64xf32>
    %69 = arith.addf %66, %68 : vector<8x64xf32>
    %cst_41 = arith.constant 0.000000e+00 : f32
    %70 = vector.broadcast %cst_41 : f32 to vector<8x64xf32>
    %71 = arith.cmpf oge, %69, %70 : vector<8x64xf32>
    %cst_42 = arith.constant 2.000000e-01 : f32
    %72 = vector.broadcast %cst_42 : f32 to vector<8x64xf32>
    %73 = arith.mulf %72, %69 : vector<8x64xf32>
    %74 = arith.select %71, %69, %73 : vector<8x64xi1>, vector<8x64xf32>
    %cst_43 = arith.constant 0.000000e+00 : f32
    %75 = vector.broadcast %cst_43 : f32 to vector<40x2xf32>
    %c0_44 = arith.constant 0 : index
    %c128_45 = arith.constant 128 : index
    %76 = vector.load %arg53[%c0_44, %c128_45] : memref<160x392xf32, #tpu.memory_space<vmem>>, vector<40x2xf32>
    tpu.vector_store %arg53[%c0_44, %c128_45], %75 {strides = array<i32>} : memref<160x392xf32, #tpu.memory_space<vmem>>, vector<40x2xf32>,
    %cst_46 = arith.constant 0.000000e+00 : f32
    %77 = vector.broadcast %cst_46 : f32 to vector<40x2xf32>
    %c0_47 = arith.constant 0 : index
    %c190 = arith.constant 190 : index
    %78 = vector.load %arg53[%c0_47, %c190] : memref<160x392xf32, #tpu.memory_space<vmem>>, vector<40x2xf32>
    tpu.vector_store %arg53[%c0_47, %c190], %77 {strides = array<i32>} : memref<160x392xf32, #tpu.memory_space<vmem>>, vector<40x2xf32>,
    %c0_48 = arith.constant 0 : index
    %c130_49 = arith.constant 130 : index
    %79 = vector.load %arg53[%c0_48, %c130_49] : memref<160x392xf32, #tpu.memory_space<vmem>>, vector<8x64xf32>
    tpu.vector_store %arg53[%c0_48, %c130_49], %74 {strides = array<i32>} : memref<160x392xf32, #tpu.memory_space<vmem>>, vector<8x64xf32>,
    %c8_50 = arith.constant 8 : index
    %c129_51 = arith.constant 129 : index
    %80 = vector.load %arg53[%c8_50, %c129_51] : memref<160x392xf32, #tpu.memory_space<vmem>>, vector<8x64xf32>
    tpu.vector_store %arg53[%c8_50, %c129_51], %74 {strides = array<i32>} : memref<160x392xf32, #tpu.memory_space<vmem>>, vector<8x64xf32>,
    %c16_52 = arith.constant 16 : index
    %c128_53 = arith.constant 128 : index
    %81 = vector.load %arg53[%c16_52, %c128_53] : memref<160x392xf32, #tpu.memory_space<vmem>>, vector<8x64xf32>
    tpu.vector_store %arg53[%c16_52, %c128_53], %74 {strides = array<i32>} : memref<160x392xf32, #tpu.memory_space<vmem>>, vector<8x64xf32>,
    %c24 = arith.constant 24 : index
    %c127_54 = arith.constant 127 : index
    %82 = vector.load %arg53[%c24, %c127_54] : memref<160x392xf32, #tpu.memory_space<vmem>>, vector<8x64xf32>
    tpu.vector_store %arg53[%c24, %c127_54], %74 {strides = array<i32>} : memref<160x392xf32, #tpu.memory_space<vmem>>, vector<8x64xf32>,
    %c32 = arith.constant 32 : index
    %c126_55 = arith.constant 126 : index
    %83 = vector.load %arg53[%c32, %c126_55] : memref<160x392xf32, #tpu.memory_space<vmem>>, vector<8x64xf32>
    tpu.vector_store %arg53[%c32, %c126_55], %74 {strides = array<i32>} : memref<160x392xf32, #tpu.memory_space<vmem>>, vector<8x64xf32>,
    %c0_56 = arith.constant 0 : index
    %c0_57 = arith.constant 0 : index
    %84 = vector.load %arg18[%c0_56, %c0_57] : memref<8x40xbf16, #tpu.memory_space<vmem>>, vector<8x40xbf16>
    %c0_58 = arith.constant 0 : index
    %c128_59 = arith.constant 128 : index
    %85 = vector.load %arg53[%c0_58, %c128_59] : memref<160x392xf32, #tpu.memory_space<vmem>>, vector<40x64xf32>
    %86 = arith.truncf %85 : vector<40x64xf32> to vector<40x64xbf16>
    %cst_60 = arith.constant dense<0.000000e+00> : vector<8x64xf32>
    %87 = tpu.matmul %84, %86, %cst_60 {dimension_numbers = #tpu.dot_dimension_numbers<[1], [0], [0], [1], [0, 0, 1, 1], [], []>} : vector<8x40xbf16>, vector<40x64xbf16>, vector<8x64xf32> -> vector<8x64xf32>
    %c0_61 = arith.constant 0 : index
    %c0_62 = arith.constant 0 : index
    %88 = vector.load %arg15[%c0_61, %c0_62] : memref<8x1xf32, #tpu.memory_space<vmem>>, vector<8x1xf32>
    %89 = vector.broadcast %88 : vector<8x1xf32> to vector<8x64xf32>
    %90 = arith.addf %87, %89 : vector<8x64xf32>
    %91 = arith.addf %90, %51 : vector<8x64xf32>
    %cst_63 = arith.constant 0.000000e+00 : f32
    %92 = vector.broadcast %cst_63 : f32 to vector<8x64xf32>
    %93 = arith.cmpf oge, %91, %92 : vector<8x64xf32>
    %cst_64 = arith.constant 2.000000e-01 : f32
    %94 = vector.broadcast %cst_64 : f32 to vector<8x64xf32>
    %95 = arith.mulf %94, %91 : vector<8x64xf32>
    %96 = arith.select %93, %91, %95 : vector<8x64xi1>, vector<8x64xf32>
    %c0_65 = arith.constant 0 : index
    %c0_66 = arith.constant 0 : index
    %97 = vector.load %arg4[%c0_65, %c0_66] : memref<64x16xbf16, #tpu.memory_space<vmem>>, vector<64x16xbf16>
    %98 = arith.truncf %96 : vector<8x64xf32> to vector<8x64xbf16>
    %cst_67 = arith.constant dense<0.000000e+00> : vector<8x16xf32>
    %99 = tpu.matmul %98, %97, %cst_67 {dimension_numbers = #tpu.dot_dimension_numbers<[1], [0], [0], [1], [0, 0, 1, 1], [], []>} : vector<8x64xbf16>, vector<64x16xbf16>, vector<8x16xf32> -> vector<8x16xf32>
    %c0_68 = arith.constant 0 : index
    %c0_69 = arith.constant 0 : index
    %100 = vector.load %arg25[%c0_68, %c0_69] : memref<16x8xbf16, #tpu.memory_space<vmem>>, vector<16x8xbf16>
    %101 = arith.truncf %99 : vector<8x16xf32> to vector<8x16xbf16>
    %cst_70 = arith.constant dense<0.000000e+00> : vector<16x16xf32>
    %102 = tpu.matmul %100, %101, %cst_70 {dimension_numbers = #tpu.dot_dimension_numbers<[1], [0], [0], [1], [0, 0, 1, 1], [], []>} : vector<16x8xbf16>, vector<8x16xbf16>, vector<16x16xf32> -> vector<16x16xf32>
    %c0_71 = arith.constant 0 : index
    %c0_72 = arith.constant 0 : index
    %103 = vector.load %arg22[%c0_71, %c0_72] : memref<16x1xf32, #tpu.memory_space<vmem>>, vector<16x1xf32>
    %104 = vector.broadcast %103 : vector<16x1xf32> to vector<16x16xf32>
    %105 = arith.addf %102, %104 : vector<16x16xf32>
    %cst_73 = arith.constant 0.000000e+00 : f32
    %106 = vector.broadcast %cst_73 : f32 to vector<40x2xf32>
    %c0_74 = arith.constant 0 : index
    %c128_75 = arith.constant 128 : index
    %107 = vector.load %arg53[%c0_74, %c128_75] : memref<160x392xf32, #tpu.memory_space<vmem>>, vector<40x2xf32>
    tpu.vector_store %arg53[%c0_74, %c128_75], %106 {strides = array<i32>} : memref<160x392xf32, #tpu.memory_space<vmem>>, vector<40x2xf32>,
    %cst_76 = arith.constant 0.000000e+00 : f32
    %108 = vector.broadcast %cst_76 : f32 to vector<40x2xf32>
    %c0_77 = arith.constant 0 : index
    %c190_78 = arith.constant 190 : index
    %109 = vector.load %arg53[%c0_77, %c190_78] : memref<160x392xf32, #tpu.memory_space<vmem>>, vector<40x2xf32>
    tpu.vector_store %arg53[%c0_77, %c190_78], %108 {strides = array<i32>} : memref<160x392xf32, #tpu.memory_space<vmem>>, vector<40x2xf32>,
    %c0_79 = arith.constant 0 : index
    %c130_80 = arith.constant 130 : index
    %110 = vector.load %arg53[%c0_79, %c130_80] : memref<160x392xf32, #tpu.memory_space<vmem>>, vector<8x64xf32>
    tpu.vector_store %arg53[%c0_79, %c130_80], %96 {strides = array<i32>} : memref<160x392xf32, #tpu.memory_space<vmem>>, vector<8x64xf32>,
    %c8_81 = arith.constant 8 : index
    %c129_82 = arith.constant 129 : index
    %111 = vector.load %arg53[%c8_81, %c129_82] : memref<160x392xf32, #tpu.memory_space<vmem>>, vector<8x64xf32>
    tpu.vector_store %arg53[%c8_81, %c129_82], %96 {strides = array<i32>} : memref<160x392xf32, #tpu.memory_space<vmem>>, vector<8x64xf32>,
    %c16_83 = arith.constant 16 : index
    %c128_84 = arith.constant 128 : index
    %112 = vector.load %arg53[%c16_83, %c128_84] : memref<160x392xf32, #tpu.memory_space<vmem>>, vector<8x64xf32>
    tpu.vector_store %arg53[%c16_83, %c128_84], %96 {strides = array<i32>} : memref<160x392xf32, #tpu.memory_space<vmem>>, vector<8x64xf32>,
    %c24_85 = arith.constant 24 : index
    %c127_86 = arith.constant 127 : index
    %113 = vector.load %arg53[%c24_85, %c127_86] : memref<160x392xf32, #tpu.memory_space<vmem>>, vector<8x64xf32>
    tpu.vector_store %arg53[%c24_85, %c127_86], %96 {strides = array<i32>} : memref<160x392xf32, #tpu.memory_space<vmem>>, vector<8x64xf32>,
    %c32_87 = arith.constant 32 : index
    %c126_88 = arith.constant 126 : index
    %114 = vector.load %arg53[%c32_87, %c126_88] : memref<160x392xf32, #tpu.memory_space<vmem>>, vector<8x64xf32>
    tpu.vector_store %arg53[%c32_87, %c126_88], %96 {strides = array<i32>} : memref<160x392xf32, #tpu.memory_space<vmem>>, vector<8x64xf32>,
    %c0_89 = arith.constant 0 : index
    %c0_90 = arith.constant 0 : index
    %115 = vector.load %arg23[%c0_89, %c0_90] : memref<16x40xbf16, #tpu.memory_space<vmem>>, vector<16x40xbf16>
    %c0_91 = arith.constant 0 : index
    %c128_92 = arith.constant 128 : index
    %116 = vector.load %arg53[%c0_91, %c128_92] : memref<160x392xf32, #tpu.memory_space<vmem>>, vector<40x64xf32>
    %117 = arith.truncf %116 : vector<40x64xf32> to vector<40x64xbf16>
    %cst_93 = arith.constant dense<0.000000e+00> : vector<16x64xf32>
    %118 = tpu.matmul %115, %117, %cst_93 {dimension_numbers = #tpu.dot_dimension_numbers<[1], [0], [0], [1], [0, 0, 1, 1], [], []>} : vector<16x40xbf16>, vector<40x64xbf16>, vector<16x64xf32> -> vector<16x64xf32>
    %119 = arith.truncf %118 : vector<16x64xf32> to vector<16x64xbf16>
    %cst_94 = arith.constant dense<0.000000e+00> : vector<16x16xf32>
    %120 = tpu.matmul %119, %97, %cst_94 {dimension_numbers = #tpu.dot_dimension_numbers<[1], [0], [0], [1], [0, 0, 1, 1], [], []>} : vector<16x64xbf16>, vector<64x16xbf16>, vector<16x16xf32> -> vector<16x16xf32>
    %c0_95 = arith.constant 0 : index
    %c0_96 = arith.constant 0 : index
    %121 = vector.load %arg20[%c0_95, %c0_96] : memref<16x1xf32, #tpu.memory_space<vmem>>, vector<16x1xf32>
    %122 = vector.broadcast %121 : vector<16x1xf32> to vector<16x16xf32>
    %123 = arith.addf %120, %122 : vector<16x16xf32>
    %cst_97 = arith.constant 0.000000e+00 : f32
    %124 = vector.broadcast %cst_97 : f32 to vector<16x16xf32>
    %125 = arith.cmpf oge, %123, %124 : vector<16x16xf32>
    %cst_98 = arith.constant 2.000000e-01 : f32
    %126 = vector.broadcast %cst_98 : f32 to vector<16x16xf32>
    %127 = arith.mulf %126, %123 : vector<16x16xf32>
    %128 = arith.select %125, %123, %127 : vector<16x16xi1>, vector<16x16xf32>
    %cst_99 = arith.constant 0.000000e+00 : f32
    %129 = vector.broadcast %cst_99 : f32 to vector<80x2xf32>
    %c0_100 = arith.constant 0 : index
    %c128_101 = arith.constant 128 : index
    %130 = vector.load %arg53[%c0_100, %c128_101] : memref<160x392xf32, #tpu.memory_space<vmem>>, vector<80x2xf32>
    tpu.vector_store %arg53[%c0_100, %c128_101], %129 {strides = array<i32>} : memref<160x392xf32, #tpu.memory_space<vmem>>, vector<80x2xf32>,
    %cst_102 = arith.constant 0.000000e+00 : f32
    %131 = vector.broadcast %cst_102 : f32 to vector<80x2xf32>
    %c0_103 = arith.constant 0 : index
    %c142 = arith.constant 142 : index
    %132 = vector.load %arg53[%c0_103, %c142] : memref<160x392xf32, #tpu.memory_space<vmem>>, vector<80x2xf32>
    tpu.vector_store %arg53[%c0_103, %c142], %131 {strides = array<i32>} : memref<160x392xf32, #tpu.memory_space<vmem>>, vector<80x2xf32>,
    %c0_104 = arith.constant 0 : index
    %c130_105 = arith.constant 130 : index
    %133 = vector.load %arg53[%c0_104, %c130_105] : memref<160x392xf32, #tpu.memory_space<vmem>>, vector<16x16xf32>
    tpu.vector_store %arg53[%c0_104, %c130_105], %128 {strides = array<i32>} : memref<160x392xf32, #tpu.memory_space<vmem>>, vector<16x16xf32>,
    %c16_106 = arith.constant 16 : index
    %c129_107 = arith.constant 129 : index
    %134 = vector.load %arg53[%c16_106, %c129_107] : memref<160x392xf32, #tpu.memory_space<vmem>>, vector<16x16xf32>
    tpu.vector_store %arg53[%c16_106, %c129_107], %128 {strides = array<i32>} : memref<160x392xf32, #tpu.memory_space<vmem>>, vector<16x16xf32>,
    %c32_108 = arith.constant 32 : index
    %c128_109 = arith.constant 128 : index
    %135 = vector.load %arg53[%c32_108, %c128_109] : memref<160x392xf32, #tpu.memory_space<vmem>>, vector<16x16xf32>
    tpu.vector_store %arg53[%c32_108, %c128_109], %128 {strides = array<i32>} : memref<160x392xf32, #tpu.memory_space<vmem>>, vector<16x16xf32>,
    %c48 = arith.constant 48 : index
    %c127_110 = arith.constant 127 : index
    %136 = vector.load %arg53[%c48, %c127_110] : memref<160x392xf32, #tpu.memory_space<vmem>>, vector<16x16xf32>
    tpu.vector_store %arg53[%c48, %c127_110], %128 {strides = array<i32>} : memref<160x392xf32, #tpu.memory_space<vmem>>, vector<16x16xf32>,
    %c64 = arith.constant 64 : index
    %c126_111 = arith.constant 126 : index
    %137 = vector.load %arg53[%c64, %c126_111] : memref<160x392xf32, #tpu.memory_space<vmem>>, vector<16x16xf32>
    tpu.vector_store %arg53[%c64, %c126_111], %128 {strides = array<i32>} : memref<160x392xf32, #tpu.memory_space<vmem>>, vector<16x16xf32>,
    %c0_112 = arith.constant 0 : index
    %c0_113 = arith.constant 0 : index
    %138 = vector.load %arg24[%c0_112, %c0_113] : memref<16x80xbf16, #tpu.memory_space<vmem>>, vector<16x80xbf16>
    %c0_114 = arith.constant 0 : index
    %c128_115 = arith.constant 128 : index
    %139 = vector.load %arg53[%c0_114, %c128_115] : memref<160x392xf32, #tpu.memory_space<vmem>>, vector<80x16xf32>
    %140 = arith.truncf %139 : vector<80x16xf32> to vector<80x16xbf16>
    %cst_116 = arith.constant dense<0.000000e+00> : vector<16x16xf32>
    %141 = tpu.matmul %138, %140, %cst_116 {dimension_numbers = #tpu.dot_dimension_numbers<[1], [0], [0], [1], [0, 0, 1, 1], [], []>} : vector<16x80xbf16>, vector<80x16xbf16>, vector<16x16xf32> -> vector<16x16xf32>
    %c0_117 = arith.constant 0 : index
    %c0_118 = arith.constant 0 : index
    %142 = vector.load %arg21[%c0_117, %c0_118] : memref<16x1xf32, #tpu.memory_space<vmem>>, vector<16x1xf32>
    %143 = vector.broadcast %142 : vector<16x1xf32> to vector<16x16xf32>
    %144 = arith.addf %141, %143 : vector<16x16xf32>
    %145 = arith.addf %144, %105 : vector<16x16xf32>
    %cst_119 = arith.constant 0.000000e+00 : f32
    %146 = vector.broadcast %cst_119 : f32 to vector<16x16xf32>
    %147 = arith.cmpf oge, %145, %146 : vector<16x16xf32>
    %cst_120 = arith.constant 2.000000e-01 : f32
    %148 = vector.broadcast %cst_120 : f32 to vector<16x16xf32>
    %149 = arith.mulf %148, %145 : vector<16x16xf32>
    %150 = arith.select %147, %145, %149 : vector<16x16xi1>, vector<16x16xf32>
    %c0_121 = arith.constant 0 : index
    %c0_122 = arith.constant 0 : index
    %151 = vector.load %arg2[%c0_121, %c0_122] : memref<16x4xbf16, #tpu.memory_space<vmem>>, vector<16x4xbf16>
    %152 = arith.truncf %150 : vector<16x16xf32> to vector<16x16xbf16>
    %cst_123 = arith.constant dense<0.000000e+00> : vector<16x4xf32>
    %153 = tpu.matmul %152, %151, %cst_123 {dimension_numbers = #tpu.dot_dimension_numbers<[1], [0], [0], [1], [0, 0, 1, 1], [], []>} : vector<16x16xbf16>, vector<16x4xbf16>, vector<16x4xf32> -> vector<16x4xf32>
    %c0_124 = arith.constant 0 : index
    %c0_125 = arith.constant 0 : index
    %154 = vector.load %arg31[%c0_124, %c0_125] : memref<32x16xbf16, #tpu.memory_space<vmem>>, vector<32x16xbf16>
    %155 = arith.truncf %153 : vector<16x4xf32> to vector<16x4xbf16>
    %cst_126 = arith.constant dense<0.000000e+00> : vector<32x4xf32>
    %156 = tpu.matmul %154, %155, %cst_126 {dimension_numbers = #tpu.dot_dimension_numbers<[1], [0], [0], [1], [0, 0, 1, 1], [], []>} : vector<32x16xbf16>, vector<16x4xbf16>, vector<32x4xf32> -> vector<32x4xf32>
    %c0_127 = arith.constant 0 : index
    %c0_128 = arith.constant 0 : index
    %157 = vector.load %arg28[%c0_127, %c0_128] : memref<32x1xf32, #tpu.memory_space<vmem>>, vector<32x1xf32>
    %158 = vector.broadcast %157 : vector<32x1xf32> to vector<32x4xf32>
    %159 = arith.addf %156, %158 : vector<32x4xf32>
    %cst_129 = arith.constant 0.000000e+00 : f32
    %160 = vector.broadcast %cst_129 : f32 to vector<80x2xf32>
    %c0_130 = arith.constant 0 : index
    %c128_131 = arith.constant 128 : index
    %161 = vector.load %arg53[%c0_130, %c128_131] : memref<160x392xf32, #tpu.memory_space<vmem>>, vector<80x2xf32>
    tpu.vector_store %arg53[%c0_130, %c128_131], %160 {strides = array<i32>} : memref<160x392xf32, #tpu.memory_space<vmem>>, vector<80x2xf32>,
    %cst_132 = arith.constant 0.000000e+00 : f32
    %162 = vector.broadcast %cst_132 : f32 to vector<80x2xf32>
    %c0_133 = arith.constant 0 : index
    %c142_134 = arith.constant 142 : index
    %163 = vector.load %arg53[%c0_133, %c142_134] : memref<160x392xf32, #tpu.memory_space<vmem>>, vector<80x2xf32>
    tpu.vector_store %arg53[%c0_133, %c142_134], %162 {strides = array<i32>} : memref<160x392xf32, #tpu.memory_space<vmem>>, vector<80x2xf32>,
    %c0_135 = arith.constant 0 : index
    %c130_136 = arith.constant 130 : index
    %164 = vector.load %arg53[%c0_135, %c130_136] : memref<160x392xf32, #tpu.memory_space<vmem>>, vector<16x16xf32>
    tpu.vector_store %arg53[%c0_135, %c130_136], %150 {strides = array<i32>} : memref<160x392xf32, #tpu.memory_space<vmem>>, vector<16x16xf32>,
    %c16_137 = arith.constant 16 : index
    %c129_138 = arith.constant 129 : index
    %165 = vector.load %arg53[%c16_137, %c129_138] : memref<160x392xf32, #tpu.memory_space<vmem>>, vector<16x16xf32>
    tpu.vector_store %arg53[%c16_137, %c129_138], %150 {strides = array<i32>} : memref<160x392xf32, #tpu.memory_space<vmem>>, vector<16x16xf32>,
    %c32_139 = arith.constant 32 : index
    %c128_140 = arith.constant 128 : index
    %166 = vector.load %arg53[%c32_139, %c128_140] : memref<160x392xf32, #tpu.memory_space<vmem>>, vector<16x16xf32>
    tpu.vector_store %arg53[%c32_139, %c128_140], %150 {strides = array<i32>} : memref<160x392xf32, #tpu.memory_space<vmem>>, vector<16x16xf32>,
    %c48_141 = arith.constant 48 : index
    %c127_142 = arith.constant 127 : index
    %167 = vector.load %arg53[%c48_141, %c127_142] : memref<160x392xf32, #tpu.memory_space<vmem>>, vector<16x16xf32>
    tpu.vector_store %arg53[%c48_141, %c127_142], %150 {strides = array<i32>} : memref<160x392xf32, #tpu.memory_space<vmem>>, vector<16x16xf32>,
    %c64_143 = arith.constant 64 : index
    %c126_144 = arith.constant 126 : index
    %168 = vector.load %arg53[%c64_143, %c126_144] : memref<160x392xf32, #tpu.memory_space<vmem>>, vector<16x16xf32>
    tpu.vector_store %arg53[%c64_143, %c126_144], %150 {strides = array<i32>} : memref<160x392xf32, #tpu.memory_space<vmem>>, vector<16x16xf32>,
    %c0_145 = arith.constant 0 : index
    %c0_146 = arith.constant 0 : index
    %169 = vector.load %arg29[%c0_145, %c0_146] : memref<32x80xbf16, #tpu.memory_space<vmem>>, vector<32x80xbf16>
    %c0_147 = arith.constant 0 : index
    %c128_148 = arith.constant 128 : index
    %170 = vector.load %arg53[%c0_147, %c128_148] : memref<160x392xf32, #tpu.memory_space<vmem>>, vector<80x16xf32>
    %171 = arith.truncf %170 : vector<80x16xf32> to vector<80x16xbf16>
    %cst_149 = arith.constant dense<0.000000e+00> : vector<32x16xf32>
    %172 = tpu.matmul %169, %171, %cst_149 {dimension_numbers = #tpu.dot_dimension_numbers<[1], [0], [0], [1], [0, 0, 1, 1], [], []>} : vector<32x80xbf16>, vector<80x16xbf16>, vector<32x16xf32> -> vector<32x16xf32>
    %173 = arith.truncf %172 : vector<32x16xf32> to vector<32x16xbf16>
    %cst_150 = arith.constant dense<0.000000e+00> : vector<32x4xf32>
    %174 = tpu.matmul %173, %151, %cst_150 {dimension_numbers = #tpu.dot_dimension_numbers<[1], [0], [0], [1], [0, 0, 1, 1], [], []>} : vector<32x16xbf16>, vector<16x4xbf16>, vector<32x4xf32> -> vector<32x4xf32>
    %c0_151 = arith.constant 0 : index
    %c0_152 = arith.constant 0 : index
    %175 = vector.load %arg26[%c0_151, %c0_152] : memref<32x1xf32, #tpu.memory_space<vmem>>, vector<32x1xf32>
    %176 = vector.broadcast %175 : vector<32x1xf32> to vector<32x4xf32>
    %177 = arith.addf %174, %176 : vector<32x4xf32>
    %cst_153 = arith.constant 0.000000e+00 : f32
    %178 = vector.broadcast %cst_153 : f32 to vector<32x4xf32>
    %179 = arith.cmpf oge, %177, %178 : vector<32x4xf32>
    %cst_154 = arith.constant 2.000000e-01 : f32
    %180 = vector.broadcast %cst_154 : f32 to vector<32x4xf32>
    %181 = arith.mulf %180, %177 : vector<32x4xf32>
    %182 = arith.select %179, %177, %181 : vector<32x4xi1>, vector<32x4xf32>
    %cst_155 = arith.constant 0.000000e+00 : f32
    %183 = vector.broadcast %cst_155 : f32 to vector<160x2xf32>
    %c0_156 = arith.constant 0 : index
    %c128_157 = arith.constant 128 : index
    %184 = vector.load %arg53[%c0_156, %c128_157] : memref<160x392xf32, #tpu.memory_space<vmem>>, vector<160x2xf32>
    tpu.vector_store %arg53[%c0_156, %c128_157], %183 {strides = array<i32>} : memref<160x392xf32, #tpu.memory_space<vmem>>, vector<160x2xf32>,
    %cst_158 = arith.constant 0.000000e+00 : f32
    %185 = vector.broadcast %cst_158 : f32 to vector<160x2xf32>
    %c0_159 = arith.constant 0 : index
    %c130_160 = arith.constant 130 : index
    %186 = vector.load %arg53[%c0_159, %c130_160] : memref<160x392xf32, #tpu.memory_space<vmem>>, vector<160x2xf32>
    tpu.vector_store %arg53[%c0_159, %c130_160], %185 {strides = array<i32>} : memref<160x392xf32, #tpu.memory_space<vmem>>, vector<160x2xf32>,
    %c0_161 = arith.constant 0 : index
    %c130_162 = arith.constant 130 : index
    %187 = vector.load %arg53[%c0_161, %c130_162] : memref<160x392xf32, #tpu.memory_space<vmem>>, vector<32x4xf32>
    tpu.vector_store %arg53[%c0_161, %c130_162], %182 {strides = array<i32>} : memref<160x392xf32, #tpu.memory_space<vmem>>, vector<32x4xf32>,
    %c32_163 = arith.constant 32 : index
    %c129_164 = arith.constant 129 : index
    %188 = vector.load %arg53[%c32_163, %c129_164] : memref<160x392xf32, #tpu.memory_space<vmem>>, vector<32x4xf32>
    tpu.vector_store %arg53[%c32_163, %c129_164], %182 {strides = array<i32>} : memref<160x392xf32, #tpu.memory_space<vmem>>, vector<32x4xf32>,
    %c64_165 = arith.constant 64 : index
    %c128_166 = arith.constant 128 : index
    %189 = vector.load %arg53[%c64_165, %c128_166] : memref<160x392xf32, #tpu.memory_space<vmem>>, vector<32x4xf32>
    tpu.vector_store %arg53[%c64_165, %c128_166], %182 {strides = array<i32>} : memref<160x392xf32, #tpu.memory_space<vmem>>, vector<32x4xf32>,
    %c96 = arith.constant 96 : index
    %c127_167 = arith.constant 127 : index
    %190 = vector.load %arg53[%c96, %c127_167] : memref<160x392xf32, #tpu.memory_space<vmem>>, vector<32x4xf32>
    tpu.vector_store %arg53[%c96, %c127_167], %182 {strides = array<i32>} : memref<160x392xf32, #tpu.memory_space<vmem>>, vector<32x4xf32>,
    %c128_168 = arith.constant 128 : index
    %c126_169 = arith.constant 126 : index
    %191 = vector.load %arg53[%c128_168, %c126_169] : memref<160x392xf32, #tpu.memory_space<vmem>>, vector<32x4xf32>
    tpu.vector_store %arg53[%c128_168, %c126_169], %182 {strides = array<i32>} : memref<160x392xf32, #tpu.memory_space<vmem>>, vector<32x4xf32>,
    %c0_170 = arith.constant 0 : index
    %c0_171 = arith.constant 0 : index
    %192 = vector.load %arg30[%c0_170, %c0_171] : memref<32x160xbf16, #tpu.memory_space<vmem>>, vector<32x160xbf16>
    %c0_172 = arith.constant 0 : index
    %c128_173 = arith.constant 128 : index
    %193 = vector.load %arg53[%c0_172, %c128_173] : memref<160x392xf32, #tpu.memory_space<vmem>>, vector<160x4xf32>
    %194 = arith.truncf %193 : vector<160x4xf32> to vector<160x4xbf16>
    %cst_174 = arith.constant dense<0.000000e+00> : vector<32x4xf32>
    %195 = tpu.matmul %192, %194, %cst_174 {dimension_numbers = #tpu.dot_dimension_numbers<[1], [0], [0], [1], [0, 0, 1, 1], [], []>} : vector<32x160xbf16>, vector<160x4xbf16>, vector<32x4xf32> -> vector<32x4xf32>
    %c0_175 = arith.constant 0 : index
    %c0_176 = arith.constant 0 : index
    %196 = vector.load %arg27[%c0_175, %c0_176] : memref<32x1xf32, #tpu.memory_space<vmem>>, vector<32x1xf32>
    %197 = vector.broadcast %196 : vector<32x1xf32> to vector<32x4xf32>
    %198 = arith.addf %195, %197 : vector<32x4xf32>
    %199 = arith.addf %198, %159 : vector<32x4xf32>
    %cst_177 = arith.constant 0.000000e+00 : f32
    %200 = vector.broadcast %cst_177 : f32 to vector<32x4xf32>
    %201 = arith.cmpf oge, %199, %200 : vector<32x4xf32>
    %cst_178 = arith.constant 2.000000e-01 : f32
    %202 = vector.broadcast %cst_178 : f32 to vector<32x4xf32>
    %203 = arith.mulf %202, %199 : vector<32x4xf32>
    %204 = arith.select %201, %199, %203 : vector<32x4xi1>, vector<32x4xf32>
    %205 = vector.extract_strided_slice %204 {offsets = [0, 0], sizes = [32, 1], strides = [1, 1]} : vector<32x4xf32> to vector<32x1xf32>
    %c0_179 = arith.constant 0 : index
    %c128_180 = arith.constant 128 : index
    %206 = vector.load %arg53[%c0_179, %c128_180] : memref<160x392xf32, #tpu.memory_space<vmem>>, vector<32x1xf32>
    tpu.vector_store %arg53[%c0_179, %c128_180], %205 {strides = array<i32>} : memref<160x392xf32, #tpu.memory_space<vmem>>, vector<32x1xf32>,
    %207 = vector.extract_strided_slice %204 {offsets = [0, 1], sizes = [32, 1], strides = [1, 1]} : vector<32x4xf32> to vector<32x1xf32>
    %c32_181 = arith.constant 32 : index
    %c128_182 = arith.constant 128 : index
    %208 = vector.load %arg53[%c32_181, %c128_182] : memref<160x392xf32, #tpu.memory_space<vmem>>, vector<32x1xf32>
    tpu.vector_store %arg53[%c32_181, %c128_182], %207 {strides = array<i32>} : memref<160x392xf32, #tpu.memory_space<vmem>>, vector<32x1xf32>,
    %209 = vector.extract_strided_slice %204 {offsets = [0, 2], sizes = [32, 1], strides = [1, 1]} : vector<32x4xf32> to vector<32x1xf32>
    %c64_183 = arith.constant 64 : index
    %c128_184 = arith.constant 128 : index
    %210 = vector.load %arg53[%c64_183, %c128_184] : memref<160x392xf32, #tpu.memory_space<vmem>>, vector<32x1xf32>
    tpu.vector_store %arg53[%c64_183, %c128_184], %209 {strides = array<i32>} : memref<160x392xf32, #tpu.memory_space<vmem>>, vector<32x1xf32>,
    %211 = vector.extract_strided_slice %204 {offsets = [0, 3], sizes = [32, 1], strides = [1, 1]} : vector<32x4xf32> to vector<32x1xf32>
    %c96_185 = arith.constant 96 : index
    %c128_186 = arith.constant 128 : index
    %212 = vector.load %arg53[%c96_185, %c128_186] : memref<160x392xf32, #tpu.memory_space<vmem>>, vector<32x1xf32>
    tpu.vector_store %arg53[%c96_185, %c128_186], %211 {strides = array<i32>} : memref<160x392xf32, #tpu.memory_space<vmem>>, vector<32x1xf32>,
    %c0_187 = arith.constant 0 : index
    %c0_188 = arith.constant 0 : index
    %213 = vector.load %arg11[%c0_187, %c0_188] : memref<256x128xbf16, #tpu.memory_space<vmem>>, vector<256x128xbf16>
    %c0_189 = arith.constant 0 : index
    %c128_190 = arith.constant 128 : index
    %214 = vector.load %arg53[%c0_189, %c128_190] : memref<160x392xf32, #tpu.memory_space<vmem>>, vector<128x1xf32>
    %215 = arith.truncf %214 : vector<128x1xf32> to vector<128x1xbf16>
    %cst_191 = arith.constant dense<0.000000e+00> : vector<256x1xf32>
    %216 = tpu.matmul %213, %215, %cst_191 {dimension_numbers = #tpu.dot_dimension_numbers<[1], [0], [0], [1], [0, 0, 1, 1], [], []>} : vector<256x128xbf16>, vector<128x1xbf16>, vector<256x1xf32> -> vector<256x1xf32>
    %c0_192 = arith.constant 0 : index
    %c0_193 = arith.constant 0 : index
    %217 = vector.load %arg10[%c0_192, %c0_193] : memref<256x1xf32, #tpu.memory_space<vmem>>, vector<256x1xf32>
    %218 = arith.addf %216, %217 : vector<256x1xf32>
    %c0_194 = arith.constant 0 : index
    %c0_195 = arith.constant 0 : index
    %219 = vector.load %arg9[%c0_194, %c0_195] : memref<128x256xbf16, #tpu.memory_space<vmem>>, vector<128x256xbf16>
    %220 = arith.truncf %218 : vector<256x1xf32> to vector<256x1xbf16>
    %cst_196 = arith.constant dense<0.000000e+00> : vector<128x1xf32>
    %221 = tpu.matmul %219, %220, %cst_196 {dimension_numbers = #tpu.dot_dimension_numbers<[1], [0], [0], [1], [0, 0, 1, 1], [], []>} : vector<128x256xbf16>, vector<256x1xbf16>, vector<128x1xf32> -> vector<128x1xf32>
    %c0_197 = arith.constant 0 : index
    %c0_198 = arith.constant 0 : index
    %222 = vector.load %arg8[%c0_197, %c0_198] : memref<128x1xf32, #tpu.memory_space<vmem>>, vector<128x1xf32>
    %223 = arith.addf %221, %222 : vector<128x1xf32>
    %224 = tpu.iota {dimensions = array<i32: 1>} : vector<32x4xi32>
    %cst_199 = arith.constant 0.000000e+00 : f32
    %225 = vector.broadcast %cst_199 : f32 to vector<32x4xf32>
    %c0_i32 = arith.constant 0 : i32
    %226 = vector.broadcast %c0_i32 : i32 to vector<32x4xi32>
    %227 = arith.cmpi eq, %224, %226 : vector<32x4xi32>
    %228 = vector.extract_strided_slice %223 {offsets = [0, 0], sizes = [32, 1], strides = [1, 1]} : vector<128x1xf32> to vector<32x1xf32>
    %cst_200 = arith.constant 0.000000e+00 : f32
    %229 = vector.shape_cast %228 : vector<32x1xf32> to vector<32x1xf32>
    %230 = vector.broadcast %229 : vector<32x1xf32> to vector<32x4xf32>
    %231 = vector.broadcast %cst_200 : f32 to vector<32x4xf32>
    %232 = arith.select %227, %230, %231 : vector<32x4xi1>, vector<32x4xf32>
    %233 = arith.addf %225, %232 : vector<32x4xf32>
    %c1_i32 = arith.constant 1 : i32
    %234 = vector.broadcast %c1_i32 : i32 to vector<32x4xi32>
    %235 = arith.cmpi eq, %224, %234 : vector<32x4xi32>
    %236 = vector.extract_strided_slice %223 {offsets = [32, 0], sizes = [32, 1], strides = [1, 1]} : vector<128x1xf32> to vector<32x1xf32>
    %cst_201 = arith.constant 0.000000e+00 : f32
    %237 = vector.shape_cast %236 : vector<32x1xf32> to vector<32x1xf32>
    %238 = vector.broadcast %237 : vector<32x1xf32> to vector<32x4xf32>
    %239 = vector.broadcast %cst_201 : f32 to vector<32x4xf32>
    %240 = arith.select %235, %238, %239 : vector<32x4xi1>, vector<32x4xf32>
    %241 = arith.addf %233, %240 : vector<32x4xf32>
    %c2_i32 = arith.constant 2 : i32
    %242 = vector.broadcast %c2_i32 : i32 to vector<32x4xi32>
    %243 = arith.cmpi eq, %224, %242 : vector<32x4xi32>
    %244 = vector.extract_strided_slice %223 {offsets = [64, 0], sizes = [32, 1], strides = [1, 1]} : vector<128x1xf32> to vector<32x1xf32>
    %cst_202 = arith.constant 0.000000e+00 : f32
    %245 = vector.shape_cast %244 : vector<32x1xf32> to vector<32x1xf32>
    %246 = vector.broadcast %245 : vector<32x1xf32> to vector<32x4xf32>
    %247 = vector.broadcast %cst_202 : f32 to vector<32x4xf32>
    %248 = arith.select %243, %246, %247 : vector<32x4xi1>, vector<32x4xf32>
    %249 = arith.addf %241, %248 : vector<32x4xf32>
    %c3_i32 = arith.constant 3 : i32
    %250 = vector.broadcast %c3_i32 : i32 to vector<32x4xi32>
    %251 = arith.cmpi eq, %224, %250 : vector<32x4xi32>
    %252 = vector.extract_strided_slice %223 {offsets = [96, 0], sizes = [32, 1], strides = [1, 1]} : vector<128x1xf32> to vector<32x1xf32>
    %cst_203 = arith.constant 0.000000e+00 : f32
    %253 = vector.shape_cast %252 : vector<32x1xf32> to vector<32x1xf32>
    %254 = vector.broadcast %253 : vector<32x1xf32> to vector<32x4xf32>
    %255 = vector.broadcast %cst_203 : f32 to vector<32x4xf32>
    %256 = arith.select %251, %254, %255 : vector<32x4xi1>, vector<32x4xf32>
    %257 = arith.addf %249, %256 : vector<32x4xf32>
    %c0_204 = arith.constant 0 : index
    %c0_205 = arith.constant 0 : index
    %258 = vector.load %arg6[%c0_204, %c0_205] : memref<4x16xbf16, #tpu.memory_space<vmem>>, vector<4x16xbf16>
    %259 = arith.truncf %257 : vector<32x4xf32> to vector<32x4xbf16>
    %cst_206 = arith.constant dense<0.000000e+00> : vector<32x16xf32>
    %260 = tpu.matmul %259, %258, %cst_206 {dimension_numbers = #tpu.dot_dimension_numbers<[1], [0], [0], [1], [0, 0, 1, 1], [], []>} : vector<32x4xbf16>, vector<4x16xbf16>, vector<32x16xf32> -> vector<32x16xf32>
    %c0_207 = arith.constant 0 : index
    %c0_208 = arith.constant 0 : index
    %261 = vector.load %arg37[%c0_207, %c0_208] : memref<16x32xbf16, #tpu.memory_space<vmem>>, vector<16x32xbf16>
    %262 = arith.truncf %260 : vector<32x16xf32> to vector<32x16xbf16>
    %cst_209 = arith.constant dense<0.000000e+00> : vector<16x16xf32>
    %263 = tpu.matmul %261, %262, %cst_209 {dimension_numbers = #tpu.dot_dimension_numbers<[1], [0], [0], [1], [0, 0, 1, 1], [], []>} : vector<16x32xbf16>, vector<32x16xbf16>, vector<16x16xf32> -> vector<16x16xf32>
    %c0_210 = arith.constant 0 : index
    %c0_211 = arith.constant 0 : index
    %264 = vector.load %arg34[%c0_210, %c0_211] : memref<16x1xf32, #tpu.memory_space<vmem>>, vector<16x1xf32>
    %265 = vector.broadcast %264 : vector<16x1xf32> to vector<16x16xf32>
    %266 = arith.addf %263, %265 : vector<16x16xf32>
    %cst_212 = arith.constant 0.000000e+00 : f32
    %267 = vector.broadcast %cst_212 : f32 to vector<160x2xf32>
    %c0_213 = arith.constant 0 : index
    %c128_214 = arith.constant 128 : index
    %268 = vector.load %arg53[%c0_213, %c128_214] : memref<160x392xf32, #tpu.memory_space<vmem>>, vector<160x2xf32>
    tpu.vector_store %arg53[%c0_213, %c128_214], %267 {strides = array<i32>} : memref<160x392xf32, #tpu.memory_space<vmem>>, vector<160x2xf32>,
    %cst_215 = arith.constant 0.000000e+00 : f32
    %269 = vector.broadcast %cst_215 : f32 to vector<160x2xf32>
    %c0_216 = arith.constant 0 : index
    %c142_217 = arith.constant 142 : index
    %270 = vector.load %arg53[%c0_216, %c142_217] : memref<160x392xf32, #tpu.memory_space<vmem>>, vector<160x2xf32>
    tpu.vector_store %arg53[%c0_216, %c142_217], %269 {strides = array<i32>} : memref<160x392xf32, #tpu.memory_space<vmem>>, vector<160x2xf32>,
    %c0_218 = arith.constant 0 : index
    %c126_219 = arith.constant 126 : index
    %271 = vector.load %arg53[%c0_218, %c126_219] : memref<160x392xf32, #tpu.memory_space<vmem>>, vector<32x16xf32>
    tpu.vector_store %arg53[%c0_218, %c126_219], %260 {strides = array<i32>} : memref<160x392xf32, #tpu.memory_space<vmem>>, vector<32x16xf32>,
    %c32_220 = arith.constant 32 : index
    %c127_221 = arith.constant 127 : index
    %272 = vector.load %arg53[%c32_220, %c127_221] : memref<160x392xf32, #tpu.memory_space<vmem>>, vector<32x16xf32>
    tpu.vector_store %arg53[%c32_220, %c127_221], %260 {strides = array<i32>} : memref<160x392xf32, #tpu.memory_space<vmem>>, vector<32x16xf32>,
    %c64_222 = arith.constant 64 : index
    %c128_223 = arith.constant 128 : index
    %273 = vector.load %arg53[%c64_222, %c128_223] : memref<160x392xf32, #tpu.memory_space<vmem>>, vector<32x16xf32>
    tpu.vector_store %arg53[%c64_222, %c128_223], %260 {strides = array<i32>} : memref<160x392xf32, #tpu.memory_space<vmem>>, vector<32x16xf32>,
    %c96_224 = arith.constant 96 : index
    %c129_225 = arith.constant 129 : index
    %274 = vector.load %arg53[%c96_224, %c129_225] : memref<160x392xf32, #tpu.memory_space<vmem>>, vector<32x16xf32>
    tpu.vector_store %arg53[%c96_224, %c129_225], %260 {strides = array<i32>} : memref<160x392xf32, #tpu.memory_space<vmem>>, vector<32x16xf32>,
    %c128_226 = arith.constant 128 : index
    %c130_227 = arith.constant 130 : index
    %275 = vector.load %arg53[%c128_226, %c130_227] : memref<160x392xf32, #tpu.memory_space<vmem>>, vector<32x16xf32>
    tpu.vector_store %arg53[%c128_226, %c130_227], %260 {strides = array<i32>} : memref<160x392xf32, #tpu.memory_space<vmem>>, vector<32x16xf32>,
    %c0_228 = arith.constant 0 : index
    %c0_229 = arith.constant 0 : index
    %276 = vector.load %arg35[%c0_228, %c0_229] : memref<16x160xbf16, #tpu.memory_space<vmem>>, vector<16x160xbf16>
    %c0_230 = arith.constant 0 : index
    %c128_231 = arith.constant 128 : index
    %277 = vector.load %arg53[%c0_230, %c128_231] : memref<160x392xf32, #tpu.memory_space<vmem>>, vector<160x16xf32>
    %278 = arith.truncf %277 : vector<160x16xf32> to vector<160x16xbf16>
    %cst_232 = arith.constant dense<0.000000e+00> : vector<16x16xf32>
    %279 = tpu.matmul %276, %278, %cst_232 {dimension_numbers = #tpu.dot_dimension_numbers<[1], [0], [0], [1], [0, 0, 1, 1], [], []>} : vector<16x160xbf16>, vector<160x16xbf16>, vector<16x16xf32> -> vector<16x16xf32>
    %c0_233 = arith.constant 0 : index
    %c0_234 = arith.constant 0 : index
    %280 = vector.load %arg32[%c0_233, %c0_234] : memref<16x1xf32, #tpu.memory_space<vmem>>, vector<16x1xf32>
    %281 = vector.broadcast %280 : vector<16x1xf32> to vector<16x16xf32>
    %282 = arith.addf %279, %281 : vector<16x16xf32>
    %cst_235 = arith.constant 0.000000e+00 : f32
    %283 = vector.broadcast %cst_235 : f32 to vector<16x16xf32>
    %284 = arith.cmpf oge, %282, %283 : vector<16x16xf32>
    %cst_236 = arith.constant 2.000000e-01 : f32
    %285 = vector.broadcast %cst_236 : f32 to vector<16x16xf32>
    %286 = arith.mulf %285, %282 : vector<16x16xf32>
    %287 = arith.select %284, %282, %286 : vector<16x16xi1>, vector<16x16xf32>
    %cst_237 = arith.constant 0.000000e+00 : f32
    %288 = vector.broadcast %cst_237 : f32 to vector<80x2xf32>
    %c0_238 = arith.constant 0 : index
    %c128_239 = arith.constant 128 : index
    %289 = vector.load %arg53[%c0_238, %c128_239] : memref<160x392xf32, #tpu.memory_space<vmem>>, vector<80x2xf32>
    tpu.vector_store %arg53[%c0_238, %c128_239], %288 {strides = array<i32>} : memref<160x392xf32, #tpu.memory_space<vmem>>, vector<80x2xf32>,
    %cst_240 = arith.constant 0.000000e+00 : f32
    %290 = vector.broadcast %cst_240 : f32 to vector<80x2xf32>
    %c0_241 = arith.constant 0 : index
    %c142_242 = arith.constant 142 : index
    %291 = vector.load %arg53[%c0_241, %c142_242] : memref<160x392xf32, #tpu.memory_space<vmem>>, vector<80x2xf32>
    tpu.vector_store %arg53[%c0_241, %c142_242], %290 {strides = array<i32>} : memref<160x392xf32, #tpu.memory_space<vmem>>, vector<80x2xf32>,
    %c0_243 = arith.constant 0 : index
    %c130_244 = arith.constant 130 : index
    %292 = vector.load %arg53[%c0_243, %c130_244] : memref<160x392xf32, #tpu.memory_space<vmem>>, vector<16x16xf32>
    tpu.vector_store %arg53[%c0_243, %c130_244], %287 {strides = array<i32>} : memref<160x392xf32, #tpu.memory_space<vmem>>, vector<16x16xf32>,
    %c16_245 = arith.constant 16 : index
    %c129_246 = arith.constant 129 : index
    %293 = vector.load %arg53[%c16_245, %c129_246] : memref<160x392xf32, #tpu.memory_space<vmem>>, vector<16x16xf32>
    tpu.vector_store %arg53[%c16_245, %c129_246], %287 {strides = array<i32>} : memref<160x392xf32, #tpu.memory_space<vmem>>, vector<16x16xf32>,
    %c32_247 = arith.constant 32 : index
    %c128_248 = arith.constant 128 : index
    %294 = vector.load %arg53[%c32_247, %c128_248] : memref<160x392xf32, #tpu.memory_space<vmem>>, vector<16x16xf32>
    tpu.vector_store %arg53[%c32_247, %c128_248], %287 {strides = array<i32>} : memref<160x392xf32, #tpu.memory_space<vmem>>, vector<16x16xf32>,
    %c48_249 = arith.constant 48 : index
    %c127_250 = arith.constant 127 : index
    %295 = vector.load %arg53[%c48_249, %c127_250] : memref<160x392xf32, #tpu.memory_space<vmem>>, vector<16x16xf32>
    tpu.vector_store %arg53[%c48_249, %c127_250], %287 {strides = array<i32>} : memref<160x392xf32, #tpu.memory_space<vmem>>, vector<16x16xf32>,
    %c64_251 = arith.constant 64 : index
    %c126_252 = arith.constant 126 : index
    %296 = vector.load %arg53[%c64_251, %c126_252] : memref<160x392xf32, #tpu.memory_space<vmem>>, vector<16x16xf32>
    tpu.vector_store %arg53[%c64_251, %c126_252], %287 {strides = array<i32>} : memref<160x392xf32, #tpu.memory_space<vmem>>, vector<16x16xf32>,
    %c0_253 = arith.constant 0 : index
    %c0_254 = arith.constant 0 : index
    %297 = vector.load %arg36[%c0_253, %c0_254] : memref<16x80xbf16, #tpu.memory_space<vmem>>, vector<16x80xbf16>
    %c0_255 = arith.constant 0 : index
    %c128_256 = arith.constant 128 : index
    %298 = vector.load %arg53[%c0_255, %c128_256] : memref<160x392xf32, #tpu.memory_space<vmem>>, vector<80x16xf32>
    %299 = arith.truncf %298 : vector<80x16xf32> to vector<80x16xbf16>
    %cst_257 = arith.constant dense<0.000000e+00> : vector<16x16xf32>
    %300 = tpu.matmul %297, %299, %cst_257 {dimension_numbers = #tpu.dot_dimension_numbers<[1], [0], [0], [1], [0, 0, 1, 1], [], []>} : vector<16x80xbf16>, vector<80x16xbf16>, vector<16x16xf32> -> vector<16x16xf32>
    %c0_258 = arith.constant 0 : index
    %c0_259 = arith.constant 0 : index
    %301 = vector.load %arg33[%c0_258, %c0_259] : memref<16x1xf32, #tpu.memory_space<vmem>>, vector<16x1xf32>
    %302 = vector.broadcast %301 : vector<16x1xf32> to vector<16x16xf32>
    %303 = arith.addf %300, %302 : vector<16x16xf32>
    %304 = arith.addf %303, %266 : vector<16x16xf32>
    %cst_260 = arith.constant 0.000000e+00 : f32
    %305 = vector.broadcast %cst_260 : f32 to vector<16x16xf32>
    %306 = arith.cmpf oge, %304, %305 : vector<16x16xf32>
    %cst_261 = arith.constant 2.000000e-01 : f32
    %307 = vector.broadcast %cst_261 : f32 to vector<16x16xf32>
    %308 = arith.mulf %307, %304 : vector<16x16xf32>
    %309 = arith.select %306, %304, %308 : vector<16x16xi1>, vector<16x16xf32>
    %c0_262 = arith.constant 0 : index
    %c0_263 = arith.constant 0 : index
    %310 = vector.load %arg5[%c0_262, %c0_263] : memref<16x64xbf16, #tpu.memory_space<vmem>>, vector<16x64xbf16>
    %311 = arith.truncf %309 : vector<16x16xf32> to vector<16x16xbf16>
    %cst_264 = arith.constant dense<0.000000e+00> : vector<16x64xf32>
    %312 = tpu.matmul %311, %310, %cst_264 {dimension_numbers = #tpu.dot_dimension_numbers<[1], [0], [0], [1], [0, 0, 1, 1], [], []>} : vector<16x16xbf16>, vector<16x64xbf16>, vector<16x64xf32> -> vector<16x64xf32>
    %c0_265 = arith.constant 0 : index
    %c0_266 = arith.constant 0 : index
    %313 = vector.load %arg43[%c0_265, %c0_266] : memref<8x16xbf16, #tpu.memory_space<vmem>>, vector<8x16xbf16>
    %314 = arith.truncf %312 : vector<16x64xf32> to vector<16x64xbf16>
    %cst_267 = arith.constant dense<0.000000e+00> : vector<8x64xf32>
    %315 = tpu.matmul %313, %314, %cst_267 {dimension_numbers = #tpu.dot_dimension_numbers<[1], [0], [0], [1], [0, 0, 1, 1], [], []>} : vector<8x16xbf16>, vector<16x64xbf16>, vector<8x64xf32> -> vector<8x64xf32>
    %c0_268 = arith.constant 0 : index
    %c0_269 = arith.constant 0 : index
    %316 = vector.load %arg40[%c0_268, %c0_269] : memref<8x1xf32, #tpu.memory_space<vmem>>, vector<8x1xf32>
    %317 = vector.broadcast %316 : vector<8x1xf32> to vector<8x64xf32>
    %318 = arith.addf %315, %317 : vector<8x64xf32>
    %cst_270 = arith.constant 0.000000e+00 : f32
    %319 = vector.broadcast %cst_270 : f32 to vector<80x2xf32>
    %c0_271 = arith.constant 0 : index
    %c128_272 = arith.constant 128 : index
    %320 = vector.load %arg53[%c0_271, %c128_272] : memref<160x392xf32, #tpu.memory_space<vmem>>, vector<80x2xf32>
    tpu.vector_store %arg53[%c0_271, %c128_272], %319 {strides = array<i32>} : memref<160x392xf32, #tpu.memory_space<vmem>>, vector<80x2xf32>,
    %cst_273 = arith.constant 0.000000e+00 : f32
    %321 = vector.broadcast %cst_273 : f32 to vector<80x2xf32>
    %c0_274 = arith.constant 0 : index
    %c190_275 = arith.constant 190 : index
    %322 = vector.load %arg53[%c0_274, %c190_275] : memref<160x392xf32, #tpu.memory_space<vmem>>, vector<80x2xf32>
    tpu.vector_store %arg53[%c0_274, %c190_275], %321 {strides = array<i32>} : memref<160x392xf32, #tpu.memory_space<vmem>>, vector<80x2xf32>,
    %c0_276 = arith.constant 0 : index
    %c126_277 = arith.constant 126 : index
    %323 = vector.load %arg53[%c0_276, %c126_277] : memref<160x392xf32, #tpu.memory_space<vmem>>, vector<16x64xf32>
    tpu.vector_store %arg53[%c0_276, %c126_277], %312 {strides = array<i32>} : memref<160x392xf32, #tpu.memory_space<vmem>>, vector<16x64xf32>,
    %c16_278 = arith.constant 16 : index
    %c127_279 = arith.constant 127 : index
    %324 = vector.load %arg53[%c16_278, %c127_279] : memref<160x392xf32, #tpu.memory_space<vmem>>, vector<16x64xf32>
    tpu.vector_store %arg53[%c16_278, %c127_279], %312 {strides = array<i32>} : memref<160x392xf32, #tpu.memory_space<vmem>>, vector<16x64xf32>,
    %c32_280 = arith.constant 32 : index
    %c128_281 = arith.constant 128 : index
    %325 = vector.load %arg53[%c32_280, %c128_281] : memref<160x392xf32, #tpu.memory_space<vmem>>, vector<16x64xf32>
    tpu.vector_store %arg53[%c32_280, %c128_281], %312 {strides = array<i32>} : memref<160x392xf32, #tpu.memory_space<vmem>>, vector<16x64xf32>,
    %c48_282 = arith.constant 48 : index
    %c129_283 = arith.constant 129 : index
    %326 = vector.load %arg53[%c48_282, %c129_283] : memref<160x392xf32, #tpu.memory_space<vmem>>, vector<16x64xf32>
    tpu.vector_store %arg53[%c48_282, %c129_283], %312 {strides = array<i32>} : memref<160x392xf32, #tpu.memory_space<vmem>>, vector<16x64xf32>,
    %c64_284 = arith.constant 64 : index
    %c130_285 = arith.constant 130 : index
    %327 = vector.load %arg53[%c64_284, %c130_285] : memref<160x392xf32, #tpu.memory_space<vmem>>, vector<16x64xf32>
    tpu.vector_store %arg53[%c64_284, %c130_285], %312 {strides = array<i32>} : memref<160x392xf32, #tpu.memory_space<vmem>>, vector<16x64xf32>,
    %c0_286 = arith.constant 0 : index
    %c0_287 = arith.constant 0 : index
    %328 = vector.load %arg41[%c0_286, %c0_287] : memref<8x80xbf16, #tpu.memory_space<vmem>>, vector<8x80xbf16>
    %c0_288 = arith.constant 0 : index
    %c128_289 = arith.constant 128 : index
    %329 = vector.load %arg53[%c0_288, %c128_289] : memref<160x392xf32, #tpu.memory_space<vmem>>, vector<80x64xf32>
    %330 = arith.truncf %329 : vector<80x64xf32> to vector<80x64xbf16>
    %cst_290 = arith.constant dense<0.000000e+00> : vector<8x64xf32>
    %331 = tpu.matmul %328, %330, %cst_290 {dimension_numbers = #tpu.dot_dimension_numbers<[1], [0], [0], [1], [0, 0, 1, 1], [], []>} : vector<8x80xbf16>, vector<80x64xbf16>, vector<8x64xf32> -> vector<8x64xf32>
    %c0_291 = arith.constant 0 : index
    %c0_292 = arith.constant 0 : index
    %332 = vector.load %arg38[%c0_291, %c0_292] : memref<8x1xf32, #tpu.memory_space<vmem>>, vector<8x1xf32>
    %333 = vector.broadcast %332 : vector<8x1xf32> to vector<8x64xf32>
    %334 = arith.addf %331, %333 : vector<8x64xf32>
    %cst_293 = arith.constant 0.000000e+00 : f32
    %335 = vector.broadcast %cst_293 : f32 to vector<8x64xf32>
    %336 = arith.cmpf oge, %334, %335 : vector<8x64xf32>
    %cst_294 = arith.constant 2.000000e-01 : f32
    %337 = vector.broadcast %cst_294 : f32 to vector<8x64xf32>
    %338 = arith.mulf %337, %334 : vector<8x64xf32>
    %339 = arith.select %336, %334, %338 : vector<8x64xi1>, vector<8x64xf32>
    %cst_295 = arith.constant 0.000000e+00 : f32
    %340 = vector.broadcast %cst_295 : f32 to vector<40x2xf32>
    %c0_296 = arith.constant 0 : index
    %c128_297 = arith.constant 128 : index
    %341 = vector.load %arg53[%c0_296, %c128_297] : memref<160x392xf32, #tpu.memory_space<vmem>>, vector<40x2xf32>
    tpu.vector_store %arg53[%c0_296, %c128_297], %340 {strides = array<i32>} : memref<160x392xf32, #tpu.memory_space<vmem>>, vector<40x2xf32>,
    %cst_298 = arith.constant 0.000000e+00 : f32
    %342 = vector.broadcast %cst_298 : f32 to vector<40x2xf32>
    %c0_299 = arith.constant 0 : index
    %c190_300 = arith.constant 190 : index
    %343 = vector.load %arg53[%c0_299, %c190_300] : memref<160x392xf32, #tpu.memory_space<vmem>>, vector<40x2xf32>
    tpu.vector_store %arg53[%c0_299, %c190_300], %342 {strides = array<i32>} : memref<160x392xf32, #tpu.memory_space<vmem>>, vector<40x2xf32>,
    %c0_301 = arith.constant 0 : index
    %c130_302 = arith.constant 130 : index
    %344 = vector.load %arg53[%c0_301, %c130_302] : memref<160x392xf32, #tpu.memory_space<vmem>>, vector<8x64xf32>
    tpu.vector_store %arg53[%c0_301, %c130_302], %339 {strides = array<i32>} : memref<160x392xf32, #tpu.memory_space<vmem>>, vector<8x64xf32>,
    %c8_303 = arith.constant 8 : index
    %c129_304 = arith.constant 129 : index
    %345 = vector.load %arg53[%c8_303, %c129_304] : memref<160x392xf32, #tpu.memory_space<vmem>>, vector<8x64xf32>
    tpu.vector_store %arg53[%c8_303, %c129_304], %339 {strides = array<i32>} : memref<160x392xf32, #tpu.memory_space<vmem>>, vector<8x64xf32>,
    %c16_305 = arith.constant 16 : index
    %c128_306 = arith.constant 128 : index
    %346 = vector.load %arg53[%c16_305, %c128_306] : memref<160x392xf32, #tpu.memory_space<vmem>>, vector<8x64xf32>
    tpu.vector_store %arg53[%c16_305, %c128_306], %339 {strides = array<i32>} : memref<160x392xf32, #tpu.memory_space<vmem>>, vector<8x64xf32>,
    %c24_307 = arith.constant 24 : index
    %c127_308 = arith.constant 127 : index
    %347 = vector.load %arg53[%c24_307, %c127_308] : memref<160x392xf32, #tpu.memory_space<vmem>>, vector<8x64xf32>
    tpu.vector_store %arg53[%c24_307, %c127_308], %339 {strides = array<i32>} : memref<160x392xf32, #tpu.memory_space<vmem>>, vector<8x64xf32>,
    %c32_309 = arith.constant 32 : index
    %c126_310 = arith.constant 126 : index
    %348 = vector.load %arg53[%c32_309, %c126_310] : memref<160x392xf32, #tpu.memory_space<vmem>>, vector<8x64xf32>
    tpu.vector_store %arg53[%c32_309, %c126_310], %339 {strides = array<i32>} : memref<160x392xf32, #tpu.memory_space<vmem>>, vector<8x64xf32>,
    %c0_311 = arith.constant 0 : index
    %c0_312 = arith.constant 0 : index
    %349 = vector.load %arg42[%c0_311, %c0_312] : memref<8x40xbf16, #tpu.memory_space<vmem>>, vector<8x40xbf16>
    %c0_313 = arith.constant 0 : index
    %c128_314 = arith.constant 128 : index
    %350 = vector.load %arg53[%c0_313, %c128_314] : memref<160x392xf32, #tpu.memory_space<vmem>>, vector<40x64xf32>
    %351 = arith.truncf %350 : vector<40x64xf32> to vector<40x64xbf16>
    %cst_315 = arith.constant dense<0.000000e+00> : vector<8x64xf32>
    %352 = tpu.matmul %349, %351, %cst_315 {dimension_numbers = #tpu.dot_dimension_numbers<[1], [0], [0], [1], [0, 0, 1, 1], [], []>} : vector<8x40xbf16>, vector<40x64xbf16>, vector<8x64xf32> -> vector<8x64xf32>
    %c0_316 = arith.constant 0 : index
    %c0_317 = arith.constant 0 : index
    %353 = vector.load %arg39[%c0_316, %c0_317] : memref<8x1xf32, #tpu.memory_space<vmem>>, vector<8x1xf32>
    %354 = vector.broadcast %353 : vector<8x1xf32> to vector<8x64xf32>
    %355 = arith.addf %352, %354 : vector<8x64xf32>
    %356 = arith.addf %355, %318 : vector<8x64xf32>
    %cst_318 = arith.constant 0.000000e+00 : f32
    %357 = vector.broadcast %cst_318 : f32 to vector<8x64xf32>
    %358 = arith.cmpf oge, %356, %357 : vector<8x64xf32>
    %cst_319 = arith.constant 2.000000e-01 : f32
    %359 = vector.broadcast %cst_319 : f32 to vector<8x64xf32>
    %360 = arith.mulf %359, %356 : vector<8x64xf32>
    %361 = arith.select %358, %356, %360 : vector<8x64xi1>, vector<8x64xf32>
    %c0_320 = arith.constant 0 : index
    %c0_321 = arith.constant 0 : index
    %362 = vector.load %arg7[%c0_320, %c0_321] : memref<64x256xbf16, #tpu.memory_space<vmem>>, vector<64x256xbf16>
    %363 = arith.truncf %361 : vector<8x64xf32> to vector<8x64xbf16>
    %cst_322 = arith.constant dense<0.000000e+00> : vector<8x256xf32>
    %364 = tpu.matmul %363, %362, %cst_322 {dimension_numbers = #tpu.dot_dimension_numbers<[1], [0], [0], [1], [0, 0, 1, 1], [], []>} : vector<8x64xbf16>, vector<64x256xbf16>, vector<8x256xf32> -> vector<8x256xf32>
    %c0_323 = arith.constant 0 : index
    %c0_324 = arith.constant 0 : index
    %365 = vector.load %arg49[%c0_323, %c0_324] : memref<4x8xbf16, #tpu.memory_space<vmem>>, vector<4x8xbf16>
    %366 = arith.truncf %364 : vector<8x256xf32> to vector<8x256xbf16>
    %cst_325 = arith.constant dense<0.000000e+00> : vector<4x256xf32>
    %367 = tpu.matmul %365, %366, %cst_325 {dimension_numbers = #tpu.dot_dimension_numbers<[1], [0], [0], [1], [0, 0, 1, 1], [], []>} : vector<4x8xbf16>, vector<8x256xbf16>, vector<4x256xf32> -> vector<4x256xf32>
    %c0_326 = arith.constant 0 : index
    %c0_327 = arith.constant 0 : index
    %368 = vector.load %arg46[%c0_326, %c0_327] : memref<4x1xf32, #tpu.memory_space<vmem>>, vector<4x1xf32>
    %369 = vector.broadcast %368 : vector<4x1xf32> to vector<4x256xf32>
    %370 = arith.addf %367, %369 : vector<4x256xf32>
    %cst_328 = arith.constant 0.000000e+00 : f32
    %371 = vector.broadcast %cst_328 : f32 to vector<40x2xf32>
    %c0_329 = arith.constant 0 : index
    %c128_330 = arith.constant 128 : index
    %372 = vector.load %arg53[%c0_329, %c128_330] : memref<160x392xf32, #tpu.memory_space<vmem>>, vector<40x2xf32>
    tpu.vector_store %arg53[%c0_329, %c128_330], %371 {strides = array<i32>} : memref<160x392xf32, #tpu.memory_space<vmem>>, vector<40x2xf32>,
    %cst_331 = arith.constant 0.000000e+00 : f32
    %373 = vector.broadcast %cst_331 : f32 to vector<40x2xf32>
    %c0_332 = arith.constant 0 : index
    %c382_333 = arith.constant 382 : index
    %374 = vector.load %arg53[%c0_332, %c382_333] : memref<160x392xf32, #tpu.memory_space<vmem>>, vector<40x2xf32>
    tpu.vector_store %arg53[%c0_332, %c382_333], %373 {strides = array<i32>} : memref<160x392xf32, #tpu.memory_space<vmem>>, vector<40x2xf32>,
    %c0_334 = arith.constant 0 : index
    %c126_335 = arith.constant 126 : index
    %375 = vector.load %arg53[%c0_334, %c126_335] : memref<160x392xf32, #tpu.memory_space<vmem>>, vector<8x256xf32>
    tpu.vector_store %arg53[%c0_334, %c126_335], %364 {strides = array<i32>} : memref<160x392xf32, #tpu.memory_space<vmem>>, vector<8x256xf32>,
    %c8_336 = arith.constant 8 : index
    %c127_337 = arith.constant 127 : index
    %376 = vector.load %arg53[%c8_336, %c127_337] : memref<160x392xf32, #tpu.memory_space<vmem>>, vector<8x256xf32>
    tpu.vector_store %arg53[%c8_336, %c127_337], %364 {strides = array<i32>} : memref<160x392xf32, #tpu.memory_space<vmem>>, vector<8x256xf32>,
    %c16_338 = arith.constant 16 : index
    %c128_339 = arith.constant 128 : index
    %377 = vector.load %arg53[%c16_338, %c128_339] : memref<160x392xf32, #tpu.memory_space<vmem>>, vector<8x256xf32>
    tpu.vector_store %arg53[%c16_338, %c128_339], %364 {strides = array<i32>} : memref<160x392xf32, #tpu.memory_space<vmem>>, vector<8x256xf32>,
    %c24_340 = arith.constant 24 : index
    %c129_341 = arith.constant 129 : index
    %378 = vector.load %arg53[%c24_340, %c129_341] : memref<160x392xf32, #tpu.memory_space<vmem>>, vector<8x256xf32>
    tpu.vector_store %arg53[%c24_340, %c129_341], %364 {strides = array<i32>} : memref<160x392xf32, #tpu.memory_space<vmem>>, vector<8x256xf32>,
    %c32_342 = arith.constant 32 : index
    %c130_343 = arith.constant 130 : index
    %379 = vector.load %arg53[%c32_342, %c130_343] : memref<160x392xf32, #tpu.memory_space<vmem>>, vector<8x256xf32>
    tpu.vector_store %arg53[%c32_342, %c130_343], %364 {strides = array<i32>} : memref<160x392xf32, #tpu.memory_space<vmem>>, vector<8x256xf32>,
    %c0_344 = arith.constant 0 : index
    %c0_345 = arith.constant 0 : index
    %380 = vector.load %arg47[%c0_344, %c0_345] : memref<4x40xbf16, #tpu.memory_space<vmem>>, vector<4x40xbf16>
    %c0_346 = arith.constant 0 : index
    %c128_347 = arith.constant 128 : index
    %381 = vector.load %arg53[%c0_346, %c128_347] : memref<160x392xf32, #tpu.memory_space<vmem>>, vector<40x256xf32>
    %382 = arith.truncf %381 : vector<40x256xf32> to vector<40x256xbf16>
    %cst_348 = arith.constant dense<0.000000e+00> : vector<4x256xf32>
    %383 = tpu.matmul %380, %382, %cst_348 {dimension_numbers = #tpu.dot_dimension_numbers<[1], [0], [0], [1], [0, 0, 1, 1], [], []>} : vector<4x40xbf16>, vector<40x256xbf16>, vector<4x256xf32> -> vector<4x256xf32>
    %c0_349 = arith.constant 0 : index
    %c0_350 = arith.constant 0 : index
    %384 = vector.load %arg44[%c0_349, %c0_350] : memref<4x1xf32, #tpu.memory_space<vmem>>, vector<4x1xf32>
    %385 = vector.broadcast %384 : vector<4x1xf32> to vector<4x256xf32>
    %386 = arith.addf %383, %385 : vector<4x256xf32>
    %cst_351 = arith.constant 0.000000e+00 : f32
    %387 = vector.broadcast %cst_351 : f32 to vector<4x256xf32>
    %388 = arith.cmpf oge, %386, %387 : vector<4x256xf32>
    %cst_352 = arith.constant 2.000000e-01 : f32
    %389 = vector.broadcast %cst_352 : f32 to vector<4x256xf32>
    %390 = arith.mulf %389, %386 : vector<4x256xf32>
    %391 = arith.select %388, %386, %390 : vector<4x256xi1>, vector<4x256xf32>
    %cst_353 = arith.constant 0.000000e+00 : f32
    %392 = vector.broadcast %cst_353 : f32 to vector<20x2xf32>
    %c0_354 = arith.constant 0 : index
    %c128_355 = arith.constant 128 : index
    %393 = vector.load %arg53[%c0_354, %c128_355] : memref<160x392xf32, #tpu.memory_space<vmem>>, vector<20x2xf32>
    tpu.vector_store %arg53[%c0_354, %c128_355], %392 {strides = array<i32>} : memref<160x392xf32, #tpu.memory_space<vmem>>, vector<20x2xf32>,
    %cst_356 = arith.constant 0.000000e+00 : f32
    %394 = vector.broadcast %cst_356 : f32 to vector<20x2xf32>
    %c0_357 = arith.constant 0 : index
    %c382_358 = arith.constant 382 : index
    %395 = vector.load %arg53[%c0_357, %c382_358] : memref<160x392xf32, #tpu.memory_space<vmem>>, vector<20x2xf32>
    tpu.vector_store %arg53[%c0_357, %c382_358], %394 {strides = array<i32>} : memref<160x392xf32, #tpu.memory_space<vmem>>, vector<20x2xf32>,
    %c0_359 = arith.constant 0 : index
    %c130_360 = arith.constant 130 : index
    %396 = vector.load %arg53[%c0_359, %c130_360] : memref<160x392xf32, #tpu.memory_space<vmem>>, vector<4x256xf32>
    tpu.vector_store %arg53[%c0_359, %c130_360], %391 {strides = array<i32>} : memref<160x392xf32, #tpu.memory_space<vmem>>, vector<4x256xf32>,
    %c4_361 = arith.constant 4 : index
    %c129_362 = arith.constant 129 : index
    %397 = vector.load %arg53[%c4_361, %c129_362] : memref<160x392xf32, #tpu.memory_space<vmem>>, vector<4x256xf32>
    tpu.vector_store %arg53[%c4_361, %c129_362], %391 {strides = array<i32>} : memref<160x392xf32, #tpu.memory_space<vmem>>, vector<4x256xf32>,
    %c8_363 = arith.constant 8 : index
    %c128_364 = arith.constant 128 : index
    %398 = vector.load %arg53[%c8_363, %c128_364] : memref<160x392xf32, #tpu.memory_space<vmem>>, vector<4x256xf32>
    tpu.vector_store %arg53[%c8_363, %c128_364], %391 {strides = array<i32>} : memref<160x392xf32, #tpu.memory_space<vmem>>, vector<4x256xf32>,
    %c12_365 = arith.constant 12 : index
    %c127_366 = arith.constant 127 : index
    %399 = vector.load %arg53[%c12_365, %c127_366] : memref<160x392xf32, #tpu.memory_space<vmem>>, vector<4x256xf32>
    tpu.vector_store %arg53[%c12_365, %c127_366], %391 {strides = array<i32>} : memref<160x392xf32, #tpu.memory_space<vmem>>, vector<4x256xf32>,
    %c16_367 = arith.constant 16 : index
    %c126_368 = arith.constant 126 : index
    %400 = vector.load %arg53[%c16_367, %c126_368] : memref<160x392xf32, #tpu.memory_space<vmem>>, vector<4x256xf32>
    tpu.vector_store %arg53[%c16_367, %c126_368], %391 {strides = array<i32>} : memref<160x392xf32, #tpu.memory_space<vmem>>, vector<4x256xf32>,
    %c0_369 = arith.constant 0 : index
    %c0_370 = arith.constant 0 : index
    %401 = vector.load %arg48[%c0_369, %c0_370] : memref<4x20xbf16, #tpu.memory_space<vmem>>, vector<4x20xbf16>
    %c0_371 = arith.constant 0 : index
    %c128_372 = arith.constant 128 : index
    %402 = vector.load %arg53[%c0_371, %c128_372] : memref<160x392xf32, #tpu.memory_space<vmem>>, vector<20x256xf32>
    %403 = arith.truncf %402 : vector<20x256xf32> to vector<20x256xbf16>
    %cst_373 = arith.constant dense<0.000000e+00> : vector<4x256xf32>
    %404 = tpu.matmul %401, %403, %cst_373 {dimension_numbers = #tpu.dot_dimension_numbers<[1], [0], [0], [1], [0, 0, 1, 1], [], []>} : vector<4x20xbf16>, vector<20x256xbf16>, vector<4x256xf32> -> vector<4x256xf32>
    %c0_374 = arith.constant 0 : index
    %c0_375 = arith.constant 0 : index
    %405 = vector.load %arg45[%c0_374, %c0_375] : memref<4x1xf32, #tpu.memory_space<vmem>>, vector<4x1xf32>
    %406 = vector.broadcast %405 : vector<4x1xf32> to vector<4x256xf32>
    %407 = arith.addf %404, %406 : vector<4x256xf32>
    %408 = arith.addf %407, %370 : vector<4x256xf32>
    %cst_376 = arith.constant 0.000000e+00 : f32
    %409 = vector.broadcast %cst_376 : f32 to vector<4x256xf32>
    %410 = arith.cmpf oge, %408, %409 : vector<4x256xf32>
    %cst_377 = arith.constant 2.000000e-01 : f32
    %411 = vector.broadcast %cst_377 : f32 to vector<4x256xf32>
    %412 = arith.mulf %411, %408 : vector<4x256xf32>
    %413 = arith.select %410, %408, %412 : vector<4x256xi1>, vector<4x256xf32>
    %c0_378 = arith.constant 0 : index
    %c0_379 = arith.constant 0 : index
    %414 = vector.load %arg13[%c0_378, %c0_379] : memref<4x4xbf16, #tpu.memory_space<vmem>>, vector<4x4xbf16>
    %415 = arith.truncf %413 : vector<4x256xf32> to vector<4x256xbf16>
    %cst_380 = arith.constant dense<0.000000e+00> : vector<4x256xf32>
    %416 = tpu.matmul %414, %415, %cst_380 {dimension_numbers = #tpu.dot_dimension_numbers<[1], [0], [0], [1], [0, 0, 1, 1], [], []>} : vector<4x4xbf16>, vector<4x256xbf16>, vector<4x256xf32> -> vector<4x256xf32>
    %c0_381 = arith.constant 0 : index
    %c0_382 = arith.constant 0 : index
    %417 = vector.load %arg12[%c0_381, %c0_382] : memref<4x1xf32, #tpu.memory_space<vmem>>, vector<4x1xf32>
    %418 = vector.broadcast %417 : vector<4x1xf32> to vector<4x256xf32>
    %419 = arith.addf %416, %418 : vector<4x256xf32>
    %420 = math.tanh %419 : vector<4x256xf32>
    %c0_383 = arith.constant 0 : index
    %c0_384 = arith.constant 0 : index
    %c0_385 = arith.constant 0 : index
    %421 = vector.load %arg52[%c0_383, %c0_384, %c0_385] : memref<1x4x256xf32, #tpu.memory_space<vmem>>, vector<1x4x256xf32>
    %422 = vector.shape_cast %421 : vector<1x4x256xf32> to vector<4x256xf32>
    %423 = vector.shape_cast %420 : vector<4x256xf32> to vector<1x4x256xf32>
    tpu.vector_store %arg52[%c0_383, %c0_384, %c0_385], %423 {strides = array<i32>} : memref<1x4x256xf32, #tpu.memory_space<vmem>>, vector<1x4x256xf32>,
    return
  }
  func.func @transform_0(%arg0: i32) -> (i32, i32, i32) {
    %c0_i32 = arith.constant 0 : i32
    %c0_i32_0 = arith.constant 0 : i32
    %c0_i32_1 = arith.constant 0 : i32
    return %arg0, %c0_i32, %c0_i32_0 : i32, i32, i32
  }
  func.func @transform_1(%arg0: i32) -> (i32, i32) {
    %c0_i32 = arith.constant 0 : i32
    %c0_i32_0 = arith.constant 0 : i32
    %c0_i32_1 = arith.constant 0 : i32
    return %c0_i32, %c0_i32_0 : i32, i32
  }
  func.func @transform_2(%arg0: i32) -> (i32, i32) {
    %c0_i32 = arith.constant 0 : i32
    %c0_i32_0 = arith.constant 0 : i32
    %c0_i32_1 = arith.constant 0 : i32
    return %c0_i32, %c0_i32_0 : i32, i32
  }
  func.func @transform_3(%arg0: i32) -> (i32, i32) {
    %c0_i32 = arith.constant 0 : i32
    %c0_i32_0 = arith.constant 0 : i32
    %c0_i32_1 = arith.constant 0 : i32
    return %c0_i32, %c0_i32_0 : i32, i32
  }
  func.func @transform_4(%arg0: i32) -> (i32, i32) {
    %c0_i32 = arith.constant 0 : i32
    %c0_i32_0 = arith.constant 0 : i32
    %c0_i32_1 = arith.constant 0 : i32
    return %c0_i32, %c0_i32_0 : i32, i32
  }
  func.func @transform_5(%arg0: i32) -> (i32, i32) {
    %c0_i32 = arith.constant 0 : i32
    %c0_i32_0 = arith.constant 0 : i32
    %c0_i32_1 = arith.constant 0 : i32
    return %c0_i32, %c0_i32_0 : i32, i32
  }
  func.func @transform_6(%arg0: i32) -> (i32, i32) {
    %c0_i32 = arith.constant 0 : i32
    %c0_i32_0 = arith.constant 0 : i32
    %c0_i32_1 = arith.constant 0 : i32
    return %c0_i32, %c0_i32_0 : i32, i32
  }
  func.func @transform_7(%arg0: i32) -> (i32, i32) {
    %c0_i32 = arith.constant 0 : i32
    %c0_i32_0 = arith.constant 0 : i32
    %c0_i32_1 = arith.constant 0 : i32
    return %c0_i32, %c0_i32_0 : i32, i32
  }
  func.func @transform_8(%arg0: i32) -> (i32, i32) {
    %c0_i32 = arith.constant 0 : i32
    %c0_i32_0 = arith.constant 0 : i32
    %c0_i32_1 = arith.constant 0 : i32
    return %c0_i32, %c0_i32_0 : i32, i32
  }
  func.func @transform_9(%arg0: i32) -> (i32, i32) {
    %c0_i32 = arith.constant 0 : i32
    %c0_i32_0 = arith.constant 0 : i32
    %c0_i32_1 = arith.constant 0 : i32
    return %c0_i32, %c0_i32_0 : i32, i32
  }
  func.func @transform_10(%arg0: i32) -> (i32, i32) {
    %c0_i32 = arith.constant 0 : i32
    %c0_i32_0 = arith.constant 0 : i32
    %c0_i32_1 = arith.constant 0 : i32
    return %c0_i32, %c0_i32_0 : i32, i32
  }
  func.func @transform_11(%arg0: i32) -> (i32, i32) {
    %c0_i32 = arith.constant 0 : i32
    %c0_i32_0 = arith.constant 0 : i32
    %c0_i32_1 = arith.constant 0 : i32
    return %c0_i32, %c0_i32_0 : i32, i32
  }
  func.func @transform_12(%arg0: i32) -> (i32, i32) {
    %c0_i32 = arith.constant 0 : i32
    %c0_i32_0 = arith.constant 0 : i32
    %c0_i32_1 = arith.constant 0 : i32
    return %c0_i32, %c0_i32_0 : i32, i32
  }
  func.func @transform_13(%arg0: i32) -> (i32, i32) {
    %c0_i32 = arith.constant 0 : i32
    %c0_i32_0 = arith.constant 0 : i32
    %c0_i32_1 = arith.constant 0 : i32
    return %c0_i32, %c0_i32_0 : i32, i32
  }
  func.func @transform_14(%arg0: i32) -> (i32, i32) {
    %c0_i32 = arith.constant 0 : i32
    %c0_i32_0 = arith.constant 0 : i32
    %c0_i32_1 = arith.constant 0 : i32
    return %c0_i32, %c0_i32_0 : i32, i32
  }
  func.func @transform_15(%arg0: i32) -> (i32, i32) {
    %c0_i32 = arith.constant 0 : i32
    %c0_i32_0 = arith.constant 0 : i32
    %c0_i32_1 = arith.constant 0 : i32
    return %c0_i32, %c0_i32_0 : i32, i32
  }
  func.func @transform_16(%arg0: i32) -> (i32, i32) {
    %c0_i32 = arith.constant 0 : i32
    %c0_i32_0 = arith.constant 0 : i32
    %c0_i32_1 = arith.constant 0 : i32
    return %c0_i32, %c0_i32_0 : i32, i32
  }
  func.func @transform_17(%arg0: i32) -> (i32, i32) {
    %c0_i32 = arith.constant 0 : i32
    %c0_i32_0 = arith.constant 0 : i32
    %c0_i32_1 = arith.constant 0 : i32
    return %c0_i32, %c0_i32_0 : i32, i32
  }
  func.func @transform_18(%arg0: i32) -> (i32, i32) {
    %c0_i32 = arith.constant 0 : i32
    %c0_i32_0 = arith.constant 0 : i32
    %c0_i32_1 = arith.constant 0 : i32
    return %c0_i32, %c0_i32_0 : i32, i32
  }
  func.func @transform_19(%arg0: i32) -> (i32, i32) {
    %c0_i32 = arith.constant 0 : i32
    %c0_i32_0 = arith.constant 0 : i32
    %c0_i32_1 = arith.constant 0 : i32
    return %c0_i32, %c0_i32_0 : i32, i32
  }
  func.func @transform_20(%arg0: i32) -> (i32, i32) {
    %c0_i32 = arith.constant 0 : i32
    %c0_i32_0 = arith.constant 0 : i32
    %c0_i32_1 = arith.constant 0 : i32
    return %c0_i32, %c0_i32_0 : i32, i32
  }
  func.func @transform_21(%arg0: i32) -> (i32, i32) {
    %c0_i32 = arith.constant 0 : i32
    %c0_i32_0 = arith.constant 0 : i32
    %c0_i32_1 = arith.constant 0 : i32
    return %c0_i32, %c0_i32_0 : i32, i32
  }
  func.func @transform_22(%arg0: i32) -> (i32, i32) {
    %c0_i32 = arith.constant 0 : i32
    %c0_i32_0 = arith.constant 0 : i32
    %c0_i32_1 = arith.constant 0 : i32
    return %c0_i32, %c0_i32_0 : i32, i32
  }
  func.func @transform_23(%arg0: i32) -> (i32, i32) {
    %c0_i32 = arith.constant 0 : i32
    %c0_i32_0 = arith.constant 0 : i32
    %c0_i32_1 = arith.constant 0 : i32
    return %c0_i32, %c0_i32_0 : i32, i32
  }
  func.func @transform_24(%arg0: i32) -> (i32, i32) {
    %c0_i32 = arith.constant 0 : i32
    %c0_i32_0 = arith.constant 0 : i32
    %c0_i32_1 = arith.constant 0 : i32
    return %c0_i32, %c0_i32_0 : i32, i32
  }
  func.func @transform_25(%arg0: i32) -> (i32, i32) {
    %c0_i32 = arith.constant 0 : i32
    %c0_i32_0 = arith.constant 0 : i32
    %c0_i32_1 = arith.constant 0 : i32
    return %c0_i32, %c0_i32_0 : i32, i32
  }
  func.func @transform_26(%arg0: i32) -> (i32, i32) {
    %c0_i32 = arith.constant 0 : i32
    %c0_i32_0 = arith.constant 0 : i32
    %c0_i32_1 = arith.constant 0 : i32
    return %c0_i32, %c0_i32_0 : i32, i32
  }
  func.func @transform_27(%arg0: i32) -> (i32, i32) {
    %c0_i32 = arith.constant 0 : i32
    %c0_i32_0 = arith.constant 0 : i32
    %c0_i32_1 = arith.constant 0 : i32
    return %c0_i32, %c0_i32_0 : i32, i32
  }
  func.func @transform_28(%arg0: i32) -> (i32, i32) {
    %c0_i32 = arith.constant 0 : i32
    %c0_i32_0 = arith.constant 0 : i32
    %c0_i32_1 = arith.constant 0 : i32
    return %c0_i32, %c0_i32_0 : i32, i32
  }
  func.func @transform_29(%arg0: i32) -> (i32, i32) {
    %c0_i32 = arith.constant 0 : i32
    %c0_i32_0 = arith.constant 0 : i32
    %c0_i32_1 = arith.constant 0 : i32
    return %c0_i32, %c0_i32_0 : i32, i32
  }
  func.func @transform_30(%arg0: i32) -> (i32, i32) {
    %c0_i32 = arith.constant 0 : i32
    %c0_i32_0 = arith.constant 0 : i32
    %c0_i32_1 = arith.constant 0 : i32
    return %c0_i32, %c0_i32_0 : i32, i32
  }
  func.func @transform_31(%arg0: i32) -> (i32, i32) {
    %c0_i32 = arith.constant 0 : i32
    %c0_i32_0 = arith.constant 0 : i32
    %c0_i32_1 = arith.constant 0 : i32
    return %c0_i32, %c0_i32_0 : i32, i32
  }
  func.func @transform_32(%arg0: i32) -> (i32, i32) {
    %c0_i32 = arith.constant 0 : i32
    %c0_i32_0 = arith.constant 0 : i32
    %c0_i32_1 = arith.constant 0 : i32
    return %c0_i32, %c0_i32_0 : i32, i32
  }
  func.func @transform_33(%arg0: i32) -> (i32, i32) {
    %c0_i32 = arith.constant 0 : i32
    %c0_i32_0 = arith.constant 0 : i32
    %c0_i32_1 = arith.constant 0 : i32
    return %c0_i32, %c0_i32_0 : i32, i32
  }
  func.func @transform_34(%arg0: i32) -> (i32, i32) {
    %c0_i32 = arith.constant 0 : i32
    %c0_i32_0 = arith.constant 0 : i32
    %c0_i32_1 = arith.constant 0 : i32
    return %c0_i32, %c0_i32_0 : i32, i32
  }
  func.func @transform_35(%arg0: i32) -> (i32, i32) {
    %c0_i32 = arith.constant 0 : i32
    %c0_i32_0 = arith.constant 0 : i32
    %c0_i32_1 = arith.constant 0 : i32
    return %c0_i32, %c0_i32_0 : i32, i32
  }
  func.func @transform_36(%arg0: i32) -> (i32, i32) {
    %c0_i32 = arith.constant 0 : i32
    %c0_i32_0 = arith.constant 0 : i32
    %c0_i32_1 = arith.constant 0 : i32
    return %c0_i32, %c0_i32_0 : i32, i32
  }
  func.func @transform_37(%arg0: i32) -> (i32, i32) {
    %c0_i32 = arith.constant 0 : i32
    %c0_i32_0 = arith.constant 0 : i32
    %c0_i32_1 = arith.constant 0 : i32
    return %c0_i32, %c0_i32_0 : i32, i32
  }
  func.func @transform_38(%arg0: i32) -> (i32, i32) {
    %c0_i32 = arith.constant 0 : i32
    %c0_i32_0 = arith.constant 0 : i32
    %c0_i32_1 = arith.constant 0 : i32
    return %c0_i32, %c0_i32_0 : i32, i32
  }
  func.func @transform_39(%arg0: i32) -> (i32, i32) {
    %c0_i32 = arith.constant 0 : i32
    %c0_i32_0 = arith.constant 0 : i32
    %c0_i32_1 = arith.constant 0 : i32
    return %c0_i32, %c0_i32_0 : i32, i32
  }
  func.func @transform_40(%arg0: i32) -> (i32, i32) {
    %c0_i32 = arith.constant 0 : i32
    %c0_i32_0 = arith.constant 0 : i32
    %c0_i32_1 = arith.constant 0 : i32
    return %c0_i32, %c0_i32_0 : i32, i32
  }
  func.func @transform_41(%arg0: i32) -> (i32, i32) {
    %c0_i32 = arith.constant 0 : i32
    %c0_i32_0 = arith.constant 0 : i32
    %c0_i32_1 = arith.constant 0 : i32
    return %c0_i32, %c0_i32_0 : i32, i32
  }
  func.func @transform_42(%arg0: i32) -> (i32, i32) {
    %c0_i32 = arith.constant 0 : i32
    %c0_i32_0 = arith.constant 0 : i32
    %c0_i32_1 = arith.constant 0 : i32
    return %c0_i32, %c0_i32_0 : i32, i32
  }
  func.func @transform_43(%arg0: i32) -> (i32, i32) {
    %c0_i32 = arith.constant 0 : i32
    %c0_i32_0 = arith.constant 0 : i32
    %c0_i32_1 = arith.constant 0 : i32
    return %c0_i32, %c0_i32_0 : i32, i32
  }
  func.func @transform_44(%arg0: i32) -> (i32, i32) {
    %c0_i32 = arith.constant 0 : i32
    %c0_i32_0 = arith.constant 0 : i32
    %c0_i32_1 = arith.constant 0 : i32
    return %c0_i32, %c0_i32_0 : i32, i32
  }
  func.func @transform_45(%arg0: i32) -> (i32, i32) {
    %c0_i32 = arith.constant 0 : i32
    %c0_i32_0 = arith.constant 0 : i32
    %c0_i32_1 = arith.constant 0 : i32
    return %c0_i32, %c0_i32_0 : i32, i32
  }
  func.func @transform_46(%arg0: i32) -> (i32, i32) {
    %c0_i32 = arith.constant 0 : i32
    %c0_i32_0 = arith.constant 0 : i32
    %c0_i32_1 = arith.constant 0 : i32
    return %c0_i32, %c0_i32_0 : i32, i32
  }
  func.func @transform_47(%arg0: i32) -> (i32, i32) {
    %c0_i32 = arith.constant 0 : i32
    %c0_i32_0 = arith.constant 0 : i32
    %c0_i32_1 = arith.constant 0 : i32
    return %c0_i32, %c0_i32_0 : i32, i32
  }
  func.func @transform_48(%arg0: i32) -> (i32, i32) {
    %c0_i32 = arith.constant 0 : i32
    %c0_i32_0 = arith.constant 0 : i32
    %c0_i32_1 = arith.constant 0 : i32
    return %c0_i32, %c0_i32_0 : i32, i32
  }
  func.func @transform_49(%arg0: i32) -> (i32, i32) {
    %c0_i32 = arith.constant 0 : i32
    %c0_i32_0 = arith.constant 0 : i32
    %c0_i32_1 = arith.constant 0 : i32
    return %c0_i32, %c0_i32_0 : i32, i32
  }
  func.func @transform_50(%arg0: i32) -> (i32, i32) {
    %c0_i32 = arith.constant 0 : i32
    %c0_i32_0 = arith.constant 0 : i32
    %c0_i32_1 = arith.constant 0 : i32
    return %c0_i32, %c0_i32_0 : i32, i32
  }
  func.func @transform_51(%arg0: i32) -> (i32, i32, i32) {
    %c0_i32 = arith.constant 0 : i32
    %c0_i32_0 = arith.constant 0 : i32
    %c0_i32_1 = arith.constant 0 : i32
    return %arg0, %c0_i32, %c0_i32_0 : i32, i32, i32
  }
}

</mosaic_0001>

<llo_original>
// kernel: ved_forward.1
$region0: #{ved_forward.1}
  #allocation0 [shape = 'u32[]', space=smem, size = 0x4, offset = 0x4, fixed_abs, tag = 'smem constant byte address 0x4 - core index']
  #allocation1 [shape = 'u32[144,128]{1,0:T(1,128)}', space=vmem, size = 0x12000, scoped, tag = 'internal scratch']
  #allocation2 [shape = 'f32[160,392]{1,0:T(8,128)}', space=vmem, size = 0x50000, scoped, tag = 'scratch operand']
  %s0 = inlined_call_operand.smem [shape: u32[52], index: -1, kind: input, shape index: {}]
  %s1 = sld [smem:[%s0]]
  %s2 = scalar_lea.smem %s0, 1
  %s3 = sld [smem:[%s2]]
  %s4 = scalar_lea.smem %s0, 2
  %s5 = sld [smem:[%s4]]
  %s6 = scalar_lea.smem %s0, 3
  %s7 = sld [smem:[%s6]]
  %s8 = scalar_lea.smem %s0, 4
  %s9 = sld [smem:[%s8]]
  %s10 = scalar_lea.smem %s0, 5
  %s11 = sld [smem:[%s10]]
  %s12 = scalar_lea.smem %s0, 6
  %s13 = sld [smem:[%s12]]
  %s14 = scalar_lea.smem %s0, 7
  %s15 = sld [smem:[%s14]]
  %s16 = scalar_lea.smem %s0, 8
  %s17 = sld [smem:[%s16]]
  %s18 = scalar_lea.smem %s0, 9
  %s19 = sld [smem:[%s18]]
  %s20 = scalar_lea.smem %s0, 10
  %s21 = sld [smem:[%s20]]
  %s22 = scalar_lea.smem %s0, 11
  %s23 = sld [smem:[%s22]]
  %s24 = scalar_lea.smem %s0, 12
  %s25 = sld [smem:[%s24]]
  %s26 = scalar_lea.smem %s0, 13
  %s27 = sld [smem:[%s26]]
  %s28 = scalar_lea.smem %s0, 14
  %s29 = sld [smem:[%s28]]
  %s30 = scalar_lea.smem %s0, 15
  %s31 = sld [smem:[%s30]]
  %s32 = scalar_lea.smem %s0, 16
  %s33 = sld [smem:[%s32]]
  %s34 = scalar_lea.smem %s0, 17
  %s35 = sld [smem:[%s34]]
  %s36 = scalar_lea.smem %s0, 18
  %s37 = sld [smem:[%s36]]
  %s38 = scalar_lea.smem %s0, 19
  %s39 = sld [smem:[%s38]]
  %s40 = scalar_lea.smem %s0, 20
  %s41 = sld [smem:[%s40]]
  %s42 = scalar_lea.smem %s0, 21
  %s43 = sld [smem:[%s42]]
  %s44 = scalar_lea.smem %s0, 22
  %s45 = sld [smem:[%s44]]
  %s46 = scalar_lea.smem %s0, 23
  %s47 = sld [smem:[%s46]]
  %s48 = scalar_lea.smem %s0, 24
  %s49 = sld [smem:[%s48]]
  %s50 = scalar_lea.smem %s0, 25
  %s51 = sld [smem:[%s50]]
  %s52 = scalar_lea.smem %s0, 26
  %s53 = sld [smem:[%s52]]
  %s54 = scalar_lea.smem %s0, 27
  %s55 = sld [smem:[%s54]]
  %s56 = scalar_lea.smem %s0, 28
  %s57 = sld [smem:[%s56]]
  %s58 = scalar_lea.smem %s0, 29
  %s59 = sld [smem:[%s58]]
  %s60 = scalar_lea.smem %s0, 30
  %s61 = sld [smem:[%s60]]
  %s62 = scalar_lea.smem %s0, 31
  %s63 = sld [smem:[%s62]]
  %s64 = scalar_lea.smem %s0, 32
  %s65 = sld [smem:[%s64]]
  %s66 = scalar_lea.smem %s0, 33
  %s67 = sld [smem:[%s66]]
  %s68 = scalar_lea.smem %s0, 34
  %s69 = sld [smem:[%s68]]
  %s70 = scalar_lea.smem %s0, 35
  %s71 = sld [smem:[%s70]]
  %s72 = scalar_lea.smem %s0, 36
  %s73 = sld [smem:[%s72]]
  %s74 = scalar_lea.smem %s0, 37
  %s75 = sld [smem:[%s74]]
  %s76 = scalar_lea.smem %s0, 38
  %s77 = sld [smem:[%s76]]
  %s78 = scalar_lea.smem %s0, 39
  %s79 = sld [smem:[%s78]]
  %s80 = scalar_lea.smem %s0, 40
  %s81 = sld [smem:[%s80]]
  %s82 = scalar_lea.smem %s0, 41
  %s83 = sld [smem:[%s82]]
  %s84 = scalar_lea.smem %s0, 42
  %s85 = sld [smem:[%s84]]
  %s86 = scalar_lea.smem %s0, 43
  %s87 = sld [smem:[%s86]]
  %s88 = scalar_lea.smem %s0, 44
  %s89 = sld [smem:[%s88]]
  %s90 = scalar_lea.smem %s0, 45
  %s91 = sld [smem:[%s90]]
  %s92 = scalar_lea.smem %s0, 46
  %s93 = sld [smem:[%s92]]
  %s94 = scalar_lea.smem %s0, 47
  %s95 = sld [smem:[%s94]]
  %s96 = scalar_lea.smem %s0, 48
  %s97 = sld [smem:[%s96]]
  %s98 = scalar_lea.smem %s0, 49
  %s99 = sld [smem:[%s98]]
  %s100 = scalar_lea.smem %s0, 50
  %s101 = sld [smem:[%s100]]
  %s102 = scalar_lea.smem %s0, 51
  %s103 = sld [smem:[%s102]]
  %s104 = sld [smem:[#allocation0]]
  $region237: #{ved_forward.1} parent=0
    _
  %s106 = ssub.s32 1, %s104
  %s107 = scalar_select 0, %s106, %s104
  loop: start=0, step=1, limit=4
  $region2: #{ved_forward.1} parent=0 // loop_pre_header
    _
  $region3: #{ved_forward.1} parent=0 // loop_header
    %s109 = sphi 0, %s113
    %p110 = scmp.ge.s32.totalorder %s109, 4
    %s119 = sphi 0, %s121
    %s122 = sphi 0, %s119
    %s123 = sphi 0, %s122
    %s139 = sphi 0, %s123
    %s143 = sphi 0, %s143
    %s145 = sphi 0, %s143
    %s146 = sphi 0, %s145
    %s160 = sphi 0, %s146
    %s164 = sphi 0, %s164
    %s166 = sphi 0, %s164
    %s167 = sphi 0, %s166
    %s181 = sphi 0, %s167
    %s185 = sphi 0, %s185
    %s187 = sphi 0, %s185
    %s188 = sphi 0, %s187
    %s202 = sphi 0, %s188
    %s206 = sphi 0, %s206
    %s208 = sphi 0, %s206
    %s209 = sphi 0, %s208
    %s223 = sphi 0, %s209
    %s227 = sphi 0, %s227
    %s229 = sphi 0, %s227
    %s230 = sphi 0, %s229
    %s244 = sphi 0, %s230
    %s248 = sphi 0, %s248
    %s250 = sphi 0, %s248
    %s251 = sphi 0, %s250
    %s265 = sphi 0, %s251
    %s269 = sphi 0, %s269
    %s271 = sphi 0, %s269
    %s272 = sphi 0, %s271
    %s286 = sphi 0, %s272
    %s290 = sphi 0, %s290
    %s292 = sphi 0, %s290
    %s293 = sphi 0, %s292
    %s307 = sphi 0, %s293
    %s311 = sphi 0, %s311
    %s313 = sphi 0, %s311
    %s314 = sphi 0, %s313
    %s328 = sphi 0, %s314
    %s332 = sphi 0, %s332
    %s334 = sphi 0, %s332
    %s335 = sphi 0, %s334
    %s349 = sphi 0, %s335
    %s353 = sphi 0, %s353
    %s355 = sphi 0, %s353
    %s356 = sphi 0, %s355
    %s370 = sphi 0, %s356
    %s374 = sphi 0, %s374
    %s376 = sphi 0, %s374
    %s377 = sphi 0, %s376
    %s391 = sphi 0, %s377
    %s395 = sphi 0, %s395
    %s397 = sphi 0, %s395
    %s398 = sphi 0, %s397
    %s412 = sphi 0, %s398
    %s416 = sphi 0, %s416
    %s418 = sphi 0, %s416
    %s419 = sphi 0, %s418
    %s433 = sphi 0, %s419
    %s437 = sphi 0, %s437
    %s439 = sphi 0, %s437
    %s440 = sphi 0, %s439
    %s454 = sphi 0, %s440
    %s458 = sphi 0, %s458
    %s460 = sphi 0, %s458
    %s461 = sphi 0, %s460
    %s475 = sphi 0, %s461
    %s479 = sphi 0, %s479
    %s481 = sphi 0, %s479
    %s482 = sphi 0, %s481
    %s496 = sphi 0, %s482
    %s500 = sphi 0, %s500
    %s502 = sphi 0, %s500
    %s503 = sphi 0, %s502
    %s517 = sphi 0, %s503
    %s521 = sphi 0, %s521
    %s523 = sphi 0, %s521
    %s524 = sphi 0, %s523
    %s538 = sphi 0, %s524
    %s542 = sphi 0, %s542
    %s544 = sphi 0, %s542
    %s545 = sphi 0, %s544
    %s559 = sphi 0, %s545
    %s563 = sphi 0, %s563
    %s565 = sphi 0, %s563
    %s566 = sphi 0, %s565
    %s580 = sphi 0, %s566
    %s584 = sphi 0, %s584
    %s586 = sphi 0, %s584
    %s587 = sphi 0, %s586
    %s601 = sphi 0, %s587
    %s605 = sphi 0, %s605
    %s607 = sphi 0, %s605
    %s608 = sphi 0, %s607
    %s622 = sphi 0, %s608
    %s626 = sphi 0, %s626
    %s628 = sphi 0, %s626
    %s629 = sphi 0, %s628
    %s643 = sphi 0, %s629
    %s647 = sphi 0, %s647
    %s649 = sphi 0, %s647
    %s650 = sphi 0, %s649
    %s664 = sphi 0, %s650
    %s668 = sphi 0, %s668
    %s670 = sphi 0, %s668
    %s671 = sphi 0, %s670
    %s685 = sphi 0, %s671
    %s689 = sphi 0, %s689
    %s691 = sphi 0, %s689
    %s692 = sphi 0, %s691
    %s706 = sphi 0, %s692
    %s710 = sphi 0, %s710
    %s712 = sphi 0, %s710
    %s713 = sphi 0, %s712
    %s727 = sphi 0, %s713
    %s731 = sphi 0, %s731
    %s733 = sphi 0, %s731
    %s734 = sphi 0, %s733
    %s748 = sphi 0, %s734
    %s752 = sphi 0, %s752
    %s754 = sphi 0, %s752
    %s755 = sphi 0, %s754
    %s769 = sphi 0, %s755
    %s773 = sphi 0, %s773
    %s775 = sphi 0, %s773
    %s776 = sphi 0, %s775
    %s790 = sphi 0, %s776
    %s794 = sphi 0, %s794
    %s796 = sphi 0, %s794
    %s797 = sphi 0, %s796
    %s811 = sphi 0, %s797
    %s815 = sphi 0, %s815
    %s817 = sphi 0, %s815
    %s818 = sphi 0, %s817
    %s832 = sphi 0, %s818
    %s836 = sphi 0, %s836
    %s838 = sphi 0, %s836
    %s839 = sphi 0, %s838
    %s853 = sphi 0, %s839
    %s857 = sphi 0, %s857
    %s859 = sphi 0, %s857
    %s860 = sphi 0, %s859
    %s874 = sphi 0, %s860
    %s878 = sphi 0, %s878
    %s880 = sphi 0, %s878
    %s881 = sphi 0, %s880
    %s895 = sphi 0, %s881
    %s899 = sphi 0, %s899
    %s901 = sphi 0, %s899
    %s902 = sphi 0, %s901
    %s916 = sphi 0, %s902
    %s920 = sphi 0, %s920
    %s922 = sphi 0, %s920
    %s923 = sphi 0, %s922
    %s937 = sphi 0, %s923
    %s941 = sphi 0, %s941
    %s943 = sphi 0, %s941
    %s944 = sphi 0, %s943
    %s958 = sphi 0, %s944
    %s962 = sphi 0, %s962
    %s964 = sphi 0, %s962
    %s965 = sphi 0, %s964
    %s979 = sphi 0, %s965
    %s983 = sphi 0, %s983
    %s985 = sphi 0, %s983
    %s986 = sphi 0, %s985
    %s1000 = sphi 0, %s986
    %s1004 = sphi 0, %s1004
    %s1006 = sphi 0, %s1004
    %s1007 = sphi 0, %s1006
    %s1021 = sphi 0, %s1007
    %s1025 = sphi 0, %s1025
    %s1027 = sphi 0, %s1025
    %s1028 = sphi 0, %s1027
    %s1042 = sphi 0, %s1028
    %s1046 = sphi 0, %s1046
    %s1048 = sphi 0, %s1046
    %s1049 = sphi 0, %s1048
    %s1063 = sphi 0, %s1049
    %s1067 = sphi 0, %s1067
    %s1069 = sphi 0, %s1067
    %s1070 = sphi 0, %s1069
    %s1084 = sphi 0, %s1070
    %s1088 = sphi 0, %s1088
    %s1090 = sphi 0, %s1088
    %s1091 = sphi 0, %s1090
    %s1105 = sphi 0, %s1091
    %s1109 = sphi 0, %s1109
    %s1111 = sphi 0, %s1109
    %s1112 = sphi 0, %s1111
    %s1126 = sphi 0, %s1112
    %s1130 = sphi 0, %s1130
    %s1132 = sphi 0, %s1130
    %s1133 = sphi 0, %s1132
    %s1147 = sphi 0, %s1133
    %s1151 = sphi 0, %s1151
    %s1153 = sphi 0, %s1151
    %s1154 = sphi 0, %s1153
    %s1168 = sphi 0, %s1154
    %s1172 = sphi 0, %s1172
    %s1174 = sphi 0, %s1172
    %s1175 = sphi 0, %s1174
    %s1189 = sphi 0, %s1175
    %s1195 = sphi 0, %s1197
    %s1198 = sphi 0, %s1195
    %s1199 = sphi 0, %s1198
    %s1215 = sphi 0, %s1199
  $region4: #{ved_forward.1} parent=0 // loop_header_branch
    %112 = sbr.rel (%p110) target = $region8
  $region5: #{ved_forward.1} parent=0 // loop_body
    %s114 = ssub.s32 %s109, 1
    %s115 = ssub.s32 %s109, 2
    %s116 = sadd.s32 %s109, 1
    %s117 = ssub.s32 %s109, %s116
    %p118 = scmp.eq.s32.totalorder %s117, 0
    %s120 = sadd.s32 %s119, 1
    %s121 = scalar_select %p118, %s119, %s120
    %p124 = pneg %p118
    %p125 = scmp.eq.s32.totalorder %s109, 1
    %p126 = por %p124, %p125
    %p127 = scmp.ne.s32.totalorder %s119, %s122
    %p128 = scmp.eq.s32.totalorder %s109, 0
    %p129 = por %p127, %p128
    %p130 = scmp.ne.s32.totalorder %s119, %s122
    %p131 = scmp.eq.s32.totalorder %s114, 1
    %p132 = por %p130, %p131
    %p133 = scmp.ne.s32.totalorder %s122, %s123
    %p134 = scmp.eq.s32.totalorder %s114, 0
    %p135 = por %p133, %p134
    %p136 = scmp.ne.s32.totalorder %s122, %s123
    %p137 = scmp.eq.s32.totalorder %s115, 1
    %p138 = por %p136, %p137
    %p140 = scmp.ne.s32.totalorder %s123, %s139
    %p141 = scmp.eq.s32.totalorder %s115, 0
    %p142 = por %p140, %p141
    %s144 = sadd.s32 %s143, 1
    %p147 = scmp.eq.s32.totalorder %s109, 1
    %p148 = scmp.ne.s32.totalorder %s143, %s145
    %p149 = scmp.eq.s32.totalorder %s109, 0
    %p150 = por %p148, %p149
    %p151 = scmp.ne.s32.totalorder %s143, %s145
    %p152 = scmp.eq.s32.totalorder %s114, 1
    %p153 = por %p151, %p152
    %p154 = scmp.ne.s32.totalorder %s145, %s146
    %p155 = scmp.eq.s32.totalorder %s114, 0
    %p156 = por %p154, %p155
    %p157 = scmp.ne.s32.totalorder %s145, %s146
    %p158 = scmp.eq.s32.totalorder %s115, 1
    %p159 = por %p157, %p158
    %p161 = scmp.ne.s32.totalorder %s146, %s160
    %p162 = scmp.eq.s32.totalorder %s115, 0
    %p163 = por %p161, %p162
    %s165 = sadd.s32 %s164, 1
    %p168 = scmp.eq.s32.totalorder %s109, 1
    %p169 = scmp.ne.s32.totalorder %s164, %s166
    %p170 = scmp.eq.s32.totalorder %s109, 0
    %p171 = por %p169, %p170
    %p172 = scmp.ne.s32.totalorder %s164, %s166
    %p173 = scmp.eq.s32.totalorder %s114, 1
    %p174 = por %p172, %p173
    %p175 = scmp.ne.s32.totalorder %s166, %s167
    %p176 = scmp.eq.s32.totalorder %s114, 0
    %p177 = por %p175, %p176
    %p178 = scmp.ne.s32.totalorder %s166, %s167
    %p179 = scmp.eq.s32.totalorder %s115, 1
    %p180 = por %p178, %p179
    %p182 = scmp.ne.s32.totalorder %s167, %s181
    %p183 = scmp.eq.s32.totalorder %s115, 0
    %p184 = por %p182, %p183
    %s186 = sadd.s32 %s185, 1
    %p189 = scmp.eq.s32.totalorder %s109, 1
    %p190 = scmp.ne.s32.totalorder %s185, %s187
    %p191 = scmp.eq.s32.totalorder %s109, 0
    %p192 = por %p190, %p191
    %p193 = scmp.ne.s32.totalorder %s185, %s187
    %p194 = scmp.eq.s32.totalorder %s114, 1
    %p195 = por %p193, %p194
    %p196 = scmp.ne.s32.totalorder %s187, %s188
    %p197 = scmp.eq.s32.totalorder %s114, 0
    %p198 = por %p196, %p197
    %p199 = scmp.ne.s32.totalorder %s187, %s188
    %p200 = scmp.eq.s32.totalorder %s115, 1
    %p201 = por %p199, %p200
    %p203 = scmp.ne.s32.totalorder %s188, %s202
    %p204 = scmp.eq.s32.totalorder %s115, 0
    %p205 = por %p203, %p204
    %s207 = sadd.s32 %s206, 1
    %p210 = scmp.eq.s32.totalorder %s109, 1
    %p211 = scmp.ne.s32.totalorder %s206, %s208
    %p212 = scmp.eq.s32.totalorder %s109, 0
    %p213 = por %p211, %p212
    %p214 = scmp.ne.s32.totalorder %s206, %s208
    %p215 = scmp.eq.s32.totalorder %s114, 1
    %p216 = por %p214, %p215
    %p217 = scmp.ne.s32.totalorder %s208, %s209
    %p218 = scmp.eq.s32.totalorder %s114, 0
    %p219 = por %p217, %p218
    %p220 = scmp.ne.s32.totalorder %s208, %s209
    %p221 = scmp.eq.s32.totalorder %s115, 1
    %p222 = por %p220, %p221
    %p224 = scmp.ne.s32.totalorder %s209, %s223
    %p225 = scmp.eq.s32.totalorder %s115, 0
    %p226 = por %p224, %p225
    %s228 = sadd.s32 %s227, 1
    %p231 = scmp.eq.s32.totalorder %s109, 1
    %p232 = scmp.ne.s32.totalorder %s227, %s229
    %p233 = scmp.eq.s32.totalorder %s109, 0
    %p234 = por %p232, %p233
    %p235 = scmp.ne.s32.totalorder %s227, %s229
    %p236 = scmp.eq.s32.totalorder %s114, 1
    %p237 = por %p235, %p236
    %p238 = scmp.ne.s32.totalorder %s229, %s230
    %p239 = scmp.eq.s32.totalorder %s114, 0
    %p240 = por %p238, %p239
    %p241 = scmp.ne.s32.totalorder %s229, %s230
    %p242 = scmp.eq.s32.totalorder %s115, 1
    %p243 = por %p241, %p242
    %p245 = scmp.ne.s32.totalorder %s230, %s244
    %p246 = scmp.eq.s32.totalorder %s115, 0
    %p247 = por %p245, %p246
    %s249 = sadd.s32 %s248, 1
    %p252 = scmp.eq.s32.totalorder %s109, 1
    %p253 = scmp.ne.s32.totalorder %s248, %s250
    %p254 = scmp.eq.s32.totalorder %s109, 0
    %p255 = por %p253, %p254
    %p256 = scmp.ne.s32.totalorder %s248, %s250
    %p257 = scmp.eq.s32.totalorder %s114, 1
    %p258 = por %p256, %p257
    %p259 = scmp.ne.s32.totalorder %s250, %s251
    %p260 = scmp.eq.s32.totalorder %s114, 0
    %p261 = por %p259, %p260
    %p262 = scmp.ne.s32.totalorder %s250, %s251
    %p263 = scmp.eq.s32.totalorder %s115, 1
    %p264 = por %p262, %p263
    %p266 = scmp.ne.s32.totalorder %s251, %s265
    %p267 = scmp.eq.s32.totalorder %s115, 0
    %p268 = por %p266, %p267
    %s270 = sadd.s32 %s269, 1
    %p273 = scmp.eq.s32.totalorder %s109, 1
    %p274 = scmp.ne.s32.totalorder %s269, %s271
    %p275 = scmp.eq.s32.totalorder %s109, 0
    %p276 = por %p274, %p275
    %p277 = scmp.ne.s32.totalorder %s269, %s271
    %p278 = scmp.eq.s32.totalorder %s114, 1
    %p279 = por %p277, %p278
    %p280 = scmp.ne.s32.totalorder %s271, %s272
    %p281 = scmp.eq.s32.totalorder %s114, 0
    %p282 = por %p280, %p281
    %p283 = scmp.ne.s32.totalorder %s271, %s272
    %p284 = scmp.eq.s32.totalorder %s115, 1
    %p285 = por %p283, %p284
    %p287 = scmp.ne.s32.totalorder %s272, %s286
    %p288 = scmp.eq.s32.totalorder %s115, 0
    %p289 = por %p287, %p288
    %s291 = sadd.s32 %s290, 1
    %p294 = scmp.eq.s32.totalorder %s109, 1
    %p295 = scmp.ne.s32.totalorder %s290, %s292
    %p296 = scmp.eq.s32.totalorder %s109, 0
    %p297 = por %p295, %p296
    %p298 = scmp.ne.s32.totalorder %s290, %s292
    %p299 = scmp.eq.s32.totalorder %s114, 1
    %p300 = por %p298, %p299
    %p301 = scmp.ne.s32.totalorder %s292, %s293
    %p302 = scmp.eq.s32.totalorder %s114, 0
    %p303 = por %p301, %p302
    %p304 = scmp.ne.s32.totalorder %s292, %s293
    %p305 = scmp.eq.s32.totalorder %s115, 1
    %p306 = por %p304, %p305
    %p308 = scmp.ne.s32.totalorder %s293, %s307
    %p309 = scmp.eq.s32.totalorder %s115, 0
    %p310 = por %p308, %p309
    %s312 = sadd.s32 %s311, 1
    %p315 = scmp.eq.s32.totalorder %s109, 1
    %p316 = scmp.ne.s32.totalorder %s311, %s313
    %p317 = scmp.eq.s32.totalorder %s109, 0
    %p318 = por %p316, %p317
    %p319 = scmp.ne.s32.totalorder %s311, %s313
    %p320 = scmp.eq.s32.totalorder %s114, 1
    %p321 = por %p319, %p320
    %p322 = scmp.ne.s32.totalorder %s313, %s314
    %p323 = scmp.eq.s32.totalorder %s114, 0
    %p324 = por %p322, %p323
    %p325 = scmp.ne.s32.totalorder %s313, %s314
    %p326 = scmp.eq.s32.totalorder %s115, 1
    %p327 = por %p325, %p326
    %p329 = scmp.ne.s32.totalorder %s314, %s328
    %p330 = scmp.eq.s32.totalorder %s115, 0
    %p331 = por %p329, %p330
    %s333 = sadd.s32 %s332, 1
    %p336 = scmp.eq.s32.totalorder %s109, 1
    %p337 = scmp.ne.s32.totalorder %s332, %s334
    %p338 = scmp.eq.s32.totalorder %s109, 0
    %p339 = por %p337, %p338
    %p340 = scmp.ne.s32.totalorder %s332, %s334
    %p341 = scmp.eq.s32.totalorder %s114, 1
    %p342 = por %p340, %p341
    %p343 = scmp.ne.s32.totalorder %s334, %s335
    %p344 = scmp.eq.s32.totalorder %s114, 0
    %p345 = por %p343, %p344
    %p346 = scmp.ne.s32.totalorder %s334, %s335
    %p347 = scmp.eq.s32.totalorder %s115, 1
    %p348 = por %p346, %p347
    %p350 = scmp.ne.s32.totalorder %s335, %s349
    %p351 = scmp.eq.s32.totalorder %s115, 0
    %p352 = por %p350, %p351
    %s354 = sadd.s32 %s353, 1
    %p357 = scmp.eq.s32.totalorder %s109, 1
    %p358 = scmp.ne.s32.totalorder %s353, %s355
    %p359 = scmp.eq.s32.totalorder %s109, 0
    %p360 = por %p358, %p359
    %p361 = scmp.ne.s32.totalorder %s353, %s355
    %p362 = scmp.eq.s32.totalorder %s114, 1
    %p363 = por %p361, %p362
    %p364 = scmp.ne.s32.totalorder %s355, %s356
    %p365 = scmp.eq.s32.totalorder %s114, 0
    %p366 = por %p364, %p365
    %p367 = scmp.ne.s32.totalorder %s355, %s356
    %p368 = scmp.eq.s32.totalorder %s115, 1
    %p369 = por %p367, %p368
    %p371 = scmp.ne.s32.totalorder %s356, %s370
    %p372 = scmp.eq.s32.totalorder %s115, 0
    %p373 = por %p371, %p372
    %s375 = sadd.s32 %s374, 1
    %p378 = scmp.eq.s32.totalorder %s109, 1
    %p379 = scmp.ne.s32.totalorder %s374, %s376
    %p380 = scmp.eq.s32.totalorder %s109, 0
    %p381 = por %p379, %p380
    %p382 = scmp.ne.s32.totalorder %s374, %s376
    %p383 = scmp.eq.s32.totalorder %s114, 1
    %p384 = por %p382, %p383
    %p385 = scmp.ne.s32.totalorder %s376, %s377
    %p386 = scmp.eq.s32.totalorder %s114, 0
    %p387 = por %p385, %p386
    %p388 = scmp.ne.s32.totalorder %s376, %s377
    %p389 = scmp.eq.s32.totalorder %s115, 1
    %p390 = por %p388, %p389
    %p392 = scmp.ne.s32.totalorder %s377, %s391
    %p393 = scmp.eq.s32.totalorder %s115, 0
    %p394 = por %p392, %p393
    %s396 = sadd.s32 %s395, 1
    %p399 = scmp.eq.s32.totalorder %s109, 1
    %p400 = scmp.ne.s32.totalorder %s395, %s397
    %p401 = scmp.eq.s32.totalorder %s109, 0
    %p402 = por %p400, %p401
    %p403 = scmp.ne.s32.totalorder %s395, %s397
    %p404 = scmp.eq.s32.totalorder %s114, 1
    %p405 = por %p403, %p404
    %p406 = scmp.ne.s32.totalorder %s397, %s398
    %p407 = scmp.eq.s32.totalorder %s114, 0
    %p408 = por %p406, %p407
    %p409 = scmp.ne.s32.totalorder %s397, %s398
    %p410 = scmp.eq.s32.totalorder %s115, 1
    %p411 = por %p409, %p410
    %p413 = scmp.ne.s32.totalorder %s398, %s412
    %p414 = scmp.eq.s32.totalorder %s115, 0
    %p415 = por %p413, %p414
    %s417 = sadd.s32 %s416, 1
    %p420 = scmp.eq.s32.totalorder %s109, 1
    %p421 = scmp.ne.s32.totalorder %s416, %s418
    %p422 = scmp.eq.s32.totalorder %s109, 0
    %p423 = por %p421, %p422
    %p424 = scmp.ne.s32.totalorder %s416, %s418
    %p425 = scmp.eq.s32.totalorder %s114, 1
    %p426 = por %p424, %p425
    %p427 = scmp.ne.s32.totalorder %s418, %s419
    %p428 = scmp.eq.s32.totalorder %s114, 0
    %p429 = por %p427, %p428
    %p430 = scmp.ne.s32.totalorder %s418, %s419
    %p431 = scmp.eq.s32.totalorder %s115, 1
    %p432 = por %p430, %p431
    %p434 = scmp.ne.s32.totalorder %s419, %s433
    %p435 = scmp.eq.s32.totalorder %s115, 0
    %p436 = por %p434, %p435
    %s438 = sadd.s32 %s437, 1
    %p441 = scmp.eq.s32.totalorder %s109, 1
    %p442 = scmp.ne.s32.totalorder %s437, %s439
    %p443 = scmp.eq.s32.totalorder %s109, 0
    %p444 = por %p442, %p443
    %p445 = scmp.ne.s32.totalorder %s437, %s439
    %p446 = scmp.eq.s32.totalorder %s114, 1
    %p447 = por %p445, %p446
    %p448 = scmp.ne.s32.totalorder %s439, %s440
    %p449 = scmp.eq.s32.totalorder %s114, 0
    %p450 = por %p448, %p449
    %p451 = scmp.ne.s32.totalorder %s439, %s440
    %p452 = scmp.eq.s32.totalorder %s115, 1
    %p453 = por %p451, %p452
    %p455 = scmp.ne.s32.totalorder %s440, %s454
    %p456 = scmp.eq.s32.totalorder %s115, 0
    %p457 = por %p455, %p456
    %s459 = sadd.s32 %s458, 1
    %p462 = scmp.eq.s32.totalorder %s109, 1
    %p463 = scmp.ne.s32.totalorder %s458, %s460
    %p464 = scmp.eq.s32.totalorder %s109, 0
    %p465 = por %p463, %p464
    %p466 = scmp.ne.s32.totalorder %s458, %s460
    %p467 = scmp.eq.s32.totalorder %s114, 1
    %p468 = por %p466, %p467
    %p469 = scmp.ne.s32.totalorder %s460, %s461
    %p470 = scmp.eq.s32.totalorder %s114, 0
    %p471 = por %p469, %p470
    %p472 = scmp.ne.s32.totalorder %s460, %s461
    %p473 = scmp.eq.s32.totalorder %s115, 1
    %p474 = por %p472, %p473
    %p476 = scmp.ne.s32.totalorder %s461, %s475
    %p477 = scmp.eq.s32.totalorder %s115, 0
    %p478 = por %p476, %p477
    %s480 = sadd.s32 %s479, 1
    %p483 = scmp.eq.s32.totalorder %s109, 1
    %p484 = scmp.ne.s32.totalorder %s479, %s481
    %p485 = scmp.eq.s32.totalorder %s109, 0
    %p486 = por %p484, %p485
    %p487 = scmp.ne.s32.totalorder %s479, %s481
    %p488 = scmp.eq.s32.totalorder %s114, 1
    %p489 = por %p487, %p488
    %p490 = scmp.ne.s32.totalorder %s481, %s482
    %p491 = scmp.eq.s32.totalorder %s114, 0
    %p492 = por %p490, %p491
    %p493 = scmp.ne.s32.totalorder %s481, %s482
    %p494 = scmp.eq.s32.totalorder %s115, 1
    %p495 = por %p493, %p494
    %p497 = scmp.ne.s32.totalorder %s482, %s496
    %p498 = scmp.eq.s32.totalorder %s115, 0
    %p499 = por %p497, %p498
    %s501 = sadd.s32 %s500, 1
    %p504 = scmp.eq.s32.totalorder %s109, 1
    %p505 = scmp.ne.s32.totalorder %s500, %s502
    %p506 = scmp.eq.s32.totalorder %s109, 0
    %p507 = por %p505, %p506
    %p508 = scmp.ne.s32.totalorder %s500, %s502
    %p509 = scmp.eq.s32.totalorder %s114, 1
    %p510 = por %p508, %p509
    %p511 = scmp.ne.s32.totalorder %s502, %s503
    %p512 = scmp.eq.s32.totalorder %s114, 0
    %p513 = por %p511, %p512
    %p514 = scmp.ne.s32.totalorder %s502, %s503
    %p515 = scmp.eq.s32.totalorder %s115, 1
    %p516 = por %p514, %p515
    %p518 = scmp.ne.s32.totalorder %s503, %s517
    %p519 = scmp.eq.s32.totalorder %s115, 0
    %p520 = por %p518, %p519
    %s522 = sadd.s32 %s521, 1
    %p525 = scmp.eq.s32.totalorder %s109, 1
    %p526 = scmp.ne.s32.totalorder %s521, %s523
    %p527 = scmp.eq.s32.totalorder %s109, 0
    %p528 = por %p526, %p527
    %p529 = scmp.ne.s32.totalorder %s521, %s523
    %p530 = scmp.eq.s32.totalorder %s114, 1
    %p531 = por %p529, %p530
    %p532 = scmp.ne.s32.totalorder %s523, %s524
    %p533 = scmp.eq.s32.totalorder %s114, 0
    %p534 = por %p532, %p533
    %p535 = scmp.ne.s32.totalorder %s523, %s524
    %p536 = scmp.eq.s32.totalorder %s115, 1
    %p537 = por %p535, %p536
    %p539 = scmp.ne.s32.totalorder %s524, %s538
    %p540 = scmp.eq.s32.totalorder %s115, 0
    %p541 = por %p539, %p540
    %s543 = sadd.s32 %s542, 1
    %p546 = scmp.eq.s32.totalorder %s109, 1
    %p547 = scmp.ne.s32.totalorder %s542, %s544
    %p548 = scmp.eq.s32.totalorder %s109, 0
    %p549 = por %p547, %p548
    %p550 = scmp.ne.s32.totalorder %s542, %s544
    %p551 = scmp.eq.s32.totalorder %s114, 1
    %p552 = por %p550, %p551
    %p553 = scmp.ne.s32.totalorder %s544, %s545
    %p554 = scmp.eq.s32.totalorder %s114, 0
    %p555 = por %p553, %p554
    %p556 = scmp.ne.s32.totalorder %s544, %s545
    %p557 = scmp.eq.s32.totalorder %s115, 1
    %p558 = por %p556, %p557
    %p560 = scmp.ne.s32.totalorder %s545, %s559
    %p561 = scmp.eq.s32.totalorder %s115, 0
    %p562 = por %p560, %p561
    %s564 = sadd.s32 %s563, 1
    %p567 = scmp.eq.s32.totalorder %s109, 1
    %p568 = scmp.ne.s32.totalorder %s563, %s565
    %p569 = scmp.eq.s32.totalorder %s109, 0
    %p570 = por %p568, %p569
    %p571 = scmp.ne.s32.totalorder %s563, %s565
    %p572 = scmp.eq.s32.totalorder %s114, 1
    %p573 = por %p571, %p572
    %p574 = scmp.ne.s32.totalorder %s565, %s566
    %p575 = scmp.eq.s32.totalorder %s114, 0
    %p576 = por %p574, %p575
    %p577 = scmp.ne.s32.totalorder %s565, %s566
    %p578 = scmp.eq.s32.totalorder %s115, 1
    %p579 = por %p577, %p578
    %p581 = scmp.ne.s32.totalorder %s566, %s580
    %p582 = scmp.eq.s32.totalorder %s115, 0
    %p583 = por %p581, %p582
    %s585 = sadd.s32 %s584, 1
    %p588 = scmp.eq.s32.totalorder %s109, 1
    %p589 = scmp.ne.s32.totalorder %s584, %s586
    %p590 = scmp.eq.s32.totalorder %s109, 0
    %p591 = por %p589, %p590
    %p592 = scmp.ne.s32.totalorder %s584, %s586
    %p593 = scmp.eq.s32.totalorder %s114, 1
    %p594 = por %p592, %p593
    %p595 = scmp.ne.s32.totalorder %s586, %s587
    %p596 = scmp.eq.s32.totalorder %s114, 0
    %p597 = por %p595, %p596
    %p598 = scmp.ne.s32.totalorder %s586, %s587
    %p599 = scmp.eq.s32.totalorder %s115, 1
    %p600 = por %p598, %p599
    %p602 = scmp.ne.s32.totalorder %s587, %s601
    %p603 = scmp.eq.s32.totalorder %s115, 0
    %p604 = por %p602, %p603
    %s606 = sadd.s32 %s605, 1
    %p609 = scmp.eq.s32.totalorder %s109, 1
    %p610 = scmp.ne.s32.totalorder %s605, %s607
    %p611 = scmp.eq.s32.totalorder %s109, 0
    %p612 = por %p610, %p611
    %p613 = scmp.ne.s32.totalorder %s605, %s607
    %p614 = scmp.eq.s32.totalorder %s114, 1
    %p615 = por %p613, %p614
    %p616 = scmp.ne.s32.totalorder %s607, %s608
    %p617 = scmp.eq.s32.totalorder %s114, 0
    %p618 = por %p616, %p617
    %p619 = scmp.ne.s32.totalorder %s607, %s608
    %p620 = scmp.eq.s32.totalorder %s115, 1
    %p621 = por %p619, %p620
    %p623 = scmp.ne.s32.totalorder %s608, %s622
    %p624 = scmp.eq.s32.totalorder %s115, 0
    %p625 = por %p623, %p624
    %s627 = sadd.s32 %s626, 1
    %p630 = scmp.eq.s32.totalorder %s109, 1
    %p631 = scmp.ne.s32.totalorder %s626, %s628
    %p632 = scmp.eq.s32.totalorder %s109, 0
    %p633 = por %p631, %p632
    %p634 = scmp.ne.s32.totalorder %s626, %s628
    %p635 = scmp.eq.s32.totalorder %s114, 1
    %p636 = por %p634, %p635
    %p637 = scmp.ne.s32.totalorder %s628, %s629
    %p638 = scmp.eq.s32.totalorder %s114, 0
    %p639 = por %p637, %p638
    %p640 = scmp.ne.s32.totalorder %s628, %s629
    %p641 = scmp.eq.s32.totalorder %s115, 1
    %p642 = por %p640, %p641
    %p644 = scmp.ne.s32.totalorder %s629, %s643
    %p645 = scmp.eq.s32.totalorder %s115, 0
    %p646 = por %p644, %p645
    %s648 = sadd.s32 %s647, 1
    %p651 = scmp.eq.s32.totalorder %s109, 1
    %p652 = scmp.ne.s32.totalorder %s647, %s649
    %p653 = scmp.eq.s32.totalorder %s109, 0
    %p654 = por %p652, %p653
    %p655 = scmp.ne.s32.totalorder %s647, %s649
    %p656 = scmp.eq.s32.totalorder %s114, 1
    %p657 = por %p655, %p656
    %p658 = scmp.ne.s32.totalorder %s649, %s650
    %p659 = scmp.eq.s32.totalorder %s114, 0
    %p660 = por %p658, %p659
    %p661 = scmp.ne.s32.totalorder %s649, %s650
    %p662 = scmp.eq.s32.totalorder %s115, 1
    %p663 = por %p661, %p662
    %p665 = scmp.ne.s32.totalorder %s650, %s664
    %p666 = scmp.eq.s32.totalorder %s115, 0
    %p667 = por %p665, %p666
    %s669 = sadd.s32 %s668, 1
    %p672 = scmp.eq.s32.totalorder %s109, 1
    %p673 = scmp.ne.s32.totalorder %s668, %s670
    %p674 = scmp.eq.s32.totalorder %s109, 0
    %p675 = por %p673, %p674
    %p676 = scmp.ne.s32.totalorder %s668, %s670
    %p677 = scmp.eq.s32.totalorder %s114, 1
    %p678 = por %p676, %p677
    %p679 = scmp.ne.s32.totalorder %s670, %s671
    %p680 = scmp.eq.s32.totalorder %s114, 0
    %p681 = por %p679, %p680
    %p682 = scmp.ne.s32.totalorder %s670, %s671
    %p683 = scmp.eq.s32.totalorder %s115, 1
    %p684 = por %p682, %p683
    %p686 = scmp.ne.s32.totalorder %s671, %s685
    %p687 = scmp.eq.s32.totalorder %s115, 0
    %p688 = por %p686, %p687
    %s690 = sadd.s32 %s689, 1
    %p693 = scmp.eq.s32.totalorder %s109, 1
    %p694 = scmp.ne.s32.totalorder %s689, %s691
    %p695 = scmp.eq.s32.totalorder %s109, 0
    %p696 = por %p694, %p695
    %p697 = scmp.ne.s32.totalorder %s689, %s691
    %p698 = scmp.eq.s32.totalorder %s114, 1
    %p699 = por %p697, %p698
    %p700 = scmp.ne.s32.totalorder %s691, %s692
    %p701 = scmp.eq.s32.totalorder %s114, 0
    %p702 = por %p700, %p701
    %p703 = scmp.ne.s32.totalorder %s691, %s692
    %p704 = scmp.eq.s32.totalorder %s115, 1
    %p705 = por %p703, %p704
    %p707 = scmp.ne.s32.totalorder %s692, %s706
    %p708 = scmp.eq.s32.totalorder %s115, 0
    %p709 = por %p707, %p708
    %s711 = sadd.s32 %s710, 1
    %p714 = scmp.eq.s32.totalorder %s109, 1
    %p715 = scmp.ne.s32.totalorder %s710, %s712
    %p716 = scmp.eq.s32.totalorder %s109, 0
    %p717 = por %p715, %p716
    %p718 = scmp.ne.s32.totalorder %s710, %s712
    %p719 = scmp.eq.s32.totalorder %s114, 1
    %p720 = por %p718, %p719
    %p721 = scmp.ne.s32.totalorder %s712, %s713
    %p722 = scmp.eq.s32.totalorder %s114, 0
    %p723 = por %p721, %p722
    %p724 = scmp.ne.s32.totalorder %s712, %s713
    %p725 = scmp.eq.s32.totalorder %s115, 1
    %p726 = por %p724, %p725
    %p728 = scmp.ne.s32.totalorder %s713, %s727
    %p729 = scmp.eq.s32.totalorder %s115, 0
    %p730 = por %p728, %p729
    %s732 = sadd.s32 %s731, 1
    %p735 = scmp.eq.s32.totalorder %s109, 1
    %p736 = scmp.ne.s32.totalorder %s731, %s733
    %p737 = scmp.eq.s32.totalorder %s109, 0
    %p738 = por %p736, %p737
    %p739 = scmp.ne.s32.totalorder %s731, %s733
    %p740 = scmp.eq.s32.totalorder %s114, 1
    %p741 = por %p739, %p740
    %p742 = scmp.ne.s32.totalorder %s733, %s734
    %p743 = scmp.eq.s32.totalorder %s114, 0
    %p744 = por %p742, %p743
    %p745 = scmp.ne.s32.totalorder %s733, %s734
    %p746 = scmp.eq.s32.totalorder %s115, 1
    %p747 = por %p745, %p746
    %p749 = scmp.ne.s32.totalorder %s734, %s748
    %p750 = scmp.eq.s32.totalorder %s115, 0
    %p751 = por %p749, %p750
    %s753 = sadd.s32 %s752, 1
    %p756 = scmp.eq.s32.totalorder %s109, 1
    %p757 = scmp.ne.s32.totalorder %s752, %s754
    %p758 = scmp.eq.s32.totalorder %s109, 0
    %p759 = por %p757, %p758
    %p760 = scmp.ne.s32.totalorder %s752, %s754
    %p761 = scmp.eq.s32.totalorder %s114, 1
    %p762 = por %p760, %p761
    %p763 = scmp.ne.s32.totalorder %s754, %s755
    %p764 = scmp.eq.s32.totalorder %s114, 0
    %p765 = por %p763, %p764
    %p766 = scmp.ne.s32.totalorder %s754, %s755
    %p767 = scmp.eq.s32.totalorder %s115, 1
    %p768 = por %p766, %p767
    %p770 = scmp.ne.s32.totalorder %s755, %s769
    %p771 = scmp.eq.s32.totalorder %s115, 0
    %p772 = por %p770, %p771
    %s774 = sadd.s32 %s773, 1
    %p777 = scmp.eq.s32.totalorder %s109, 1
    %p778 = scmp.ne.s32.totalorder %s773, %s775
    %p779 = scmp.eq.s32.totalorder %s109, 0
    %p780 = por %p778, %p779
    %p781 = scmp.ne.s32.totalorder %s773, %s775
    %p782 = scmp.eq.s32.totalorder %s114, 1
    %p783 = por %p781, %p782
    %p784 = scmp.ne.s32.totalorder %s775, %s776
    %p785 = scmp.eq.s32.totalorder %s114, 0
    %p786 = por %p784, %p785
    %p787 = scmp.ne.s32.totalorder %s775, %s776
    %p788 = scmp.eq.s32.totalorder %s115, 1
    %p789 = por %p787, %p788
    %p791 = scmp.ne.s32.totalorder %s776, %s790
    %p792 = scmp.eq.s32.totalorder %s115, 0
    %p793 = por %p791, %p792
    %s795 = sadd.s32 %s794, 1
    %p798 = scmp.eq.s32.totalorder %s109, 1
    %p799 = scmp.ne.s32.totalorder %s794, %s796
    %p800 = scmp.eq.s32.totalorder %s109, 0
    %p801 = por %p799, %p800
    %p802 = scmp.ne.s32.totalorder %s794, %s796
    %p803 = scmp.eq.s32.totalorder %s114, 1
    %p804 = por %p802, %p803
    %p805 = scmp.ne.s32.totalorder %s796, %s797
    %p806 = scmp.eq.s32.totalorder %s114, 0
    %p807 = por %p805, %p806
    %p808 = scmp.ne.s32.totalorder %s796, %s797
    %p809 = scmp.eq.s32.totalorder %s115, 1
    %p810 = por %p808, %p809
    %p812 = scmp.ne.s32.totalorder %s797, %s811
    %p813 = scmp.eq.s32.totalorder %s115, 0
    %p814 = por %p812, %p813
    %s816 = sadd.s32 %s815, 1
    %p819 = scmp.eq.s32.totalorder %s109, 1
    %p820 = scmp.ne.s32.totalorder %s815, %s817
    %p821 = scmp.eq.s32.totalorder %s109, 0
    %p822 = por %p820, %p821
    %p823 = scmp.ne.s32.totalorder %s815, %s817
    %p824 = scmp.eq.s32.totalorder %s114, 1
    %p825 = por %p823, %p824
    %p826 = scmp.ne.s32.totalorder %s817, %s818
    %p827 = scmp.eq.s32.totalorder %s114, 0
    %p828 = por %p826, %p827
    %p829 = scmp.ne.s32.totalorder %s817, %s818
    %p830 = scmp.eq.s32.totalorder %s115, 1
    %p831 = por %p829, %p830
    %p833 = scmp.ne.s32.totalorder %s818, %s832
    %p834 = scmp.eq.s32.totalorder %s115, 0
    %p835 = por %p833, %p834
    %s837 = sadd.s32 %s836, 1
    %p840 = scmp.eq.s32.totalorder %s109, 1
    %p841 = scmp.ne.s32.totalorder %s836, %s838
    %p842 = scmp.eq.s32.totalorder %s109, 0
    %p843 = por %p841, %p842
    %p844 = scmp.ne.s32.totalorder %s836, %s838
    %p845 = scmp.eq.s32.totalorder %s114, 1
    %p846 = por %p844, %p845
    %p847 = scmp.ne.s32.totalorder %s838, %s839
    %p848 = scmp.eq.s32.totalorder %s114, 0
    %p849 = por %p847, %p848
    %p850 = scmp.ne.s32.totalorder %s838, %s839
    %p851 = scmp.eq.s32.totalorder %s115, 1
    %p852 = por %p850, %p851
    %p854 = scmp.ne.s32.totalorder %s839, %s853
    %p855 = scmp.eq.s32.totalorder %s115, 0
    %p856 = por %p854, %p855
    %s858 = sadd.s32 %s857, 1
    %p861 = scmp.eq.s32.totalorder %s109, 1
    %p862 = scmp.ne.s32.totalorder %s857, %s859
    %p863 = scmp.eq.s32.totalorder %s109, 0
    %p864 = por %p862, %p863
    %p865 = scmp.ne.s32.totalorder %s857, %s859
    %p866 = scmp.eq.s32.totalorder %s114, 1
    %p867 = por %p865, %p866
    %p868 = scmp.ne.s32.totalorder %s859, %s860
    %p869 = scmp.eq.s32.totalorder %s114, 0
    %p870 = por %p868, %p869
    %p871 = scmp.ne.s32.totalorder %s859, %s860
    %p872 = scmp.eq.s32.totalorder %s115, 1
    %p873 = por %p871, %p872
    %p875 = scmp.ne.s32.totalorder %s860, %s874
    %p876 = scmp.eq.s32.totalorder %s115, 0
    %p877 = por %p875, %p876
    %s879 = sadd.s32 %s878, 1
    %p882 = scmp.eq.s32.totalorder %s109, 1
    %p883 = scmp.ne.s32.totalorder %s878, %s880
    %p884 = scmp.eq.s32.totalorder %s109, 0
    %p885 = por %p883, %p884
    %p886 = scmp.ne.s32.totalorder %s878, %s880
    %p887 = scmp.eq.s32.totalorder %s114, 1
    %p888 = por %p886, %p887
    %p889 = scmp.ne.s32.totalorder %s880, %s881
    %p890 = scmp.eq.s32.totalorder %s114, 0
    %p891 = por %p889, %p890
    %p892 = scmp.ne.s32.totalorder %s880, %s881
    %p893 = scmp.eq.s32.totalorder %s115, 1
    %p894 = por %p892, %p893
    %p896 = scmp.ne.s32.totalorder %s881, %s895
    %p897 = scmp.eq.s32.totalorder %s115, 0
    %p898 = por %p896, %p897
    %s900 = sadd.s32 %s899, 1
    %p903 = scmp.eq.s32.totalorder %s109, 1
    %p904 = scmp.ne.s32.totalorder %s899, %s901
    %p905 = scmp.eq.s32.totalorder %s109, 0
    %p906 = por %p904, %p905
    %p907 = scmp.ne.s32.totalorder %s899, %s901
    %p908 = scmp.eq.s32.totalorder %s114, 1
    %p909 = por %p907, %p908
    %p910 = scmp.ne.s32.totalorder %s901, %s902
    %p911 = scmp.eq.s32.totalorder %s114, 0
    %p912 = por %p910, %p911
    %p913 = scmp.ne.s32.totalorder %s901, %s902
    %p914 = scmp.eq.s32.totalorder %s115, 1
    %p915 = por %p913, %p914
    %p917 = scmp.ne.s32.totalorder %s902, %s916
    %p918 = scmp.eq.s32.totalorder %s115, 0
    %p919 = por %p917, %p918
    %s921 = sadd.s32 %s920, 1
    %p924 = scmp.eq.s32.totalorder %s109, 1
    %p925 = scmp.ne.s32.totalorder %s920, %s922
    %p926 = scmp.eq.s32.totalorder %s109, 0
    %p927 = por %p925, %p926
    %p928 = scmp.ne.s32.totalorder %s920, %s922
    %p929 = scmp.eq.s32.totalorder %s114, 1
    %p930 = por %p928, %p929
    %p931 = scmp.ne.s32.totalorder %s922, %s923
    %p932 = scmp.eq.s32.totalorder %s114, 0
    %p933 = por %p931, %p932
    %p934 = scmp.ne.s32.totalorder %s922, %s923
    %p935 = scmp.eq.s32.totalorder %s115, 1
    %p936 = por %p934, %p935
    %p938 = scmp.ne.s32.totalorder %s923, %s937
    %p939 = scmp.eq.s32.totalorder %s115, 0
    %p940 = por %p938, %p939
    %s942 = sadd.s32 %s941, 1
    %p945 = scmp.eq.s32.totalorder %s109, 1
    %p946 = scmp.ne.s32.totalorder %s941, %s943
    %p947 = scmp.eq.s32.totalorder %s109, 0
    %p948 = por %p946, %p947
    %p949 = scmp.ne.s32.totalorder %s941, %s943
    %p950 = scmp.eq.s32.totalorder %s114, 1
    %p951 = por %p949, %p950
    %p952 = scmp.ne.s32.totalorder %s943, %s944
    %p953 = scmp.eq.s32.totalorder %s114, 0
    %p954 = por %p952, %p953
    %p955 = scmp.ne.s32.totalorder %s943, %s944
    %p956 = scmp.eq.s32.totalorder %s115, 1
    %p957 = por %p955, %p956
    %p959 = scmp.ne.s32.totalorder %s944, %s958
    %p960 = scmp.eq.s32.totalorder %s115, 0
    %p961 = por %p959, %p960
    %s963 = sadd.s32 %s962, 1
    %p966 = scmp.eq.s32.totalorder %s109, 1
    %p967 = scmp.ne.s32.totalorder %s962, %s964
    %p968 = scmp.eq.s32.totalorder %s109, 0
    %p969 = por %p967, %p968
    %p970 = scmp.ne.s32.totalorder %s962, %s964
    %p971 = scmp.eq.s32.totalorder %s114, 1
    %p972 = por %p970, %p971
    %p973 = scmp.ne.s32.totalorder %s964, %s965
    %p974 = scmp.eq.s32.totalorder %s114, 0
    %p975 = por %p973, %p974
    %p976 = scmp.ne.s32.totalorder %s964, %s965
    %p977 = scmp.eq.s32.totalorder %s115, 1
    %p978 = por %p976, %p977
    %p980 = scmp.ne.s32.totalorder %s965, %s979
    %p981 = scmp.eq.s32.totalorder %s115, 0
    %p982 = por %p980, %p981
    %s984 = sadd.s32 %s983, 1
    %p987 = scmp.eq.s32.totalorder %s109, 1
    %p988 = scmp.ne.s32.totalorder %s983, %s985
    %p989 = scmp.eq.s32.totalorder %s109, 0
    %p990 = por %p988, %p989
    %p991 = scmp.ne.s32.totalorder %s983, %s985
    %p992 = scmp.eq.s32.totalorder %s114, 1
    %p993 = por %p991, %p992
    %p994 = scmp.ne.s32.totalorder %s985, %s986
    %p995 = scmp.eq.s32.totalorder %s114, 0
    %p996 = por %p994, %p995
    %p997 = scmp.ne.s32.totalorder %s985, %s986
    %p998 = scmp.eq.s32.totalorder %s115, 1
    %p999 = por %p997, %p998
    %p1001 = scmp.ne.s32.totalorder %s986, %s1000
    %p1002 = scmp.eq.s32.totalorder %s115, 0
    %p1003 = por %p1001, %p1002
    %s1005 = sadd.s32 %s1004, 1
    %p1008 = scmp.eq.s32.totalorder %s109, 1
    %p1009 = scmp.ne.s32.totalorder %s1004, %s1006
    %p1010 = scmp.eq.s32.totalorder %s109, 0
    %p1011 = por %p1009, %p1010
    %p1012 = scmp.ne.s32.totalorder %s1004, %s1006
    %p1013 = scmp.eq.s32.totalorder %s114, 1
    %p1014 = por %p1012, %p1013
    %p1015 = scmp.ne.s32.totalorder %s1006, %s1007
    %p1016 = scmp.eq.s32.totalorder %s114, 0
    %p1017 = por %p1015, %p1016
    %p1018 = scmp.ne.s32.totalorder %s1006, %s1007
    %p1019 = scmp.eq.s32.totalorder %s115, 1
    %p1020 = por %p1018, %p1019
    %p1022 = scmp.ne.s32.totalorder %s1007, %s1021
    %p1023 = scmp.eq.s32.totalorder %s115, 0
    %p1024 = por %p1022, %p1023
    %s1026 = sadd.s32 %s1025, 1
    %p1029 = scmp.eq.s32.totalorder %s109, 1
    %p1030 = scmp.ne.s32.totalorder %s1025, %s1027
    %p1031 = scmp.eq.s32.totalorder %s109, 0
    %p1032 = por %p1030, %p1031
    %p1033 = scmp.ne.s32.totalorder %s1025, %s1027
    %p1034 = scmp.eq.s32.totalorder %s114, 1
    %p1035 = por %p1033, %p1034
    %p1036 = scmp.ne.s32.totalorder %s1027, %s1028
    %p1037 = scmp.eq.s32.totalorder %s114, 0
    %p1038 = por %p1036, %p1037
    %p1039 = scmp.ne.s32.totalorder %s1027, %s1028
    %p1040 = scmp.eq.s32.totalorder %s115, 1
    %p1041 = por %p1039, %p1040
    %p1043 = scmp.ne.s32.totalorder %s1028, %s1042
    %p1044 = scmp.eq.s32.totalorder %s115, 0
    %p1045 = por %p1043, %p1044
    %s1047 = sadd.s32 %s1046, 1
    %p1050 = scmp.eq.s32.totalorder %s109, 1
    %p1051 = scmp.ne.s32.totalorder %s1046, %s1048
    %p1052 = scmp.eq.s32.totalorder %s109, 0
    %p1053 = por %p1051, %p1052
    %p1054 = scmp.ne.s32.totalorder %s1046, %s1048
    %p1055 = scmp.eq.s32.totalorder %s114, 1
    %p1056 = por %p1054, %p1055
    %p1057 = scmp.ne.s32.totalorder %s1048, %s1049
    %p1058 = scmp.eq.s32.totalorder %s114, 0
    %p1059 = por %p1057, %p1058
    %p1060 = scmp.ne.s32.totalorder %s1048, %s1049
    %p1061 = scmp.eq.s32.totalorder %s115, 1
    %p1062 = por %p1060, %p1061
    %p1064 = scmp.ne.s32.totalorder %s1049, %s1063
    %p1065 = scmp.eq.s32.totalorder %s115, 0
    %p1066 = por %p1064, %p1065
    %s1068 = sadd.s32 %s1067, 1
    %p1071 = scmp.eq.s32.totalorder %s109, 1
    %p1072 = scmp.ne.s32.totalorder %s1067, %s1069
    %p1073 = scmp.eq.s32.totalorder %s109, 0
    %p1074 = por %p1072, %p1073
    %p1075 = scmp.ne.s32.totalorder %s1067, %s1069
    %p1076 = scmp.eq.s32.totalorder %s114, 1
    %p1077 = por %p1075, %p1076
    %p1078 = scmp.ne.s32.totalorder %s1069, %s1070
    %p1079 = scmp.eq.s32.totalorder %s114, 0
    %p1080 = por %p1078, %p1079
    %p1081 = scmp.ne.s32.totalorder %s1069, %s1070
    %p1082 = scmp.eq.s32.totalorder %s115, 1
    %p1083 = por %p1081, %p1082
    %p1085 = scmp.ne.s32.totalorder %s1070, %s1084
    %p1086 = scmp.eq.s32.totalorder %s115, 0
    %p1087 = por %p1085, %p1086
    %s1089 = sadd.s32 %s1088, 1
    %p1092 = scmp.eq.s32.totalorder %s109, 1
    %p1093 = scmp.ne.s32.totalorder %s1088, %s1090
    %p1094 = scmp.eq.s32.totalorder %s109, 0
    %p1095 = por %p1093, %p1094
    %p1096 = scmp.ne.s32.totalorder %s1088, %s1090
    %p1097 = scmp.eq.s32.totalorder %s114, 1
    %p1098 = por %p1096, %p1097
    %p1099 = scmp.ne.s32.totalorder %s1090, %s1091
    %p1100 = scmp.eq.s32.totalorder %s114, 0
    %p1101 = por %p1099, %p1100
    %p1102 = scmp.ne.s32.totalorder %s1090, %s1091
    %p1103 = scmp.eq.s32.totalorder %s115, 1
    %p1104 = por %p1102, %p1103
    %p1106 = scmp.ne.s32.totalorder %s1091, %s1105
    %p1107 = scmp.eq.s32.totalorder %s115, 0
    %p1108 = por %p1106, %p1107
    %s1110 = sadd.s32 %s1109, 1
    %p1113 = scmp.eq.s32.totalorder %s109, 1
    %p1114 = scmp.ne.s32.totalorder %s1109, %s1111
    %p1115 = scmp.eq.s32.totalorder %s109, 0
    %p1116 = por %p1114, %p1115
    %p1117 = scmp.ne.s32.totalorder %s1109, %s1111
    %p1118 = scmp.eq.s32.totalorder %s114, 1
    %p1119 = por %p1117, %p1118
    %p1120 = scmp.ne.s32.totalorder %s1111, %s1112
    %p1121 = scmp.eq.s32.totalorder %s114, 0
    %p1122 = por %p1120, %p1121
    %p1123 = scmp.ne.s32.totalorder %s1111, %s1112
    %p1124 = scmp.eq.s32.totalorder %s115, 1
    %p1125 = por %p1123, %p1124
    %p1127 = scmp.ne.s32.totalorder %s1112, %s1126
    %p1128 = scmp.eq.s32.totalorder %s115, 0
    %p1129 = por %p1127, %p1128
    %s1131 = sadd.s32 %s1130, 1
    %p1134 = scmp.eq.s32.totalorder %s109, 1
    %p1135 = scmp.ne.s32.totalorder %s1130, %s1132
    %p1136 = scmp.eq.s32.totalorder %s109, 0
    %p1137 = por %p1135, %p1136
    %p1138 = scmp.ne.s32.totalorder %s1130, %s1132
    %p1139 = scmp.eq.s32.totalorder %s114, 1
    %p1140 = por %p1138, %p1139
    %p1141 = scmp.ne.s32.totalorder %s1132, %s1133
    %p1142 = scmp.eq.s32.totalorder %s114, 0
    %p1143 = por %p1141, %p1142
    %p1144 = scmp.ne.s32.totalorder %s1132, %s1133
    %p1145 = scmp.eq.s32.totalorder %s115, 1
    %p1146 = por %p1144, %p1145
    %p1148 = scmp.ne.s32.totalorder %s1133, %s1147
    %p1149 = scmp.eq.s32.totalorder %s115, 0
    %p1150 = por %p1148, %p1149
    %s1152 = sadd.s32 %s1151, 1
    %p1155 = scmp.eq.s32.totalorder %s109, 1
    %p1156 = scmp.ne.s32.totalorder %s1151, %s1153
    %p1157 = scmp.eq.s32.totalorder %s109, 0
    %p1158 = por %p1156, %p1157
    %p1159 = scmp.ne.s32.totalorder %s1151, %s1153
    %p1160 = scmp.eq.s32.totalorder %s114, 1
    %p1161 = por %p1159, %p1160
    %p1162 = scmp.ne.s32.totalorder %s1153, %s1154
    %p1163 = scmp.eq.s32.totalorder %s114, 0
    %p1164 = por %p1162, %p1163
    %p1165 = scmp.ne.s32.totalorder %s1153, %s1154
    %p1166 = scmp.eq.s32.totalorder %s115, 1
    %p1167 = por %p1165, %p1166
    %p1169 = scmp.ne.s32.totalorder %s1154, %s1168
    %p1170 = scmp.eq.s32.totalorder %s115, 0
    %p1171 = por %p1169, %p1170
    %s1173 = sadd.s32 %s1172, 1
    %p1176 = scmp.eq.s32.totalorder %s109, 1
    %p1177 = scmp.ne.s32.totalorder %s1172, %s1174
    %p1178 = scmp.eq.s32.totalorder %s109, 0
    %p1179 = por %p1177, %p1178
    %p1180 = scmp.ne.s32.totalorder %s1172, %s1174
    %p1181 = scmp.eq.s32.totalorder %s114, 1
    %p1182 = por %p1180, %p1181
    %p1183 = scmp.ne.s32.totalorder %s1174, %s1175
    %p1184 = scmp.eq.s32.totalorder %s114, 0
    %p1185 = por %p1183, %p1184
    %p1186 = scmp.ne.s32.totalorder %s1174, %s1175
    %p1187 = scmp.eq.s32.totalorder %s115, 1
    %p1188 = por %p1186, %p1187
    %p1190 = scmp.ne.s32.totalorder %s1175, %s1189
    %p1191 = scmp.eq.s32.totalorder %s115, 0
    %p1192 = por %p1190, %p1191
    %s1193 = ssub.s32 %s109, %s116
    %p1194 = scmp.eq.s32.totalorder %s1193, 0
    %s1196 = sadd.s32 %s1195, 1
    %s1197 = scalar_select %p1194, %s1195, %s1196
    %p1200 = pneg %p1194
    %p1201 = scmp.eq.s32.totalorder %s109, 1
    %p1202 = por %p1200, %p1201
    %p1203 = scmp.ne.s32.totalorder %s1195, %s1198
    %p1204 = scmp.eq.s32.totalorder %s109, 0
    %p1205 = por %p1203, %p1204
    %p1206 = scmp.ne.s32.totalorder %s1195, %s1198
    %p1207 = scmp.eq.s32.totalorder %s114, 1
    %p1208 = por %p1206, %p1207
    %p1209 = scmp.ne.s32.totalorder %s1198, %s1199
    %p1210 = scmp.eq.s32.totalorder %s114, 0
    %p1211 = por %p1209, %p1210
    %p1212 = scmp.ne.s32.totalorder %s1198, %s1199
    %p1213 = scmp.eq.s32.totalorder %s115, 1
    %p1214 = por %p1212, %p1213
    %p1216 = scmp.ne.s32.totalorder %s1199, %s1215
    %p1217 = scmp.eq.s32.totalorder %s115, 0
    %p1218 = por %p1216, %p1217
    %p1219 = scmp.le.s32.totalorder 1, %s109
    %p1220 = scmp.lt.s32.totalorder %s109, 3
    %p1221 = pnand %p1219, %p1220
    %p1222 = pneg %p1221
    // Predicated region
    $region9: #{ved_forward.1} parent=5 // pred_check
      _
    $region10: #{ved_forward.1} parent=5 // pred_check_branch
      %1224 = sbr.rel (%p1221) target = $region12
    $region11: #{ved_forward.1} parent=5 // pred_region
      %s1225 = ssub.s32 %s109, 1
      // Predicated region
      $region13: #{ved_forward.1} parent=11 // pred_check
        %p1226 = pneg %p156
      $region14: #{ved_forward.1} parent=11 // pred_check_branch
        %1228 = sbr.rel (%p1226) target = $region16
      $region15: #{ved_forward.1} parent=11 // pred_region
        _
      $region16: #{ved_forward.1} parent=11 // pred_fallthru
        _
      // Predicated region
      $region17: #{ved_forward.1} parent=11 // pred_check
        %p1229 = pneg %p177
      $region18: #{ved_forward.1} parent=11 // pred_check_branch
        %1231 = sbr.rel (%p1229) target = $region20
      $region19: #{ved_forward.1} parent=11 // pred_region
        _
      $region20: #{ved_forward.1} parent=11 // pred_fallthru
        _
      // Predicated region
      $region21: #{ved_forward.1} parent=11 // pred_check
        %p1232 = pneg %p198
      $region22: #{ved_forward.1} parent=11 // pred_check_branch
        %1234 = sbr.rel (%p1232) target = $region24
      $region23: #{ved_forward.1} parent=11 // pred_region
        _
      $region24: #{ved_forward.1} parent=11 // pred_fallthru
        _
      // Predicated region
      $region25: #{ved_forward.1} parent=11 // pred_check
        %p1235 = pneg %p219
      $region26: #{ved_forward.1} parent=11 // pred_check_branch
        %1237 = sbr.rel (%p1235) target = $region28
      $region27: #{ved_forward.1} parent=11 // pred_region
        _
      $region28: #{ved_forward.1} parent=11 // pred_fallthru
        _
      // Predicated region
      $region29: #{ved_forward.1} parent=11 // pred_check
        %p1238 = pneg %p240
      $region30: #{ved_forward.1} parent=11 // pred_check_branch
        %1240 = sbr.rel (%p1238) target = $region32
      $region31: #{ved_forward.1} parent=11 // pred_region
        _
      $region32: #{ved_forward.1} parent=11 // pred_fallthru
        _
      // Predicated region
      $region33: #{ved_forward.1} parent=11 // pred_check
        %p1241 = pneg %p261
      $region34: #{ved_forward.1} parent=11 // pred_check_branch
        %1243 = sbr.rel (%p1241) target = $region36
      $region35: #{ved_forward.1} parent=11 // pred_region
        _
      $region36: #{ved_forward.1} parent=11 // pred_fallthru
        _
      // Predicated region
      $region37: #{ved_forward.1} parent=11 // pred_check
        %p1244 = pneg %p282
      $region38: #{ved_forward.1} parent=11 // pred_check_branch
        %1246 = sbr.rel (%p1244) target = $region40
      $region39: #{ved_forward.1} parent=11 // pred_region
        _
      $region40: #{ved_forward.1} parent=11 // pred_fallthru
        _
      // Predicated region
      $region41: #{ved_forward.1} parent=11 // pred_check
        %p1247 = pneg %p303
      $region42: #{ved_forward.1} parent=11 // pred_check_branch
        %1249 = sbr.rel (%p1247) target = $region44
      $region43: #{ved_forward.1} parent=11 // pred_region
        _
      $region44: #{ved_forward.1} parent=11 // pred_fallthru
        _
      // Predicated region
      $region45: #{ved_forward.1} parent=11 // pred_check
        %p1250 = pneg %p324
      $region46: #{ved_forward.1} parent=11 // pred_check_branch
        %1252 = sbr.rel (%p1250) target = $region48
      $region47: #{ved_forward.1} parent=11 // pred_region
        _
      $region48: #{ved_forward.1} parent=11 // pred_fallthru
        _
      // Predicated region
      $region49: #{ved_forward.1} parent=11 // pred_check
        %p1253 = pneg %p345
      $region50: #{ved_forward.1} parent=11 // pred_check_branch
        %1255 = sbr.rel (%p1253) target = $region52
      $region51: #{ved_forward.1} parent=11 // pred_region
        _
      $region52: #{ved_forward.1} parent=11 // pred_fallthru
        _
      // Predicated region
      $region53: #{ved_forward.1} parent=11 // pred_check
        %p1256 = pneg %p366
      $region54: #{ved_forward.1} parent=11 // pred_check_branch
        %1258 = sbr.rel (%p1256) target = $region56
      $region55: #{ved_forward.1} parent=11 // pred_region
        _
      $region56: #{ved_forward.1} parent=11 // pred_fallthru
        _
      // Predicated region
      $region57: #{ved_forward.1} parent=11 // pred_check
        %p1259 = pneg %p387
      $region58: #{ved_forward.1} parent=11 // pred_check_branch
        %1261 = sbr.rel (%p1259) target = $region60
      $region59: #{ved_forward.1} parent=11 // pred_region
        _
      $region60: #{ved_forward.1} parent=11 // pred_fallthru
        _
      // Predicated region
      $region61: #{ved_forward.1} parent=11 // pred_check
        %p1262 = pneg %p408
      $region62: #{ved_forward.1} parent=11 // pred_check_branch
        %1264 = sbr.rel (%p1262) target = $region64
      $region63: #{ved_forward.1} parent=11 // pred_region
        _
      $region64: #{ved_forward.1} parent=11 // pred_fallthru
        _
      // Predicated region
      $region65: #{ved_forward.1} parent=11 // pred_check
        %p1265 = pneg %p429
      $region66: #{ved_forward.1} parent=11 // pred_check_branch
        %1267 = sbr.rel (%p1265) target = $region68
      $region67: #{ved_forward.1} parent=11 // pred_region
        _
      $region68: #{ved_forward.1} parent=11 // pred_fallthru
        _
      // Predicated region
      $region69: #{ved_forward.1} parent=11 // pred_check
        %p1268 = pneg %p450
      $region70: #{ved_forward.1} parent=11 // pred_check_branch
        %1270 = sbr.rel (%p1268) target = $region72
      $region71: #{ved_forward.1} parent=11 // pred_region
        _
      $region72: #{ved_forward.1} parent=11 // pred_fallthru
        _
      // Predicated region
      $region73: #{ved_forward.1} parent=11 // pred_check
        %p1271 = pneg %p471
      $region74: #{ved_forward.1} parent=11 // pred_check_branch
        %1273 = sbr.rel (%p1271) target = $region76
      $region75: #{ved_forward.1} parent=11 // pred_region
        _
      $region76: #{ved_forward.1} parent=11 // pred_fallthru
        _
      // Predicated region
      $region77: #{ved_forward.1} parent=11 // pred_check
        %p1274 = pneg %p492
      $region78: #{ved_forward.1} parent=11 // pred_check_branch
        %1276 = sbr.rel (%p1274) target = $region80
      $region79: #{ved_forward.1} parent=11 // pred_region
        _
      $region80: #{ved_forward.1} parent=11 // pred_fallthru
        _
      // Predicated region
      $region81: #{ved_forward.1} parent=11 // pred_check
        %p1277 = pneg %p513
      $region82: #{ved_forward.1} parent=11 // pred_check_branch
        %1279 = sbr.rel (%p1277) target = $region84
      $region83: #{ved_forward.1} parent=11 // pred_region
        _
      $region84: #{ved_forward.1} parent=11 // pred_fallthru
        _
      // Predicated region
      $region85: #{ved_forward.1} parent=11 // pred_check
        %p1280 = pneg %p534
      $region86: #{ved_forward.1} parent=11 // pred_check_branch
        %1282 = sbr.rel (%p1280) target = $region88
      $region87: #{ved_forward.1} parent=11 // pred_region
        _
      $region88: #{ved_forward.1} parent=11 // pred_fallthru
        _
      // Predicated region
      $region89: #{ved_forward.1} parent=11 // pred_check
        %p1283 = pneg %p555
      $region90: #{ved_forward.1} parent=11 // pred_check_branch
        %1285 = sbr.rel (%p1283) target = $region92
      $region91: #{ved_forward.1} parent=11 // pred_region
        _
      $region92: #{ved_forward.1} parent=11 // pred_fallthru
        _
      // Predicated region
      $region93: #{ved_forward.1} parent=11 // pred_check
        %p1286 = pneg %p576
      $region94: #{ved_forward.1} parent=11 // pred_check_branch
        %1288 = sbr.rel (%p1286) target = $region96
      $region95: #{ved_forward.1} parent=11 // pred_region
        _
      $region96: #{ved_forward.1} parent=11 // pred_fallthru
        _
      // Predicated region
      $region97: #{ved_forward.1} parent=11 // pred_check
        %p1289 = pneg %p597
      $region98: #{ved_forward.1} parent=11 // pred_check_branch
        %1291 = sbr.rel (%p1289) target = $region100
      $region99: #{ved_forward.1} parent=11 // pred_region
        _
      $region100: #{ved_forward.1} parent=11 // pred_fallthru
        _
      // Predicated region
      $region101: #{ved_forward.1} parent=11 // pred_check
        %p1292 = pneg %p618
      $region102: #{ved_forward.1} parent=11 // pred_check_branch
        %1294 = sbr.rel (%p1292) target = $region104
      $region103: #{ved_forward.1} parent=11 // pred_region
        _
      $region104: #{ved_forward.1} parent=11 // pred_fallthru
        _
      // Predicated region
      $region105: #{ved_forward.1} parent=11 // pred_check
        %p1295 = pneg %p639
      $region106: #{ved_forward.1} parent=11 // pred_check_branch
        %1297 = sbr.rel (%p1295) target = $region108
      $region107: #{ved_forward.1} parent=11 // pred_region
        _
      $region108: #{ved_forward.1} parent=11 // pred_fallthru
        _
      // Predicated region
      $region109: #{ved_forward.1} parent=11 // pred_check
        %p1298 = pneg %p660
      $region110: #{ved_forward.1} parent=11 // pred_check_branch
        %1300 = sbr.rel (%p1298) target = $region112
      $region111: #{ved_forward.1} parent=11 // pred_region
        _
      $region112: #{ved_forward.1} parent=11 // pred_fallthru
        _
      // Predicated region
      $region113: #{ved_forward.1} parent=11 // pred_check
        %p1301 = pneg %p681
      $region114: #{ved_forward.1} parent=11 // pred_check_branch
        %1303 = sbr.rel (%p1301) target = $region116
      $region115: #{ved_forward.1} parent=11 // pred_region
        _
      $region116: #{ved_forward.1} parent=11 // pred_fallthru
        _
      // Predicated region
      $region117: #{ved_forward.1} parent=11 // pred_check
        %p1304 = pneg %p702
      $region118: #{ved_forward.1} parent=11 // pred_check_branch
        %1306 = sbr.rel (%p1304) target = $region120
      $region119: #{ved_forward.1} parent=11 // pred_region
        _
      $region120: #{ved_forward.1} parent=11 // pred_fallthru
        _
      // Predicated region
      $region121: #{ved_forward.1} parent=11 // pred_check
        %p1307 = pneg %p723
      $region122: #{ved_forward.1} parent=11 // pred_check_branch
        %1309 = sbr.rel (%p1307) target = $region124
      $region123: #{ved_forward.1} parent=11 // pred_region
        _
      $region124: #{ved_forward.1} parent=11 // pred_fallthru
        _
      // Predicated region
      $region125: #{ved_forward.1} parent=11 // pred_check
        %p1310 = pneg %p744
      $region126: #{ved_forward.1} parent=11 // pred_check_branch
        %1312 = sbr.rel (%p1310) target = $region128
      $region127: #{ved_forward.1} parent=11 // pred_region
        _
      $region128: #{ved_forward.1} parent=11 // pred_fallthru
        _
      // Predicated region
      $region129: #{ved_forward.1} parent=11 // pred_check
        %p1313 = pneg %p765
      $region130: #{ved_forward.1} parent=11 // pred_check_branch
        %1315 = sbr.rel (%p1313) target = $region132
      $region131: #{ved_forward.1} parent=11 // pred_region
        _
      $region132: #{ved_forward.1} parent=11 // pred_fallthru
        _
      // Predicated region
      $region133: #{ved_forward.1} parent=11 // pred_check
        %p1316 = pneg %p786
      $region134: #{ved_forward.1} parent=11 // pred_check_branch
        %1318 = sbr.rel (%p1316) target = $region136
      $region135: #{ved_forward.1} parent=11 // pred_region
        _
      $region136: #{ved_forward.1} parent=11 // pred_fallthru
        _
      // Predicated region
      $region137: #{ved_forward.1} parent=11 // pred_check
        %p1319 = pneg %p807
      $region138: #{ved_forward.1} parent=11 // pred_check_branch
        %1321 = sbr.rel (%p1319) target = $region140
      $region139: #{ved_forward.1} parent=11 // pred_region
        _
      $region140: #{ved_forward.1} parent=11 // pred_fallthru
        _
      // Predicated region
      $region141: #{ved_forward.1} parent=11 // pred_check
        %p1322 = pneg %p828
      $region142: #{ved_forward.1} parent=11 // pred_check_branch
        %1324 = sbr.rel (%p1322) target = $region144
      $region143: #{ved_forward.1} parent=11 // pred_region
        _
      $region144: #{ved_forward.1} parent=11 // pred_fallthru
        _
      // Predicated region
      $region145: #{ved_forward.1} parent=11 // pred_check
        %p1325 = pneg %p849
      $region146: #{ved_forward.1} parent=11 // pred_check_branch
        %1327 = sbr.rel (%p1325) target = $region148
      $region147: #{ved_forward.1} parent=11 // pred_region
        _
      $region148: #{ved_forward.1} parent=11 // pred_fallthru
        _
      // Predicated region
      $region149: #{ved_forward.1} parent=11 // pred_check
        %p1328 = pneg %p870
      $region150: #{ved_forward.1} parent=11 // pred_check_branch
        %1330 = sbr.rel (%p1328) target = $region152
      $region151: #{ved_forward.1} parent=11 // pred_region
        _
      $region152: #{ved_forward.1} parent=11 // pred_fallthru
        _
      // Predicated region
      $region153: #{ved_forward.1} parent=11 // pred_check
        %p1331 = pneg %p891
      $region154: #{ved_forward.1} parent=11 // pred_check_branch
        %1333 = sbr.rel (%p1331) target = $region156
      $region155: #{ved_forward.1} parent=11 // pred_region
        _
      $region156: #{ved_forward.1} parent=11 // pred_fallthru
        _
      // Predicated region
      $region157: #{ved_forward.1} parent=11 // pred_check
        %p1334 = pneg %p912
      $region158: #{ved_forward.1} parent=11 // pred_check_branch
        %1336 = sbr.rel (%p1334) target = $region160
      $region159: #{ved_forward.1} parent=11 // pred_region
        _
      $region160: #{ved_forward.1} parent=11 // pred_fallthru
        _
      // Predicated region
      $region161: #{ved_forward.1} parent=11 // pred_check
        %p1337 = pneg %p933
      $region162: #{ved_forward.1} parent=11 // pred_check_branch
        %1339 = sbr.rel (%p1337) target = $region164
      $region163: #{ved_forward.1} parent=11 // pred_region
        _
      $region164: #{ved_forward.1} parent=11 // pred_fallthru
        _
      // Predicated region
      $region165: #{ved_forward.1} parent=11 // pred_check
        %p1340 = pneg %p954
      $region166: #{ved_forward.1} parent=11 // pred_check_branch
        %1342 = sbr.rel (%p1340) target = $region168
      $region167: #{ved_forward.1} parent=11 // pred_region
        _
      $region168: #{ved_forward.1} parent=11 // pred_fallthru
        _
      // Predicated region
      $region169: #{ved_forward.1} parent=11 // pred_check
        %p1343 = pneg %p975
      $region170: #{ved_forward.1} parent=11 // pred_check_branch
        %1345 = sbr.rel (%p1343) target = $region172
      $region171: #{ved_forward.1} parent=11 // pred_region
        _
      $region172: #{ved_forward.1} parent=11 // pred_fallthru
        _
      // Predicated region
      $region173: #{ved_forward.1} parent=11 // pred_check
        %p1346 = pneg %p996
      $region174: #{ved_forward.1} parent=11 // pred_check_branch
        %1348 = sbr.rel (%p1346) target = $region176
      $region175: #{ved_forward.1} parent=11 // pred_region
        _
      $region176: #{ved_forward.1} parent=11 // pred_fallthru
        _
      // Predicated region
      $region177: #{ved_forward.1} parent=11 // pred_check
        %p1349 = pneg %p1017
      $region178: #{ved_forward.1} parent=11 // pred_check_branch
        %1351 = sbr.rel (%p1349) target = $region180
      $region179: #{ved_forward.1} parent=11 // pred_region
        _
      $region180: #{ved_forward.1} parent=11 // pred_fallthru
        _
      // Predicated region
      $region181: #{ved_forward.1} parent=11 // pred_check
        %p1352 = pneg %p1038
      $region182: #{ved_forward.1} parent=11 // pred_check_branch
        %1354 = sbr.rel (%p1352) target = $region184
      $region183: #{ved_forward.1} parent=11 // pred_region
        _
      $region184: #{ved_forward.1} parent=11 // pred_fallthru
        _
      // Predicated region
      $region185: #{ved_forward.1} parent=11 // pred_check
        %p1355 = pneg %p1059
      $region186: #{ved_forward.1} parent=11 // pred_check_branch
        %1357 = sbr.rel (%p1355) target = $region188
      $region187: #{ved_forward.1} parent=11 // pred_region
        _
      $region188: #{ved_forward.1} parent=11 // pred_fallthru
        _
      // Predicated region
      $region189: #{ved_forward.1} parent=11 // pred_check
        %p1358 = pneg %p1080
      $region190: #{ved_forward.1} parent=11 // pred_check_branch
        %1360 = sbr.rel (%p1358) target = $region192
      $region191: #{ved_forward.1} parent=11 // pred_region
        _
      $region192: #{ved_forward.1} parent=11 // pred_fallthru
        _
      // Predicated region
      $region193: #{ved_forward.1} parent=11 // pred_check
        %p1361 = pneg %p1101
      $region194: #{ved_forward.1} parent=11 // pred_check_branch
        %1363 = sbr.rel (%p1361) target = $region196
      $region195: #{ved_forward.1} parent=11 // pred_region
        _
      $region196: #{ved_forward.1} parent=11 // pred_fallthru
        _
      // Predicated region
      $region197: #{ved_forward.1} parent=11 // pred_check
        %p1364 = pneg %p1122
      $region198: #{ved_forward.1} parent=11 // pred_check_branch
        %1366 = sbr.rel (%p1364) target = $region200
      $region199: #{ved_forward.1} parent=11 // pred_region
        _
      $region200: #{ved_forward.1} parent=11 // pred_fallthru
        _
      // Predicated region
      $region201: #{ved_forward.1} parent=11 // pred_check
        %p1367 = pneg %p1143
      $region202: #{ved_forward.1} parent=11 // pred_check_branch
        %1369 = sbr.rel (%p1367) target = $region204
      $region203: #{ved_forward.1} parent=11 // pred_region
        _
      $region204: #{ved_forward.1} parent=11 // pred_fallthru
        _
      // Predicated region
      $region205: #{ved_forward.1} parent=11 // pred_check
        %p1370 = pneg %p1164
      $region206: #{ved_forward.1} parent=11 // pred_check_branch
        %1372 = sbr.rel (%p1370) target = $region208
      $region207: #{ved_forward.1} parent=11 // pred_region
        _
      $region208: #{ved_forward.1} parent=11 // pred_fallthru
        _
      // Predicated region
      $region209: #{ved_forward.1} parent=11 // pred_check
        %p1373 = pneg %p1185
      $region210: #{ved_forward.1} parent=11 // pred_check_branch
        %1375 = sbr.rel (%p1373) target = $region212
      $region211: #{ved_forward.1} parent=11 // pred_region
        _
      $region212: #{ved_forward.1} parent=11 // pred_fallthru
        _
    $region12: #{ved_forward.1} parent=5 // pred_fallthru
      _
    %p1376 = scmp.lt.s32.totalorder %s109, 2
    // Predicated region
    $region213: #{ved_forward.1} parent=5 // pred_check
      %p1377 = pneg %p1376
    $region214: #{ved_forward.1} parent=5 // pred_check_branch
      %1379 = sbr.rel (%p1377) target = $region216
    $region215: #{ved_forward.1} parent=5 // pred_region
      // Predicated region
      $region217: #{ved_forward.1} parent=215 // pred_check
        %p1380 = pneg %p129
      $region218: #{ved_forward.1} parent=215 // pred_check_branch
        %1382 = sbr.rel (%p1380) target = $region220
      $region219: #{ved_forward.1} parent=215 // pred_region
        %p1383 = scmp.lt.s32.totalorder %s109, 1
        %s1384 = scalar_select %p1383, %s109, 1
        %s1385 = smul.addr %s1384, 2
        %s1386 = smul.addr %s1385, 4
        %s1387 = scalar_lea.vmem %s1, %s1386
      $region220: #{ved_forward.1} parent=215 // pred_fallthru
        _
    $region216: #{ved_forward.1} parent=5 // pred_fallthru
      _
    %p1388 = scmp.le.s32.totalorder 1, %s109
    %p1389 = scmp.lt.s32.totalorder %s109, 3
    %p1390 = pnand %p1388, %p1389
    %p1391 = pneg %p1390
    // Predicated region
    $region221: #{ved_forward.1} parent=5 // pred_check
      _
    $region222: #{ved_forward.1} parent=5 // pred_check_branch
      %1393 = sbr.rel (%p1390) target = $region224
    $region223: #{ved_forward.1} parent=5 // pred_region
      %s1394 = ssub.s32 %s109, 1
      %p1395 = scmp.lt.s32.totalorder %s114, 1
      %s1396 = scalar_select %p1395, %s114, 1
      %s1397 = smul.addr %s1396, 2
      %s1398 = smul.addr %s1397, 4
      %s1399 = scalar_lea.vmem %s1, %s1398
      %p1400 = pneg %p135
      %p1401 = pneg %p132
      %p1402 = pneg %p156
      %p1403 = pneg %p153
      %p1404 = pneg %p177
      %p1405 = pneg %p174
      %p1406 = pneg %p198
      %p1407 = pneg %p195
      %p1408 = pneg %p219
      %p1409 = pneg %p216
      %p1410 = pneg %p240
      %p1411 = pneg %p237
      %p1412 = pneg %p261
      %p1413 = pneg %p258
      %p1414 = pneg %p282
      %p1415 = pneg %p279
      %p1416 = pneg %p303
      %p1417 = pneg %p300
      %p1418 = pneg %p324
      %p1419 = pneg %p321
      %p1420 = pneg %p345
      %p1421 = pneg %p342
      %p1422 = pneg %p366
      %p1423 = pneg %p363
      %p1424 = pneg %p387
      %p1425 = pneg %p384
      %p1426 = pneg %p408
      %p1427 = pneg %p405
      %p1428 = pneg %p429
      %p1429 = pneg %p426
      %p1430 = pneg %p450
      %p1431 = pneg %p447
      %p1432 = pneg %p471
      %p1433 = pneg %p468
      %p1434 = pneg %p492
      %p1435 = pneg %p489
      %p1436 = pneg %p513
      %p1437 = pneg %p510
      %p1438 = pneg %p534
      %p1439 = pneg %p531
      %p1440 = pneg %p555
      %p1441 = pneg %p552
      %p1442 = pneg %p576
      %p1443 = pneg %p573
      %p1444 = pneg %p597
      %p1445 = pneg %p594
      %p1446 = pneg %p618
      %p1447 = pneg %p615
      %p1448 = pneg %p639
      %p1449 = pneg %p636
      %p1450 = pneg %p660
      %p1451 = pneg %p657
      %p1452 = pneg %p681
      %p1453 = pneg %p678
      %p1454 = pneg %p702
      %p1455 = pneg %p699
      %p1456 = pneg %p723
      %p1457 = pneg %p720
      %p1458 = pneg %p744
      %p1459 = pneg %p741
      %p1460 = pneg %p765
      %p1461 = pneg %p762
      %p1462 = pneg %p786
      %p1463 = pneg %p783
      %p1464 = pneg %p807
      %p1465 = pneg %p804
      %p1466 = pneg %p828
      %p1467 = pneg %p825
      %p1468 = pneg %p849
      %p1469 = pneg %p846
      %p1470 = pneg %p870
      %p1471 = pneg %p867
      %p1472 = pneg %p891
      %p1473 = pneg %p888
      %p1474 = pneg %p912
      %p1475 = pneg %p909
      %p1476 = pneg %p933
      %p1477 = pneg %p930
      %p1478 = pneg %p954
      %p1479 = pneg %p951
      %p1480 = pneg %p975
      %p1481 = pneg %p972
      %p1482 = pneg %p996
      %p1483 = pneg %p993
      %p1484 = pneg %p1017
      %p1485 = pneg %p1014
      %p1486 = pneg %p1038
      %p1487 = pneg %p1035
      %p1488 = pneg %p1059
      %p1489 = pneg %p1056
      %p1490 = pneg %p1080
      %p1491 = pneg %p1077
      %p1492 = pneg %p1101
      %p1493 = pneg %p1098
      %p1494 = pneg %p1122
      %p1495 = pneg %p1119
      %p1496 = pneg %p1143
      %p1497 = pneg %p1140
      %p1498 = pneg %p1164
      %p1499 = pneg %p1161
      %p1500 = pneg %p1185
      %p1501 = pneg %p1182
      %p1502 = pneg %p1211
      %p1503 = pneg %p1208
      %p1504 = scmp.lt.s32.totalorder %s114, 1
      %s1505 = scalar_select %p1504, %s114, 1
      %s1506 = smul.addr %s1505, 2
      %s1507 = smul.addr %s1506, 4
      %s1508 = scalar_lea.vmem %s103, %s1507
      %p1509 = scmp.lt.s32.totalorder %s114, 1
      %s1510 = scalar_select %p1509, %s114, 1
      %s1511 = smul.addr %s1510, 2
      %s1512 = smul.addr %s1511, 4
      %s1513 = scalar_lea.vmem %s1, %s1512
      %p1514 = scmp.lt.s32.totalorder %s114, 1
      %s1515 = scalar_select %p1514, %s114, 1
      %s1516 = smul.addr %s1515, 2
      %s1517 = smul.addr %s1516, 4
      %s1518 = scalar_lea.vmem %s103, %s1517
      %v1520 = vld [vmem:[%s1513] sm:$0xff]
      %vm1521 = vcmask 1044464
      %1522 = vst.msk [vmem:[#allocation2] sm:$0xf] %vm1521, 0.0
      %v1524 = vcombine.high %v1520, %v1520
      %1526 = vst [vmem:[#allocation2 + $0x8] sm:$0xf] %v1520
      %1527 = vst [vmem:[#allocation2 + $0x10] sm:$0xf] %v1524
      %v1528 = vld [vmem:[%s101] sm:$0xf]
      %v1529 = vld [vmem:[%s99] sm:$0xf]
      %s1530 = scalar_lea.vmem [#allocation2], 2
      %v1531 = vld [vmem:[%s1530] ss:$8 sm:$0x7]
      %1533 = vset.pattern.permute.xlu0 0
      %1534 = vperm.xlu0 %1533, %v1528
      %v1535 = vpop.permute.xlu0 %1534
      %v1538 = vlaneseq
      %v1539 = vshrl.u32 %v1538, 7
      %v1540 = vsub.s32 0, %v1539
      %v1541 = vrot.slane %v1531, %v1540
      %v1542 = vlaneseq
      %v1543 = vshrl.u32 %v1542, 7
      %v1544 = vsub.s32 1, %v1543
      %v1545 = vrot.slane %v1531, %v1544
      %v1546 = vlaneseq
      %v1547 = vshrl.u32 %v1546, 7
      %v1548 = vsub.s32 2, %v1547
      %v1549 = vrot.slane %v1531, %v1548
      %v1553 = vmul.f32 %v1535, %v1541
      %v1554 = vmul.f32 %v1535, %v1545
      %v1555 = vmul.f32 %v1535, %v1549
      %1557 = vset.pattern.permute.xlu0 0
      %1558 = vperm.xlu0 %1557, %v1529
      %v1559 = vpop.permute.xlu0 %1558
      %v1561 = vadd.f32 %v1559, %v1553
      %v1562 = vadd.f32 %v1559, %v1554
      %v1563 = vadd.f32 %v1559, %v1555
      %s1564 = scalar_lea.vmem [#allocation2], 3
      %v1565 = vld [vmem:[%s1564] ss:$8 sm:$0x7]
      %1566 = vset.pattern.permute.xlu0 1
      %1567 = vperm.xlu0 %1566, %v1528
      %v1568 = vpop.permute.xlu0 %1567
      %v1571 = vlaneseq
      %v1572 = vshrl.u32 %v1571, 7
      %v1573 = vsub.s32 0, %v1572
      %v1574 = vrot.slane %v1565, %v1573
      %v1575 = vlaneseq
      %v1576 = vshrl.u32 %v1575, 7
      %v1577 = vsub.s32 1, %v1576
      %v1578 = vrot.slane %v1565, %v1577
      %v1579 = vlaneseq
      %v1580 = vshrl.u32 %v1579, 7
      %v1581 = vsub.s32 2, %v1580
      %v1582 = vrot.slane %v1565, %v1581
      %v1586 = vmul.f32 %v1568, %v1574
      %v1587 = vmul.f32 %v1568, %v1578
      %v1588 = vmul.f32 %v1568, %v1582
      %v1589 = vadd.f32 %v1561, %v1586
      %v1590 = vadd.f32 %v1562, %v1587
      %v1591 = vadd.f32 %v1563, %v1588
      %s1592 = scalar_lea.vmem [#allocation2], 8
      %v1593 = vld [vmem:[%s1592] ss:$8 sm:$0x3]
      %1594 = vset.pattern.permute.xlu0 2
      %1595 = vperm.xlu0 %1594, %v1528
      %v1596 = vpop.permute.xlu0 %1595
      %v1599 = vlaneseq
      %v1600 = vshrl.u32 %v1599, 7
      %v1601 = vsub.s32 0, %v1600
      %v1602 = vrot.slane %v1593, %v1601
      %v1603 = vlaneseq
      %v1604 = vshrl.u32 %v1603, 7
      %v1605 = vsub.s32 1, %v1604
      %v1606 = vrot.slane %v1593, %v1605
      %v1609 = vmul.f32 %v1596, %v1602
      %v1610 = vmul.f32 %v1596, %v1606
      %1613 = vrot.lane.b32.xlu0 %v1609, 127
      %v1614 = vpop.permute.xlu0 %1613
      %1615 = vrot.lane.b32.xlu0 %v1610, 127
      %v1616 = vpop.permute.xlu0 %1615
      %vm1617 = vcmask 1039360
      %v1618 = vsel %vm1617, %v1614, %v1616
      %v1622 = vadd.f32 %v1589, %v1614
      %v1623 = vadd.f32 %v1590, %v1618
      %v1624 = vadd.f32 %v1591, %v1616
      %s1625 = scalar_lea.vmem [#allocation2], 9
      %v1626 = vld [vmem:[%s1625] ss:$8 sm:$0x3]
      %1627 = vset.pattern.permute.xlu0 3
      %1628 = vperm.xlu0 %1627, %v1528
      %v1629 = vpop.permute.xlu0 %1628
      %v1632 = vlaneseq
      %v1633 = vshrl.u32 %v1632, 7
      %v1634 = vsub.s32 0, %v1633
      %v1635 = vrot.slane %v1626, %v1634
      %v1636 = vlaneseq
      %v1637 = vshrl.u32 %v1636, 7
      %v1638 = vsub.s32 1, %v1637
      %v1639 = vrot.slane %v1626, %v1638
      %v1642 = vmul.f32 %v1629, %v1635
      %v1643 = vmul.f32 %v1629, %v1639
      %1646 = vrot.lane.b32.xlu0 %v1642, 127
      %v1647 = vpop.permute.xlu0 %1646
      %1648 = vrot.lane.b32.xlu0 %v1643, 127
      %v1649 = vpop.permute.xlu0 %1648
      %v1650 = vsel %vm1617, %v1647, %v1649
      %v1654 = vadd.f32 %v1622, %v1647
      %v1655 = vadd.f32 %v1623, %v1650
      %v1656 = vadd.f32 %v1624, %v1649
      %s1657 = scalar_lea.vmem [#allocation2], 10
      %v1658 = vld [vmem:[%s1657] ss:$8 sm:$0x3]
      %1659 = vset.pattern.permute.xlu0 4
      %1660 = vperm.xlu0 %1659, %v1528
      %v1661 = vpop.permute.xlu0 %1660
      %v1664 = vlaneseq
      %v1665 = vshrl.u32 %v1664, 7
      %v1666 = vsub.s32 0, %v1665
      %v1667 = vrot.slane %v1658, %v1666
      %v1668 = vlaneseq
      %v1669 = vshrl.u32 %v1668, 7
      %v1670 = vsub.s32 1, %v1669
      %v1671 = vrot.slane %v1658, %v1670
      %v1674 = vmul.f32 %v1661, %v1667
      %v1675 = vmul.f32 %v1661, %v1671
      %1678 = vrot.lane.b32.xlu0 %v1674, 127
      %v1679 = vpop.permute.xlu0 %1678
      %1680 = vrot.lane.b32.xlu0 %v1675, 127
      %v1681 = vpop.permute.xlu0 %1680
      %v1682 = vsel %vm1617, %v1679, %v1681
      %v1686 = vadd.f32 %v1654, %v1679
      %v1687 = vadd.f32 %v1655, %v1682
      %v1688 = vadd.f32 %v1656, %v1681
      %vm1689 = vcmp.ge.f32.partialorder %v1686, 0.0
      %vm1690 = vcmp.ge.f32.partialorder %v1687, 0.0
      %vm1691 = vcmp.ge.f32.partialorder %v1688, 0.0
      %v1692 = vmul.f32 %v1686, 0.2
      %v1693 = vmul.f32 %v1687, 0.2
      %v1694 = vmul.f32 %v1688, 0.2
      %v1695 = vsel %vm1689, %v1686, %v1692
      %v1696 = vsel %vm1690, %v1687, %v1693
      %v1697 = vsel %vm1691, %v1688, %v1694
      %v1698 = vld [vmem:[%s5] sm:$0xf]
      %v1699 = vld [vmem:[%s5 + $0x4] sm:$0xf]
      %v1700 = vld [vmem:[%s5 + $0x8] sm:$0xf]
      %v1701 = vld [vmem:[%s5 + $0xc] sm:$0xf]
      %v1702 = vld [vmem:[%s5 + $0x10] sm:$0xf]
      %v1703 = vld [vmem:[%s5 + $0x14] sm:$0xf]
      %v1704 = vld [vmem:[%s5 + $0x18] sm:$0xf]
      %v1705 = vld [vmem:[%s5 + $0x1c] sm:$0xf]
      %v1706 = vld [vmem:[%s5 + $0x20] sm:$0xf]
      %v1707 = vld [vmem:[%s5 + $0x24] sm:$0xf]
      %v1708 = vld [vmem:[%s5 + $0x28] sm:$0xf]
      %v1709 = vld [vmem:[%s5 + $0x2c] sm:$0xf]
      %v1710 = vld [vmem:[%s5 + $0x30] sm:$0xf]
      %v1711 = vld [vmem:[%s5 + $0x34] sm:$0xf]
      %v1712 = vld [vmem:[%s5 + $0x38] sm:$0xf]
      %v1713 = vld [vmem:[%s5 + $0x3c] sm:$0xf]
      %v1714 = vld [vmem:[%s5 + $0x40] sm:$0xf]
      %v1715 = vld [vmem:[%s5 + $0x44] sm:$0xf]
      %v1716 = vld [vmem:[%s5 + $0x48] sm:$0xf]
      %v1717 = vld [vmem:[%s5 + $0x4c] sm:$0xf]
      %v1718 = vld [vmem:[%s5 + $0x50] sm:$0xf]
      %v1719 = vld [vmem:[%s5 + $0x54] sm:$0xf]
      %v1720 = vld [vmem:[%s5 + $0x58] sm:$0xf]
      %v1721 = vld [vmem:[%s5 + $0x5c] sm:$0xf]
      %v1722 = vld [vmem:[%s5 + $0x60] sm:$0xf]
      %v1723 = vld [vmem:[%s5 + $0x64] sm:$0xf]
      %v1724 = vld [vmem:[%s5 + $0x68] sm:$0xf]
      %v1725 = vld [vmem:[%s5 + $0x6c] sm:$0xf]
      %v1726 = vld [vmem:[%s5 + $0x70] sm:$0xf]
      %v1727 = vld [vmem:[%s5 + $0x74] sm:$0xf]
      %v1728 = vld [vmem:[%s5 + $0x78] sm:$0xf]
      %v1729 = vld [vmem:[%s5 + $0x7c] sm:$0xf]
      %v1730 = vpack.c.bf16 %v1695, %v1695
      %v1731 = vpack.c.bf16 %v1696, %v1696
      %v1732 = vpack.c.bf16 %v1697, %v1697
      %1736 = vrot.lane.b32.xlu0 %v1730, 1
      %v1737 = vpop.permute.xlu0 %1736
      %1738 = vrot.lane.b32.xlu0 %v1731, 1
      %v1739 = vpop.permute.xlu0 %1738
      %1740 = vrot.lane.b32.xlu0 %v1732, 1
      %v1741 = vpop.permute.xlu0 %1740
      %vm1742 = vcmask 7168
      %v1743 = vsel %vm1742, %v1737, %v1739
      %v1744 = vsel %vm1742, %v1739, %v1741
      %v1779 = vunpack.c.l.b16 %v1698
      %v1780 = vunpack.c.l.b16 %v1699
      %v1781 = vunpack.c.l.b16 %v1700
      %v1782 = vunpack.c.l.b16 %v1701
      %v1783 = vunpack.c.l.b16 %v1702
      %v1784 = vunpack.c.l.b16 %v1703
      %v1785 = vunpack.c.l.b16 %v1704
      %v1786 = vunpack.c.l.b16 %v1705
      %v1787 = vunpack.c.l.b16 %v1706
      %v1788 = vunpack.c.l.b16 %v1707
      %v1789 = vunpack.c.l.b16 %v1708
      %v1790 = vunpack.c.l.b16 %v1709
      %v1791 = vunpack.c.l.b16 %v1710
      %v1792 = vunpack.c.l.b16 %v1711
      %v1793 = vunpack.c.l.b16 %v1712
      %v1794 = vunpack.c.l.b16 %v1713
      %v1795 = vunpack.c.l.b16 %v1714
      %v1796 = vunpack.c.l.b16 %v1715
      %v1797 = vunpack.c.l.b16 %v1716
      %v1798 = vunpack.c.l.b16 %v1717
      %v1799 = vunpack.c.l.b16 %v1718
      %v1800 = vunpack.c.l.b16 %v1719
      %v1801 = vunpack.c.l.b16 %v1720
      %v1802 = vunpack.c.l.b16 %v1721
      %v1803 = vunpack.c.l.b16 %v1722
      %v1804 = vunpack.c.l.b16 %v1723
      %v1805 = vunpack.c.l.b16 %v1724
      %v1806 = vunpack.c.l.b16 %v1725
      %v1807 = vunpack.c.l.b16 %v1726
      %v1808 = vunpack.c.l.b16 %v1727
      %v1809 = vunpack.c.l.b16 %v1728
      %v1810 = vunpack.c.l.b16 %v1729
      %v1811 = vpack.c.b16 %v1780, %v1779
      %v1812 = vpack.c.b16 %v1782, %v1781
      %v1813 = vpack.c.b16 %v1784, %v1783
      %v1814 = vpack.c.b16 %v1786, %v1785
      %v1815 = vpack.c.b16 %v1788, %v1787
      %v1816 = vpack.c.b16 %v1790, %v1789
      %v1817 = vpack.c.b16 %v1792, %v1791
      %v1818 = vpack.c.b16 %v1794, %v1793
      %v1819 = vpack.c.b16 %v1796, %v1795
      %v1820 = vpack.c.b16 %v1798, %v1797
      %v1821 = vpack.c.b16 %v1800, %v1799
      %v1822 = vpack.c.b16 %v1802, %v1801
      %v1823 = vpack.c.b16 %v1804, %v1803
      %v1824 = vpack.c.b16 %v1806, %v1805
      %v1825 = vpack.c.b16 %v1808, %v1807
      %v1826 = vpack.c.b16 %v1810, %v1809
      %1843 = vmatprep.subr.bf16.mxu0 0
      %1844 = vmatpush1.bf16.msra.mxu0 %v1811
      %1845 = vmatprep.subr.bf16.mxu0 0
      %1846 = vmatpush1.bf16.msra.mxu0 %v1812
      %1847 = vmatprep.subr.bf16.mxu0 0
      %1848 = vmatpush1.bf16.msra.mxu0 %v1813
      %1849 = vmatprep.subr.bf16.mxu0 0
      %1850 = vmatpush1.bf16.msra.mxu0 %v1814
      %1851 = vmatprep.subr.bf16.mxu0 0
      %1852 = vmatpush1.bf16.msra.mxu0 %v1815
      %1853 = vmatprep.subr.bf16.mxu0 0
      %1854 = vmatpush1.bf16.msra.mxu0 %v1816
      %1855 = vmatprep.subr.bf16.mxu0 0
      %1856 = vmatpush1.bf16.msra.mxu0 %v1817
      %1857 = vmatprep.subr.bf16.mxu0 0
      %1858 = vmatpush1.bf16.msra.mxu0 %v1818
      %1859 = vmatprep.subr.bf16.mxu0 0
      %1860 = vmatpush1.bf16.msra.mxu0 %v1819
      %1861 = vmatprep.subr.bf16.mxu0 0
      %1862 = vmatpush1.bf16.msra.mxu0 %v1820
      %1863 = vmatprep.subr.bf16.mxu0 0
      %1864 = vmatpush1.bf16.msra.mxu0 %v1821
      %1865 = vmatprep.subr.bf16.mxu0 0
      %1866 = vmatpush1.bf16.msra.mxu0 %v1822
      %1867 = vmatprep.subr.bf16.mxu0 0
      %1868 = vmatpush1.bf16.msra.mxu0 %v1823
      %1869 = vmatprep.subr.bf16.mxu0 0
      %1870 = vmatpush1.bf16.msra.mxu0 %v1824
      %1871 = vmatprep.subr.bf16.mxu0 0
      %1872 = vmatpush1.bf16.msra.mxu0 %v1825
      %1873 = vmatprep.subr.bf16.mxu0 0
      %1874 = vmatpush1.bf16.msra.mxu0 %v1826
      %1875 = vmatprep.mubr.bf16.mxu0 %v1744
      %1876 = vmatmul.mubr.bf16.gmra.mrb[0].mxu0 %v1743
      %v1877 = vpop.f32.mrb[0].mxu0
      %v1878 = vadd.f32 0.0, %v1877
      %v1879 = vpop.f32.mrb[0].mxu0
      %v1880 = vpop.f32.mrb[0].mxu0
      %v1881 = vpop.f32.mrb[0].mxu0
      %1882 = vdwg.mxu0
      %v1883 = vld [vmem:[%s37] sm:$0xf]
      %v1884 = vpack.c.bf16 %v1878, %v1878
      %v1885 = vld [vmem:[%s31] sm:$0xff]
      %1887 = vset.pattern.permute.xlu0 0
      %1888 = vperm.xlu0 %1887, %v1885
      %v1889 = vpop.permute.xlu0 %1888
      %vm1891 = vcmask 31744
      %v1893 = vsel %vm1891, %v1883, 0
      %vm1895 = vcmask 1041408
      %v1897 = vsel %vm1895, %v1884, 0
      %1899 = vmatprep.subr.bf16.mxu0 0
      %1900 = vmatpush1.bf16.msra.mxu0 %v1897
      %1901 = vmatprep.subr.bf16.mxu0 0
      %1902 = vmatpush1.bf16.msra.mxu0 0
      %1903 = vmatprep.subr.bf16.mxu0 0
      %1904 = vmatpush1.bf16.msra.mxu0 0
      %1905 = vmatprep.subr.bf16.mxu0 0
      %1906 = vmatpush1.bf16.msra.mxu0 0
      %1907 = vmatprep.subr.bf16.mxu0 0
      %1908 = vmatpush1.bf16.msra.mxu0 0
      %1909 = vmatprep.subr.bf16.mxu0 0
      %1910 = vmatpush1.bf16.msra.mxu0 0
      %1911 = vmatprep.subr.bf16.mxu0 0
      %1912 = vmatpush1.bf16.msra.mxu0 0
      %1913 = vmatprep.subr.bf16.mxu0 0
      %1914 = vmatpush1.bf16.msra.mxu0 0
      %1915 = vmatprep.subr.bf16.mxu0 0
      %1916 = vmatpush1.bf16.msra.mxu0 0
      %1917 = vmatprep.subr.bf16.mxu0 0
      %1918 = vmatpush1.bf16.msra.mxu0 0
      %1919 = vmatprep.subr.bf16.mxu0 0
      %1920 = vmatpush1.bf16.msra.mxu0 0
      %1921 = vmatprep.subr.bf16.mxu0 0
      %1922 = vmatpush1.bf16.msra.mxu0 0
      %1923 = vmatprep.subr.bf16.mxu0 0
      %1924 = vmatpush1.bf16.msra.mxu0 0
      %1925 = vmatprep.subr.bf16.mxu0 0
      %1926 = vmatpush1.bf16.msra.mxu0 0
      %1927 = vmatprep.subr.bf16.mxu0 0
      %1928 = vmatpush1.bf16.msra.mxu0 0
      %1929 = vmatprep.subr.bf16.mxu0 0
      %1930 = vmatpush1.bf16.msra.mxu0 0
      %1931 = vmatprep.mubr.bf16.mxu0 0
      %1932 = vmatmul.mubr.bf16.gmra.mrb[0].mxu0 %v1893
      %v1933 = vpop.f32.mrb[0].mxu0
      %v1934 = vadd.f32 %v1889, %v1933
      %v1935 = vpop.f32.mrb[0].mxu0
      %v1936 = vpop.f32.mrb[0].mxu0
      %v1937 = vpop.f32.mrb[0].mxu0
      %1938 = vdwg.mxu0
      %vm1939 = vcmask 15360
      %1940 = vst.msk [vmem:[#allocation2 + $0x8] sm:$0xff] %vm1939, 0.0
      %1941 = vst.msk [vmem:[#allocation2 + $0x28] sm:$0xff] %vm1939, 0.0
      %vm1942 = vcmask 11264
      %1943 = vst.msk [vmem:[#allocation2 + $0x48] sm:$0xf] %vm1942, 0.0
      %vm1944 = vcmask 1048560
      %1945 = vst.msk [vmem:[#allocation2 + $0x10] sm:$0xff] %vm1944, 0.0
      %1946 = vst.msk [vmem:[#allocation2 + $0x30] sm:$0xff] %vm1944, 0.0
      %1947 = vst.msk [vmem:[#allocation2 + $0x50] sm:$0xf] %vm1521, 0.0
      %1951 = vrot.lane.b32.xlu0 %v1695, 3
      %v1952 = vpop.permute.xlu0 %1951
      %1953 = vrot.lane.b32.xlu0 %v1696, 3
      %v1954 = vpop.permute.xlu0 %1953
      %1955 = vrot.lane.b32.xlu0 %v1697, 3
      %v1956 = vpop.permute.xlu0 %1955
      %vm1957 = vcmask 23552
      %v1958 = vsel %vm1957, %v1952, %v1954
      %v1959 = vsel %vm1957, %v1954, %v1956
      %vm1963 = vcmask 1043472
      %1964 = vst.msk [vmem:[#allocation2 + $0x8] sm:$0xf] %vm1963, %v1958
      %1965 = vst [vmem:[#allocation2 + $0x10] sm:$0xf] %v1959
      %1966 = vst.msk [vmem:[#allocation2 + $0x18] sm:$0xf] %vm1942, %v1956
      %v1967 = vrot.slane %v1695, 4
      %v1968 = vrot.slane %v1696, 4
      %v1969 = vrot.slane %v1697, 4
      %1970 = vrot.lane.b32.xlu0 %v1967, 2
      %v1971 = vpop.permute.xlu0 %1970
      %1972 = vrot.lane.b32.xlu0 %v1968, 2
      %v1973 = vpop.permute.xlu0 %1972
      %1974 = vrot.lane.b32.xlu0 %v1969, 2
      %v1975 = vpop.permute.xlu0 %1974
      %v1976 = vsel %vm1939, %v1971, %v1973
      %v1977 = vsel %vm1939, %v1973, %v1975
      %vm1981 = vcmask 1047564
      %1982 = vst.msk [vmem:[#allocation2 + $0x8] sm:$0xf0] %vm1981, %v1976
      %1983 = vst [vmem:[#allocation2 + $0x10] sm:$0xf0] %v1977
      %vm1984 = vcmask 7172
      %1985 = vst.msk [vmem:[#allocation2 + $0x18] sm:$0xf0] %vm1984, %v1975
      %1986 = vrot.lane.b32.xlu0 %v1695, 1
      %v1987 = vpop.permute.xlu0 %1986
      %1988 = vrot.lane.b32.xlu0 %v1696, 1
      %v1989 = vpop.permute.xlu0 %1988
      %1990 = vrot.lane.b32.xlu0 %v1697, 1
      %v1991 = vpop.permute.xlu0 %1990
      %vm1992 = vcmask 7168
      %v1993 = vsel %vm1992, %v1987, %v1989
      %v1994 = vsel %vm1992, %v1989, %v1991
      %1997 = vst [vmem:[#allocation2 + $0x28] sm:$0xf] %v1993
      %1998 = vst [vmem:[#allocation2 + $0x30] sm:$0xf] %v1994
      %vm2002 = vcmask 1048572
      %2003 = vst.msk [vmem:[#allocation2 + $0x20] sm:$0xf0] %vm2002, %v1967
      %2004 = vst [vmem:[#allocation2 + $0x28] sm:$0xf0] %v1968
      %vm2005 = vcmask 1039364
      %2006 = vst.msk [vmem:[#allocation2 + $0x30] sm:$0xf0] %vm2005, %v1969
      %2007 = vrot.lane.b32.xlu0 %v1695, 127
      %v2008 = vpop.permute.xlu0 %2007
      %2009 = vrot.lane.b32.xlu0 %v1696, 127
      %v2010 = vpop.permute.xlu0 %2009
      %2011 = vrot.lane.b32.xlu0 %v1697, 127
      %v2012 = vpop.permute.xlu0 %2011
      %v2013 = vsel %vm1617, %v2008, %v2010
      %v2014 = vsel %vm1617, %v2010, %v2012
      %2018 = vst.msk [vmem:[#allocation2 + $0x40] sm:$0xf] %vm1521, %v2013
      %2019 = vst [vmem:[#allocation2 + $0x48] sm:$0xf] %v2014
      %vm2020 = vcmask 1027072
      %2021 = vst.msk [vmem:[#allocation2 + $0x50] sm:$0xf] %vm2020, %v2012
      %v2022 = vld [vmem:[%s33] sm:$0xf]
      %v2023 = vld [vmem:[#allocation2 + $0x8] sm:$0xff]
      %v2024 = vld [vmem:[#allocation2 + $0x10] sm:$0xff]
      %v2025 = vld [vmem:[#allocation2 + $0x28] sm:$0xff]
      %v2026 = vld [vmem:[#allocation2 + $0x30] sm:$0xff]
      %v2027 = vld [vmem:[#allocation2 + $0x48] sm:$0xf]
      %v2028 = vld [vmem:[#allocation2 + $0x50] sm:$0xf]
      %v2029 = vpack.c.bf16 %v2025, %v2023
      %v2030 = vpack.c.bf16 %v2026, %v2024
      %v2031 = vpack.c.bf16 %v2027, %v2027
      %v2032 = vpack.c.bf16 %v2028, %v2028
      %vm2033 = vcmask 162816
      %v2035 = vsel %vm2033, %v2022, 0
      %v2038 = vsel %vm1895, %v2031, 0
      %v2041 = vsel %vm1895, %v2032, 0
      %2043 = vmatprep.subr.bf16.mxu0 %v2030
      %2044 = vmatpush1.bf16.msra.mxu0 %v2029
      %2045 = vmatprep.subr.bf16.mxu0 %v2041
      %2046 = vmatpush1.bf16.msra.mxu0 %v2038
      %2047 = vmatprep.subr.bf16.mxu0 0
      %2048 = vmatpush1.bf16.msra.mxu0 0
      %2049 = vmatprep.subr.bf16.mxu0 0
      %2050 = vmatpush1.bf16.msra.mxu0 0
      %2051 = vmatprep.subr.bf16.mxu0 0
      %2052 = vmatpush1.bf16.msra.mxu0 0
      %2053 = vmatprep.subr.bf16.mxu0 0
      %2054 = vmatpush1.bf16.msra.mxu0 0
      %2055 = vmatprep.subr.bf16.mxu0 0
      %2056 = vmatpush1.bf16.msra.mxu0 0
      %2057 = vmatprep.subr.bf16.mxu0 0
      %2058 = vmatpush1.bf16.msra.mxu0 0
      %2059 = vmatprep.subr.bf16.mxu0 0
      %2060 = vmatpush1.bf16.msra.mxu0 0
      %2061 = vmatprep.subr.bf16.mxu0 0
      %2062 = vmatpush1.bf16.msra.mxu0 0
      %2063 = vmatprep.subr.bf16.mxu0 0
      %2064 = vmatpush1.bf16.msra.mxu0 0
      %2065 = vmatprep.subr.bf16.mxu0 0
      %2066 = vmatpush1.bf16.msra.mxu0 0
      %2067 = vmatprep.subr.bf16.mxu0 0
      %2068 = vmatpush1.bf16.msra.mxu0 0
      %2069 = vmatprep.subr.bf16.mxu0 0
      %2070 = vmatpush1.bf16.msra.mxu0 0
      %2071 = vmatprep.subr.bf16.mxu0 0
      %2072 = vmatpush1.bf16.msra.mxu0 0
      %2073 = vmatprep.subr.bf16.mxu0 0
      %2074 = vmatpush1.bf16.msra.mxu0 0
      %2075 = vmatprep.mubr.bf16.mxu0 0
      %2076 = vmatmul.mubr.bf16.gmra.mrb[0].mxu0 %v2035
      %v2077 = vpop.f32.mrb[0].mxu0
      %v2078 = vadd.f32 0.0, %v2077
      %v2079 = vpop.f32.mrb[0].mxu0
      %v2080 = vadd.f32 0.0, %v2079
      %v2081 = vpop.f32.mrb[0].mxu0
      %v2082 = vpop.f32.mrb[0].mxu0
      %2083 = vdwg.mxu0
      %v2084 = vpack.c.bf16 %v2078, %v2078
      %v2085 = vpack.c.bf16 %v2080, %v2080
      %v2086 = vld [vmem:[%s27] sm:$0xff]
      %2088 = vset.pattern.permute.xlu0 0
      %2089 = vperm.xlu0 %2088, %v2086
      %v2090 = vpop.permute.xlu0 %2089
      %2092 = vmatprep.subr.bf16.mxu0 0
      %2093 = vmatpush1.bf16.msra.mxu0 %v1811
      %2094 = vmatprep.subr.bf16.mxu0 0
      %2095 = vmatpush1.bf16.msra.mxu0 %v1812
      %2096 = vmatprep.subr.bf16.mxu0 0
      %2097 = vmatpush1.bf16.msra.mxu0 %v1813
      %2098 = vmatprep.subr.bf16.mxu0 0
      %2099 = vmatpush1.bf16.msra.mxu0 %v1814
      %2100 = vmatprep.subr.bf16.mxu0 0
      %2101 = vmatpush1.bf16.msra.mxu0 %v1815
      %2102 = vmatprep.subr.bf16.mxu0 0
      %2103 = vmatpush1.bf16.msra.mxu0 %v1816
      %2104 = vmatprep.subr.bf16.mxu0 0
      %2105 = vmatpush1.bf16.msra.mxu0 %v1817
      %2106 = vmatprep.subr.bf16.mxu0 0
      %2107 = vmatpush1.bf16.msra.mxu0 %v1818
      %2108 = vmatprep.subr.bf16.mxu0 0
      %2109 = vmatpush1.bf16.msra.mxu0 %v1819
      %2110 = vmatprep.subr.bf16.mxu0 0
      %2111 = vmatpush1.bf16.msra.mxu0 %v1820
      %2112 = vmatprep.subr.bf16.mxu0 0
      %2113 = vmatpush1.bf16.msra.mxu0 %v1821
      %2114 = vmatprep.subr.bf16.mxu0 0
      %2115 = vmatpush1.bf16.msra.mxu0 %v1822
      %2116 = vmatprep.subr.bf16.mxu0 0
      %2117 = vmatpush1.bf16.msra.mxu0 %v1823
      %2118 = vmatprep.subr.bf16.mxu0 0
      %2119 = vmatpush1.bf16.msra.mxu0 %v1824
      %2120 = vmatprep.subr.bf16.mxu0 0
      %2121 = vmatpush1.bf16.msra.mxu0 %v1825
      %2122 = vmatprep.subr.bf16.mxu0 0
      %2123 = vmatpush1.bf16.msra.mxu0 %v1826
      %2124 = vmatprep.mubr.bf16.mxu0 %v2085
      %2125 = vmatmul.mubr.bf16.gmra.mrb[0].mxu0 %v2084
      %v2126 = vpop.f32.mrb[0].mxu0
      %v2127 = vadd.f32 %v2090, %v2126
      %v2128 = vpop.f32.mrb[0].mxu0
      %v2129 = vpop.f32.mrb[0].mxu0
      %v2130 = vpop.f32.mrb[0].mxu0
      %2131 = vdwg.mxu0
      %vm2132 = vcmp.ge.f32.partialorder %v2127, 0.0
      %v2133 = vmul.f32 %v2127, 0.2
      %v2134 = vsel %vm2132, %v2127, %v2133
      %2135 = vst.msk [vmem:[#allocation2 + $0x8] sm:$0xff] %vm1939, 0.0
      %2136 = vst.msk [vmem:[#allocation2 + $0x28] sm:$0xff] %vm1939, 0.0
      %2137 = vst.msk [vmem:[#allocation2 + $0x48] sm:$0xff] %vm1939, 0.0
      %2138 = vst.msk [vmem:[#allocation2 + $0x68] sm:$0xff] %vm1939, 0.0
      %2139 = vst.msk [vmem:[#allocation2 + $0x88] sm:$0xff] %vm1939, 0.0
      %vm2140 = vcmask 523760
      %2141 = vst.msk [vmem:[#allocation2 + $0x8] sm:$0xff] %vm2140, 0.0
      %2142 = vst.msk [vmem:[#allocation2 + $0x28] sm:$0xff] %vm2140, 0.0
      %2143 = vst.msk [vmem:[#allocation2 + $0x48] sm:$0xff] %vm2140, 0.0
      %2144 = vst.msk [vmem:[#allocation2 + $0x68] sm:$0xff] %vm2140, 0.0
      %2145 = vst.msk [vmem:[#allocation2 + $0x88] sm:$0xff] %vm2140, 0.0
      %2147 = vrot.lane.b32.xlu0 %v2134, 2
      %v2148 = vpop.permute.xlu0 %2147
      %vm2150 = vcmask 539664
      %2151 = vst.msk [vmem:[#allocation2 + $0x8] sm:$0xff] %vm2150, %v2148
      %2152 = vrot.lane.b32.xlu0 %v2134, 1
      %v2153 = vpop.permute.xlu0 %2152
      %vm2155 = vcmask 531464
      %2156 = vst.msk [vmem:[#allocation2 + $0x28] sm:$0xff] %vm2155, %v2153
      %vm2157 = vcmask 523264
      %2158 = vst.msk [vmem:[#allocation2 + $0x48] sm:$0xff] %vm2157, %v2134
      %2159 = vrot.lane.b32.xlu0 %v2134, 127
      %v2160 = vpop.permute.xlu0 %2159
      %vm2162 = vcmask 1048568
      %2163 = vst.msk [vmem:[#allocation2 + $0x60] sm:$0xff] %vm2162, %v2160
      %vm2164 = vcmask 515072
      %2165 = vst.msk [vmem:[#allocation2 + $0x68] sm:$0xff] %vm2164, %v2160
      %2166 = vrot.lane.b32.xlu0 %v2134, 126
      %v2167 = vpop.permute.xlu0 %2166
      %2169 = vst.msk [vmem:[#allocation2 + $0x80] sm:$0xff] %vm1944, %v2167
      %vm2170 = vcmask 506880
      %2171 = vst.msk [vmem:[#allocation2 + $0x88] sm:$0xff] %vm2170, %v2167
      %v2172 = vld [vmem:[%s35] sm:$0xf]
      %v2173 = vld [vmem:[#allocation2 + $0x8] sm:$0xff]
      %v2174 = vld [vmem:[#allocation2 + $0x28] sm:$0xff]
      %v2175 = vld [vmem:[#allocation2 + $0x48] sm:$0xff]
      %v2176 = vld [vmem:[#allocation2 + $0x68] sm:$0xff]
      %v2177 = vld [vmem:[#allocation2 + $0x88] sm:$0xff]
      %v2178 = vpack.c.bf16 %v2174, %v2173
      %v2179 = vpack.c.bf16 %v2176, %v2175
      %v2180 = vpack.c.bf16 %v2177, %v2177
      %v2181 = vld [vmem:[%s29] sm:$0xff]
      %2183 = vset.pattern.permute.xlu0 0
      %2184 = vperm.xlu0 %2183, %v2181
      %v2185 = vpop.permute.xlu0 %2184
      %vm2187 = vcmask 326656
      %v2189 = vsel %vm2187, %v2172, 0
      %vm2191 = vcmask 1043456
      %v2193 = vsel %vm2191, %v2180, 0
      %2195 = vmatprep.subr.bf16.mxu0 0
      %2196 = vmatpush1.bf16.msra.mxu0 %v2178
      %2197 = vmatprep.subr.bf16.mxu0 0
      %2198 = vmatpush1.bf16.msra.mxu0 %v2179
      %2199 = vmatprep.subr.bf16.mxu0 0
      %2200 = vmatpush1.bf16.msra.mxu0 %v2193
      %2201 = vmatprep.subr.bf16.mxu0 0
      %2202 = vmatpush1.bf16.msra.mxu0 0
      %2203 = vmatprep.subr.bf16.mxu0 0
      %2204 = vmatpush1.bf16.msra.mxu0 0
      %2205 = vmatprep.subr.bf16.mxu0 0
      %2206 = vmatpush1.bf16.msra.mxu0 0
      %2207 = vmatprep.subr.bf16.mxu0 0
      %2208 = vmatpush1.bf16.msra.mxu0 0
      %2209 = vmatprep.subr.bf16.mxu0 0
      %2210 = vmatpush1.bf16.msra.mxu0 0
      %2211 = vmatprep.subr.bf16.mxu0 0
      %2212 = vmatpush1.bf16.msra.mxu0 0
      %2213 = vmatprep.subr.bf16.mxu0 0
      %2214 = vmatpush1.bf16.msra.mxu0 0
      %2215 = vmatprep.subr.bf16.mxu0 0
      %2216 = vmatpush1.bf16.msra.mxu0 0
      %2217 = vmatprep.subr.bf16.mxu0 0
      %2218 = vmatpush1.bf16.msra.mxu0 0
      %2219 = vmatprep.subr.bf16.mxu0 0
      %2220 = vmatpush1.bf16.msra.mxu0 0
      %2221 = vmatprep.subr.bf16.mxu0 0
      %2222 = vmatpush1.bf16.msra.mxu0 0
      %2223 = vmatprep.subr.bf16.mxu0 0
      %2224 = vmatpush1.bf16.msra.mxu0 0
      %2225 = vmatprep.subr.bf16.mxu0 0
      %2226 = vmatpush1.bf16.msra.mxu0 0
      %2227 = vmatprep.mubr.bf16.mxu0 0
      %2228 = vmatmul.mubr.bf16.gmra.mrb[0].mxu0 %v2189
      %v2229 = vpop.f32.mrb[0].mxu0
      %v2230 = vadd.f32 %v2185, %v2229
      %v2231 = vpop.f32.mrb[0].mxu0
      %v2232 = vpop.f32.mrb[0].mxu0
      %v2233 = vpop.f32.mrb[0].mxu0
      %2234 = vdwg.mxu0
      %v2235 = vadd.f32 %v2230, %v1934
      %vm2236 = vcmp.ge.f32.partialorder %v2235, 0.0
      %v2237 = vmul.f32 %v2235, 0.2
      %v2238 = vsel %vm2236, %v2235, %v2237
      %v2239 = vld [vmem:[%s7] sm:$0xf]
      %v2240 = vld [vmem:[%s7 + $0x4] sm:$0xf]
      %v2241 = vld [vmem:[%s7 + $0x8] sm:$0xf]
      %v2242 = vld [vmem:[%s7 + $0xc] sm:$0xf]
      %v2243 = vld [vmem:[%s7 + $0x10] sm:$0xf]
      %v2244 = vld [vmem:[%s7 + $0x14] sm:$0xf]
      %v2245 = vld [vmem:[%s7 + $0x18] sm:$0xf]
      %v2246 = vld [vmem:[%s7 + $0x1c] sm:$0xf]
      %v2247 = vpack.c.bf16 %v2238, %v2238
      %v2256 = vunpack.c.l.b16 %v2239
      %v2257 = vunpack.c.l.b16 %v2240
      %v2258 = vunpack.c.l.b16 %v2241
      %v2259 = vunpack.c.l.b16 %v2242
      %v2260 = vunpack.c.l.b16 %v2243
      %v2261 = vunpack.c.l.b16 %v2244
      %v2262 = vunpack.c.l.b16 %v2245
      %v2263 = vunpack.c.l.b16 %v2246
      %v2264 = vpack.c.b16 %v2257, %v2256
      %v2265 = vpack.c.b16 %v2259, %v2258
      %v2266 = vpack.c.b16 %v2261, %v2260
      %v2267 = vpack.c.b16 %v2263, %v2262
      %v2273 = vsel %vm2157, %v2247, 0
      %2275 = vmatprep.subr.bf16.mxu0 0
      %2276 = vmatpush1.bf16.msra.mxu0 %v2264
      %2277 = vmatprep.subr.bf16.mxu0 0
      %2278 = vmatpush1.bf16.msra.mxu0 %v2265
      %2279 = vmatprep.subr.bf16.mxu0 0
      %2280 = vmatpush1.bf16.msra.mxu0 %v2266
      %2281 = vmatprep.subr.bf16.mxu0 0
      %2282 = vmatpush1.bf16.msra.mxu0 %v2267
      %2283 = vmatprep.subr.bf16.mxu0 0
      %2284 = vmatpush1.bf16.msra.mxu0 0
      %2285 = vmatprep.subr.bf16.mxu0 0
      %2286 = vmatpush1.bf16.msra.mxu0 0
      %2287 = vmatprep.subr.bf16.mxu0 0
      %2288 = vmatpush1.bf16.msra.mxu0 0
      %2289 = vmatprep.subr.bf16.mxu0 0
      %2290 = vmatpush1.bf16.msra.mxu0 0
      %2291 = vmatprep.subr.bf16.mxu0 0
      %2292 = vmatpush1.bf16.msra.mxu0 0
      %2293 = vmatprep.subr.bf16.mxu0 0
      %2294 = vmatpush1.bf16.msra.mxu0 0
      %2295 = vmatprep.subr.bf16.mxu0 0
      %2296 = vmatpush1.bf16.msra.mxu0 0
      %2297 = vmatprep.subr.bf16.mxu0 0
      %2298 = vmatpush1.bf16.msra.mxu0 0
      %2299 = vmatprep.subr.bf16.mxu0 0
      %2300 = vmatpush1.bf16.msra.mxu0 0
      %2301 = vmatprep.subr.bf16.mxu0 0
      %2302 = vmatpush1.bf16.msra.mxu0 0
      %2303 = vmatprep.subr.bf16.mxu0 0
      %2304 = vmatpush1.bf16.msra.mxu0 0
      %2305 = vmatprep.subr.bf16.mxu0 0
      %2306 = vmatpush1.bf16.msra.mxu0 0
      %2307 = vmatprep.mubr.bf16.mxu0 0
      %2308 = vmatmul.mubr.bf16.gmra.mrb[0].mxu0 %v2273
      %v2309 = vpop.f32.mrb[0].mxu0
      %v2310 = vadd.f32 0.0, %v2309
      %v2311 = vpop.f32.mrb[0].mxu0
      %v2312 = vpop.f32.mrb[0].mxu0
      %v2313 = vpop.f32.mrb[0].mxu0
      %2314 = vdwg.mxu0
      %v2315 = vld [vmem:[%s49] sm:$0xf]
      %v2316 = vld [vmem:[%s49 + $0x4] sm:$0xf]
      %v2317 = vpack.c.bf16 %v2310, %v2310
      %v2318 = vld [vmem:[%s43] sm:$0xff]
      %v2319 = vld [vmem:[%s43 + $0x8] sm:$0xff]
      %2321 = vset.pattern.permute.xlu0 0
      %2322 = vperm.xlu0 %2321, %v2318
      %v2323 = vpop.permute.xlu0 %2322
      %2326 = vset.pattern.permute.xlu0 0
      %2327 = vperm.xlu0 %2326, %v2319
      %v2328 = vpop.permute.xlu0 %2327
      %v2332 = vunpack.c.l.b16 %v2315
      %v2333 = vunpack.c.l.b16 %v2316
      %v2334 = vpack.c.b16 %v2333, %v2332
      %vm2335 = vcmask 64512
      %v2337 = vsel %vm2335, %v2334, 0
      %v2340 = vsel %vm2191, %v2317, 0
      %2342 = vmatprep.subr.bf16.mxu0 0
      %2343 = vmatpush1.bf16.msra.mxu0 %v2340
      %2344 = vmatprep.subr.bf16.mxu0 0
      %2345 = vmatpush1.bf16.msra.mxu0 0
      %2346 = vmatprep.subr.bf16.mxu0 0
      %2347 = vmatpush1.bf16.msra.mxu0 0
      %2348 = vmatprep.subr.bf16.mxu0 0
      %2349 = vmatpush1.bf16.msra.mxu0 0
      %2350 = vmatprep.subr.bf16.mxu0 0
      %2351 = vmatpush1.bf16.msra.mxu0 0
      %2352 = vmatprep.subr.bf16.mxu0 0
      %2353 = vmatpush1.bf16.msra.mxu0 0
      %2354 = vmatprep.subr.bf16.mxu0 0
      %2355 = vmatpush1.bf16.msra.mxu0 0
      %2356 = vmatprep.subr.bf16.mxu0 0
      %2357 = vmatpush1.bf16.msra.mxu0 0
      %2358 = vmatprep.subr.bf16.mxu0 0
      %2359 = vmatpush1.bf16.msra.mxu0 0
      %2360 = vmatprep.subr.bf16.mxu0 0
      %2361 = vmatpush1.bf16.msra.mxu0 0
      %2362 = vmatprep.subr.bf16.mxu0 0
      %2363 = vmatpush1.bf16.msra.mxu0 0
      %2364 = vmatprep.subr.bf16.mxu0 0
      %2365 = vmatpush1.bf16.msra.mxu0 0
      %2366 = vmatprep.subr.bf16.mxu0 0
      %2367 = vmatpush1.bf16.msra.mxu0 0
      %2368 = vmatprep.subr.bf16.mxu0 0
      %2369 = vmatpush1.bf16.msra.mxu0 0
      %2370 = vmatprep.subr.bf16.mxu0 0
      %2371 = vmatpush1.bf16.msra.mxu0 0
      %2372 = vmatprep.subr.bf16.mxu0 0
      %2373 = vmatpush1.bf16.msra.mxu0 0
      %2374 = vmatprep.mubr.bf16.mxu0 0
      %2375 = vmatmul.mubr.bf16.gmra.mrb[0].mxu0 %v2337
      %v2376 = vpop.f32.mrb[0].mxu0
      %v2377 = vadd.f32 %v2323, %v2376
      %v2378 = vpop.f32.mrb[0].mxu0
      %v2379 = vpop.f32.mrb[0].mxu0
      %v2380 = vadd.f32 %v2328, %v2379
      %v2381 = vpop.f32.mrb[0].mxu0
      %2382 = vdwg.mxu0
      %2383 = vst.msk [vmem:[#allocation2 + $0x8] sm:$0xff] %vm1939, 0.0
      %2384 = vst.msk [vmem:[#allocation2 + $0x28] sm:$0xff] %vm1939, 0.0
      %2385 = vst.msk [vmem:[#allocation2 + $0x48] sm:$0xff] %vm1939, 0.0
      %2386 = vst.msk [vmem:[#allocation2 + $0x68] sm:$0xff] %vm1939, 0.0
      %2387 = vst.msk [vmem:[#allocation2 + $0x88] sm:$0xff] %vm1939, 0.0
      %2388 = vst.msk [vmem:[#allocation2 + $0x8] sm:$0xff] %vm2140, 0.0
      %2389 = vst.msk [vmem:[#allocation2 + $0x28] sm:$0xff] %vm2140, 0.0
      %2390 = vst.msk [vmem:[#allocation2 + $0x48] sm:$0xff] %vm2140, 0.0
      %2391 = vst.msk [vmem:[#allocation2 + $0x68] sm:$0xff] %vm2140, 0.0
      %2392 = vst.msk [vmem:[#allocation2 + $0x88] sm:$0xff] %vm2140, 0.0
      %2394 = vrot.lane.b32.xlu0 %v2238, 2
      %v2395 = vpop.permute.xlu0 %2394
      %2397 = vst.msk [vmem:[#allocation2 + $0x8] sm:$0xff] %vm2150, %v2395
      %2398 = vrot.lane.b32.xlu0 %v2238, 1
      %v2399 = vpop.permute.xlu0 %2398
      %2401 = vst.msk [vmem:[#allocation2 + $0x28] sm:$0xff] %vm2155, %v2399
      %2402 = vst.msk [vmem:[#allocation2 + $0x48] sm:$0xff] %vm2157, %v2238
      %2403 = vrot.lane.b32.xlu0 %v2238, 127
      %v2404 = vpop.permute.xlu0 %2403
      %2406 = vst.msk [vmem:[#allocation2 + $0x60] sm:$0xff] %vm2162, %v2404
      %2407 = vst.msk [vmem:[#allocation2 + $0x68] sm:$0xff] %vm2164, %v2404
      %2408 = vrot.lane.b32.xlu0 %v2238, 126
      %v2409 = vpop.permute.xlu0 %2408
      %2411 = vst.msk [vmem:[#allocation2 + $0x80] sm:$0xff] %vm1944, %v2409
      %2412 = vst.msk [vmem:[#allocation2 + $0x88] sm:$0xff] %vm2170, %v2409
      %v2413 = vld [vmem:[%s45] sm:$0xf]
      %v2414 = vld [vmem:[%s45 + $0x4] sm:$0xf]
      %v2415 = vld [vmem:[#allocation2 + $0x8] sm:$0xff]
      %v2416 = vld [vmem:[#allocation2 + $0x28] sm:$0xff]
      %v2417 = vld [vmem:[#allocation2 + $0x48] sm:$0xff]
      %v2418 = vld [vmem:[#allocation2 + $0x68] sm:$0xff]
      %v2419 = vld [vmem:[#allocation2 + $0x88] sm:$0xff]
      %v2420 = vpack.c.bf16 %v2416, %v2415
      %v2421 = vpack.c.bf16 %v2418, %v2417
      %v2422 = vpack.c.bf16 %v2419, %v2419
      %v2425 = vunpack.c.l.b16 %v2413
      %v2426 = vunpack.c.l.b16 %v2414
      %v2427 = vpack.c.b16 %v2426, %v2425
      %v2429 = vsel %vm2187, %v2427, 0
      %v2432 = vsel %vm2191, %v2422, 0
      %2434 = vmatprep.subr.bf16.mxu0 0
      %2435 = vmatpush1.bf16.msra.mxu0 %v2420
      %2436 = vmatprep.subr.bf16.mxu0 0
      %2437 = vmatpush1.bf16.msra.mxu0 %v2421
      %2438 = vmatprep.subr.bf16.mxu0 0
      %2439 = vmatpush1.bf16.msra.mxu0 %v2432
      %2440 = vmatprep.subr.bf16.mxu0 0
      %2441 = vmatpush1.bf16.msra.mxu0 0
      %2442 = vmatprep.subr.bf16.mxu0 0
      %2443 = vmatpush1.bf16.msra.mxu0 0
      %2444 = vmatprep.subr.bf16.mxu0 0
      %2445 = vmatpush1.bf16.msra.mxu0 0
      %2446 = vmatprep.subr.bf16.mxu0 0
      %2447 = vmatpush1.bf16.msra.mxu0 0
      %2448 = vmatprep.subr.bf16.mxu0 0
      %2449 = vmatpush1.bf16.msra.mxu0 0
      %2450 = vmatprep.subr.bf16.mxu0 0
      %2451 = vmatpush1.bf16.msra.mxu0 0
      %2452 = vmatprep.subr.bf16.mxu0 0
      %2453 = vmatpush1.bf16.msra.mxu0 0
      %2454 = vmatprep.subr.bf16.mxu0 0
      %2455 = vmatpush1.bf16.msra.mxu0 0
      %2456 = vmatprep.subr.bf16.mxu0 0
      %2457 = vmatpush1.bf16.msra.mxu0 0
      %2458 = vmatprep.subr.bf16.mxu0 0
      %2459 = vmatpush1.bf16.msra.mxu0 0
      %2460 = vmatprep.subr.bf16.mxu0 0
      %2461 = vmatpush1.bf16.msra.mxu0 0
      %2462 = vmatprep.subr.bf16.mxu0 0
      %2463 = vmatpush1.bf16.msra.mxu0 0
      %2464 = vmatprep.subr.bf16.mxu0 0
      %2465 = vmatpush1.bf16.msra.mxu0 0
      %2466 = vmatprep.mubr.bf16.mxu0 0
      %2467 = vmatmul.mubr.bf16.gmra.mrb[0].mxu0 %v2429
      %v2468 = vpop.f32.mrb[0].mxu0
      %v2469 = vadd.f32 0.0, %v2468
      %v2470 = vpop.f32.mrb[0].mxu0
      %v2471 = vpop.f32.mrb[0].mxu0
      %v2472 = vadd.f32 0.0, %v2471
      %v2473 = vpop.f32.mrb[0].mxu0
      %2474 = vdwg.mxu0
      %v2475 = vpack.c.bf16 %v2472, %v2469
      %v2476 = vld [vmem:[%s39] sm:$0xff]
      %v2477 = vld [vmem:[%s39 + $0x8] sm:$0xff]
      %2479 = vset.pattern.permute.xlu0 0
      %2480 = vperm.xlu0 %2479, %v2476
      %v2481 = vpop.permute.xlu0 %2480
      %2484 = vset.pattern.permute.xlu0 0
      %2485 = vperm.xlu0 %2484, %v2477
      %v2486 = vpop.permute.xlu0 %2485
      %v2489 = vsel %vm2157, %v2475, 0
      %2491 = vmatprep.subr.bf16.mxu0 0
      %2492 = vmatpush1.bf16.msra.mxu0 %v2264
      %2493 = vmatprep.subr.bf16.mxu0 0
      %2494 = vmatpush1.bf16.msra.mxu0 %v2265
      %2495 = vmatprep.subr.bf16.mxu0 0
      %2496 = vmatpush1.bf16.msra.mxu0 %v2266
      %2497 = vmatprep.subr.bf16.mxu0 0
      %2498 = vmatpush1.bf16.msra.mxu0 %v2267
      %2499 = vmatprep.subr.bf16.mxu0 0
      %2500 = vmatpush1.bf16.msra.mxu0 0
      %2501 = vmatprep.subr.bf16.mxu0 0
      %2502 = vmatpush1.bf16.msra.mxu0 0
      %2503 = vmatprep.subr.bf16.mxu0 0
      %2504 = vmatpush1.bf16.msra.mxu0 0
      %2505 = vmatprep.subr.bf16.mxu0 0
      %2506 = vmatpush1.bf16.msra.mxu0 0
      %2507 = vmatprep.subr.bf16.mxu0 0
      %2508 = vmatpush1.bf16.msra.mxu0 0
      %2509 = vmatprep.subr.bf16.mxu0 0
      %2510 = vmatpush1.bf16.msra.mxu0 0
      %2511 = vmatprep.subr.bf16.mxu0 0
      %2512 = vmatpush1.bf16.msra.mxu0 0
      %2513 = vmatprep.subr.bf16.mxu0 0
      %2514 = vmatpush1.bf16.msra.mxu0 0
      %2515 = vmatprep.subr.bf16.mxu0 0
      %2516 = vmatpush1.bf16.msra.mxu0 0
      %2517 = vmatprep.subr.bf16.mxu0 0
      %2518 = vmatpush1.bf16.msra.mxu0 0
      %2519 = vmatprep.subr.bf16.mxu0 0
      %2520 = vmatpush1.bf16.msra.mxu0 0
      %2521 = vmatprep.subr.bf16.mxu0 0
      %2522 = vmatpush1.bf16.msra.mxu0 0
      %2523 = vmatprep.mubr.bf16.mxu0 0
      %2524 = vmatmul.mubr.bf16.gmra.mrb[0].mxu0 %v2489
      %v2525 = vpop.f32.mrb[0].mxu0
      %v2526 = vadd.f32 %v2481, %v2525
      %v2527 = vpop.f32.mrb[0].mxu0
      %v2528 = vpop.f32.mrb[0].mxu0
      %v2529 = vadd.f32 %v2486, %v2528
      %v2530 = vpop.f32.mrb[0].mxu0
      %2531 = vdwg.mxu0
      %vm2532 = vcmp.ge.f32.partialorder %v2526, 0.0
      %vm2533 = vcmp.ge.f32.partialorder %v2529, 0.0
      %v2534 = vmul.f32 %v2526, 0.2
      %v2535 = vmul.f32 %v2529, 0.2
      %v2536 = vsel %vm2532, %v2526, %v2534
      %v2537 = vsel %vm2533, %v2529, %v2535
      %2538 = vst.msk [vmem:[#allocation2 + $0x8] sm:$0xff] %vm1939, 0.0
      %2539 = vst.msk [vmem:[#allocation2 + $0x28] sm:$0xff] %vm1939, 0.0
      %2540 = vst.msk [vmem:[#allocation2 + $0x48] sm:$0xff] %vm1939, 0.0
      %2541 = vst.msk [vmem:[#allocation2 + $0x68] sm:$0xff] %vm1939, 0.0
      %2542 = vst.msk [vmem:[#allocation2 + $0x88] sm:$0xff] %vm1939, 0.0
      %2543 = vst.msk [vmem:[#allocation2 + $0xa8] sm:$0xff] %vm1939, 0.0
      %2544 = vst.msk [vmem:[#allocation2 + $0xc8] sm:$0xff] %vm1939, 0.0
      %2545 = vst.msk [vmem:[#allocation2 + $0xe8] sm:$0xff] %vm1939, 0.0
      %2546 = vst.msk [vmem:[#allocation2 + $0x108] sm:$0xff] %vm1939, 0.0
      %2547 = vst.msk [vmem:[#allocation2 + $0x128] sm:$0xff] %vm1939, 0.0
      %vm2548 = vcmask 130160
      %2549 = vst.msk [vmem:[#allocation2 + $0x8] sm:$0xff] %vm2548, 0.0
      %2550 = vst.msk [vmem:[#allocation2 + $0x28] sm:$0xff] %vm2548, 0.0
      %2551 = vst.msk [vmem:[#allocation2 + $0x48] sm:$0xff] %vm2548, 0.0
      %2552 = vst.msk [vmem:[#allocation2 + $0x68] sm:$0xff] %vm2548, 0.0
      %2553 = vst.msk [vmem:[#allocation2 + $0x88] sm:$0xff] %vm2548, 0.0
      %2554 = vst.msk [vmem:[#allocation2 + $0xa8] sm:$0xff] %vm2548, 0.0
      %2555 = vst.msk [vmem:[#allocation2 + $0xc8] sm:$0xff] %vm2548, 0.0
      %2556 = vst.msk [vmem:[#allocation2 + $0xe8] sm:$0xff] %vm2548, 0.0
      %2557 = vst.msk [vmem:[#allocation2 + $0x108] sm:$0xff] %vm2548, 0.0
      %2558 = vst.msk [vmem:[#allocation2 + $0x128] sm:$0xff] %vm2548, 0.0
      %2561 = vrot.lane.b32.xlu0 %v2536, 2
      %v2562 = vpop.permute.xlu0 %2561
      %2563 = vrot.lane.b32.xlu0 %v2537, 2
      %v2564 = vpop.permute.xlu0 %2563
      %vm2567 = vcmask 146448
      %2568 = vst.msk [vmem:[#allocation2 + $0x8] sm:$0xff] %vm2567, %v2562
      %2569 = vst.msk [vmem:[#allocation2 + $0x28] sm:$0xff] %vm2567, %v2564
      %2570 = vrot.lane.b32.xlu0 %v2536, 1
      %v2571 = vpop.permute.xlu0 %2570
      %2572 = vrot.lane.b32.xlu0 %v2537, 1
      %v2573 = vpop.permute.xlu0 %2572
      %vm2576 = vcmask 138248
      %2577 = vst.msk [vmem:[#allocation2 + $0x48] sm:$0xff] %vm2576, %v2571
      %2578 = vst.msk [vmem:[#allocation2 + $0x68] sm:$0xff] %vm2576, %v2573
      %vm2579 = vcmask 130048
      %2580 = vst.msk [vmem:[#allocation2 + $0x88] sm:$0xff] %vm2579, %v2536
      %2581 = vst.msk [vmem:[#allocation2 + $0xa8] sm:$0xff] %vm2579, %v2537
      %2582 = vrot.lane.b32.xlu0 %v2536, 127
      %v2583 = vpop.permute.xlu0 %2582
      %2584 = vrot.lane.b32.xlu0 %v2537, 127
      %v2585 = vpop.permute.xlu0 %2584
      %2588 = vst.msk [vmem:[#allocation2 + $0xc0] sm:$0xff] %vm2162, %v2583
      %vm2589 = vcmask 121856
      %2590 = vst.msk [vmem:[#allocation2 + $0xc8] sm:$0xff] %vm2589, %v2583
      %2591 = vst.msk [vmem:[#allocation2 + $0xe0] sm:$0xff] %vm2162, %v2585
      %2592 = vst.msk [vmem:[#allocation2 + $0xe8] sm:$0xff] %vm2589, %v2585
      %2593 = vrot.lane.b32.xlu0 %v2536, 126
      %v2594 = vpop.permute.xlu0 %2593
      %2595 = vrot.lane.b32.xlu0 %v2537, 126
      %v2596 = vpop.permute.xlu0 %2595
      %2599 = vst.msk [vmem:[#allocation2 + $0x100] sm:$0xff] %vm1944, %v2594
      %vm2600 = vcmask 113664
      %2601 = vst.msk [vmem:[#allocation2 + $0x108] sm:$0xff] %vm2600, %v2594
      %2602 = vst.msk [vmem:[#allocation2 + $0x120] sm:$0xff] %vm1944, %v2596
      %2603 = vst.msk [vmem:[#allocation2 + $0x128] sm:$0xff] %vm2600, %v2596
      %v2604 = vld [vmem:[%s47] sm:$0xf]
      %v2605 = vld [vmem:[%s47 + $0x4] sm:$0xf]
      %v2606 = vld [vmem:[#allocation2 + $0x8] sm:$0xff]
      %v2607 = vld [vmem:[#allocation2 + $0x28] sm:$0xff]
      %v2608 = vld [vmem:[#allocation2 + $0x48] sm:$0xff]
      %v2609 = vld [vmem:[#allocation2 + $0x68] sm:$0xff]
      %v2610 = vld [vmem:[#allocation2 + $0x88] sm:$0xff]
      %v2611 = vld [vmem:[#allocation2 + $0xa8] sm:$0xff]
      %v2612 = vld [vmem:[#allocation2 + $0xc8] sm:$0xff]
      %v2613 = vld [vmem:[#allocation2 + $0xe8] sm:$0xff]
      %v2614 = vld [vmem:[#allocation2 + $0x108] sm:$0xff]
      %v2615 = vld [vmem:[#allocation2 + $0x128] sm:$0xff]
      %v2616 = vpack.c.bf16 %v2607, %v2606
      %v2617 = vpack.c.bf16 %v2609, %v2608
      %v2618 = vpack.c.bf16 %v2611, %v2610
      %v2619 = vpack.c.bf16 %v2613, %v2612
      %v2620 = vpack.c.bf16 %v2615, %v2614
      %v2621 = vld [vmem:[%s41] sm:$0xff]
      %v2622 = vld [vmem:[%s41 + $0x8] sm:$0xff]
      %2624 = vset.pattern.permute.xlu0 0
      %2625 = vperm.xlu0 %2624, %v2621
      %v2626 = vpop.permute.xlu0 %2625
      %2629 = vset.pattern.permute.xlu0 0
      %2630 = vperm.xlu0 %2629, %v2622
      %v2631 = vpop.permute.xlu0 %2630
      %v2635 = vunpack.c.l.b16 %v2604
      %v2636 = vunpack.c.l.b16 %v2605
      %v2637 = vpack.c.b16 %v2636, %v2635
      %vm2638 = vcmask 654336
      %v2640 = vsel %vm2638, %v2637, 0
      %2642 = vmatprep.subr.bf16.mxu0 0
      %2643 = vmatpush1.bf16.msra.mxu0 %v2616
      %2644 = vmatprep.subr.bf16.mxu0 0
      %2645 = vmatpush1.bf16.msra.mxu0 %v2617
      %2646 = vmatprep.subr.bf16.mxu0 0
      %2647 = vmatpush1.bf16.msra.mxu0 %v2618
      %2648 = vmatprep.subr.bf16.mxu0 0
      %2649 = vmatpush1.bf16.msra.mxu0 %v2619
      %2650 = vmatprep.subr.bf16.mxu0 0
      %2651 = vmatpush1.bf16.msra.mxu0 %v2620
      %2652 = vmatprep.subr.bf16.mxu0 0
      %2653 = vmatpush1.bf16.msra.mxu0 0
      %2654 = vmatprep.subr.bf16.mxu0 0
      %2655 = vmatpush1.bf16.msra.mxu0 0
      %2656 = vmatprep.subr.bf16.mxu0 0
      %2657 = vmatpush1.bf16.msra.mxu0 0
      %2658 = vmatprep.subr.bf16.mxu0 0
      %2659 = vmatpush1.bf16.msra.mxu0 0
      %2660 = vmatprep.subr.bf16.mxu0 0
      %2661 = vmatpush1.bf16.msra.mxu0 0
      %2662 = vmatprep.subr.bf16.mxu0 0
      %2663 = vmatpush1.bf16.msra.mxu0 0
      %2664 = vmatprep.subr.bf16.mxu0 0
      %2665 = vmatpush1.bf16.msra.mxu0 0
      %2666 = vmatprep.subr.bf16.mxu0 0
      %2667 = vmatpush1.bf16.msra.mxu0 0
      %2668 = vmatprep.subr.bf16.mxu0 0
      %2669 = vmatpush1.bf16.msra.mxu0 0
      %2670 = vmatprep.subr.bf16.mxu0 0
      %2671 = vmatpush1.bf16.msra.mxu0 0
      %2672 = vmatprep.subr.bf16.mxu0 0
      %2673 = vmatpush1.bf16.msra.mxu0 0
      %2674 = vmatprep.mubr.bf16.mxu0 0
      %2675 = vmatmul.mubr.bf16.gmra.mrb[0].mxu0 %v2640
      %v2676 = vpop.f32.mrb[0].mxu0
      %v2677 = vadd.f32 %v2626, %v2676
      %v2678 = vpop.f32.mrb[0].mxu0
      %v2679 = vpop.f32.mrb[0].mxu0
      %v2680 = vadd.f32 %v2631, %v2679
      %v2681 = vpop.f32.mrb[0].mxu0
      %2682 = vdwg.mxu0
      %v2683 = vadd.f32 %v2677, %v2377
      %v2684 = vadd.f32 %v2680, %v2380
      %vm2685 = vcmp.ge.f32.partialorder %v2683, 0.0
      %vm2686 = vcmp.ge.f32.partialorder %v2684, 0.0
      %v2687 = vmul.f32 %v2683, 0.2
      %v2688 = vmul.f32 %v2684, 0.2
      %v2689 = vsel %vm2685, %v2683, %v2687
      %v2690 = vsel %vm2686, %v2684, %v2688
      %v2691 = vld [vmem:[%s3] sm:$0xf]
      %v2692 = vld [vmem:[%s3 + $0x4] sm:$0xf]
      %v2693 = vpack.c.bf16 %v2690, %v2689
      %v2696 = vunpack.c.l.b16 %v2691
      %v2697 = vunpack.c.l.b16 %v2692
      %v2698 = vpack.c.b16 %v2697, %v2696
      %v2701 = vsel %vm2579, %v2693, 0
      %2703 = vmatprep.subr.bf16.mxu0 0
      %2704 = vmatpush1.bf16.msra.mxu0 %v2698
      %2705 = vmatprep.subr.bf16.mxu0 0
      %2706 = vmatpush1.bf16.msra.mxu0 0
      %2707 = vmatprep.subr.bf16.mxu0 0
      %2708 = vmatpush1.bf16.msra.mxu0 0
      %2709 = vmatprep.subr.bf16.mxu0 0
      %2710 = vmatpush1.bf16.msra.mxu0 0
      %2711 = vmatprep.subr.bf16.mxu0 0
      %2712 = vmatpush1.bf16.msra.mxu0 0
      %2713 = vmatprep.subr.bf16.mxu0 0
      %2714 = vmatpush1.bf16.msra.mxu0 0
      %2715 = vmatprep.subr.bf16.mxu0 0
      %2716 = vmatpush1.bf16.msra.mxu0 0
      %2717 = vmatprep.subr.bf16.mxu0 0
      %2718 = vmatpush1.bf16.msra.mxu0 0
      %2719 = vmatprep.subr.bf16.mxu0 0
      %2720 = vmatpush1.bf16.msra.mxu0 0
      %2721 = vmatprep.subr.bf16.mxu0 0
      %2722 = vmatpush1.bf16.msra.mxu0 0
      %2723 = vmatprep.subr.bf16.mxu0 0
      %2724 = vmatpush1.bf16.msra.mxu0 0
      %2725 = vmatprep.subr.bf16.mxu0 0
      %2726 = vmatpush1.bf16.msra.mxu0 0
      %2727 = vmatprep.subr.bf16.mxu0 0
      %2728 = vmatpush1.bf16.msra.mxu0 0
      %2729 = vmatprep.subr.bf16.mxu0 0
      %2730 = vmatpush1.bf16.msra.mxu0 0
      %2731 = vmatprep.subr.bf16.mxu0 0
      %2732 = vmatpush1.bf16.msra.mxu0 0
      %2733 = vmatprep.subr.bf16.mxu0 0
      %2734 = vmatpush1.bf16.msra.mxu0 0
      %2735 = vmatprep.mubr.bf16.mxu0 0
      %2736 = vmatmul.mubr.bf16.gmra.mrb[0].mxu0 %v2701
      %v2737 = vpop.f32.mrb[0].mxu0
      %v2738 = vadd.f32 0.0, %v2737
      %v2739 = vpop.f32.mrb[0].mxu0
      %v2740 = vpop.f32.mrb[0].mxu0
      %v2741 = vadd.f32 0.0, %v2740
      %v2742 = vpop.f32.mrb[0].mxu0
      %2743 = vdwg.mxu0
      %v2744 = vld [vmem:[%s61] sm:$0xf]
      %v2745 = vld [vmem:[%s61 + $0x4] sm:$0xf]
      %v2746 = vld [vmem:[%s61 + $0x8] sm:$0xf]
      %v2747 = vld [vmem:[%s61 + $0xc] sm:$0xf]
      %v2748 = vpack.c.bf16 %v2741, %v2738
      %v2749 = vld [vmem:[%s55] sm:$0xff]
      %v2750 = vld [vmem:[%s55 + $0x8] sm:$0xff]
      %v2751 = vld [vmem:[%s55 + $0x10] sm:$0xff]
      %v2752 = vld [vmem:[%s55 + $0x18] sm:$0xff]
      %2754 = vset.pattern.permute.xlu0 0
      %2755 = vperm.xlu0 %2754, %v2749
      %v2756 = vpop.permute.xlu0 %2755
      %2759 = vset.pattern.permute.xlu0 0
      %2760 = vperm.xlu0 %2759, %v2750
      %v2761 = vpop.permute.xlu0 %2760
      %2764 = vset.pattern.permute.xlu0 0
      %2765 = vperm.xlu0 %2764, %v2751
      %v2766 = vpop.permute.xlu0 %2765
      %2769 = vset.pattern.permute.xlu0 0
      %2770 = vperm.xlu0 %2769, %v2752
      %v2771 = vpop.permute.xlu0 %2770
      %v2777 = vunpack.c.l.b16 %v2744
      %v2778 = vunpack.c.l.b16 %v2745
      %v2779 = vunpack.c.l.b16 %v2746
      %v2780 = vunpack.c.l.b16 %v2747
      %v2781 = vpack.c.b16 %v2778, %v2777
      %v2782 = vpack.c.b16 %v2780, %v2779
      %v2784 = vsel %vm2579, %v2781, 0
      %v2787 = vsel %vm2579, %v2782, 0
      %2789 = vmatprep.subr.bf16.mxu0 0
      %2790 = vmatpush1.bf16.msra.mxu0 %v2748
      %2791 = vmatprep.subr.bf16.mxu0 0
      %2792 = vmatpush1.bf16.msra.mxu0 0
      %2793 = vmatprep.subr.bf16.mxu0 0
      %2794 = vmatpush1.bf16.msra.mxu0 0
      %2795 = vmatprep.subr.bf16.mxu0 0
      %2796 = vmatpush1.bf16.msra.mxu0 0
      %2797 = vmatprep.subr.bf16.mxu0 0
      %2798 = vmatpush1.bf16.msra.mxu0 0
      %2799 = vmatprep.subr.bf16.mxu0 0
      %2800 = vmatpush1.bf16.msra.mxu0 0
      %2801 = vmatprep.subr.bf16.mxu0 0
      %2802 = vmatpush1.bf16.msra.mxu0 0
      %2803 = vmatprep.subr.bf16.mxu0 0
      %2804 = vmatpush1.bf16.msra.mxu0 0
      %2805 = vmatprep.subr.bf16.mxu0 0
      %2806 = vmatpush1.bf16.msra.mxu0 0
      %2807 = vmatprep.subr.bf16.mxu0 0
      %2808 = vmatpush1.bf16.msra.mxu0 0
      %2809 = vmatprep.subr.bf16.mxu0 0
      %2810 = vmatpush1.bf16.msra.mxu0 0
      %2811 = vmatprep.subr.bf16.mxu0 0
      %2812 = vmatpush1.bf16.msra.mxu0 0
      %2813 = vmatprep.subr.bf16.mxu0 0
      %2814 = vmatpush1.bf16.msra.mxu0 0
      %2815 = vmatprep.subr.bf16.mxu0 0
      %2816 = vmatpush1.bf16.msra.mxu0 0
      %2817 = vmatprep.subr.bf16.mxu0 0
      %2818 = vmatpush1.bf16.msra.mxu0 0
      %2819 = vmatprep.subr.bf16.mxu0 0
      %2820 = vmatpush1.bf16.msra.mxu0 0
      %2821 = vmatprep.mubr.bf16.mxu0 0
      %2822 = vmatmul.mubr.bf16.gmra.mrb[0].mxu0 %v2784
      %v2823 = vpop.f32.mrb[0].mxu0
      %v2824 = vadd.f32 %v2756, %v2823
      %v2825 = vpop.f32.mrb[0].mxu0
      %v2826 = vpop.f32.mrb[0].mxu0
      %v2827 = vadd.f32 %v2761, %v2826
      %v2828 = vpop.f32.mrb[0].mxu0
      %2829 = vmatprep.mubr.bf16.mxu0 0
      %2830 = vmatmul.mubr.bf16.gmra.mrb[0].mxu0 %v2787
      %v2831 = vpop.f32.mrb[0].mxu0
      %v2832 = vadd.f32 %v2766, %v2831
      %v2833 = vpop.f32.mrb[0].mxu0
      %v2834 = vpop.f32.mrb[0].mxu0
      %v2835 = vadd.f32 %v2771, %v2834
      %v2836 = vpop.f32.mrb[0].mxu0
      %2837 = vdwg.mxu0
      %2838 = vst.msk [vmem:[#allocation2 + $0x8] sm:$0xff] %vm1939, 0.0
      %2839 = vst.msk [vmem:[#allocation2 + $0x28] sm:$0xff] %vm1939, 0.0
      %2840 = vst.msk [vmem:[#allocation2 + $0x48] sm:$0xff] %vm1939, 0.0
      %2841 = vst.msk [vmem:[#allocation2 + $0x68] sm:$0xff] %vm1939, 0.0
      %2842 = vst.msk [vmem:[#allocation2 + $0x88] sm:$0xff] %vm1939, 0.0
      %2843 = vst.msk [vmem:[#allocation2 + $0xa8] sm:$0xff] %vm1939, 0.0
      %2844 = vst.msk [vmem:[#allocation2 + $0xc8] sm:$0xff] %vm1939, 0.0
      %2845 = vst.msk [vmem:[#allocation2 + $0xe8] sm:$0xff] %vm1939, 0.0
      %2846 = vst.msk [vmem:[#allocation2 + $0x108] sm:$0xff] %vm1939, 0.0
      %2847 = vst.msk [vmem:[#allocation2 + $0x128] sm:$0xff] %vm1939, 0.0
      %2848 = vst.msk [vmem:[#allocation2 + $0x8] sm:$0xff] %vm2548, 0.0
      %2849 = vst.msk [vmem:[#allocation2 + $0x28] sm:$0xff] %vm2548, 0.0
      %2850 = vst.msk [vmem:[#allocation2 + $0x48] sm:$0xff] %vm2548, 0.0
      %2851 = vst.msk [vmem:[#allocation2 + $0x68] sm:$0xff] %vm2548, 0.0
      %2852 = vst.msk [vmem:[#allocation2 + $0x88] sm:$0xff] %vm2548, 0.0
      %2853 = vst.msk [vmem:[#allocation2 + $0xa8] sm:$0xff] %vm2548, 0.0
      %2854 = vst.msk [vmem:[#allocation2 + $0xc8] sm:$0xff] %vm2548, 0.0
      %2855 = vst.msk [vmem:[#allocation2 + $0xe8] sm:$0xff] %vm2548, 0.0
      %2856 = vst.msk [vmem:[#allocation2 + $0x108] sm:$0xff] %vm2548, 0.0
      %2857 = vst.msk [vmem:[#allocation2 + $0x128] sm:$0xff] %vm2548, 0.0
      %2860 = vrot.lane.b32.xlu0 %v2689, 2
      %v2861 = vpop.permute.xlu0 %2860
      %2862 = vrot.lane.b32.xlu0 %v2690, 2
      %v2863 = vpop.permute.xlu0 %2862
      %2866 = vst.msk [vmem:[#allocation2 + $0x8] sm:$0xff] %vm2567, %v2861
      %2867 = vst.msk [vmem:[#allocation2 + $0x28] sm:$0xff] %vm2567, %v2863
      %2868 = vrot.lane.b32.xlu0 %v2689, 1
      %v2869 = vpop.permute.xlu0 %2868
      %2870 = vrot.lane.b32.xlu0 %v2690, 1
      %v2871 = vpop.permute.xlu0 %2870
      %2874 = vst.msk [vmem:[#allocation2 + $0x48] sm:$0xff] %vm2576, %v2869
      %2875 = vst.msk [vmem:[#allocation2 + $0x68] sm:$0xff] %vm2576, %v2871
      %2876 = vst.msk [vmem:[#allocation2 + $0x88] sm:$0xff] %vm2579, %v2689
      %2877 = vst.msk [vmem:[#allocation2 + $0xa8] sm:$0xff] %vm2579, %v2690
      %2878 = vrot.lane.b32.xlu0 %v2689, 127
      %v2879 = vpop.permute.xlu0 %2878
      %2880 = vrot.lane.b32.xlu0 %v2690, 127
      %v2881 = vpop.permute.xlu0 %2880
      %2884 = vst.msk [vmem:[#allocation2 + $0xc0] sm:$0xff] %vm2162, %v2879
      %2885 = vst.msk [vmem:[#allocation2 + $0xc8] sm:$0xff] %vm2589, %v2879
      %2886 = vst.msk [vmem:[#allocation2 + $0xe0] sm:$0xff] %vm2162, %v2881
      %2887 = vst.msk [vmem:[#allocation2 + $0xe8] sm:$0xff] %vm2589, %v2881
      %2888 = vrot.lane.b32.xlu0 %v2689, 126
      %v2889 = vpop.permute.xlu0 %2888
      %2890 = vrot.lane.b32.xlu0 %v2690, 126
      %v2891 = vpop.permute.xlu0 %2890
      %2894 = vst.msk [vmem:[#allocation2 + $0x100] sm:$0xff] %vm1944, %v2889
      %2895 = vst.msk [vmem:[#allocation2 + $0x108] sm:$0xff] %vm2600, %v2889
      %2896 = vst.msk [vmem:[#allocation2 + $0x120] sm:$0xff] %vm1944, %v2891
      %2897 = vst.msk [vmem:[#allocation2 + $0x128] sm:$0xff] %vm2600, %v2891
      %v2898 = vld [vmem:[%s57] sm:$0xf]
      %v2899 = vld [vmem:[%s57 + $0x4] sm:$0xf]
      %v2900 = vld [vmem:[%s57 + $0x8] sm:$0xf]
      %v2901 = vld [vmem:[%s57 + $0xc] sm:$0xf]
      %v2902 = vld [vmem:[#allocation2 + $0x8] sm:$0xff]
      %v2903 = vld [vmem:[#allocation2 + $0x28] sm:$0xff]
      %v2904 = vld [vmem:[#allocation2 + $0x48] sm:$0xff]
      %v2905 = vld [vmem:[#allocation2 + $0x68] sm:$0xff]
      %v2906 = vld [vmem:[#allocation2 + $0x88] sm:$0xff]
      %v2907 = vld [vmem:[#allocation2 + $0xa8] sm:$0xff]
      %v2908 = vld [vmem:[#allocation2 + $0xc8] sm:$0xff]
      %v2909 = vld [vmem:[#allocation2 + $0xe8] sm:$0xff]
      %v2910 = vld [vmem:[#allocation2 + $0x108] sm:$0xff]
      %v2911 = vld [vmem:[#allocation2 + $0x128] sm:$0xff]
      %v2912 = vpack.c.bf16 %v2903, %v2902
      %v2913 = vpack.c.bf16 %v2905, %v2904
      %v2914 = vpack.c.bf16 %v2907, %v2906
      %v2915 = vpack.c.bf16 %v2909, %v2908
      %v2916 = vpack.c.bf16 %v2911, %v2910
      %v2921 = vunpack.c.l.b16 %v2898
      %v2922 = vunpack.c.l.b16 %v2899
      %v2923 = vunpack.c.l.b16 %v2900
      %v2924 = vunpack.c.l.b16 %v2901
      %v2925 = vpack.c.b16 %v2922, %v2921
      %v2926 = vpack.c.b16 %v2924, %v2923
      %v2928 = vsel %vm2638, %v2925, 0
      %v2931 = vsel %vm2638, %v2926, 0
      %2933 = vmatprep.subr.bf16.mxu0 0
      %2934 = vmatpush1.bf16.msra.mxu0 %v2912
      %2935 = vmatprep.subr.bf16.mxu0 0
      %2936 = vmatpush1.bf16.msra.mxu0 %v2913
      %2937 = vmatprep.subr.bf16.mxu0 0
      %2938 = vmatpush1.bf16.msra.mxu0 %v2914
      %2939 = vmatprep.subr.bf16.mxu0 0
      %2940 = vmatpush1.bf16.msra.mxu0 %v2915
      %2941 = vmatprep.subr.bf16.mxu0 0
      %2942 = vmatpush1.bf16.msra.mxu0 %v2916
      %2943 = vmatprep.subr.bf16.mxu0 0
      %2944 = vmatpush1.bf16.msra.mxu0 0
      %2945 = vmatprep.subr.bf16.mxu0 0
      %2946 = vmatpush1.bf16.msra.mxu0 0
      %2947 = vmatprep.subr.bf16.mxu0 0
      %2948 = vmatpush1.bf16.msra.mxu0 0
      %2949 = vmatprep.subr.bf16.mxu0 0
      %2950 = vmatpush1.bf16.msra.mxu0 0
      %2951 = vmatprep.subr.bf16.mxu0 0
      %2952 = vmatpush1.bf16.msra.mxu0 0
      %2953 = vmatprep.subr.bf16.mxu0 0
      %2954 = vmatpush1.bf16.msra.mxu0 0
      %2955 = vmatprep.subr.bf16.mxu0 0
      %2956 = vmatpush1.bf16.msra.mxu0 0
      %2957 = vmatprep.subr.bf16.mxu0 0
      %2958 = vmatpush1.bf16.msra.mxu0 0
      %2959 = vmatprep.subr.bf16.mxu0 0
      %2960 = vmatpush1.bf16.msra.mxu0 0
      %2961 = vmatprep.subr.bf16.mxu0 0
      %2962 = vmatpush1.bf16.msra.mxu0 0
      %2963 = vmatprep.subr.bf16.mxu0 0
      %2964 = vmatpush1.bf16.msra.mxu0 0
      %2965 = vmatprep.mubr.bf16.mxu0 0
      %2966 = vmatmul.mubr.bf16.gmra.mrb[0].mxu0 %v2928
      %v2967 = vpop.f32.mrb[0].mxu0
      %v2968 = vadd.f32 0.0, %v2967
      %v2969 = vpop.f32.mrb[0].mxu0
      %v2970 = vpop.f32.mrb[0].mxu0
      %v2971 = vadd.f32 0.0, %v2970
      %v2972 = vpop.f32.mrb[0].mxu0
      %2973 = vmatprep.mubr.bf16.mxu0 0
      %2974 = vmatmul.mubr.bf16.gmra.mrb[0].mxu0 %v2931
      %v2975 = vpop.f32.mrb[0].mxu0
      %v2976 = vadd.f32 0.0, %v2975
      %v2977 = vpop.f32.mrb[0].mxu0
      %v2978 = vpop.f32.mrb[0].mxu0
      %v2979 = vadd.f32 0.0, %v2978
      %v2980 = vpop.f32.mrb[0].mxu0
      %2981 = vdwg.mxu0
      %v2982 = vpack.c.bf16 %v2971, %v2968
      %v2983 = vpack.c.bf16 %v2979, %v2976
      %v2984 = vld [vmem:[%s51] sm:$0xff]
      %v2985 = vld [vmem:[%s51 + $0x8] sm:$0xff]
      %v2986 = vld [vmem:[%s51 + $0x10] sm:$0xff]
      %v2987 = vld [vmem:[%s51 + $0x18] sm:$0xff]
      %2989 = vset.pattern.permute.xlu0 0
      %2990 = vperm.xlu0 %2989, %v2984
      %v2991 = vpop.permute.xlu0 %2990
      %2994 = vset.pattern.permute.xlu0 0
      %2995 = vperm.xlu0 %2994, %v2985
      %v2996 = vpop.permute.xlu0 %2995
      %2999 = vset.pattern.permute.xlu0 0
      %3000 = vperm.xlu0 %2999, %v2986
      %v3001 = vpop.permute.xlu0 %3000
      %3004 = vset.pattern.permute.xlu0 0
      %3005 = vperm.xlu0 %3004, %v2987
      %v3006 = vpop.permute.xlu0 %3005
      %v3009 = vsel %vm2579, %v2982, 0
      %v3012 = vsel %vm2579, %v2983, 0
      %3014 = vmatprep.subr.bf16.mxu0 0
      %3015 = vmatpush1.bf16.msra.mxu0 %v2698
      %3016 = vmatprep.subr.bf16.mxu0 0
      %3017 = vmatpush1.bf16.msra.mxu0 0
      %3018 = vmatprep.subr.bf16.mxu0 0
      %3019 = vmatpush1.bf16.msra.mxu0 0
      %3020 = vmatprep.subr.bf16.mxu0 0
      %3021 = vmatpush1.bf16.msra.mxu0 0
      %3022 = vmatprep.subr.bf16.mxu0 0
      %3023 = vmatpush1.bf16.msra.mxu0 0
      %3024 = vmatprep.subr.bf16.mxu0 0
      %3025 = vmatpush1.bf16.msra.mxu0 0
      %3026 = vmatprep.subr.bf16.mxu0 0
      %3027 = vmatpush1.bf16.msra.mxu0 0
      %3028 = vmatprep.subr.bf16.mxu0 0
      %3029 = vmatpush1.bf16.msra.mxu0 0
      %3030 = vmatprep.subr.bf16.mxu0 0
      %3031 = vmatpush1.bf16.msra.mxu0 0
      %3032 = vmatprep.subr.bf16.mxu0 0
      %3033 = vmatpush1.bf16.msra.mxu0 0
      %3034 = vmatprep.subr.bf16.mxu0 0
      %3035 = vmatpush1.bf16.msra.mxu0 0
      %3036 = vmatprep.subr.bf16.mxu0 0
      %3037 = vmatpush1.bf16.msra.mxu0 0
      %3038 = vmatprep.subr.bf16.mxu0 0
      %3039 = vmatpush1.bf16.msra.mxu0 0
      %3040 = vmatprep.subr.bf16.mxu0 0
      %3041 = vmatpush1.bf16.msra.mxu0 0
      %3042 = vmatprep.subr.bf16.mxu0 0
      %3043 = vmatpush1.bf16.msra.mxu0 0
      %3044 = vmatprep.subr.bf16.mxu0 0
      %3045 = vmatpush1.bf16.msra.mxu0 0
      %3046 = vmatprep.mubr.bf16.mxu0 0
      %3047 = vmatmul.mubr.bf16.gmra.mrb[0].mxu0 %v3009
      %v3048 = vpop.f32.mrb[0].mxu0
      %v3049 = vadd.f32 %v2991, %v3048
      %v3050 = vpop.f32.mrb[0].mxu0
      %v3051 = vpop.f32.mrb[0].mxu0
      %v3052 = vadd.f32 %v2996, %v3051
      %v3053 = vpop.f32.mrb[0].mxu0
      %3054 = vmatprep.mubr.bf16.mxu0 0
      %3055 = vmatmul.mubr.bf16.gmra.mrb[0].mxu0 %v3012
      %v3056 = vpop.f32.mrb[0].mxu0
      %v3057 = vadd.f32 %v3001, %v3056
      %v3058 = vpop.f32.mrb[0].mxu0
      %v3059 = vpop.f32.mrb[0].mxu0
      %v3060 = vadd.f32 %v3006, %v3059
      %v3061 = vpop.f32.mrb[0].mxu0
      %3062 = vdwg.mxu0
      %vm3063 = vcmp.ge.f32.partialorder %v3049, 0.0
      %vm3064 = vcmp.ge.f32.partialorder %v3052, 0.0
      %vm3065 = vcmp.ge.f32.partialorder %v3057, 0.0
      %vm3066 = vcmp.ge.f32.partialorder %v3060, 0.0
      %v3067 = vmul.f32 %v3049, 0.2
      %v3068 = vmul.f32 %v3052, 0.2
      %v3069 = vmul.f32 %v3057, 0.2
      %v3070 = vmul.f32 %v3060, 0.2
      %v3071 = vsel %vm3063, %v3049, %v3067
      %v3072 = vsel %vm3064, %v3052, %v3068
      %v3073 = vsel %vm3065, %v3057, %v3069
      %v3074 = vsel %vm3066, %v3060, %v3070
      %3075 = vst.msk [vmem:[#allocation2 + $0x8] sm:$0xff] %vm1939, 0.0
      %3076 = vst.msk [vmem:[#allocation2 + $0x28] sm:$0xff] %vm1939, 0.0
      %3077 = vst.msk [vmem:[#allocation2 + $0x48] sm:$0xff] %vm1939, 0.0
      %3078 = vst.msk [vmem:[#allocation2 + $0x68] sm:$0xff] %vm1939, 0.0
      %3079 = vst.msk [vmem:[#allocation2 + $0x88] sm:$0xff] %vm1939, 0.0
      %3080 = vst.msk [vmem:[#allocation2 + $0xa8] sm:$0xff] %vm1939, 0.0
      %3081 = vst.msk [vmem:[#allocation2 + $0xc8] sm:$0xff] %vm1939, 0.0
      %3082 = vst.msk [vmem:[#allocation2 + $0xe8] sm:$0xff] %vm1939, 0.0
      %3083 = vst.msk [vmem:[#allocation2 + $0x108] sm:$0xff] %vm1939, 0.0
      %3084 = vst.msk [vmem:[#allocation2 + $0x128] sm:$0xff] %vm1939, 0.0
      %3085 = vst.msk [vmem:[#allocation2 + $0x148] sm:$0xff] %vm1939, 0.0
      %3086 = vst.msk [vmem:[#allocation2 + $0x168] sm:$0xff] %vm1939, 0.0
      %3087 = vst.msk [vmem:[#allocation2 + $0x188] sm:$0xff] %vm1939, 0.0
      %3088 = vst.msk [vmem:[#allocation2 + $0x1a8] sm:$0xff] %vm1939, 0.0
      %3089 = vst.msk [vmem:[#allocation2 + $0x1c8] sm:$0xff] %vm1939, 0.0
      %3090 = vst.msk [vmem:[#allocation2 + $0x1e8] sm:$0xff] %vm1939, 0.0
      %3091 = vst.msk [vmem:[#allocation2 + $0x208] sm:$0xff] %vm1939, 0.0
      %3092 = vst.msk [vmem:[#allocation2 + $0x228] sm:$0xff] %vm1939, 0.0
      %3093 = vst.msk [vmem:[#allocation2 + $0x248] sm:$0xff] %vm1939, 0.0
      %3094 = vst.msk [vmem:[#allocation2 + $0x268] sm:$0xff] %vm1939, 0.0
      %vm3095 = vcmask 31760
      %3096 = vst.msk [vmem:[#allocation2 + $0x8] sm:$0xff] %vm3095, 0.0
      %3097 = vst.msk [vmem:[#allocation2 + $0x28] sm:$0xff] %vm3095, 0.0
      %3098 = vst.msk [vmem:[#allocation2 + $0x48] sm:$0xff] %vm3095, 0.0
      %3099 = vst.msk [vmem:[#allocation2 + $0x68] sm:$0xff] %vm3095, 0.0
      %3100 = vst.msk [vmem:[#allocation2 + $0x88] sm:$0xff] %vm3095, 0.0
      %3101 = vst.msk [vmem:[#allocation2 + $0xa8] sm:$0xff] %vm3095, 0.0
      %3102 = vst.msk [vmem:[#allocation2 + $0xc8] sm:$0xff] %vm3095, 0.0
      %3103 = vst.msk [vmem:[#allocation2 + $0xe8] sm:$0xff] %vm3095, 0.0
      %3104 = vst.msk [vmem:[#allocation2 + $0x108] sm:$0xff] %vm3095, 0.0
      %3105 = vst.msk [vmem:[#allocation2 + $0x128] sm:$0xff] %vm3095, 0.0
      %3106 = vst.msk [vmem:[#allocation2 + $0x148] sm:$0xff] %vm3095, 0.0
      %3107 = vst.msk [vmem:[#allocation2 + $0x168] sm:$0xff] %vm3095, 0.0
      %3108 = vst.msk [vmem:[#allocation2 + $0x188] sm:$0xff] %vm3095, 0.0
      %3109 = vst.msk [vmem:[#allocation2 + $0x1a8] sm:$0xff] %vm3095, 0.0
      %3110 = vst.msk [vmem:[#allocation2 + $0x1c8] sm:$0xff] %vm3095, 0.0
      %3111 = vst.msk [vmem:[#allocation2 + $0x1e8] sm:$0xff] %vm3095, 0.0
      %3112 = vst.msk [vmem:[#allocation2 + $0x208] sm:$0xff] %vm3095, 0.0
      %3113 = vst.msk [vmem:[#allocation2 + $0x228] sm:$0xff] %vm3095, 0.0
      %3114 = vst.msk [vmem:[#allocation2 + $0x248] sm:$0xff] %vm3095, 0.0
      %3115 = vst.msk [vmem:[#allocation2 + $0x268] sm:$0xff] %vm3095, 0.0
      %3120 = vrot.lane.b32.xlu0 %v3071, 2
      %v3121 = vpop.permute.xlu0 %3120
      %3122 = vrot.lane.b32.xlu0 %v3072, 2
      %v3123 = vpop.permute.xlu0 %3122
      %3124 = vrot.lane.b32.xlu0 %v3073, 2
      %v3125 = vpop.permute.xlu0 %3124
      %3126 = vrot.lane.b32.xlu0 %v3074, 2
      %v3127 = vpop.permute.xlu0 %3126
      %vm3132 = vcmask 48144
      %3133 = vst.msk [vmem:[#allocation2 + $0x8] sm:$0xff] %vm3132, %v3121
      %3134 = vst.msk [vmem:[#allocation2 + $0x28] sm:$0xff] %vm3132, %v3123
      %3135 = vst.msk [vmem:[#allocation2 + $0x48] sm:$0xff] %vm3132, %v3125
      %3136 = vst.msk [vmem:[#allocation2 + $0x68] sm:$0xff] %vm3132, %v3127
      %3137 = vrot.lane.b32.xlu0 %v3071, 1
      %v3138 = vpop.permute.xlu0 %3137
      %3139 = vrot.lane.b32.xlu0 %v3072, 1
      %v3140 = vpop.permute.xlu0 %3139
      %3141 = vrot.lane.b32.xlu0 %v3073, 1
      %v3142 = vpop.permute.xlu0 %3141
      %3143 = vrot.lane.b32.xlu0 %v3074, 1
      %v3144 = vpop.permute.xlu0 %3143
      %vm3149 = vcmask 39944
      %3150 = vst.msk [vmem:[#allocation2 + $0x88] sm:$0xff] %vm3149, %v3138
      %3151 = vst.msk [vmem:[#allocation2 + $0xa8] sm:$0xff] %vm3149, %v3140
      %3152 = vst.msk [vmem:[#allocation2 + $0xc8] sm:$0xff] %vm3149, %v3142
      %3153 = vst.msk [vmem:[#allocation2 + $0xe8] sm:$0xff] %vm3149, %v3144
      %3154 = vst.msk [vmem:[#allocation2 + $0x108] sm:$0xff] %vm1891, %v3071
      %3155 = vst.msk [vmem:[#allocation2 + $0x128] sm:$0xff] %vm1891, %v3072
      %3156 = vst.msk [vmem:[#allocation2 + $0x148] sm:$0xff] %vm1891, %v3073
      %3157 = vst.msk [vmem:[#allocation2 + $0x168] sm:$0xff] %vm1891, %v3074
      %3158 = vrot.lane.b32.xlu0 %v3071, 127
      %v3159 = vpop.permute.xlu0 %3158
      %3160 = vrot.lane.b32.xlu0 %v3072, 127
      %v3161 = vpop.permute.xlu0 %3160
      %3162 = vrot.lane.b32.xlu0 %v3073, 127
      %v3163 = vpop.permute.xlu0 %3162
      %3164 = vrot.lane.b32.xlu0 %v3074, 127
      %v3165 = vpop.permute.xlu0 %3164
      %3170 = vst.msk [vmem:[#allocation2 + $0x180] sm:$0xff] %vm2162, %v3159
      %3171 = vst.msk [vmem:[#allocation2 + $0x188] sm:$0xff] %vm1957, %v3159
      %3172 = vst.msk [vmem:[#allocation2 + $0x1a0] sm:$0xff] %vm2162, %v3161
      %3173 = vst.msk [vmem:[#allocation2 + $0x1a8] sm:$0xff] %vm1957, %v3161
      %3174 = vst.msk [vmem:[#allocation2 + $0x1c0] sm:$0xff] %vm2162, %v3163
      %3175 = vst.msk [vmem:[#allocation2 + $0x1c8] sm:$0xff] %vm1957, %v3163
      %3176 = vst.msk [vmem:[#allocation2 + $0x1e0] sm:$0xff] %vm2162, %v3165
      %3177 = vst.msk [vmem:[#allocation2 + $0x1e8] sm:$0xff] %vm1957, %v3165
      %3178 = vrot.lane.b32.xlu0 %v3071, 126
      %v3179 = vpop.permute.xlu0 %3178
      %3180 = vrot.lane.b32.xlu0 %v3072, 126
      %v3181 = vpop.permute.xlu0 %3180
      %3182 = vrot.lane.b32.xlu0 %v3073, 126
      %v3183 = vpop.permute.xlu0 %3182
      %3184 = vrot.lane.b32.xlu0 %v3074, 126
      %v3185 = vpop.permute.xlu0 %3184
      %3190 = vst.msk [vmem:[#allocation2 + $0x200] sm:$0xff] %vm1944, %v3179
      %3191 = vst.msk [vmem:[#allocation2 + $0x208] sm:$0xff] %vm1939, %v3179
      %3192 = vst.msk [vmem:[#allocation2 + $0x220] sm:$0xff] %vm1944, %v3181
      %3193 = vst.msk [vmem:[#allocation2 + $0x228] sm:$0xff] %vm1939, %v3181
      %3194 = vst.msk [vmem:[#allocation2 + $0x240] sm:$0xff] %vm1944, %v3183
      %3195 = vst.msk [vmem:[#allocation2 + $0x248] sm:$0xff] %vm1939, %v3183
      %3196 = vst.msk [vmem:[#allocation2 + $0x260] sm:$0xff] %vm1944, %v3185
      %3197 = vst.msk [vmem:[#allocation2 + $0x268] sm:$0xff] %vm1939, %v3185
      %v3198 = vld [vmem:[%s59] sm:$0xff]
      %v3199 = vld [vmem:[%s59 + $0x8] sm:$0xff]
      %v3200 = vld [vmem:[%s59 + $0x10] sm:$0xff]
      %v3201 = vld [vmem:[%s59 + $0x18] sm:$0xff]
      %v3202 = vld [vmem:[#allocation2 + $0x8] sm:$0xff]
      %v3203 = vld [vmem:[#allocation2 + $0x28] sm:$0xff]
      %v3204 = vld [vmem:[#allocation2 + $0x48] sm:$0xff]
      %v3205 = vld [vmem:[#allocation2 + $0x68] sm:$0xff]
      %v3206 = vld [vmem:[#allocation2 + $0x88] sm:$0xff]
      %v3207 = vld [vmem:[#allocation2 + $0xa8] sm:$0xff]
      %v3208 = vld [vmem:[#allocation2 + $0xc8] sm:$0xff]
      %v3209 = vld [vmem:[#allocation2 + $0xe8] sm:$0xff]
      %v3210 = vld [vmem:[#allocation2 + $0x108] sm:$0xff]
      %v3211 = vld [vmem:[#allocation2 + $0x128] sm:$0xff]
      %v3212 = vld [vmem:[#allocation2 + $0x148] sm:$0xff]
      %v3213 = vld [vmem:[#allocation2 + $0x168] sm:$0xff]
      %v3214 = vld [vmem:[#allocation2 + $0x188] sm:$0xff]
      %v3215 = vld [vmem:[#allocation2 + $0x1a8] sm:$0xff]
      %v3216 = vld [vmem:[#allocation2 + $0x1c8] sm:$0xff]
      %v3217 = vld [vmem:[#allocation2 + $0x1e8] sm:$0xff]
      %v3218 = vld [vmem:[#allocation2 + $0x208] sm:$0xff]
      %v3219 = vld [vmem:[#allocation2 + $0x228] sm:$0xff]
      %v3220 = vld [vmem:[#allocation2 + $0x248] sm:$0xff]
      %v3221 = vld [vmem:[#allocation2 + $0x268] sm:$0xff]
      %v3222 = vpack.c.bf16 %v3203, %v3202
      %v3223 = vpack.c.bf16 %v3205, %v3204
      %v3224 = vpack.c.bf16 %v3207, %v3206
      %v3225 = vpack.c.bf16 %v3209, %v3208
      %v3226 = vpack.c.bf16 %v3211, %v3210
      %v3227 = vpack.c.bf16 %v3213, %v3212
      %v3228 = vpack.c.bf16 %v3215, %v3214
      %v3229 = vpack.c.bf16 %v3217, %v3216
      %v3230 = vpack.c.bf16 %v3219, %v3218
      %v3231 = vpack.c.bf16 %v3221, %v3220
      %v3232 = vld [vmem:[%s53] sm:$0xff]
      %v3233 = vld [vmem:[%s53 + $0x8] sm:$0xff]
      %v3234 = vld [vmem:[%s53 + $0x10] sm:$0xff]
      %v3235 = vld [vmem:[%s53 + $0x18] sm:$0xff]
      %3237 = vset.pattern.permute.xlu0 0
      %3238 = vperm.xlu0 %3237, %v3232
      %v3239 = vpop.permute.xlu0 %3238
      %3242 = vset.pattern.permute.xlu0 0
      %3243 = vperm.xlu0 %3242, %v3233
      %v3244 = vpop.permute.xlu0 %3243
      %3247 = vset.pattern.permute.xlu0 0
      %3248 = vperm.xlu0 %3247, %v3234
      %v3249 = vpop.permute.xlu0 %3248
      %3252 = vset.pattern.permute.xlu0 0
      %3253 = vperm.xlu0 %3252, %v3235
      %v3254 = vpop.permute.xlu0 %3253
      %v3260 = vunpack.c.l.b16 %v3198
      %v3261 = vunpack.c.h.b16 %v3198
      %v3262 = vunpack.c.l.b16 %v3199
      %v3263 = vunpack.c.h.b16 %v3199
      %v3264 = vunpack.c.l.b16 %v3200
      %v3265 = vunpack.c.h.b16 %v3200
      %v3266 = vunpack.c.l.b16 %v3201
      %v3267 = vunpack.c.h.b16 %v3201
      %v3268 = vpack.c.b16 %v3262, %v3260
      %v3269 = vpack.c.b16 %v3263, %v3261
      %v3270 = vpack.c.b16 %v3266, %v3264
      %v3271 = vpack.c.b16 %v3267, %v3265
      %vm3274 = vcmask 261120
      %v3276 = vsel %vm3274, %v3269, 0
      %v3279 = vsel %vm3274, %v3271, 0
      %3281 = vmatprep.subr.bf16.mxu0 0
      %3282 = vmatpush1.bf16.msra.mxu0 %v3222
      %3283 = vmatprep.subr.bf16.mxu0 0
      %3284 = vmatpush1.bf16.msra.mxu0 %v3223
      %3285 = vmatprep.subr.bf16.mxu0 0
      %3286 = vmatpush1.bf16.msra.mxu0 %v3224
      %3287 = vmatprep.subr.bf16.mxu0 0
      %3288 = vmatpush1.bf16.msra.mxu0 %v3225
      %3289 = vmatprep.subr.bf16.mxu0 0
      %3290 = vmatpush1.bf16.msra.mxu0 %v3226
      %3291 = vmatprep.subr.bf16.mxu0 0
      %3292 = vmatpush1.bf16.msra.mxu0 %v3227
      %3293 = vmatprep.subr.bf16.mxu0 0
      %3294 = vmatpush1.bf16.msra.mxu0 %v3228
      %3295 = vmatprep.subr.bf16.mxu0 0
      %3296 = vmatpush1.bf16.msra.mxu0 %v3229
      %3297 = vmatprep.subr.bf16.mxu0 0
      %3298 = vmatpush1.bf16.msra.mxu0 %v3230
      %3299 = vmatprep.subr.bf16.mxu0 0
      %3300 = vmatpush1.bf16.msra.mxu0 %v3231
      %3301 = vmatprep.subr.bf16.mxu0 0
      %3302 = vmatpush1.bf16.msra.mxu0 0
      %3303 = vmatprep.subr.bf16.mxu0 0
      %3304 = vmatpush1.bf16.msra.mxu0 0
      %3305 = vmatprep.subr.bf16.mxu0 0
      %3306 = vmatpush1.bf16.msra.mxu0 0
      %3307 = vmatprep.subr.bf16.mxu0 0
      %3308 = vmatpush1.bf16.msra.mxu0 0
      %3309 = vmatprep.subr.bf16.mxu0 0
      %3310 = vmatpush1.bf16.msra.mxu0 0
      %3311 = vmatprep.subr.bf16.mxu0 0
      %3312 = vmatpush1.bf16.msra.mxu0 0
      %3313 = vmatprep.mubr.bf16.mxu0 %v3276
      %3314 = vmatmul.mubr.bf16.gmra.mrb[0].mxu0 %v3268
      %v3315 = vpop.f32.mrb[0].mxu0
      %v3316 = vadd.f32 %v3239, %v3315
      %v3317 = vpop.f32.mrb[0].mxu0
      %v3318 = vpop.f32.mrb[0].mxu0
      %v3319 = vadd.f32 %v3244, %v3318
      %v3320 = vpop.f32.mrb[0].mxu0
      %3321 = vmatprep.mubr.bf16.mxu0 %v3279
      %3322 = vmatmul.mubr.bf16.gmra.mrb[0].mxu0 %v3270
      %v3323 = vpop.f32.mrb[0].mxu0
      %v3324 = vadd.f32 %v3249, %v3323
      %v3325 = vpop.f32.mrb[0].mxu0
      %v3326 = vpop.f32.mrb[0].mxu0
      %v3327 = vadd.f32 %v3254, %v3326
      %v3328 = vpop.f32.mrb[0].mxu0
      %3329 = vdwg.mxu0
      %v3330 = vadd.f32 %v3316, %v2824
      %v3331 = vadd.f32 %v3319, %v2827
      %v3332 = vadd.f32 %v3324, %v2832
      %v3333 = vadd.f32 %v3327, %v2835
      %vm3334 = vcmp.ge.f32.partialorder %v3330, 0.0
      %vm3335 = vcmp.ge.f32.partialorder %v3331, 0.0
      %vm3336 = vcmp.ge.f32.partialorder %v3332, 0.0
      %vm3337 = vcmp.ge.f32.partialorder %v3333, 0.0
      %v3338 = vmul.f32 %v3330, 0.2
      %v3339 = vmul.f32 %v3331, 0.2
      %v3340 = vmul.f32 %v3332, 0.2
      %v3341 = vmul.f32 %v3333, 0.2
      %v3342 = vsel %vm3334, %v3330, %v3338
      %v3343 = vsel %vm3335, %v3331, %v3339
      %v3344 = vsel %vm3336, %v3332, %v3340
      %v3345 = vsel %vm3337, %v3333, %v3341
      %3346 = vst.msk [vmem:[#allocation2 + $0x8] sm:$0xff] %vm1992, %v3342
      %3347 = vst.msk [vmem:[#allocation2 + $0x28] sm:$0xff] %vm1992, %v3343
      %3348 = vst.msk [vmem:[#allocation2 + $0x48] sm:$0xff] %vm1992, %v3344
      %3349 = vst.msk [vmem:[#allocation2 + $0x68] sm:$0xff] %vm1992, %v3345
      %3354 = vrot.lane.b32.xlu0 %v3342, 127
      %v3355 = vpop.permute.xlu0 %3354
      %3356 = vrot.lane.b32.xlu0 %v3343, 127
      %v3357 = vpop.permute.xlu0 %3356
      %3358 = vrot.lane.b32.xlu0 %v3344, 127
      %v3359 = vpop.permute.xlu0 %3358
      %3360 = vrot.lane.b32.xlu0 %v3345, 127
      %v3361 = vpop.permute.xlu0 %3360
      %3366 = vst.msk [vmem:[#allocation2 + $0x88] sm:$0xff] %vm1992, %v3355
      %3367 = vst.msk [vmem:[#allocation2 + $0xa8] sm:$0xff] %vm1992, %v3357
      %3368 = vst.msk [vmem:[#allocation2 + $0xc8] sm:$0xff] %vm1992, %v3359
      %3369 = vst.msk [vmem:[#allocation2 + $0xe8] sm:$0xff] %vm1992, %v3361
      %3370 = vrot.lane.b32.xlu0 %v3342, 126
      %v3371 = vpop.permute.xlu0 %3370
      %3372 = vrot.lane.b32.xlu0 %v3343, 126
      %v3373 = vpop.permute.xlu0 %3372
      %3374 = vrot.lane.b32.xlu0 %v3344, 126
      %v3375 = vpop.permute.xlu0 %3374
      %3376 = vrot.lane.b32.xlu0 %v3345, 126
      %v3377 = vpop.permute.xlu0 %3376
      %3382 = vst.msk [vmem:[#allocation2 + $0x108] sm:$0xff] %vm1992, %v3371
      %3383 = vst.msk [vmem:[#allocation2 + $0x128] sm:$0xff] %vm1992, %v3373
      %3384 = vst.msk [vmem:[#allocation2 + $0x148] sm:$0xff] %vm1992, %v3375
      %3385 = vst.msk [vmem:[#allocation2 + $0x168] sm:$0xff] %vm1992, %v3377
      %3386 = vrot.lane.b32.xlu0 %v3342, 125
      %v3387 = vpop.permute.xlu0 %3386
      %3388 = vrot.lane.b32.xlu0 %v3343, 125
      %v3389 = vpop.permute.xlu0 %3388
      %3390 = vrot.lane.b32.xlu0 %v3344, 125
      %v3391 = vpop.permute.xlu0 %3390
      %3392 = vrot.lane.b32.xlu0 %v3345, 125
      %v3393 = vpop.permute.xlu0 %3392
      %3398 = vst.msk [vmem:[#allocation2 + $0x188] sm:$0xff] %vm1992, %v3387
      %3399 = vst.msk [vmem:[#allocation2 + $0x1a8] sm:$0xff] %vm1992, %v3389
      %3400 = vst.msk [vmem:[#allocation2 + $0x1c8] sm:$0xff] %vm1992, %v3391
      %3401 = vst.msk [vmem:[#allocation2 + $0x1e8] sm:$0xff] %vm1992, %v3393
      %v3402 = vld [vmem:[%s21] sm:$0xf]
      %v3403 = vld [vmem:[%s21 + $0x4] sm:$0xf]
      %v3404 = vld [vmem:[%s21 + $0x8] sm:$0xf]
      %v3405 = vld [vmem:[%s21 + $0xc] sm:$0xf]
      %v3406 = vld [vmem:[%s21 + $0x10] sm:$0xf]
      %v3407 = vld [vmem:[%s21 + $0x14] sm:$0xf]
      %v3408 = vld [vmem:[%s21 + $0x18] sm:$0xf]
      %v3409 = vld [vmem:[%s21 + $0x1c] sm:$0xf]
      %v3410 = vld [vmem:[%s21 + $0x20] sm:$0xf]
      %v3411 = vld [vmem:[%s21 + $0x24] sm:$0xf]
      %v3412 = vld [vmem:[%s21 + $0x28] sm:$0xf]
      %v3413 = vld [vmem:[%s21 + $0x2c] sm:$0xf]
      %v3414 = vld [vmem:[%s21 + $0x30] sm:$0xf]
      %v3415 = vld [vmem:[%s21 + $0x34] sm:$0xf]
      %v3416 = vld [vmem:[%s21 + $0x38] sm:$0xf]
      %v3417 = vld [vmem:[%s21 + $0x3c] sm:$0xf]
      %v3418 = vld [vmem:[%s21 + $0x40] sm:$0xf]
      %v3419 = vld [vmem:[%s21 + $0x44] sm:$0xf]
      %v3420 = vld [vmem:[%s21 + $0x48] sm:$0xf]
      %v3421 = vld [vmem:[%s21 + $0x4c] sm:$0xf]
      %v3422 = vld [vmem:[%s21 + $0x50] sm:$0xf]
      %v3423 = vld [vmem:[%s21 + $0x54] sm:$0xf]
      %v3424 = vld [vmem:[%s21 + $0x58] sm:$0xf]
      %v3425 = vld [vmem:[%s21 + $0x5c] sm:$0xf]
      %v3426 = vld [vmem:[%s21 + $0x60] sm:$0xf]
      %v3427 = vld [vmem:[%s21 + $0x64] sm:$0xf]
      %v3428 = vld [vmem:[%s21 + $0x68] sm:$0xf]
      %v3429 = vld [vmem:[%s21 + $0x6c] sm:$0xf]
      %v3430 = vld [vmem:[%s21 + $0x70] sm:$0xf]
      %v3431 = vld [vmem:[%s21 + $0x74] sm:$0xf]
      %v3432 = vld [vmem:[%s21 + $0x78] sm:$0xf]
      %v3433 = vld [vmem:[%s21 + $0x7c] sm:$0xf]
      %v3434 = vld [vmem:[#allocation2 + $0x8] sm:$0xff]
      %v3435 = vld [vmem:[#allocation2 + $0x28] sm:$0xff]
      %v3436 = vld [vmem:[#allocation2 + $0x48] sm:$0xff]
      %v3437 = vld [vmem:[#allocation2 + $0x68] sm:$0xff]
      %v3438 = vld [vmem:[#allocation2 + $0x88] sm:$0xff]
      %v3439 = vld [vmem:[#allocation2 + $0xa8] sm:$0xff]
      %v3440 = vld [vmem:[#allocation2 + $0xc8] sm:$0xff]
      %v3441 = vld [vmem:[#allocation2 + $0xe8] sm:$0xff]
      %v3442 = vld [vmem:[#allocation2 + $0x108] sm:$0xff]
      %v3443 = vld [vmem:[#allocation2 + $0x128] sm:$0xff]
      %v3444 = vld [vmem:[#allocation2 + $0x148] sm:$0xff]
      %v3445 = vld [vmem:[#allocation2 + $0x168] sm:$0xff]
      %v3446 = vld [vmem:[#allocation2 + $0x188] sm:$0xff]
      %v3447 = vld [vmem:[#allocation2 + $0x1a8] sm:$0xff]
      %v3448 = vld [vmem:[#allocation2 + $0x1c8] sm:$0xff]
      %v3449 = vld [vmem:[#allocation2 + $0x1e8] sm:$0xff]
      %v3450 = vpack.c.bf16 %v3435, %v3434
      %v3451 = vpack.c.bf16 %v3437, %v3436
      %v3452 = vpack.c.bf16 %v3439, %v3438
      %v3453 = vpack.c.bf16 %v3441, %v3440
      %v3454 = vpack.c.bf16 %v3443, %v3442
      %v3455 = vpack.c.bf16 %v3445, %v3444
      %v3456 = vpack.c.bf16 %v3447, %v3446
      %v3457 = vpack.c.bf16 %v3449, %v3448
      %v3458 = vld [vmem:[%s19] sm:$0xff]
      %v3459 = vld [vmem:[%s19 + $0x8] sm:$0xff]
      %v3460 = vld [vmem:[%s19 + $0x10] sm:$0xff]
      %v3461 = vld [vmem:[%s19 + $0x18] sm:$0xff]
      %v3462 = vld [vmem:[%s19 + $0x20] sm:$0xff]
      %v3463 = vld [vmem:[%s19 + $0x28] sm:$0xff]
      %v3464 = vld [vmem:[%s19 + $0x30] sm:$0xff]
      %v3465 = vld [vmem:[%s19 + $0x38] sm:$0xff]
      %v3466 = vld [vmem:[%s19 + $0x40] sm:$0xff]
      %v3467 = vld [vmem:[%s19 + $0x48] sm:$0xff]
      %v3468 = vld [vmem:[%s19 + $0x50] sm:$0xff]
      %v3469 = vld [vmem:[%s19 + $0x58] sm:$0xff]
      %v3470 = vld [vmem:[%s19 + $0x60] sm:$0xff]
      %v3471 = vld [vmem:[%s19 + $0x68] sm:$0xff]
      %v3472 = vld [vmem:[%s19 + $0x70] sm:$0xff]
      %v3473 = vld [vmem:[%s19 + $0x78] sm:$0xff]
      %v3474 = vld [vmem:[%s19 + $0x80] sm:$0xff]
      %v3475 = vld [vmem:[%s19 + $0x88] sm:$0xff]
      %v3476 = vld [vmem:[%s19 + $0x90] sm:$0xff]
      %v3477 = vld [vmem:[%s19 + $0x98] sm:$0xff]
      %v3478 = vld [vmem:[%s19 + $0xa0] sm:$0xff]
      %v3479 = vld [vmem:[%s19 + $0xa8] sm:$0xff]
      %v3480 = vld [vmem:[%s19 + $0xb0] sm:$0xff]
      %v3481 = vld [vmem:[%s19 + $0xb8] sm:$0xff]
      %v3482 = vld [vmem:[%s19 + $0xc0] sm:$0xff]
      %v3483 = vld [vmem:[%s19 + $0xc8] sm:$0xff]
      %v3484 = vld [vmem:[%s19 + $0xd0] sm:$0xff]
      %v3485 = vld [vmem:[%s19 + $0xd8] sm:$0xff]
      %v3486 = vld [vmem:[%s19 + $0xe0] sm:$0xff]
      %v3487 = vld [vmem:[%s19 + $0xe8] sm:$0xff]
      %v3488 = vld [vmem:[%s19 + $0xf0] sm:$0xff]
      %v3489 = vld [vmem:[%s19 + $0xf8] sm:$0xff]
      %v3522 = vunpack.c.l.b16 %v3402
      %v3523 = vunpack.c.l.b16 %v3403
      %v3524 = vunpack.c.l.b16 %v3404
      %v3525 = vunpack.c.l.b16 %v3405
      %v3526 = vunpack.c.l.b16 %v3406
      %v3527 = vunpack.c.l.b16 %v3407
      %v3528 = vunpack.c.l.b16 %v3408
      %v3529 = vunpack.c.l.b16 %v3409
      %v3530 = vunpack.c.l.b16 %v3410
      %v3531 = vunpack.c.l.b16 %v3411
      %v3532 = vunpack.c.l.b16 %v3412
      %v3533 = vunpack.c.l.b16 %v3413
      %v3534 = vunpack.c.l.b16 %v3414
      %v3535 = vunpack.c.l.b16 %v3415
      %v3536 = vunpack.c.l.b16 %v3416
      %v3537 = vunpack.c.l.b16 %v3417
      %v3538 = vunpack.c.l.b16 %v3418
      %v3539 = vunpack.c.l.b16 %v3419
      %v3540 = vunpack.c.l.b16 %v3420
      %v3541 = vunpack.c.l.b16 %v3421
      %v3542 = vunpack.c.l.b16 %v3422
      %v3543 = vunpack.c.l.b16 %v3423
      %v3544 = vunpack.c.l.b16 %v3424
      %v3545 = vunpack.c.l.b16 %v3425
      %v3546 = vunpack.c.l.b16 %v3426
      %v3547 = vunpack.c.l.b16 %v3427
      %v3548 = vunpack.c.l.b16 %v3428
      %v3549 = vunpack.c.l.b16 %v3429
      %v3550 = vunpack.c.l.b16 %v3430
      %v3551 = vunpack.c.l.b16 %v3431
      %v3552 = vunpack.c.l.b16 %v3432
      %v3553 = vunpack.c.l.b16 %v3433
      %v3554 = vpack.c.b16 %v3523, %v3522
      %v3555 = vpack.c.b16 %v3525, %v3524
      %v3556 = vpack.c.b16 %v3527, %v3526
      %v3557 = vpack.c.b16 %v3529, %v3528
      %v3558 = vpack.c.b16 %v3531, %v3530
      %v3559 = vpack.c.b16 %v3533, %v3532
      %v3560 = vpack.c.b16 %v3535, %v3534
      %v3561 = vpack.c.b16 %v3537, %v3536
      %v3562 = vpack.c.b16 %v3539, %v3538
      %v3563 = vpack.c.b16 %v3541, %v3540
      %v3564 = vpack.c.b16 %v3543, %v3542
      %v3565 = vpack.c.b16 %v3545, %v3544
      %v3566 = vpack.c.b16 %v3547, %v3546
      %v3567 = vpack.c.b16 %v3549, %v3548
      %v3568 = vpack.c.b16 %v3551, %v3550
      %v3569 = vpack.c.b16 %v3553, %v3552
      %3586 = vmatprep.subr.bf16.mxu0 0
      %3587 = vmatpush1.bf16.msra.mxu0 %v3450
      %3588 = vmatprep.subr.bf16.mxu0 0
      %3589 = vmatpush1.bf16.msra.mxu0 %v3451
      %3590 = vmatprep.subr.bf16.mxu0 0
      %3591 = vmatpush1.bf16.msra.mxu0 %v3452
      %3592 = vmatprep.subr.bf16.mxu0 0
      %3593 = vmatpush1.bf16.msra.mxu0 %v3453
      %3594 = vmatprep.subr.bf16.mxu0 0
      %3595 = vmatpush1.bf16.msra.mxu0 %v3454
      %3596 = vmatprep.subr.bf16.mxu0 0
      %3597 = vmatpush1.bf16.msra.mxu0 %v3455
      %3598 = vmatprep.subr.bf16.mxu0 0
      %3599 = vmatpush1.bf16.msra.mxu0 %v3456
      %3600 = vmatprep.subr.bf16.mxu0 0
      %3601 = vmatpush1.bf16.msra.mxu0 %v3457
      %3602 = vmatprep.subr.bf16.mxu0 0
      %3603 = vmatpush1.bf16.msra.mxu0 0
      %3604 = vmatprep.subr.bf16.mxu0 0
      %3605 = vmatpush1.bf16.msra.mxu0 0
      %3606 = vmatprep.subr.bf16.mxu0 0
      %3607 = vmatpush1.bf16.msra.mxu0 0
      %3608 = vmatprep.subr.bf16.mxu0 0
      %3609 = vmatpush1.bf16.msra.mxu0 0
      %3610 = vmatprep.subr.bf16.mxu0 0
      %3611 = vmatpush1.bf16.msra.mxu0 0
      %3612 = vmatprep.subr.bf16.mxu0 0
      %3613 = vmatpush1.bf16.msra.mxu0 0
      %3614 = vmatprep.subr.bf16.mxu0 0
      %3615 = vmatpush1.bf16.msra.mxu0 0
      %3616 = vmatprep.subr.bf16.mxu0 0
      %3617 = vmatpush1.bf16.msra.mxu0 0
      %3618 = vmatprep.mubr.bf16.mxu0 0
      %3619 = vmatmul.mubr.bf16.gmra.mrb[0].mxu0 %v3554
      %v3620 = vpop.f32.mrb[0].mxu0
      %v3621 = vadd.f32 %v3458, %v3620
      %v3622 = vpop.f32.mrb[0].mxu0
      %v3623 = vpop.f32.mrb[0].mxu0
      %v3624 = vadd.f32 %v3459, %v3623
      %v3625 = vpop.f32.mrb[0].mxu0
      %3626 = vmatprep.mubr.bf16.mxu0 0
      %3627 = vmatmul.mubr.bf16.gmra.mrb[0].mxu0 %v3555
      %v3628 = vpop.f32.mrb[0].mxu0
      %v3629 = vadd.f32 %v3460, %v3628
      %v3630 = vpop.f32.mrb[0].mxu0
      %v3631 = vpop.f32.mrb[0].mxu0
      %v3632 = vadd.f32 %v3461, %v3631
      %v3633 = vpop.f32.mrb[0].mxu0
      %3634 = vmatprep.mubr.bf16.mxu0 0
      %3635 = vmatmul.mubr.bf16.gmra.mrb[0].mxu0 %v3556
      %v3636 = vpop.f32.mrb[0].mxu0
      %v3637 = vadd.f32 %v3462, %v3636
      %v3638 = vpop.f32.mrb[0].mxu0
      %v3639 = vpop.f32.mrb[0].mxu0
      %v3640 = vadd.f32 %v3463, %v3639
      %v3641 = vpop.f32.mrb[0].mxu0
      %3642 = vmatprep.mubr.bf16.mxu0 0
      %3643 = vmatmul.mubr.bf16.gmra.mrb[0].mxu0 %v3557
      %v3644 = vpop.f32.mrb[0].mxu0
      %v3645 = vadd.f32 %v3464, %v3644
      %v3646 = vpop.f32.mrb[0].mxu0
      %v3647 = vpop.f32.mrb[0].mxu0
      %v3648 = vadd.f32 %v3465, %v3647
      %v3649 = vpop.f32.mrb[0].mxu0
      %3650 = vmatprep.mubr.bf16.mxu0 0
      %3651 = vmatmul.mubr.bf16.gmra.mrb[0].mxu0 %v3558
      %v3652 = vpop.f32.mrb[0].mxu0
      %v3653 = vadd.f32 %v3466, %v3652
      %v3654 = vpop.f32.mrb[0].mxu0
      %v3655 = vpop.f32.mrb[0].mxu0
      %v3656 = vadd.f32 %v3467, %v3655
      %v3657 = vpop.f32.mrb[0].mxu0
      %3658 = vmatprep.mubr.bf16.mxu0 0
      %3659 = vmatmul.mubr.bf16.gmra.mrb[0].mxu0 %v3559
      %v3660 = vpop.f32.mrb[0].mxu0
      %v3661 = vadd.f32 %v3468, %v3660
      %v3662 = vpop.f32.mrb[0].mxu0
      %v3663 = vpop.f32.mrb[0].mxu0
      %v3664 = vadd.f32 %v3469, %v3663
      %v3665 = vpop.f32.mrb[0].mxu0
      %3666 = vmatprep.mubr.bf16.mxu0 0
      %3667 = vmatmul.mubr.bf16.gmra.mrb[0].mxu0 %v3560
      %v3668 = vpop.f32.mrb[0].mxu0
      %v3669 = vadd.f32 %v3470, %v3668
      %v3670 = vpop.f32.mrb[0].mxu0
      %v3671 = vpop.f32.mrb[0].mxu0
      %v3672 = vadd.f32 %v3471, %v3671
      %v3673 = vpop.f32.mrb[0].mxu0
      %3674 = vmatprep.mubr.bf16.mxu0 0
      %3675 = vmatmul.mubr.bf16.gmra.mrb[0].mxu0 %v3561
      %v3676 = vpop.f32.mrb[0].mxu0
      %v3677 = vadd.f32 %v3472, %v3676
      %v3678 = vpop.f32.mrb[0].mxu0
      %v3679 = vpop.f32.mrb[0].mxu0
      %v3680 = vadd.f32 %v3473, %v3679
      %v3681 = vpop.f32.mrb[0].mxu0
      %3682 = vmatprep.mubr.bf16.mxu0 0
      %3683 = vmatmul.mubr.bf16.gmra.mrb[0].mxu0 %v3562
      %v3684 = vpop.f32.mrb[0].mxu0
      %v3685 = vadd.f32 %v3474, %v3684
      %v3686 = vpop.f32.mrb[0].mxu0
      %v3687 = vpop.f32.mrb[0].mxu0
      %v3688 = vadd.f32 %v3475, %v3687
      %v3689 = vpop.f32.mrb[0].mxu0
      %3690 = vmatprep.mubr.bf16.mxu0 0
      %3691 = vmatmul.mubr.bf16.gmra.mrb[0].mxu0 %v3563
      %v3692 = vpop.f32.mrb[0].mxu0
      %v3693 = vadd.f32 %v3476, %v3692
      %v3694 = vpop.f32.mrb[0].mxu0
      %v3695 = vpop.f32.mrb[0].mxu0
      %v3696 = vadd.f32 %v3477, %v3695
      %v3697 = vpop.f32.mrb[0].mxu0
      %3698 = vmatprep.mubr.bf16.mxu0 0
      %3699 = vmatmul.mubr.bf16.gmra.mrb[0].mxu0 %v3564
      %v3700 = vpop.f32.mrb[0].mxu0
      %v3701 = vadd.f32 %v3478, %v3700
      %v3702 = vpop.f32.mrb[0].mxu0
      %v3703 = vpop.f32.mrb[0].mxu0
      %v3704 = vadd.f32 %v3479, %v3703
      %v3705 = vpop.f32.mrb[0].mxu0
      %3706 = vmatprep.mubr.bf16.mxu0 0
      %3707 = vmatmul.mubr.bf16.gmra.mrb[0].mxu0 %v3565
      %v3708 = vpop.f32.mrb[0].mxu0
      %v3709 = vadd.f32 %v3480, %v3708
      %v3710 = vpop.f32.mrb[0].mxu0
      %v3711 = vpop.f32.mrb[0].mxu0
      %v3712 = vadd.f32 %v3481, %v3711
      %v3713 = vpop.f32.mrb[0].mxu0
      %3714 = vmatprep.mubr.bf16.mxu0 0
      %3715 = vmatmul.mubr.bf16.gmra.mrb[0].mxu0 %v3566
      %v3716 = vpop.f32.mrb[0].mxu0
      %v3717 = vadd.f32 %v3482, %v3716
      %v3718 = vpop.f32.mrb[0].mxu0
      %v3719 = vpop.f32.mrb[0].mxu0
      %v3720 = vadd.f32 %v3483, %v3719
      %v3721 = vpop.f32.mrb[0].mxu0
      %3722 = vmatprep.mubr.bf16.mxu0 0
      %3723 = vmatmul.mubr.bf16.gmra.mrb[0].mxu0 %v3567
      %v3724 = vpop.f32.mrb[0].mxu0
      %v3725 = vadd.f32 %v3484, %v3724
      %v3726 = vpop.f32.mrb[0].mxu0
      %v3727 = vpop.f32.mrb[0].mxu0
      %v3728 = vadd.f32 %v3485, %v3727
      %v3729 = vpop.f32.mrb[0].mxu0
      %3730 = vmatprep.mubr.bf16.mxu0 0
      %3731 = vmatmul.mubr.bf16.gmra.mrb[0].mxu0 %v3568
      %v3732 = vpop.f32.mrb[0].mxu0
      %v3733 = vadd.f32 %v3486, %v3732
      %v3734 = vpop.f32.mrb[0].mxu0
      %v3735 = vpop.f32.mrb[0].mxu0
      %v3736 = vadd.f32 %v3487, %v3735
      %v3737 = vpop.f32.mrb[0].mxu0
      %3738 = vmatprep.mubr.bf16.mxu0 0
      %3739 = vmatmul.mubr.bf16.gmra.mrb[0].mxu0 %v3569
      %v3740 = vpop.f32.mrb[0].mxu0
      %v3741 = vadd.f32 %v3488, %v3740
      %v3742 = vpop.f32.mrb[0].mxu0
      %v3743 = vpop.f32.mrb[0].mxu0
      %v3744 = vadd.f32 %v3489, %v3743
      %v3745 = vpop.f32.mrb[0].mxu0
      %3746 = vdwg.mxu0
      %v3747 = vld [vmem:[%s17] sm:$0xff]
      %v3748 = vld [vmem:[%s17 + $0x8] sm:$0xff]
      %v3749 = vld [vmem:[%s17 + $0x10] sm:$0xff]
      %v3750 = vld [vmem:[%s17 + $0x18] sm:$0xff]
      %v3751 = vld [vmem:[%s17 + $0x20] sm:$0xff]
      %v3752 = vld [vmem:[%s17 + $0x28] sm:$0xff]
      %v3753 = vld [vmem:[%s17 + $0x30] sm:$0xff]
      %v3754 = vld [vmem:[%s17 + $0x38] sm:$0xff]
      %v3755 = vld [vmem:[%s17 + $0x40] sm:$0xff]
      %v3756 = vld [vmem:[%s17 + $0x48] sm:$0xff]
      %v3757 = vld [vmem:[%s17 + $0x50] sm:$0xff]
      %v3758 = vld [vmem:[%s17 + $0x58] sm:$0xff]
      %v3759 = vld [vmem:[%s17 + $0x60] sm:$0xff]
      %v3760 = vld [vmem:[%s17 + $0x68] sm:$0xff]
      %v3761 = vld [vmem:[%s17 + $0x70] sm:$0xff]
      %v3762 = vld [vmem:[%s17 + $0x78] sm:$0xff]
      %v3763 = vpack.c.bf16 %v3624, %v3621
      %v3764 = vpack.c.bf16 %v3632, %v3629
      %v3765 = vpack.c.bf16 %v3640, %v3637
      %v3766 = vpack.c.bf16 %v3648, %v3645
      %v3767 = vpack.c.bf16 %v3656, %v3653
      %v3768 = vpack.c.bf16 %v3664, %v3661
      %v3769 = vpack.c.bf16 %v3672, %v3669
      %v3770 = vpack.c.bf16 %v3680, %v3677
      %v3771 = vpack.c.bf16 %v3688, %v3685
      %v3772 = vpack.c.bf16 %v3696, %v3693
      %v3773 = vpack.c.bf16 %v3704, %v3701
      %v3774 = vpack.c.bf16 %v3712, %v3709
      %v3775 = vpack.c.bf16 %v3720, %v3717
      %v3776 = vpack.c.bf16 %v3728, %v3725
      %v3777 = vpack.c.bf16 %v3736, %v3733
      %v3778 = vpack.c.bf16 %v3744, %v3741
      %v3779 = vld [vmem:[%s15] sm:$0xff]
      %v3780 = vld [vmem:[%s15 + $0x8] sm:$0xff]
      %v3781 = vld [vmem:[%s15 + $0x10] sm:$0xff]
      %v3782 = vld [vmem:[%s15 + $0x18] sm:$0xff]
      %v3783 = vld [vmem:[%s15 + $0x20] sm:$0xff]
      %v3784 = vld [vmem:[%s15 + $0x28] sm:$0xff]
      %v3785 = vld [vmem:[%s15 + $0x30] sm:$0xff]
      %v3786 = vld [vmem:[%s15 + $0x38] sm:$0xff]
      %v3787 = vld [vmem:[%s15 + $0x40] sm:$0xff]
      %v3788 = vld [vmem:[%s15 + $0x48] sm:$0xff]
      %v3789 = vld [vmem:[%s15 + $0x50] sm:$0xff]
      %v3790 = vld [vmem:[%s15 + $0x58] sm:$0xff]
      %v3791 = vld [vmem:[%s15 + $0x60] sm:$0xff]
      %v3792 = vld [vmem:[%s15 + $0x68] sm:$0xff]
      %v3793 = vld [vmem:[%s15 + $0x70] sm:$0xff]
      %v3794 = vld [vmem:[%s15 + $0x78] sm:$0xff]
      %v3811 = vunpack.c.l.b16 %v3747
      %v3812 = vunpack.c.h.b16 %v3747
      %v3813 = vunpack.c.l.b16 %v3748
      %v3814 = vunpack.c.h.b16 %v3748
      %v3815 = vunpack.c.l.b16 %v3749
      %v3816 = vunpack.c.h.b16 %v3749
      %v3817 = vunpack.c.l.b16 %v3750
      %v3818 = vunpack.c.h.b16 %v3750
      %v3819 = vunpack.c.l.b16 %v3751
      %v3820 = vunpack.c.h.b16 %v3751
      %v3821 = vunpack.c.l.b16 %v3752
      %v3822 = vunpack.c.h.b16 %v3752
      %v3823 = vunpack.c.l.b16 %v3753
      %v3824 = vunpack.c.h.b16 %v3753
      %v3825 = vunpack.c.l.b16 %v3754
      %v3826 = vunpack.c.h.b16 %v3754
      %v3827 = vunpack.c.l.b16 %v3755
      %v3828 = vunpack.c.h.b16 %v3755
      %v3829 = vunpack.c.l.b16 %v3756
      %v3830 = vunpack.c.h.b16 %v3756
      %v3831 = vunpack.c.l.b16 %v3757
      %v3832 = vunpack.c.h.b16 %v3757
      %v3833 = vunpack.c.l.b16 %v3758
      %v3834 = vunpack.c.h.b16 %v3758
      %v3835 = vunpack.c.l.b16 %v3759
      %v3836 = vunpack.c.h.b16 %v3759
      %v3837 = vunpack.c.l.b16 %v3760
      %v3838 = vunpack.c.h.b16 %v3760
      %v3839 = vunpack.c.l.b16 %v3761
      %v3840 = vunpack.c.h.b16 %v3761
      %v3841 = vunpack.c.l.b16 %v3762
      %v3842 = vunpack.c.h.b16 %v3762
      %v3843 = vpack.c.b16 %v3813, %v3811
      %v3844 = vpack.c.b16 %v3814, %v3812
      %v3845 = vpack.c.b16 %v3817, %v3815
      %v3846 = vpack.c.b16 %v3818, %v3816
      %v3847 = vpack.c.b16 %v3821, %v3819
      %v3848 = vpack.c.b16 %v3822, %v3820
      %v3849 = vpack.c.b16 %v3825, %v3823
      %v3850 = vpack.c.b16 %v3826, %v3824
      %v3851 = vpack.c.b16 %v3829, %v3827
      %v3852 = vpack.c.b16 %v3830, %v3828
      %v3853 = vpack.c.b16 %v3833, %v3831
      %v3854 = vpack.c.b16 %v3834, %v3832
      %v3855 = vpack.c.b16 %v3837, %v3835
      %v3856 = vpack.c.b16 %v3838, %v3836
      %v3857 = vpack.c.b16 %v3841, %v3839
      %v3858 = vpack.c.b16 %v3842, %v3840
      %3875 = vmatprep.subr.bf16.mxu0 0
      %3876 = vmatpush1.bf16.msra.mxu0 %v3763
      %3877 = vmatprep.subr.bf16.mxu0 0
      %3878 = vmatpush1.bf16.msra.mxu0 %v3764
      %3879 = vmatprep.subr.bf16.mxu0 0
      %3880 = vmatpush1.bf16.msra.mxu0 %v3765
      %3881 = vmatprep.subr.bf16.mxu0 0
      %3882 = vmatpush1.bf16.msra.mxu0 %v3766
      %3883 = vmatprep.subr.bf16.mxu0 0
      %3884 = vmatpush1.bf16.msra.mxu0 %v3767
      %3885 = vmatprep.subr.bf16.mxu0 0
      %3886 = vmatpush1.bf16.msra.mxu0 %v3768
      %3887 = vmatprep.subr.bf16.mxu0 0
      %3888 = vmatpush1.bf16.msra.mxu0 %v3769
      %3889 = vmatprep.subr.bf16.mxu0 0
      %3890 = vmatpush1.bf16.msra.mxu0 %v3770
      %3891 = vmatprep.subr.bf16.mxu0 0
      %3892 = vmatpush1.bf16.msra.mxu0 %v3771
      %3893 = vmatprep.subr.bf16.mxu0 0
      %3894 = vmatpush1.bf16.msra.mxu0 %v3772
      %3895 = vmatprep.subr.bf16.mxu0 0
      %3896 = vmatpush1.bf16.msra.mxu0 %v3773
      %3897 = vmatprep.subr.bf16.mxu0 0
      %3898 = vmatpush1.bf16.msra.mxu0 %v3774
      %3899 = vmatprep.subr.bf16.mxu0 0
      %3900 = vmatpush1.bf16.msra.mxu0 %v3775
      %3901 = vmatprep.subr.bf16.mxu0 0
      %3902 = vmatpush1.bf16.msra.mxu0 %v3776
      %3903 = vmatprep.subr.bf16.mxu0 0
      %3904 = vmatpush1.bf16.msra.mxu0 %v3777
      %3905 = vmatprep.subr.bf16.mxu0 0
      %3906 = vmatpush1.bf16.msra.mxu0 %v3778
      %3907 = vmatprep.mubr.bf16.mxu0 %v3844
      %3908 = vmatmul.mubr.bf16.gmra.mrb[0].mxu0 %v3843
      %v3909 = vpop.f32.mrb[0].mxu0
      %v3910 = vadd.f32 %v3779, %v3909
      %v3911 = vpop.f32.mrb[0].mxu0
      %v3912 = vpop.f32.mrb[0].mxu0
      %v3913 = vadd.f32 %v3780, %v3912
      %v3914 = vpop.f32.mrb[0].mxu0
      %3915 = vmatprep.mubr.bf16.mxu0 %v3846
      %3916 = vmatmul.mubr.bf16.gmra.mrb[0].mxu0 %v3845
      %v3917 = vpop.f32.mrb[0].mxu0
      %v3918 = vadd.f32 %v3781, %v3917
      %v3919 = vpop.f32.mrb[0].mxu0
      %v3920 = vpop.f32.mrb[0].mxu0
      %v3921 = vadd.f32 %v3782, %v3920
      %v3922 = vpop.f32.mrb[0].mxu0
      %3923 = vmatprep.mubr.bf16.mxu0 %v3848
      %3924 = vmatmul.mubr.bf16.gmra.mrb[0].mxu0 %v3847
      %v3925 = vpop.f32.mrb[0].mxu0
      %v3926 = vadd.f32 %v3783, %v3925
      %v3927 = vpop.f32.mrb[0].mxu0
      %v3928 = vpop.f32.mrb[0].mxu0
      %v3929 = vadd.f32 %v3784, %v3928
      %v3930 = vpop.f32.mrb[0].mxu0
      %3931 = vmatprep.mubr.bf16.mxu0 %v3850
      %3932 = vmatmul.mubr.bf16.gmra.mrb[0].mxu0 %v3849
      %v3933 = vpop.f32.mrb[0].mxu0
      %v3934 = vadd.f32 %v3785, %v3933
      %v3935 = vpop.f32.mrb[0].mxu0
      %v3936 = vpop.f32.mrb[0].mxu0
      %v3937 = vadd.f32 %v3786, %v3936
      %v3938 = vpop.f32.mrb[0].mxu0
      %3939 = vmatprep.mubr.bf16.mxu0 %v3852
      %3940 = vmatmul.mubr.bf16.gmra.mrb[0].mxu0 %v3851
      %v3941 = vpop.f32.mrb[0].mxu0
      %v3942 = vadd.f32 %v3787, %v3941
      %v3943 = vpop.f32.mrb[0].mxu0
      %v3944 = vpop.f32.mrb[0].mxu0
      %v3945 = vadd.f32 %v3788, %v3944
      %v3946 = vpop.f32.mrb[0].mxu0
      %3947 = vmatprep.mubr.bf16.mxu0 %v3854
      %3948 = vmatmul.mubr.bf16.gmra.mrb[0].mxu0 %v3853
      %v3949 = vpop.f32.mrb[0].mxu0
      %v3950 = vadd.f32 %v3789, %v3949
      %v3951 = vpop.f32.mrb[0].mxu0
      %v3952 = vpop.f32.mrb[0].mxu0
      %v3953 = vadd.f32 %v3790, %v3952
      %v3954 = vpop.f32.mrb[0].mxu0
      %3955 = vmatprep.mubr.bf16.mxu0 %v3856
      %3956 = vmatmul.mubr.bf16.gmra.mrb[0].mxu0 %v3855
      %v3957 = vpop.f32.mrb[0].mxu0
      %v3958 = vadd.f32 %v3791, %v3957
      %v3959 = vpop.f32.mrb[0].mxu0
      %v3960 = vpop.f32.mrb[0].mxu0
      %v3961 = vadd.f32 %v3792, %v3960
      %v3962 = vpop.f32.mrb[0].mxu0
      %3963 = vmatprep.mubr.bf16.mxu0 %v3858
      %3964 = vmatmul.mubr.bf16.gmra.mrb[0].mxu0 %v3857
      %v3965 = vpop.f32.mrb[0].mxu0
      %v3966 = vadd.f32 %v3793, %v3965
      %v3967 = vpop.f32.mrb[0].mxu0
      %v3968 = vpop.f32.mrb[0].mxu0
      %v3969 = vadd.f32 %v3794, %v3968
      %v3970 = vpop.f32.mrb[0].mxu0
      %3971 = vdwg.mxu0
      %v3972 = vlaneseq
      %v3973 = vand.u32 %v3972, 127
      %vm3974 = vcmp.eq.s32.totalorder %v3973, 0
      %3976 = vset.pattern.permute.xlu0 0
      %3977 = vperm.xlu0 %3976, %v3910
      %v3978 = vpop.permute.xlu0 %3977
      %3981 = vset.pattern.permute.xlu0 0
      %3982 = vperm.xlu0 %3981, %v3913
      %v3983 = vpop.permute.xlu0 %3982
      %3986 = vset.pattern.permute.xlu0 0
      %3987 = vperm.xlu0 %3986, %v3918
      %v3988 = vpop.permute.xlu0 %3987
      %3991 = vset.pattern.permute.xlu0 0
      %3992 = vperm.xlu0 %3991, %v3921
      %v3993 = vpop.permute.xlu0 %3992
      %v3995 = vsel %vm3974, %v3978, 0.0
      %v3996 = vsel %vm3974, %v3983, 0.0
      %v3997 = vsel %vm3974, %v3988, 0.0
      %v3998 = vsel %vm3974, %v3993, 0.0
      %v3999 = vadd.f32 %v3995, 0.0
      %v4000 = vadd.f32 %v3996, 0.0
      %v4001 = vadd.f32 %v3997, 0.0
      %v4002 = vadd.f32 %v3998, 0.0
      %vm4003 = vcmp.eq.s32.totalorder %v3973, 1
      %4005 = vset.pattern.permute.xlu0 0
      %4006 = vperm.xlu0 %4005, %v3926
      %v4007 = vpop.permute.xlu0 %4006
      %4010 = vset.pattern.permute.xlu0 0
      %4011 = vperm.xlu0 %4010, %v3929
      %v4012 = vpop.permute.xlu0 %4011
      %4015 = vset.pattern.permute.xlu0 0
      %4016 = vperm.xlu0 %4015, %v3934
      %v4017 = vpop.permute.xlu0 %4016
      %4020 = vset.pattern.permute.xlu0 0
      %4021 = vperm.xlu0 %4020, %v3937
      %v4022 = vpop.permute.xlu0 %4021
      %v4024 = vsel %vm4003, %v4007, 0.0
      %v4025 = vsel %vm4003, %v4012, 0.0
      %v4026 = vsel %vm4003, %v4017, 0.0
      %v4027 = vsel %vm4003, %v4022, 0.0
      %v4028 = vadd.f32 %v3999, %v4024
      %v4029 = vadd.f32 %v4000, %v4025
      %v4030 = vadd.f32 %v4001, %v4026
      %v4031 = vadd.f32 %v4002, %v4027
      %vm4032 = vcmp.eq.s32.totalorder %v3973, 2
      %4034 = vset.pattern.permute.xlu0 0
      %4035 = vperm.xlu0 %4034, %v3942
      %v4036 = vpop.permute.xlu0 %4035
      %4039 = vset.pattern.permute.xlu0 0
      %4040 = vperm.xlu0 %4039, %v3945
      %v4041 = vpop.permute.xlu0 %4040
      %4044 = vset.pattern.permute.xlu0 0
      %4045 = vperm.xlu0 %4044, %v3950
      %v4046 = vpop.permute.xlu0 %4045
      %4049 = vset.pattern.permute.xlu0 0
      %4050 = vperm.xlu0 %4049, %v3953
      %v4051 = vpop.permute.xlu0 %4050
      %v4053 = vsel %vm4032, %v4036, 0.0
      %v4054 = vsel %vm4032, %v4041, 0.0
      %v4055 = vsel %vm4032, %v4046, 0.0
      %v4056 = vsel %vm4032, %v4051, 0.0
      %v4057 = vadd.f32 %v4028, %v4053
      %v4058 = vadd.f32 %v4029, %v4054
      %v4059 = vadd.f32 %v4030, %v4055
      %v4060 = vadd.f32 %v4031, %v4056
      %vm4061 = vcmp.eq.s32.totalorder %v3973, 3
      %4063 = vset.pattern.permute.xlu0 0
      %4064 = vperm.xlu0 %4063, %v3958
      %v4065 = vpop.permute.xlu0 %4064
      %4068 = vset.pattern.permute.xlu0 0
      %4069 = vperm.xlu0 %4068, %v3961
      %v4070 = vpop.permute.xlu0 %4069
      %4073 = vset.pattern.permute.xlu0 0
      %4074 = vperm.xlu0 %4073, %v3966
      %v4075 = vpop.permute.xlu0 %4074
      %4078 = vset.pattern.permute.xlu0 0
      %4079 = vperm.xlu0 %4078, %v3969
      %v4080 = vpop.permute.xlu0 %4079
      %v4082 = vsel %vm4061, %v4065, 0.0
      %v4083 = vsel %vm4061, %v4070, 0.0
      %v4084 = vsel %vm4061, %v4075, 0.0
      %v4085 = vsel %vm4061, %v4080, 0.0
      %v4086 = vadd.f32 %v4057, %v4082
      %v4087 = vadd.f32 %v4058, %v4083
      %v4088 = vadd.f32 %v4059, %v4084
      %v4089 = vadd.f32 %v4060, %v4085
      %v4090 = vld [vmem:[%s11] sm:$0x3]
      %v4091 = vpack.c.bf16 %v4087, %v4086
      %v4092 = vpack.c.bf16 %v4089, %v4088
      %v4094 = vsel %vm1891, %v4091, 0
      %v4097 = vsel %vm1891, %v4092, 0
      %v4100 = vsel %vm1895, %v4090, 0
      %4102 = vmatprep.subr.bf16.mxu0 0
      %4103 = vmatpush1.bf16.msra.mxu0 %v4100
      %4104 = vmatprep.subr.bf16.mxu0 0
      %4105 = vmatpush1.bf16.msra.mxu0 0
      %4106 = vmatprep.subr.bf16.mxu0 0
      %4107 = vmatpush1.bf16.msra.mxu0 0
      %4108 = vmatprep.subr.bf16.mxu0 0
      %4109 = vmatpush1.bf16.msra.mxu0 0
      %4110 = vmatprep.subr.bf16.mxu0 0
      %4111 = vmatpush1.bf16.msra.mxu0 0
      %4112 = vmatprep.subr.bf16.mxu0 0
      %4113 = vmatpush1.bf16.msra.mxu0 0
      %4114 = vmatprep.subr.bf16.mxu0 0
      %4115 = vmatpush1.bf16.msra.mxu0 0
      %4116 = vmatprep.subr.bf16.mxu0 0
      %4117 = vmatpush1.bf16.msra.mxu0 0
      %4118 = vmatprep.subr.bf16.mxu0 0
      %4119 = vmatpush1.bf16.msra.mxu0 0
      %4120 = vmatprep.subr.bf16.mxu0 0
      %4121 = vmatpush1.bf16.msra.mxu0 0
      %4122 = vmatprep.subr.bf16.mxu0 0
      %4123 = vmatpush1.bf16.msra.mxu0 0
      %4124 = vmatprep.subr.bf16.mxu0 0
      %4125 = vmatpush1.bf16.msra.mxu0 0
      %4126 = vmatprep.subr.bf16.mxu0 0
      %4127 = vmatpush1.bf16.msra.mxu0 0
      %4128 = vmatprep.subr.bf16.mxu0 0
      %4129 = vmatpush1.bf16.msra.mxu0 0
      %4130 = vmatprep.subr.bf16.mxu0 0
      %4131 = vmatpush1.bf16.msra.mxu0 0
      %4132 = vmatprep.subr.bf16.mxu0 0
      %4133 = vmatpush1.bf16.msra.mxu0 0
      %4134 = vmatprep.mubr.bf16.mxu0 0
      %4135 = vmatmul.mubr.bf16.gmra.mrb[0].mxu0 %v4094
      %v4136 = vpop.f32.mrb[0].mxu0
      %v4137 = vadd.f32 0.0, %v4136
      %v4138 = vpop.f32.mrb[0].mxu0
      %v4139 = vpop.f32.mrb[0].mxu0
      %v4140 = vadd.f32 0.0, %v4139
      %v4141 = vpop.f32.mrb[0].mxu0
      %4142 = vmatprep.mubr.bf16.mxu0 0
      %4143 = vmatmul.mubr.bf16.gmra.mrb[0].mxu0 %v4097
      %v4144 = vpop.f32.mrb[0].mxu0
      %v4145 = vadd.f32 0.0, %v4144
      %v4146 = vpop.f32.mrb[0].mxu0
      %v4147 = vpop.f32.mrb[0].mxu0
      %v4148 = vadd.f32 0.0, %v4147
      %v4149 = vpop.f32.mrb[0].mxu0
      %4150 = vdwg.mxu0
      %v4151 = vld [vmem:[%s73] sm:$0xf]
      %v4152 = vld [vmem:[%s73 + $0x4] sm:$0xf]
      %v4153 = vpack.c.bf16 %v4140, %v4137
      %v4154 = vpack.c.bf16 %v4148, %v4145
      %v4155 = vld [vmem:[%s67] sm:$0xff]
      %v4156 = vld [vmem:[%s67 + $0x8] sm:$0xff]
      %4158 = vset.pattern.permute.xlu0 0
      %4159 = vperm.xlu0 %4158, %v4155
      %v4160 = vpop.permute.xlu0 %4159
      %4163 = vset.pattern.permute.xlu0 0
      %4164 = vperm.xlu0 %4163, %v4156
      %v4165 = vpop.permute.xlu0 %4164
      %v4169 = vunpack.c.l.b16 %v4151
      %v4170 = vunpack.c.l.b16 %v4152
      %v4171 = vpack.c.b16 %v4170, %v4169
      %v4173 = vsel %vm3274, %v4171, 0
      %4175 = vmatprep.subr.bf16.mxu0 0
      %4176 = vmatpush1.bf16.msra.mxu0 %v4153
      %4177 = vmatprep.subr.bf16.mxu0 0
      %4178 = vmatpush1.bf16.msra.mxu0 %v4154
      %4179 = vmatprep.subr.bf16.mxu0 0
      %4180 = vmatpush1.bf16.msra.mxu0 0
      %4181 = vmatprep.subr.bf16.mxu0 0
      %4182 = vmatpush1.bf16.msra.mxu0 0
      %4183 = vmatprep.subr.bf16.mxu0 0
      %4184 = vmatpush1.bf16.msra.mxu0 0
      %4185 = vmatprep.subr.bf16.mxu0 0
      %4186 = vmatpush1.bf16.msra.mxu0 0
      %4187 = vmatprep.subr.bf16.mxu0 0
      %4188 = vmatpush1.bf16.msra.mxu0 0
      %4189 = vmatprep.subr.bf16.mxu0 0
      %4190 = vmatpush1.bf16.msra.mxu0 0
      %4191 = vmatprep.subr.bf16.mxu0 0
      %4192 = vmatpush1.bf16.msra.mxu0 0
      %4193 = vmatprep.subr.bf16.mxu0 0
      %4194 = vmatpush1.bf16.msra.mxu0 0
      %4195 = vmatprep.subr.bf16.mxu0 0
      %4196 = vmatpush1.bf16.msra.mxu0 0
      %4197 = vmatprep.subr.bf16.mxu0 0
      %4198 = vmatpush1.bf16.msra.mxu0 0
      %4199 = vmatprep.subr.bf16.mxu0 0
      %4200 = vmatpush1.bf16.msra.mxu0 0
      %4201 = vmatprep.subr.bf16.mxu0 0
      %4202 = vmatpush1.bf16.msra.mxu0 0
      %4203 = vmatprep.subr.bf16.mxu0 0
      %4204 = vmatpush1.bf16.msra.mxu0 0
      %4205 = vmatprep.subr.bf16.mxu0 0
      %4206 = vmatpush1.bf16.msra.mxu0 0
      %4207 = vmatprep.mubr.bf16.mxu0 0
      %4208 = vmatmul.mubr.bf16.gmra.mrb[0].mxu0 %v4173
      %v4209 = vpop.f32.mrb[0].mxu0
      %v4210 = vadd.f32 %v4160, %v4209
      %v4211 = vpop.f32.mrb[0].mxu0
      %v4212 = vpop.f32.mrb[0].mxu0
      %v4213 = vadd.f32 %v4165, %v4212
      %v4214 = vpop.f32.mrb[0].mxu0
      %4215 = vdwg.mxu0
      %4216 = vst.msk [vmem:[#allocation2 + $0x8] sm:$0xff] %vm1939, 0.0
      %4217 = vst.msk [vmem:[#allocation2 + $0x28] sm:$0xff] %vm1939, 0.0
      %4218 = vst.msk [vmem:[#allocation2 + $0x48] sm:$0xff] %vm1939, 0.0
      %4219 = vst.msk [vmem:[#allocation2 + $0x68] sm:$0xff] %vm1939, 0.0
      %4220 = vst.msk [vmem:[#allocation2 + $0x88] sm:$0xff] %vm1939, 0.0
      %4221 = vst.msk [vmem:[#allocation2 + $0xa8] sm:$0xff] %vm1939, 0.0
      %4222 = vst.msk [vmem:[#allocation2 + $0xc8] sm:$0xff] %vm1939, 0.0
      %4223 = vst.msk [vmem:[#allocation2 + $0xe8] sm:$0xff] %vm1939, 0.0
      %4224 = vst.msk [vmem:[#allocation2 + $0x108] sm:$0xff] %vm1939, 0.0
      %4225 = vst.msk [vmem:[#allocation2 + $0x128] sm:$0xff] %vm1939, 0.0
      %4226 = vst.msk [vmem:[#allocation2 + $0x148] sm:$0xff] %vm1939, 0.0
      %4227 = vst.msk [vmem:[#allocation2 + $0x168] sm:$0xff] %vm1939, 0.0
      %4228 = vst.msk [vmem:[#allocation2 + $0x188] sm:$0xff] %vm1939, 0.0
      %4229 = vst.msk [vmem:[#allocation2 + $0x1a8] sm:$0xff] %vm1939, 0.0
      %4230 = vst.msk [vmem:[#allocation2 + $0x1c8] sm:$0xff] %vm1939, 0.0
      %4231 = vst.msk [vmem:[#allocation2 + $0x1e8] sm:$0xff] %vm1939, 0.0
      %4232 = vst.msk [vmem:[#allocation2 + $0x208] sm:$0xff] %vm1939, 0.0
      %4233 = vst.msk [vmem:[#allocation2 + $0x228] sm:$0xff] %vm1939, 0.0
      %4234 = vst.msk [vmem:[#allocation2 + $0x248] sm:$0xff] %vm1939, 0.0
      %4235 = vst.msk [vmem:[#allocation2 + $0x268] sm:$0xff] %vm1939, 0.0
      %4236 = vst.msk [vmem:[#allocation2 + $0x8] sm:$0xff] %vm2548, 0.0
      %4237 = vst.msk [vmem:[#allocation2 + $0x28] sm:$0xff] %vm2548, 0.0
      %4238 = vst.msk [vmem:[#allocation2 + $0x48] sm:$0xff] %vm2548, 0.0
      %4239 = vst.msk [vmem:[#allocation2 + $0x68] sm:$0xff] %vm2548, 0.0
      %4240 = vst.msk [vmem:[#allocation2 + $0x88] sm:$0xff] %vm2548, 0.0
      %4241 = vst.msk [vmem:[#allocation2 + $0xa8] sm:$0xff] %vm2548, 0.0
      %4242 = vst.msk [vmem:[#allocation2 + $0xc8] sm:$0xff] %vm2548, 0.0
      %4243 = vst.msk [vmem:[#allocation2 + $0xe8] sm:$0xff] %vm2548, 0.0
      %4244 = vst.msk [vmem:[#allocation2 + $0x108] sm:$0xff] %vm2548, 0.0
      %4245 = vst.msk [vmem:[#allocation2 + $0x128] sm:$0xff] %vm2548, 0.0
      %4246 = vst.msk [vmem:[#allocation2 + $0x148] sm:$0xff] %vm2548, 0.0
      %4247 = vst.msk [vmem:[#allocation2 + $0x168] sm:$0xff] %vm2548, 0.0
      %4248 = vst.msk [vmem:[#allocation2 + $0x188] sm:$0xff] %vm2548, 0.0
      %4249 = vst.msk [vmem:[#allocation2 + $0x1a8] sm:$0xff] %vm2548, 0.0
      %4250 = vst.msk [vmem:[#allocation2 + $0x1c8] sm:$0xff] %vm2548, 0.0
      %4251 = vst.msk [vmem:[#allocation2 + $0x1e8] sm:$0xff] %vm2548, 0.0
      %4252 = vst.msk [vmem:[#allocation2 + $0x208] sm:$0xff] %vm2548, 0.0
      %4253 = vst.msk [vmem:[#allocation2 + $0x228] sm:$0xff] %vm2548, 0.0
      %4254 = vst.msk [vmem:[#allocation2 + $0x248] sm:$0xff] %vm2548, 0.0
      %4255 = vst.msk [vmem:[#allocation2 + $0x268] sm:$0xff] %vm2548, 0.0
      %4260 = vrot.lane.b32.xlu0 %v4137, 126
      %v4261 = vpop.permute.xlu0 %4260
      %4262 = vrot.lane.b32.xlu0 %v4140, 126
      %v4263 = vpop.permute.xlu0 %4262
      %4264 = vrot.lane.b32.xlu0 %v4145, 126
      %v4265 = vpop.permute.xlu0 %4264
      %4266 = vrot.lane.b32.xlu0 %v4148, 126
      %v4267 = vpop.permute.xlu0 %4266
      %4272 = vst.msk [vmem:[#allocation2] sm:$0xff] %vm1944, %v4261
      %4273 = vst.msk [vmem:[#allocation2 + $0x8] sm:$0xff] %vm2600, %v4261
      %4274 = vst.msk [vmem:[#allocation2 + $0x20] sm:$0xff] %vm1944, %v4263
      %4275 = vst.msk [vmem:[#allocation2 + $0x28] sm:$0xff] %vm2600, %v4263
      %4276 = vst.msk [vmem:[#allocation2 + $0x40] sm:$0xff] %vm1944, %v4265
      %4277 = vst.msk [vmem:[#allocation2 + $0x48] sm:$0xff] %vm2600, %v4265
      %4278 = vst.msk [vmem:[#allocation2 + $0x60] sm:$0xff] %vm1944, %v4267
      %4279 = vst.msk [vmem:[#allocation2 + $0x68] sm:$0xff] %vm2600, %v4267
      %4280 = vrot.lane.b32.xlu0 %v4137, 127
      %v4281 = vpop.permute.xlu0 %4280
      %4282 = vrot.lane.b32.xlu0 %v4140, 127
      %v4283 = vpop.permute.xlu0 %4282
      %4284 = vrot.lane.b32.xlu0 %v4145, 127
      %v4285 = vpop.permute.xlu0 %4284
      %4286 = vrot.lane.b32.xlu0 %v4148, 127
      %v4287 = vpop.permute.xlu0 %4286
      %4292 = vst.msk [vmem:[#allocation2 + $0x80] sm:$0xff] %vm2162, %v4281
      %4293 = vst.msk [vmem:[#allocation2 + $0x88] sm:$0xff] %vm2589, %v4281
      %4294 = vst.msk [vmem:[#allocation2 + $0xa0] sm:$0xff] %vm2162, %v4283
      %4295 = vst.msk [vmem:[#allocation2 + $0xa8] sm:$0xff] %vm2589, %v4283
      %4296 = vst.msk [vmem:[#allocation2 + $0xc0] sm:$0xff] %vm2162, %v4285
      %4297 = vst.msk [vmem:[#allocation2 + $0xc8] sm:$0xff] %vm2589, %v4285
      %4298 = vst.msk [vmem:[#allocation2 + $0xe0] sm:$0xff] %vm2162, %v4287
      %4299 = vst.msk [vmem:[#allocation2 + $0xe8] sm:$0xff] %vm2589, %v4287
      %4300 = vst.msk [vmem:[#allocation2 + $0x108] sm:$0xff] %vm2579, %v4137
      %4301 = vst.msk [vmem:[#allocation2 + $0x128] sm:$0xff] %vm2579, %v4140
      %4302 = vst.msk [vmem:[#allocation2 + $0x148] sm:$0xff] %vm2579, %v4145
      %4303 = vst.msk [vmem:[#allocation2 + $0x168] sm:$0xff] %vm2579, %v4148
      %4304 = vrot.lane.b32.xlu0 %v4137, 1
      %v4305 = vpop.permute.xlu0 %4304
      %4306 = vrot.lane.b32.xlu0 %v4140, 1
      %v4307 = vpop.permute.xlu0 %4306
      %4308 = vrot.lane.b32.xlu0 %v4145, 1
      %v4309 = vpop.permute.xlu0 %4308
      %4310 = vrot.lane.b32.xlu0 %v4148, 1
      %v4311 = vpop.permute.xlu0 %4310
      %4316 = vst.msk [vmem:[#allocation2 + $0x188] sm:$0xff] %vm2576, %v4305
      %4317 = vst.msk [vmem:[#allocation2 + $0x1a8] sm:$0xff] %vm2576, %v4307
      %4318 = vst.msk [vmem:[#allocation2 + $0x1c8] sm:$0xff] %vm2576, %v4309
      %4319 = vst.msk [vmem:[#allocation2 + $0x1e8] sm:$0xff] %vm2576, %v4311
      %4320 = vrot.lane.b32.xlu0 %v4137, 2
      %v4321 = vpop.permute.xlu0 %4320
      %4322 = vrot.lane.b32.xlu0 %v4140, 2
      %v4323 = vpop.permute.xlu0 %4322
      %4324 = vrot.lane.b32.xlu0 %v4145, 2
      %v4325 = vpop.permute.xlu0 %4324
      %4326 = vrot.lane.b32.xlu0 %v4148, 2
      %v4327 = vpop.permute.xlu0 %4326
      %4332 = vst.msk [vmem:[#allocation2 + $0x208] sm:$0xff] %vm2567, %v4321
      %4333 = vst.msk [vmem:[#allocation2 + $0x228] sm:$0xff] %vm2567, %v4323
      %4334 = vst.msk [vmem:[#allocation2 + $0x248] sm:$0xff] %vm2567, %v4325
      %4335 = vst.msk [vmem:[#allocation2 + $0x268] sm:$0xff] %vm2567, %v4327
      %v4336 = vld [vmem:[%s69] sm:$0xff]
      %v4337 = vld [vmem:[%s69 + $0x8] sm:$0xff]
      %v4338 = vld [vmem:[#allocation2 + $0x8] sm:$0xff]
      %v4339 = vld [vmem:[#allocation2 + $0x28] sm:$0xff]
      %v4340 = vld [vmem:[#allocation2 + $0x48] sm:$0xff]
      %v4341 = vld [vmem:[#allocation2 + $0x68] sm:$0xff]
      %v4342 = vld [vmem:[#allocation2 + $0x88] sm:$0xff]
      %v4343 = vld [vmem:[#allocation2 + $0xa8] sm:$0xff]
      %v4344 = vld [vmem:[#allocation2 + $0xc8] sm:$0xff]
      %v4345 = vld [vmem:[#allocation2 + $0xe8] sm:$0xff]
      %v4346 = vld [vmem:[#allocation2 + $0x108] sm:$0xff]
      %v4347 = vld [vmem:[#allocation2 + $0x128] sm:$0xff]
      %v4348 = vld [vmem:[#allocation2 + $0x148] sm:$0xff]
      %v4349 = vld [vmem:[#allocation2 + $0x168] sm:$0xff]
      %v4350 = vld [vmem:[#allocation2 + $0x188] sm:$0xff]
      %v4351 = vld [vmem:[#allocation2 + $0x1a8] sm:$0xff]
      %v4352 = vld [vmem:[#allocation2 + $0x1c8] sm:$0xff]
      %v4353 = vld [vmem:[#allocation2 + $0x1e8] sm:$0xff]
      %v4354 = vld [vmem:[#allocation2 + $0x208] sm:$0xff]
      %v4355 = vld [vmem:[#allocation2 + $0x228] sm:$0xff]
      %v4356 = vld [vmem:[#allocation2 + $0x248] sm:$0xff]
      %v4357 = vld [vmem:[#allocation2 + $0x268] sm:$0xff]
      %v4358 = vpack.c.bf16 %v4339, %v4338
      %v4359 = vpack.c.bf16 %v4341, %v4340
      %v4360 = vpack.c.bf16 %v4343, %v4342
      %v4361 = vpack.c.bf16 %v4345, %v4344
      %v4362 = vpack.c.bf16 %v4347, %v4346
      %v4363 = vpack.c.bf16 %v4349, %v4348
      %v4364 = vpack.c.bf16 %v4351, %v4350
      %v4365 = vpack.c.bf16 %v4353, %v4352
      %v4366 = vpack.c.bf16 %v4355, %v4354
      %v4367 = vpack.c.bf16 %v4357, %v4356
      %v4368 = vld [vmem:[%s63] sm:$0xff]
      %v4369 = vld [vmem:[%s63 + $0x8] sm:$0xff]
      %4371 = vset.pattern.permute.xlu0 0
      %4372 = vperm.xlu0 %4371, %v4368
      %v4373 = vpop.permute.xlu0 %4372
      %4376 = vset.pattern.permute.xlu0 0
      %4377 = vperm.xlu0 %4376, %v4369
      %v4378 = vpop.permute.xlu0 %4377
      %v4382 = vunpack.c.l.b16 %v4336
      %v4383 = vunpack.c.h.b16 %v4336
      %v4384 = vunpack.c.l.b16 %v4337
      %v4385 = vunpack.c.h.b16 %v4337
      %v4386 = vpack.c.b16 %v4384, %v4382
      %v4387 = vpack.c.b16 %v4385, %v4383
      %v4390 = vsel %vm3274, %v4387, 0
      %4392 = vmatprep.subr.bf16.mxu0 0
      %4393 = vmatpush1.bf16.msra.mxu0 %v4358
      %4394 = vmatprep.subr.bf16.mxu0 0
      %4395 = vmatpush1.bf16.msra.mxu0 %v4359
      %4396 = vmatprep.subr.bf16.mxu0 0
      %4397 = vmatpush1.bf16.msra.mxu0 %v4360
      %4398 = vmatprep.subr.bf16.mxu0 0
      %4399 = vmatpush1.bf16.msra.mxu0 %v4361
      %4400 = vmatprep.subr.bf16.mxu0 0
      %4401 = vmatpush1.bf16.msra.mxu0 %v4362
      %4402 = vmatprep.subr.bf16.mxu0 0
      %4403 = vmatpush1.bf16.msra.mxu0 %v4363
      %4404 = vmatprep.subr.bf16.mxu0 0
      %4405 = vmatpush1.bf16.msra.mxu0 %v4364
      %4406 = vmatprep.subr.bf16.mxu0 0
      %4407 = vmatpush1.bf16.msra.mxu0 %v4365
      %4408 = vmatprep.subr.bf16.mxu0 0
      %4409 = vmatpush1.bf16.msra.mxu0 %v4366
      %4410 = vmatprep.subr.bf16.mxu0 0
      %4411 = vmatpush1.bf16.msra.mxu0 %v4367
      %4412 = vmatprep.subr.bf16.mxu0 0
      %4413 = vmatpush1.bf16.msra.mxu0 0
      %4414 = vmatprep.subr.bf16.mxu0 0
      %4415 = vmatpush1.bf16.msra.mxu0 0
      %4416 = vmatprep.subr.bf16.mxu0 0
      %4417 = vmatpush1.bf16.msra.mxu0 0
      %4418 = vmatprep.subr.bf16.mxu0 0
      %4419 = vmatpush1.bf16.msra.mxu0 0
      %4420 = vmatprep.subr.bf16.mxu0 0
      %4421 = vmatpush1.bf16.msra.mxu0 0
      %4422 = vmatprep.subr.bf16.mxu0 0
      %4423 = vmatpush1.bf16.msra.mxu0 0
      %4424 = vmatprep.mubr.bf16.mxu0 %v4390
      %4425 = vmatmul.mubr.bf16.gmra.mrb[0].mxu0 %v4386
      %v4426 = vpop.f32.mrb[0].mxu0
      %v4427 = vadd.f32 %v4373, %v4426
      %v4428 = vpop.f32.mrb[0].mxu0
      %v4429 = vpop.f32.mrb[0].mxu0
      %v4430 = vadd.f32 %v4378, %v4429
      %v4431 = vpop.f32.mrb[0].mxu0
      %4432 = vdwg.mxu0
      %vm4433 = vcmp.ge.f32.partialorder %v4427, 0.0
      %vm4434 = vcmp.ge.f32.partialorder %v4430, 0.0
      %v4435 = vmul.f32 %v4427, 0.2
      %v4436 = vmul.f32 %v4430, 0.2
      %v4437 = vsel %vm4433, %v4427, %v4435
      %v4438 = vsel %vm4434, %v4430, %v4436
      %4439 = vst.msk [vmem:[#allocation2 + $0x8] sm:$0xff] %vm1939, 0.0
      %4440 = vst.msk [vmem:[#allocation2 + $0x28] sm:$0xff] %vm1939, 0.0
      %4441 = vst.msk [vmem:[#allocation2 + $0x48] sm:$0xff] %vm1939, 0.0
      %4442 = vst.msk [vmem:[#allocation2 + $0x68] sm:$0xff] %vm1939, 0.0
      %4443 = vst.msk [vmem:[#allocation2 + $0x88] sm:$0xff] %vm1939, 0.0
      %4444 = vst.msk [vmem:[#allocation2 + $0xa8] sm:$0xff] %vm1939, 0.0
      %4445 = vst.msk [vmem:[#allocation2 + $0xc8] sm:$0xff] %vm1939, 0.0
      %4446 = vst.msk [vmem:[#allocation2 + $0xe8] sm:$0xff] %vm1939, 0.0
      %4447 = vst.msk [vmem:[#allocation2 + $0x108] sm:$0xff] %vm1939, 0.0
      %4448 = vst.msk [vmem:[#allocation2 + $0x128] sm:$0xff] %vm1939, 0.0
      %4449 = vst.msk [vmem:[#allocation2 + $0x8] sm:$0xff] %vm2548, 0.0
      %4450 = vst.msk [vmem:[#allocation2 + $0x28] sm:$0xff] %vm2548, 0.0
      %4451 = vst.msk [vmem:[#allocation2 + $0x48] sm:$0xff] %vm2548, 0.0
      %4452 = vst.msk [vmem:[#allocation2 + $0x68] sm:$0xff] %vm2548, 0.0
      %4453 = vst.msk [vmem:[#allocation2 + $0x88] sm:$0xff] %vm2548, 0.0
      %4454 = vst.msk [vmem:[#allocation2 + $0xa8] sm:$0xff] %vm2548, 0.0
      %4455 = vst.msk [vmem:[#allocation2 + $0xc8] sm:$0xff] %vm2548, 0.0
      %4456 = vst.msk [vmem:[#allocation2 + $0xe8] sm:$0xff] %vm2548, 0.0
      %4457 = vst.msk [vmem:[#allocation2 + $0x108] sm:$0xff] %vm2548, 0.0
      %4458 = vst.msk [vmem:[#allocation2 + $0x128] sm:$0xff] %vm2548, 0.0
      %4461 = vrot.lane.b32.xlu0 %v4437, 2
      %v4462 = vpop.permute.xlu0 %4461
      %4463 = vrot.lane.b32.xlu0 %v4438, 2
      %v4464 = vpop.permute.xlu0 %4463
      %4467 = vst.msk [vmem:[#allocation2 + $0x8] sm:$0xff] %vm2567, %v4462
      %4468 = vst.msk [vmem:[#allocation2 + $0x28] sm:$0xff] %vm2567, %v4464
      %4469 = vrot.lane.b32.xlu0 %v4437, 1
      %v4470 = vpop.permute.xlu0 %4469
      %4471 = vrot.lane.b32.xlu0 %v4438, 1
      %v4472 = vpop.permute.xlu0 %4471
      %4475 = vst.msk [vmem:[#allocation2 + $0x48] sm:$0xff] %vm2576, %v4470
      %4476 = vst.msk [vmem:[#allocation2 + $0x68] sm:$0xff] %vm2576, %v4472
      %4477 = vst.msk [vmem:[#allocation2 + $0x88] sm:$0xff] %vm2579, %v4437
      %4478 = vst.msk [vmem:[#allocation2 + $0xa8] sm:$0xff] %vm2579, %v4438
      %4479 = vrot.lane.b32.xlu0 %v4437, 127
      %v4480 = vpop.permute.xlu0 %4479
      %4481 = vrot.lane.b32.xlu0 %v4438, 127
      %v4482 = vpop.permute.xlu0 %4481
      %4485 = vst.msk [vmem:[#allocation2 + $0xc0] sm:$0xff] %vm2162, %v4480
      %4486 = vst.msk [vmem:[#allocation2 + $0xc8] sm:$0xff] %vm2589, %v4480
      %4487 = vst.msk [vmem:[#allocation2 + $0xe0] sm:$0xff] %vm2162, %v4482
      %4488 = vst.msk [vmem:[#allocation2 + $0xe8] sm:$0xff] %vm2589, %v4482
      %4489 = vrot.lane.b32.xlu0 %v4437, 126
      %v4490 = vpop.permute.xlu0 %4489
      %4491 = vrot.lane.b32.xlu0 %v4438, 126
      %v4492 = vpop.permute.xlu0 %4491
      %4495 = vst.msk [vmem:[#allocation2 + $0x100] sm:$0xff] %vm1944, %v4490
      %4496 = vst.msk [vmem:[#allocation2 + $0x108] sm:$0xff] %vm2600, %v4490
      %4497 = vst.msk [vmem:[#allocation2 + $0x120] sm:$0xff] %vm1944, %v4492
      %4498 = vst.msk [vmem:[#allocation2 + $0x128] sm:$0xff] %vm2600, %v4492
      %v4499 = vld [vmem:[%s71] sm:$0xf]
      %v4500 = vld [vmem:[%s71 + $0x4] sm:$0xf]
      %v4501 = vld [vmem:[#allocation2 + $0x8] sm:$0xff]
      %v4502 = vld [vmem:[#allocation2 + $0x28] sm:$0xff]
      %v4503 = vld [vmem:[#allocation2 + $0x48] sm:$0xff]
      %v4504 = vld [vmem:[#allocation2 + $0x68] sm:$0xff]
      %v4505 = vld [vmem:[#allocation2 + $0x88] sm:$0xff]
      %v4506 = vld [vmem:[#allocation2 + $0xa8] sm:$0xff]
      %v4507 = vld [vmem:[#allocation2 + $0xc8] sm:$0xff]
      %v4508 = vld [vmem:[#allocation2 + $0xe8] sm:$0xff]
      %v4509 = vld [vmem:[#allocation2 + $0x108] sm:$0xff]
      %v4510 = vld [vmem:[#allocation2 + $0x128] sm:$0xff]
      %v4511 = vpack.c.bf16 %v4502, %v4501
      %v4512 = vpack.c.bf16 %v4504, %v4503
      %v4513 = vpack.c.bf16 %v4506, %v4505
      %v4514 = vpack.c.bf16 %v4508, %v4507
      %v4515 = vpack.c.bf16 %v4510, %v4509
      %v4516 = vld [vmem:[%s65] sm:$0xff]
      %v4517 = vld [vmem:[%s65 + $0x8] sm:$0xff]
      %4519 = vset.pattern.permute.xlu0 0
      %4520 = vperm.xlu0 %4519, %v4516
      %v4521 = vpop.permute.xlu0 %4520
      %4524 = vset.pattern.permute.xlu0 0
      %4525 = vperm.xlu0 %4524, %v4517
      %v4526 = vpop.permute.xlu0 %4525
      %v4530 = vunpack.c.l.b16 %v4499
      %v4531 = vunpack.c.l.b16 %v4500
      %v4532 = vpack.c.b16 %v4531, %v4530
      %v4534 = vsel %vm2638, %v4532, 0
      %4536 = vmatprep.subr.bf16.mxu0 0
      %4537 = vmatpush1.bf16.msra.mxu0 %v4511
      %4538 = vmatprep.subr.bf16.mxu0 0
      %4539 = vmatpush1.bf16.msra.mxu0 %v4512
      %4540 = vmatprep.subr.bf16.mxu0 0
      %4541 = vmatpush1.bf16.msra.mxu0 %v4513
      %4542 = vmatprep.subr.bf16.mxu0 0
      %4543 = vmatpush1.bf16.msra.mxu0 %v4514
      %4544 = vmatprep.subr.bf16.mxu0 0
      %4545 = vmatpush1.bf16.msra.mxu0 %v4515
      %4546 = vmatprep.subr.bf16.mxu0 0
      %4547 = vmatpush1.bf16.msra.mxu0 0
      %4548 = vmatprep.subr.bf16.mxu0 0
      %4549 = vmatpush1.bf16.msra.mxu0 0
      %4550 = vmatprep.subr.bf16.mxu0 0
      %4551 = vmatpush1.bf16.msra.mxu0 0
      %4552 = vmatprep.subr.bf16.mxu0 0
      %4553 = vmatpush1.bf16.msra.mxu0 0
      %4554 = vmatprep.subr.bf16.mxu0 0
      %4555 = vmatpush1.bf16.msra.mxu0 0
      %4556 = vmatprep.subr.bf16.mxu0 0
      %4557 = vmatpush1.bf16.msra.mxu0 0
      %4558 = vmatprep.subr.bf16.mxu0 0
      %4559 = vmatpush1.bf16.msra.mxu0 0
      %4560 = vmatprep.subr.bf16.mxu0 0
      %4561 = vmatpush1.bf16.msra.mxu0 0
      %4562 = vmatprep.subr.bf16.mxu0 0
      %4563 = vmatpush1.bf16.msra.mxu0 0
      %4564 = vmatprep.subr.bf16.mxu0 0
      %4565 = vmatpush1.bf16.msra.mxu0 0
      %4566 = vmatprep.subr.bf16.mxu0 0
      %4567 = vmatpush1.bf16.msra.mxu0 0
      %4568 = vmatprep.mubr.bf16.mxu0 0
      %4569 = vmatmul.mubr.bf16.gmra.mrb[0].mxu0 %v4534
      %v4570 = vpop.f32.mrb[0].mxu0
      %v4571 = vadd.f32 %v4521, %v4570
      %v4572 = vpop.f32.mrb[0].mxu0
      %v4573 = vpop.f32.mrb[0].mxu0
      %v4574 = vadd.f32 %v4526, %v4573
      %v4575 = vpop.f32.mrb[0].mxu0
      %4576 = vdwg.mxu0
      %v4577 = vadd.f32 %v4571, %v4210
      %v4578 = vadd.f32 %v4574, %v4213
      %vm4579 = vcmp.ge.f32.partialorder %v4577, 0.0
      %vm4580 = vcmp.ge.f32.partialorder %v4578, 0.0
      %v4581 = vmul.f32 %v4577, 0.2
      %v4582 = vmul.f32 %v4578, 0.2
      %v4583 = vsel %vm4579, %v4577, %v4581
      %v4584 = vsel %vm4580, %v4578, %v4582
      %v4585 = vld [vmem:[%s9] sm:$0xf]
      %v4586 = vld [vmem:[%s9 + $0x4] sm:$0xf]
      %v4587 = vpack.c.bf16 %v4584, %v4583
      %v4590 = vunpack.c.l.b16 %v4585
      %v4591 = vunpack.c.l.b16 %v4586
      %v4592 = vpack.c.b16 %v4591, %v4590
      %v4595 = vsel %vm2579, %v4587, 0
      %4597 = vmatprep.subr.bf16.mxu0 0
      %4598 = vmatpush1.bf16.msra.mxu0 %v4592
      %4599 = vmatprep.subr.bf16.mxu0 0
      %4600 = vmatpush1.bf16.msra.mxu0 0
      %4601 = vmatprep.subr.bf16.mxu0 0
      %4602 = vmatpush1.bf16.msra.mxu0 0
      %4603 = vmatprep.subr.bf16.mxu0 0
      %4604 = vmatpush1.bf16.msra.mxu0 0
      %4605 = vmatprep.subr.bf16.mxu0 0
      %4606 = vmatpush1.bf16.msra.mxu0 0
      %4607 = vmatprep.subr.bf16.mxu0 0
      %4608 = vmatpush1.bf16.msra.mxu0 0
      %4609 = vmatprep.subr.bf16.mxu0 0
      %4610 = vmatpush1.bf16.msra.mxu0 0
      %4611 = vmatprep.subr.bf16.mxu0 0
      %4612 = vmatpush1.bf16.msra.mxu0 0
      %4613 = vmatprep.subr.bf16.mxu0 0
      %4614 = vmatpush1.bf16.msra.mxu0 0
      %4615 = vmatprep.subr.bf16.mxu0 0
      %4616 = vmatpush1.bf16.msra.mxu0 0
      %4617 = vmatprep.subr.bf16.mxu0 0
      %4618 = vmatpush1.bf16.msra.mxu0 0
      %4619 = vmatprep.subr.bf16.mxu0 0
      %4620 = vmatpush1.bf16.msra.mxu0 0
      %4621 = vmatprep.subr.bf16.mxu0 0
      %4622 = vmatpush1.bf16.msra.mxu0 0
      %4623 = vmatprep.subr.bf16.mxu0 0
      %4624 = vmatpush1.bf16.msra.mxu0 0
      %4625 = vmatprep.subr.bf16.mxu0 0
      %4626 = vmatpush1.bf16.msra.mxu0 0
      %4627 = vmatprep.subr.bf16.mxu0 0
      %4628 = vmatpush1.bf16.msra.mxu0 0
      %4629 = vmatprep.mubr.bf16.mxu0 0
      %4630 = vmatmul.mubr.bf16.gmra.mrb[0].mxu0 %v4595
      %v4631 = vpop.f32.mrb[0].mxu0
      %v4632 = vadd.f32 0.0, %v4631
      %v4633 = vpop.f32.mrb[0].mxu0
      %v4634 = vpop.f32.mrb[0].mxu0
      %v4635 = vadd.f32 0.0, %v4634
      %v4636 = vpop.f32.mrb[0].mxu0
      %4637 = vdwg.mxu0
      %v4638 = vld [vmem:[%s85] sm:$0xf]
      %v4639 = vpack.c.bf16 %v4635, %v4632
      %v4640 = vld [vmem:[%s79] sm:$0xff]
      %4642 = vset.pattern.permute.xlu0 0
      %4643 = vperm.xlu0 %4642, %v4640
      %v4644 = vpop.permute.xlu0 %4643
      %v4647 = vsel %vm2579, %v4638, 0
      %4649 = vmatprep.subr.bf16.mxu0 0
      %4650 = vmatpush1.bf16.msra.mxu0 %v4639
      %4651 = vmatprep.subr.bf16.mxu0 0
      %4652 = vmatpush1.bf16.msra.mxu0 0
      %4653 = vmatprep.subr.bf16.mxu0 0
      %4654 = vmatpush1.bf16.msra.mxu0 0
      %4655 = vmatprep.subr.bf16.mxu0 0
      %4656 = vmatpush1.bf16.msra.mxu0 0
      %4657 = vmatprep.subr.bf16.mxu0 0
      %4658 = vmatpush1.bf16.msra.mxu0 0
      %4659 = vmatprep.subr.bf16.mxu0 0
      %4660 = vmatpush1.bf16.msra.mxu0 0
      %4661 = vmatprep.subr.bf16.mxu0 0
      %4662 = vmatpush1.bf16.msra.mxu0 0
      %4663 = vmatprep.subr.bf16.mxu0 0
      %4664 = vmatpush1.bf16.msra.mxu0 0
      %4665 = vmatprep.subr.bf16.mxu0 0
      %4666 = vmatpush1.bf16.msra.mxu0 0
      %4667 = vmatprep.subr.bf16.mxu0 0
      %4668 = vmatpush1.bf16.msra.mxu0 0
      %4669 = vmatprep.subr.bf16.mxu0 0
      %4670 = vmatpush1.bf16.msra.mxu0 0
      %4671 = vmatprep.subr.bf16.mxu0 0
      %4672 = vmatpush1.bf16.msra.mxu0 0
      %4673 = vmatprep.subr.bf16.mxu0 0
      %4674 = vmatpush1.bf16.msra.mxu0 0
      %4675 = vmatprep.subr.bf16.mxu0 0
      %4676 = vmatpush1.bf16.msra.mxu0 0
      %4677 = vmatprep.subr.bf16.mxu0 0
      %4678 = vmatpush1.bf16.msra.mxu0 0
      %4679 = vmatprep.subr.bf16.mxu0 0
      %4680 = vmatpush1.bf16.msra.mxu0 0
      %4681 = vmatprep.mubr.bf16.mxu0 0
      %4682 = vmatmul.mubr.bf16.gmra.mrb[0].mxu0 %v4647
      %v4683 = vpop.f32.mrb[0].mxu0
      %v4684 = vadd.f32 %v4644, %v4683
      %v4685 = vpop.f32.mrb[0].mxu0
      %v4686 = vpop.f32.mrb[0].mxu0
      %v4687 = vpop.f32.mrb[0].mxu0
      %4688 = vdwg.mxu0
      %4689 = vst.msk [vmem:[#allocation2 + $0x8] sm:$0xff] %vm1939, 0.0
      %4690 = vst.msk [vmem:[#allocation2 + $0x28] sm:$0xff] %vm1939, 0.0
      %4691 = vst.msk [vmem:[#allocation2 + $0x48] sm:$0xff] %vm1939, 0.0
      %4692 = vst.msk [vmem:[#allocation2 + $0x68] sm:$0xff] %vm1939, 0.0
      %4693 = vst.msk [vmem:[#allocation2 + $0x88] sm:$0xff] %vm1939, 0.0
      %4694 = vst.msk [vmem:[#allocation2 + $0xa8] sm:$0xff] %vm1939, 0.0
      %4695 = vst.msk [vmem:[#allocation2 + $0xc8] sm:$0xff] %vm1939, 0.0
      %4696 = vst.msk [vmem:[#allocation2 + $0xe8] sm:$0xff] %vm1939, 0.0
      %4697 = vst.msk [vmem:[#allocation2 + $0x108] sm:$0xff] %vm1939, 0.0
      %4698 = vst.msk [vmem:[#allocation2 + $0x128] sm:$0xff] %vm1939, 0.0
      %4699 = vst.msk [vmem:[#allocation2 + $0x8] sm:$0xff] %vm2140, 0.0
      %4700 = vst.msk [vmem:[#allocation2 + $0x28] sm:$0xff] %vm2140, 0.0
      %4701 = vst.msk [vmem:[#allocation2 + $0x48] sm:$0xff] %vm2140, 0.0
      %4702 = vst.msk [vmem:[#allocation2 + $0x68] sm:$0xff] %vm2140, 0.0
      %4703 = vst.msk [vmem:[#allocation2 + $0x88] sm:$0xff] %vm2140, 0.0
      %4704 = vst.msk [vmem:[#allocation2 + $0xa8] sm:$0xff] %vm2140, 0.0
      %4705 = vst.msk [vmem:[#allocation2 + $0xc8] sm:$0xff] %vm2140, 0.0
      %4706 = vst.msk [vmem:[#allocation2 + $0xe8] sm:$0xff] %vm2140, 0.0
      %4707 = vst.msk [vmem:[#allocation2 + $0x108] sm:$0xff] %vm2140, 0.0
      %4708 = vst.msk [vmem:[#allocation2 + $0x128] sm:$0xff] %vm2140, 0.0
      %4711 = vrot.lane.b32.xlu0 %v4632, 126
      %v4712 = vpop.permute.xlu0 %4711
      %4713 = vrot.lane.b32.xlu0 %v4635, 126
      %v4714 = vpop.permute.xlu0 %4713
      %4717 = vst.msk [vmem:[#allocation2] sm:$0xff] %vm1944, %v4712
      %4718 = vst.msk [vmem:[#allocation2 + $0x8] sm:$0xff] %vm2170, %v4712
      %4719 = vst.msk [vmem:[#allocation2 + $0x20] sm:$0xff] %vm1944, %v4714
      %4720 = vst.msk [vmem:[#allocation2 + $0x28] sm:$0xff] %vm2170, %v4714
      %4721 = vrot.lane.b32.xlu0 %v4632, 127
      %v4722 = vpop.permute.xlu0 %4721
      %4723 = vrot.lane.b32.xlu0 %v4635, 127
      %v4724 = vpop.permute.xlu0 %4723
      %4727 = vst.msk [vmem:[#allocation2 + $0x40] sm:$0xff] %vm2162, %v4722
      %4728 = vst.msk [vmem:[#allocation2 + $0x48] sm:$0xff] %vm2164, %v4722
      %4729 = vst.msk [vmem:[#allocation2 + $0x60] sm:$0xff] %vm2162, %v4724
      %4730 = vst.msk [vmem:[#allocation2 + $0x68] sm:$0xff] %vm2164, %v4724
      %4731 = vst.msk [vmem:[#allocation2 + $0x88] sm:$0xff] %vm2157, %v4632
      %4732 = vst.msk [vmem:[#allocation2 + $0xa8] sm:$0xff] %vm2157, %v4635
      %4733 = vrot.lane.b32.xlu0 %v4632, 1
      %v4734 = vpop.permute.xlu0 %4733
      %4735 = vrot.lane.b32.xlu0 %v4635, 1
      %v4736 = vpop.permute.xlu0 %4735
      %4739 = vst.msk [vmem:[#allocation2 + $0xc8] sm:$0xff] %vm2155, %v4734
      %4740 = vst.msk [vmem:[#allocation2 + $0xe8] sm:$0xff] %vm2155, %v4736
      %4741 = vrot.lane.b32.xlu0 %v4632, 2
      %v4742 = vpop.permute.xlu0 %4741
      %4743 = vrot.lane.b32.xlu0 %v4635, 2
      %v4744 = vpop.permute.xlu0 %4743
      %4747 = vst.msk [vmem:[#allocation2 + $0x108] sm:$0xff] %vm2150, %v4742
      %4748 = vst.msk [vmem:[#allocation2 + $0x128] sm:$0xff] %vm2150, %v4744
      %v4749 = vld [vmem:[%s81] sm:$0xf]
      %v4750 = vld [vmem:[#allocation2 + $0x8] sm:$0xff]
      %v4751 = vld [vmem:[#allocation2 + $0x28] sm:$0xff]
      %v4752 = vld [vmem:[#allocation2 + $0x48] sm:$0xff]
      %v4753 = vld [vmem:[#allocation2 + $0x68] sm:$0xff]
      %v4754 = vld [vmem:[#allocation2 + $0x88] sm:$0xff]
      %v4755 = vld [vmem:[#allocation2 + $0xa8] sm:$0xff]
      %v4756 = vld [vmem:[#allocation2 + $0xc8] sm:$0xff]
      %v4757 = vld [vmem:[#allocation2 + $0xe8] sm:$0xff]
      %v4758 = vld [vmem:[#allocation2 + $0x108] sm:$0xff]
      %v4759 = vld [vmem:[#allocation2 + $0x128] sm:$0xff]
      %v4760 = vpack.c.bf16 %v4751, %v4750
      %v4761 = vpack.c.bf16 %v4753, %v4752
      %v4762 = vpack.c.bf16 %v4755, %v4754
      %v4763 = vpack.c.bf16 %v4757, %v4756
      %v4764 = vpack.c.bf16 %v4759, %v4758
      %v4765 = vld [vmem:[%s75] sm:$0xff]
      %4767 = vset.pattern.permute.xlu0 0
      %4768 = vperm.xlu0 %4767, %v4765
      %v4769 = vpop.permute.xlu0 %4768
      %v4772 = vsel %vm2638, %v4749, 0
      %4774 = vmatprep.subr.bf16.mxu0 0
      %4775 = vmatpush1.bf16.msra.mxu0 %v4760
      %4776 = vmatprep.subr.bf16.mxu0 0
      %4777 = vmatpush1.bf16.msra.mxu0 %v4761
      %4778 = vmatprep.subr.bf16.mxu0 0
      %4779 = vmatpush1.bf16.msra.mxu0 %v4762
      %4780 = vmatprep.subr.bf16.mxu0 0
      %4781 = vmatpush1.bf16.msra.mxu0 %v4763
      %4782 = vmatprep.subr.bf16.mxu0 0
      %4783 = vmatpush1.bf16.msra.mxu0 %v4764
      %4784 = vmatprep.subr.bf16.mxu0 0
      %4785 = vmatpush1.bf16.msra.mxu0 0
      %4786 = vmatprep.subr.bf16.mxu0 0
      %4787 = vmatpush1.bf16.msra.mxu0 0
      %4788 = vmatprep.subr.bf16.mxu0 0
      %4789 = vmatpush1.bf16.msra.mxu0 0
      %4790 = vmatprep.subr.bf16.mxu0 0
      %4791 = vmatpush1.bf16.msra.mxu0 0
      %4792 = vmatprep.subr.bf16.mxu0 0
      %4793 = vmatpush1.bf16.msra.mxu0 0
      %4794 = vmatprep.subr.bf16.mxu0 0
      %4795 = vmatpush1.bf16.msra.mxu0 0
      %4796 = vmatprep.subr.bf16.mxu0 0
      %4797 = vmatpush1.bf16.msra.mxu0 0
      %4798 = vmatprep.subr.bf16.mxu0 0
      %4799 = vmatpush1.bf16.msra.mxu0 0
      %4800 = vmatprep.subr.bf16.mxu0 0
      %4801 = vmatpush1.bf16.msra.mxu0 0
      %4802 = vmatprep.subr.bf16.mxu0 0
      %4803 = vmatpush1.bf16.msra.mxu0 0
      %4804 = vmatprep.subr.bf16.mxu0 0
      %4805 = vmatpush1.bf16.msra.mxu0 0
      %4806 = vmatprep.mubr.bf16.mxu0 0
      %4807 = vmatmul.mubr.bf16.gmra.mrb[0].mxu0 %v4772
      %v4808 = vpop.f32.mrb[0].mxu0
      %v4809 = vadd.f32 %v4769, %v4808
      %v4810 = vpop.f32.mrb[0].mxu0
      %v4811 = vpop.f32.mrb[0].mxu0
      %v4812 = vpop.f32.mrb[0].mxu0
      %4813 = vdwg.mxu0
      %vm4814 = vcmp.ge.f32.partialorder %v4809, 0.0
      %v4815 = vmul.f32 %v4809, 0.2
      %v4816 = vsel %vm4814, %v4809, %v4815
      %4817 = vst.msk [vmem:[#allocation2 + $0x8] sm:$0xff] %vm1939, 0.0
      %4818 = vst.msk [vmem:[#allocation2 + $0x28] sm:$0xff] %vm1939, 0.0
      %4819 = vst.msk [vmem:[#allocation2 + $0x48] sm:$0xff] %vm1939, 0.0
      %4820 = vst.msk [vmem:[#allocation2 + $0x68] sm:$0xff] %vm1939, 0.0
      %4821 = vst.msk [vmem:[#allocation2 + $0x88] sm:$0xff] %vm1939, 0.0
      %4822 = vst.msk [vmem:[#allocation2 + $0x8] sm:$0xff] %vm2140, 0.0
      %4823 = vst.msk [vmem:[#allocation2 + $0x28] sm:$0xff] %vm2140, 0.0
      %4824 = vst.msk [vmem:[#allocation2 + $0x48] sm:$0xff] %vm2140, 0.0
      %4825 = vst.msk [vmem:[#allocation2 + $0x68] sm:$0xff] %vm2140, 0.0
      %4826 = vst.msk [vmem:[#allocation2 + $0x88] sm:$0xff] %vm2140, 0.0
      %4828 = vrot.lane.b32.xlu0 %v4816, 2
      %v4829 = vpop.permute.xlu0 %4828
      %4831 = vst.msk [vmem:[#allocation2 + $0x8] sm:$0xff] %vm2150, %v4829
      %4832 = vrot.lane.b32.xlu0 %v4816, 1
      %v4833 = vpop.permute.xlu0 %4832
      %4835 = vst.msk [vmem:[#allocation2 + $0x28] sm:$0xff] %vm2155, %v4833
      %4836 = vst.msk [vmem:[#allocation2 + $0x48] sm:$0xff] %vm2157, %v4816
      %4837 = vrot.lane.b32.xlu0 %v4816, 127
      %v4838 = vpop.permute.xlu0 %4837
      %4840 = vst.msk [vmem:[#allocation2 + $0x60] sm:$0xff] %vm2162, %v4838
      %4841 = vst.msk [vmem:[#allocation2 + $0x68] sm:$0xff] %vm2164, %v4838
      %4842 = vrot.lane.b32.xlu0 %v4816, 126
      %v4843 = vpop.permute.xlu0 %4842
      %4845 = vst.msk [vmem:[#allocation2 + $0x80] sm:$0xff] %vm1944, %v4843
      %4846 = vst.msk [vmem:[#allocation2 + $0x88] sm:$0xff] %vm2170, %v4843
      %v4847 = vld [vmem:[%s83] sm:$0xf]
      %v4848 = vld [vmem:[#allocation2 + $0x8] sm:$0xff]
      %v4849 = vld [vmem:[#allocation2 + $0x28] sm:$0xff]
      %v4850 = vld [vmem:[#allocation2 + $0x48] sm:$0xff]
      %v4851 = vld [vmem:[#allocation2 + $0x68] sm:$0xff]
      %v4852 = vld [vmem:[#allocation2 + $0x88] sm:$0xff]
      %v4853 = vpack.c.bf16 %v4849, %v4848
      %v4854 = vpack.c.bf16 %v4851, %v4850
      %v4855 = vpack.c.bf16 %v4852, %v4852
      %v4856 = vld [vmem:[%s77] sm:$0xff]
      %4858 = vset.pattern.permute.xlu0 0
      %4859 = vperm.xlu0 %4858, %v4856
      %v4860 = vpop.permute.xlu0 %4859
      %v4863 = vsel %vm2187, %v4847, 0
      %v4866 = vsel %vm2191, %v4855, 0
      %4868 = vmatprep.subr.bf16.mxu0 0
      %4869 = vmatpush1.bf16.msra.mxu0 %v4853
      %4870 = vmatprep.subr.bf16.mxu0 0
      %4871 = vmatpush1.bf16.msra.mxu0 %v4854
      %4872 = vmatprep.subr.bf16.mxu0 0
      %4873 = vmatpush1.bf16.msra.mxu0 %v4866
      %4874 = vmatprep.subr.bf16.mxu0 0
      %4875 = vmatpush1.bf16.msra.mxu0 0
      %4876 = vmatprep.subr.bf16.mxu0 0
      %4877 = vmatpush1.bf16.msra.mxu0 0
      %4878 = vmatprep.subr.bf16.mxu0 0
      %4879 = vmatpush1.bf16.msra.mxu0 0
      %4880 = vmatprep.subr.bf16.mxu0 0
      %4881 = vmatpush1.bf16.msra.mxu0 0
      %4882 = vmatprep.subr.bf16.mxu0 0
      %4883 = vmatpush1.bf16.msra.mxu0 0
      %4884 = vmatprep.subr.bf16.mxu0 0
      %4885 = vmatpush1.bf16.msra.mxu0 0
      %4886 = vmatprep.subr.bf16.mxu0 0
      %4887 = vmatpush1.bf16.msra.mxu0 0
      %4888 = vmatprep.subr.bf16.mxu0 0
      %4889 = vmatpush1.bf16.msra.mxu0 0
      %4890 = vmatprep.subr.bf16.mxu0 0
      %4891 = vmatpush1.bf16.msra.mxu0 0
      %4892 = vmatprep.subr.bf16.mxu0 0
      %4893 = vmatpush1.bf16.msra.mxu0 0
      %4894 = vmatprep.subr.bf16.mxu0 0
      %4895 = vmatpush1.bf16.msra.mxu0 0
      %4896 = vmatprep.subr.bf16.mxu0 0
      %4897 = vmatpush1.bf16.msra.mxu0 0
      %4898 = vmatprep.subr.bf16.mxu0 0
      %4899 = vmatpush1.bf16.msra.mxu0 0
      %4900 = vmatprep.mubr.bf16.mxu0 0
      %4901 = vmatmul.mubr.bf16.gmra.mrb[0].mxu0 %v4863
      %v4902 = vpop.f32.mrb[0].mxu0
      %v4903 = vadd.f32 %v4860, %v4902
      %v4904 = vpop.f32.mrb[0].mxu0
      %v4905 = vpop.f32.mrb[0].mxu0
      %v4906 = vpop.f32.mrb[0].mxu0
      %4907 = vdwg.mxu0
      %v4908 = vadd.f32 %v4903, %v4684
      %vm4909 = vcmp.ge.f32.partialorder %v4908, 0.0
      %v4910 = vmul.f32 %v4908, 0.2
      %v4911 = vsel %vm4909, %v4908, %v4910
      %v4912 = vld [vmem:[%s13] sm:$0xff]
      %v4913 = vld [vmem:[%s13 + $0x8] sm:$0xff]
      %v4914 = vld [vmem:[%s13 + $0x10] sm:$0xff]
      %v4915 = vld [vmem:[%s13 + $0x18] sm:$0xff]
      %v4916 = vld [vmem:[%s13 + $0x20] sm:$0xff]
      %v4917 = vld [vmem:[%s13 + $0x28] sm:$0xff]
      %v4918 = vld [vmem:[%s13 + $0x30] sm:$0xff]
      %v4919 = vld [vmem:[%s13 + $0x38] sm:$0xff]
      %v4920 = vpack.c.bf16 %v4911, %v4911
      %v4929 = vunpack.c.l.b16 %v4912
      %v4930 = vunpack.c.h.b16 %v4912
      %v4931 = vunpack.c.l.b16 %v4913
      %v4932 = vunpack.c.h.b16 %v4913
      %v4933 = vunpack.c.l.b16 %v4914
      %v4934 = vunpack.c.h.b16 %v4914
      %v4935 = vunpack.c.l.b16 %v4915
      %v4936 = vunpack.c.h.b16 %v4915
      %v4937 = vunpack.c.l.b16 %v4916
      %v4938 = vunpack.c.h.b16 %v4916
      %v4939 = vunpack.c.l.b16 %v4917
      %v4940 = vunpack.c.h.b16 %v4917
      %v4941 = vunpack.c.l.b16 %v4918
      %v4942 = vunpack.c.h.b16 %v4918
      %v4943 = vunpack.c.l.b16 %v4919
      %v4944 = vunpack.c.h.b16 %v4919
      %v4945 = vpack.c.b16 %v4931, %v4929
      %v4946 = vpack.c.b16 %v4932, %v4930
      %v4947 = vpack.c.b16 %v4935, %v4933
      %v4948 = vpack.c.b16 %v4936, %v4934
      %v4949 = vpack.c.b16 %v4939, %v4937
      %v4950 = vpack.c.b16 %v4940, %v4938
      %v4951 = vpack.c.b16 %v4943, %v4941
      %v4952 = vpack.c.b16 %v4944, %v4942
      %v4962 = vsel %vm2157, %v4920, 0
      %4964 = vmatprep.subr.bf16.mxu0 %v4946
      %4965 = vmatpush1.bf16.msra.mxu0 %v4945
      %4966 = vmatprep.subr.bf16.mxu0 %v4948
      %4967 = vmatpush1.bf16.msra.mxu0 %v4947
      %4968 = vmatprep.subr.bf16.mxu0 %v4950
      %4969 = vmatpush1.bf16.msra.mxu0 %v4949
      %4970 = vmatprep.subr.bf16.mxu0 %v4952
      %4971 = vmatpush1.bf16.msra.mxu0 %v4951
      %4972 = vmatprep.subr.bf16.mxu0 0
      %4973 = vmatpush1.bf16.msra.mxu0 0
      %4974 = vmatprep.subr.bf16.mxu0 0
      %4975 = vmatpush1.bf16.msra.mxu0 0
      %4976 = vmatprep.subr.bf16.mxu0 0
      %4977 = vmatpush1.bf16.msra.mxu0 0
      %4978 = vmatprep.subr.bf16.mxu0 0
      %4979 = vmatpush1.bf16.msra.mxu0 0
      %4980 = vmatprep.subr.bf16.mxu0 0
      %4981 = vmatpush1.bf16.msra.mxu0 0
      %4982 = vmatprep.subr.bf16.mxu0 0
      %4983 = vmatpush1.bf16.msra.mxu0 0
      %4984 = vmatprep.subr.bf16.mxu0 0
      %4985 = vmatpush1.bf16.msra.mxu0 0
      %4986 = vmatprep.subr.bf16.mxu0 0
      %4987 = vmatpush1.bf16.msra.mxu0 0
      %4988 = vmatprep.subr.bf16.mxu0 0
      %4989 = vmatpush1.bf16.msra.mxu0 0
      %4990 = vmatprep.subr.bf16.mxu0 0
      %4991 = vmatpush1.bf16.msra.mxu0 0
      %4992 = vmatprep.subr.bf16.mxu0 0
      %4993 = vmatpush1.bf16.msra.mxu0 0
      %4994 = vmatprep.subr.bf16.mxu0 0
      %4995 = vmatpush1.bf16.msra.mxu0 0
      %4996 = vmatprep.mubr.bf16.mxu0 0
      %4997 = vmatmul.mubr.bf16.gmra.mrb[0].mxu0 %v4962
      %v4998 = vpop.f32.mrb[0].mxu0
      %v4999 = vadd.f32 0.0, %v4998
      %v5000 = vpop.f32.mrb[0].mxu0
      %v5001 = vadd.f32 0.0, %v5000
      %v5002 = vpop.f32.mrb[0].mxu0
      %v5003 = vpop.f32.mrb[0].mxu0
      %5004 = vdwg.mxu0
      %v5005 = vld [vmem:[%s97] sm:$0x3]
      %v5006 = vpack.c.bf16 %v4999, %v4999
      %v5007 = vpack.c.bf16 %v5001, %v5001
      %v5008 = vld [vmem:[%s91] sm:$0xf]
      %5010 = vset.pattern.permute.xlu0 0
      %5011 = vperm.xlu0 %5010, %v5008
      %v5012 = vpop.permute.xlu0 %5011
      %v5015 = vsel %vm2335, %v5005, 0
      %v5018 = vsel %vm2191, %v5006, 0
      %v5021 = vsel %vm2191, %v5007, 0
      %5023 = vmatprep.subr.bf16.mxu0 %v5021
      %5024 = vmatpush1.bf16.msra.mxu0 %v5018
      %5025 = vmatprep.subr.bf16.mxu0 0
      %5026 = vmatpush1.bf16.msra.mxu0 0
      %5027 = vmatprep.subr.bf16.mxu0 0
      %5028 = vmatpush1.bf16.msra.mxu0 0
      %5029 = vmatprep.subr.bf16.mxu0 0
      %5030 = vmatpush1.bf16.msra.mxu0 0
      %5031 = vmatprep.subr.bf16.mxu0 0
      %5032 = vmatpush1.bf16.msra.mxu0 0
      %5033 = vmatprep.subr.bf16.mxu0 0
      %5034 = vmatpush1.bf16.msra.mxu0 0
      %5035 = vmatprep.subr.bf16.mxu0 0
      %5036 = vmatpush1.bf16.msra.mxu0 0
      %5037 = vmatprep.subr.bf16.mxu0 0
      %5038 = vmatpush1.bf16.msra.mxu0 0
      %5039 = vmatprep.subr.bf16.mxu0 0
      %5040 = vmatpush1.bf16.msra.mxu0 0
      %5041 = vmatprep.subr.bf16.mxu0 0
      %5042 = vmatpush1.bf16.msra.mxu0 0
      %5043 = vmatprep.subr.bf16.mxu0 0
      %5044 = vmatpush1.bf16.msra.mxu0 0
      %5045 = vmatprep.subr.bf16.mxu0 0
      %5046 = vmatpush1.bf16.msra.mxu0 0
      %5047 = vmatprep.subr.bf16.mxu0 0
      %5048 = vmatpush1.bf16.msra.mxu0 0
      %5049 = vmatprep.subr.bf16.mxu0 0
      %5050 = vmatpush1.bf16.msra.mxu0 0
      %5051 = vmatprep.subr.bf16.mxu0 0
      %5052 = vmatpush1.bf16.msra.mxu0 0
      %5053 = vmatprep.subr.bf16.mxu0 0
      %5054 = vmatpush1.bf16.msra.mxu0 0
      %5055 = vmatprep.mubr.bf16.mxu0 0
      %5056 = vmatmul.mubr.bf16.gmra.mrb[0].mxu0 %v5015
      %v5057 = vpop.f32.mrb[0].mxu0
      %v5058 = vadd.f32 %v5012, %v5057
      %v5059 = vpop.f32.mrb[0].mxu0
      %v5060 = vadd.f32 %v5012, %v5059
      %v5061 = vpop.f32.mrb[0].mxu0
      %v5062 = vpop.f32.mrb[0].mxu0
      %5063 = vdwg.mxu0
      %5064 = vst.msk [vmem:[#allocation2 + $0x8] sm:$0xff] %vm1939, 0.0
      %5065 = vst.msk [vmem:[#allocation2 + $0x28] sm:$0xff] %vm1939, 0.0
      %5066 = vst.msk [vmem:[#allocation2 + $0x48] sm:$0xff] %vm1939, 0.0
      %5067 = vst.msk [vmem:[#allocation2 + $0x68] sm:$0xff] %vm1939, 0.0
      %5068 = vst.msk [vmem:[#allocation2 + $0x88] sm:$0xff] %vm1939, 0.0
      %5069 = vst.msk [vmem:[#allocation2 + $0x10] sm:$0xff] %vm1944, 0.0
      %5070 = vst.msk [vmem:[#allocation2 + $0x30] sm:$0xff] %vm1944, 0.0
      %5071 = vst.msk [vmem:[#allocation2 + $0x50] sm:$0xff] %vm1944, 0.0
      %5072 = vst.msk [vmem:[#allocation2 + $0x70] sm:$0xff] %vm1944, 0.0
      %5073 = vst.msk [vmem:[#allocation2 + $0x90] sm:$0xff] %vm1944, 0.0
      %5076 = vrot.lane.b32.xlu0 %v4999, 126
      %v5077 = vpop.permute.xlu0 %5076
      %5078 = vrot.lane.b32.xlu0 %v5001, 126
      %v5079 = vpop.permute.xlu0 %5078
      %vm5080 = vcmask 1031168
      %v5081 = vsel %vm5080, %v5077, %v5079
      %5085 = vst.msk [vmem:[#allocation2] sm:$0xff] %vm1944, %v5077
      %5086 = vst [vmem:[#allocation2 + $0x8] sm:$0xff] %v5081
      %5087 = vst.msk [vmem:[#allocation2 + $0x10] sm:$0xff] %vm5080, %v5079
      %5088 = vrot.lane.b32.xlu0 %v4999, 127
      %v5089 = vpop.permute.xlu0 %5088
      %5090 = vrot.lane.b32.xlu0 %v5001, 127
      %v5091 = vpop.permute.xlu0 %5090
      %v5092 = vsel %vm1617, %v5089, %v5091
      %5096 = vst.msk [vmem:[#allocation2 + $0x20] sm:$0xff] %vm2162, %v5089
      %5097 = vst [vmem:[#allocation2 + $0x28] sm:$0xff] %v5092
      %5098 = vst.msk [vmem:[#allocation2 + $0x30] sm:$0xff] %vm1617, %v5091
      %5099 = vst [vmem:[#allocation2 + $0x48] sm:$0xff] %v4999
      %5100 = vst [vmem:[#allocation2 + $0x50] sm:$0xff] %v5001
      %5101 = vrot.lane.b32.xlu0 %v4999, 1
      %v5102 = vpop.permute.xlu0 %5101
      %5103 = vrot.lane.b32.xlu0 %v5001, 1
      %v5104 = vpop.permute.xlu0 %5103
      %v5105 = vsel %vm1992, %v5102, %v5104
      %vm5109 = vcmask 1047560
      %5110 = vst.msk [vmem:[#allocation2 + $0x68] sm:$0xff] %vm5109, %v5102
      %5111 = vst [vmem:[#allocation2 + $0x70] sm:$0xff] %v5105
      %5112 = vst.msk [vmem:[#allocation2 + $0x78] sm:$0xff] %vm1992, %v5104
      %5113 = vrot.lane.b32.xlu0 %v4999, 2
      %v5114 = vpop.permute.xlu0 %5113
      %5115 = vrot.lane.b32.xlu0 %v5001, 2
      %v5116 = vpop.permute.xlu0 %5115
      %v5117 = vsel %vm1939, %v5114, %v5116
      %vm5121 = vcmask 1047568
      %5122 = vst.msk [vmem:[#allocation2 + $0x88] sm:$0xff] %vm5121, %v5114
      %5123 = vst [vmem:[#allocation2 + $0x90] sm:$0xff] %v5117
      %5124 = vst.msk [vmem:[#allocation2 + $0x98] sm:$0xff] %vm1939, %v5116
      %v5125 = vld [vmem:[%s93] sm:$0x3]
      %v5126 = vld [vmem:[#allocation2 + $0x8] sm:$0xff]
      %v5127 = vld [vmem:[#allocation2 + $0x10] sm:$0xff]
      %v5128 = vld [vmem:[#allocation2 + $0x28] sm:$0xff]
      %v5129 = vld [vmem:[#allocation2 + $0x30] sm:$0xff]
      %v5130 = vld [vmem:[#allocation2 + $0x48] sm:$0xff]
      %v5131 = vld [vmem:[#allocation2 + $0x50] sm:$0xff]
      %v5132 = vld [vmem:[#allocation2 + $0x68] sm:$0xff]
      %v5133 = vld [vmem:[#allocation2 + $0x70] sm:$0xff]
      %v5134 = vld [vmem:[#allocation2 + $0x88] sm:$0xff]
      %v5135 = vld [vmem:[#allocation2 + $0x90] sm:$0xff]
      %v5136 = vpack.c.bf16 %v5128, %v5126
      %v5137 = vpack.c.bf16 %v5129, %v5127
      %v5138 = vpack.c.bf16 %v5132, %v5130
      %v5139 = vpack.c.bf16 %v5133, %v5131
      %v5140 = vpack.c.bf16 %v5134, %v5134
      %v5141 = vpack.c.bf16 %v5135, %v5135
      %v5142 = vld [vmem:[%s87] sm:$0xf]
      %5144 = vset.pattern.permute.xlu0 0
      %5145 = vperm.xlu0 %5144, %v5142
      %v5146 = vpop.permute.xlu0 %5145
      %v5149 = vsel %vm2187, %v5125, 0
      %v5152 = vsel %vm2191, %v5140, 0
      %v5155 = vsel %vm2191, %v5141, 0
      %5157 = vmatprep.subr.bf16.mxu0 %v5137
      %5158 = vmatpush1.bf16.msra.mxu0 %v5136
      %5159 = vmatprep.subr.bf16.mxu0 %v5139
      %5160 = vmatpush1.bf16.msra.mxu0 %v5138
      %5161 = vmatprep.subr.bf16.mxu0 %v5155
      %5162 = vmatpush1.bf16.msra.mxu0 %v5152
      %5163 = vmatprep.subr.bf16.mxu0 0
      %5164 = vmatpush1.bf16.msra.mxu0 0
      %5165 = vmatprep.subr.bf16.mxu0 0
      %5166 = vmatpush1.bf16.msra.mxu0 0
      %5167 = vmatprep.subr.bf16.mxu0 0
      %5168 = vmatpush1.bf16.msra.mxu0 0
      %5169 = vmatprep.subr.bf16.mxu0 0
      %5170 = vmatpush1.bf16.msra.mxu0 0
      %5171 = vmatprep.subr.bf16.mxu0 0
      %5172 = vmatpush1.bf16.msra.mxu0 0
      %5173 = vmatprep.subr.bf16.mxu0 0
      %5174 = vmatpush1.bf16.msra.mxu0 0
      %5175 = vmatprep.subr.bf16.mxu0 0
      %5176 = vmatpush1.bf16.msra.mxu0 0
      %5177 = vmatprep.subr.bf16.mxu0 0
      %5178 = vmatpush1.bf16.msra.mxu0 0
      %5179 = vmatprep.subr.bf16.mxu0 0
      %5180 = vmatpush1.bf16.msra.mxu0 0
      %5181 = vmatprep.subr.bf16.mxu0 0
      %5182 = vmatpush1.bf16.msra.mxu0 0
      %5183 = vmatprep.subr.bf16.mxu0 0
      %5184 = vmatpush1.bf16.msra.mxu0 0
      %5185 = vmatprep.subr.bf16.mxu0 0
      %5186 = vmatpush1.bf16.msra.mxu0 0
      %5187 = vmatprep.subr.bf16.mxu0 0
      %5188 = vmatpush1.bf16.msra.mxu0 0
      %5189 = vmatprep.mubr.bf16.mxu0 0
      %5190 = vmatmul.mubr.bf16.gmra.mrb[0].mxu0 %v5149
      %v5191 = vpop.f32.mrb[0].mxu0
      %v5192 = vadd.f32 %v5146, %v5191
      %v5193 = vpop.f32.mrb[0].mxu0
      %v5194 = vadd.f32 %v5146, %v5193
      %v5195 = vpop.f32.mrb[0].mxu0
      %v5196 = vpop.f32.mrb[0].mxu0
      %5197 = vdwg.mxu0
      %vm5198 = vcmp.ge.f32.partialorder %v5192, 0.0
      %vm5199 = vcmp.ge.f32.partialorder %v5194, 0.0
      %v5200 = vmul.f32 %v5192, 0.2
      %v5201 = vmul.f32 %v5194, 0.2
      %v5202 = vsel %vm5198, %v5192, %v5200
      %v5203 = vsel %vm5199, %v5194, %v5201
      %5204 = vst.msk [vmem:[#allocation2 + $0x8] sm:$0xff] %vm1939, 0.0
      %5205 = vst.msk [vmem:[#allocation2 + $0x28] sm:$0xff] %vm1939, 0.0
      %5206 = vst.msk [vmem:[#allocation2 + $0x48] sm:$0xf] %vm1942, 0.0
      %5207 = vst.msk [vmem:[#allocation2 + $0x10] sm:$0xff] %vm1944, 0.0
      %5208 = vst.msk [vmem:[#allocation2 + $0x30] sm:$0xff] %vm1944, 0.0
      %5209 = vst.msk [vmem:[#allocation2 + $0x50] sm:$0xf] %vm1521, 0.0
      %5212 = vrot.lane.b32.xlu0 %v5202, 2
      %v5213 = vpop.permute.xlu0 %5212
      %5214 = vrot.lane.b32.xlu0 %v5203, 2
      %v5215 = vpop.permute.xlu0 %5214
      %v5216 = vsel %vm1939, %v5213, %v5215
      %5220 = vst.msk [vmem:[#allocation2 + $0x8] sm:$0xf] %vm1963, %v5213
      %5221 = vst [vmem:[#allocation2 + $0x10] sm:$0xf] %v5216
      %5222 = vst.msk [vmem:[#allocation2 + $0x18] sm:$0xf] %vm1942, %v5215
      %v5223 = vrot.slane %v5202, 4
      %v5224 = vrot.slane %v5203, 4
      %5225 = vrot.lane.b32.xlu0 %v5223, 1
      %v5226 = vpop.permute.xlu0 %5225
      %5227 = vrot.lane.b32.xlu0 %v5224, 1
      %v5228 = vpop.permute.xlu0 %5227
      %v5229 = vsel %vm1992, %v5226, %v5228
      %5233 = vst.msk [vmem:[#allocation2 + $0x8] sm:$0xf0] %vm1981, %v5226
      %5234 = vst [vmem:[#allocation2 + $0x10] sm:$0xf0] %v5229
      %5235 = vst.msk [vmem:[#allocation2 + $0x18] sm:$0xf0] %vm1984, %v5228
      %5236 = vst [vmem:[#allocation2 + $0x28] sm:$0xf] %v5202
      %5237 = vst [vmem:[#allocation2 + $0x30] sm:$0xf] %v5203
      %5238 = vrot.lane.b32.xlu0 %v5223, 127
      %v5239 = vpop.permute.xlu0 %5238
      %5240 = vrot.lane.b32.xlu0 %v5224, 127
      %v5241 = vpop.permute.xlu0 %5240
      %v5242 = vsel %vm1617, %v5239, %v5241
      %5246 = vst.msk [vmem:[#allocation2 + $0x20] sm:$0xf0] %vm2002, %v5239
      %5247 = vst [vmem:[#allocation2 + $0x28] sm:$0xf0] %v5242
      %5248 = vst.msk [vmem:[#allocation2 + $0x30] sm:$0xf0] %vm2005, %v5241
      %5249 = vrot.lane.b32.xlu0 %v5202, 126
      %v5250 = vpop.permute.xlu0 %5249
      %5251 = vrot.lane.b32.xlu0 %v5203, 126
      %v5252 = vpop.permute.xlu0 %5251
      %v5253 = vsel %vm5080, %v5250, %v5252
      %5257 = vst.msk [vmem:[#allocation2 + $0x40] sm:$0xf] %vm1521, %v5250
      %5258 = vst [vmem:[#allocation2 + $0x48] sm:$0xf] %v5253
      %5259 = vst.msk [vmem:[#allocation2 + $0x50] sm:$0xf] %vm2020, %v5252
      %v5260 = vld [vmem:[%s95] sm:$0x3]
      %v5261 = vld [vmem:[#allocation2 + $0x8] sm:$0xff]
      %v5262 = vld [vmem:[#allocation2 + $0x10] sm:$0xff]
      %v5263 = vld [vmem:[#allocation2 + $0x28] sm:$0xff]
      %v5264 = vld [vmem:[#allocation2 + $0x30] sm:$0xff]
      %v5265 = vld [vmem:[#allocation2 + $0x48] sm:$0xf]
      %v5266 = vld [vmem:[#allocation2 + $0x50] sm:$0xf]
      %v5267 = vpack.c.bf16 %v5263, %v5261
      %v5268 = vpack.c.bf16 %v5264, %v5262
      %v5269 = vpack.c.bf16 %v5265, %v5265
      %v5270 = vpack.c.bf16 %v5266, %v5266
      %v5271 = vld [vmem:[%s89] sm:$0xf]
      %5273 = vset.pattern.permute.xlu0 0
      %5274 = vperm.xlu0 %5273, %v5271
      %v5275 = vpop.permute.xlu0 %5274
      %v5278 = vsel %vm2033, %v5260, 0
      %v5281 = vsel %vm1895, %v5269, 0
      %v5284 = vsel %vm1895, %v5270, 0
      %5286 = vmatprep.subr.bf16.mxu0 %v5268
      %5287 = vmatpush1.bf16.msra.mxu0 %v5267
      %5288 = vmatprep.subr.bf16.mxu0 %v5284
      %5289 = vmatpush1.bf16.msra.mxu0 %v5281
      %5290 = vmatprep.subr.bf16.mxu0 0
      %5291 = vmatpush1.bf16.msra.mxu0 0
      %5292 = vmatprep.subr.bf16.mxu0 0
      %5293 = vmatpush1.bf16.msra.mxu0 0
      %5294 = vmatprep.subr.bf16.mxu0 0
      %5295 = vmatpush1.bf16.msra.mxu0 0
      %5296 = vmatprep.subr.bf16.mxu0 0
      %5297 = vmatpush1.bf16.msra.mxu0 0
      %5298 = vmatprep.subr.bf16.mxu0 0
      %5299 = vmatpush1.bf16.msra.mxu0 0
      %5300 = vmatprep.subr.bf16.mxu0 0
      %5301 = vmatpush1.bf16.msra.mxu0 0
      %5302 = vmatprep.subr.bf16.mxu0 0
      %5303 = vmatpush1.bf16.msra.mxu0 0
      %5304 = vmatprep.subr.bf16.mxu0 0
      %5305 = vmatpush1.bf16.msra.mxu0 0
      %5306 = vmatprep.subr.bf16.mxu0 0
      %5307 = vmatpush1.bf16.msra.mxu0 0
      %5308 = vmatprep.subr.bf16.mxu0 0
      %5309 = vmatpush1.bf16.msra.mxu0 0
      %5310 = vmatprep.subr.bf16.mxu0 0
      %5311 = vmatpush1.bf16.msra.mxu0 0
      %5312 = vmatprep.subr.bf16.mxu0 0
      %5313 = vmatpush1.bf16.msra.mxu0 0
      %5314 = vmatprep.subr.bf16.mxu0 0
      %5315 = vmatpush1.bf16.msra.mxu0 0
      %5316 = vmatprep.subr.bf16.mxu0 0
      %5317 = vmatpush1.bf16.msra.mxu0 0
      %5318 = vmatprep.mubr.bf16.mxu0 0
      %5319 = vmatmul.mubr.bf16.gmra.mrb[0].mxu0 %v5278
      %v5320 = vpop.f32.mrb[0].mxu0
      %v5321 = vadd.f32 %v5275, %v5320
      %v5322 = vpop.f32.mrb[0].mxu0
      %v5323 = vadd.f32 %v5275, %v5322
      %v5324 = vpop.f32.mrb[0].mxu0
      %v5325 = vpop.f32.mrb[0].mxu0
      %5326 = vdwg.mxu0
      %v5327 = vadd.f32 %v5321, %v5058
      %v5328 = vadd.f32 %v5323, %v5060
      %vm5329 = vcmp.ge.f32.partialorder %v5327, 0.0
      %vm5330 = vcmp.ge.f32.partialorder %v5328, 0.0
      %v5331 = vmul.f32 %v5327, 0.2
      %v5332 = vmul.f32 %v5328, 0.2
      %v5333 = vsel %vm5329, %v5327, %v5331
      %v5334 = vsel %vm5330, %v5328, %v5332
      %v5335 = vld [vmem:[%s25] sm:$0x3]
      %v5336 = vpack.c.bf16 %v5333, %v5333
      %v5337 = vpack.c.bf16 %v5334, %v5334
      %v5338 = vld [vmem:[%s23] sm:$0xf]
      %5340 = vset.pattern.permute.xlu0 0
      %5341 = vperm.xlu0 %5340, %v5338
      %v5342 = vpop.permute.xlu0 %5341
      %v5345 = vsel %vm1891, %v5335, 0
      %v5348 = vsel %vm1895, %v5336, 0
      %v5351 = vsel %vm1895, %v5337, 0
      %5353 = vmatprep.subr.bf16.mxu0 %v5351
      %5354 = vmatpush1.bf16.msra.mxu0 %v5348
      %5355 = vmatprep.subr.bf16.mxu0 0
      %5356 = vmatpush1.bf16.msra.mxu0 0
      %5357 = vmatprep.subr.bf16.mxu0 0
      %5358 = vmatpush1.bf16.msra.mxu0 0
      %5359 = vmatprep.subr.bf16.mxu0 0
      %5360 = vmatpush1.bf16.msra.mxu0 0
      %5361 = vmatprep.subr.bf16.mxu0 0
      %5362 = vmatpush1.bf16.msra.mxu0 0
      %5363 = vmatprep.subr.bf16.mxu0 0
      %5364 = vmatpush1.bf16.msra.mxu0 0
      %5365 = vmatprep.subr.bf16.mxu0 0
      %5366 = vmatpush1.bf16.msra.mxu0 0
      %5367 = vmatprep.subr.bf16.mxu0 0
      %5368 = vmatpush1.bf16.msra.mxu0 0
      %5369 = vmatprep.subr.bf16.mxu0 0
      %5370 = vmatpush1.bf16.msra.mxu0 0
      %5371 = vmatprep.subr.bf16.mxu0 0
      %5372 = vmatpush1.bf16.msra.mxu0 0
      %5373 = vmatprep.subr.bf16.mxu0 0
      %5374 = vmatpush1.bf16.msra.mxu0 0
      %5375 = vmatprep.subr.bf16.mxu0 0
      %5376 = vmatpush1.bf16.msra.mxu0 0
      %5377 = vmatprep.subr.bf16.mxu0 0
      %5378 = vmatpush1.bf16.msra.mxu0 0
      %5379 = vmatprep.subr.bf16.mxu0 0
      %5380 = vmatpush1.bf16.msra.mxu0 0
      %5381 = vmatprep.subr.bf16.mxu0 0
      %5382 = vmatpush1.bf16.msra.mxu0 0
      %5383 = vmatprep.subr.bf16.mxu0 0
      %5384 = vmatpush1.bf16.msra.mxu0 0
      %5385 = vmatprep.mubr.bf16.mxu0 0
      %5386 = vmatmul.mubr.bf16.gmra.mrb[0].mxu0 %v5345
      %v5387 = vpop.f32.mrb[0].mxu0
      %v5388 = vadd.f32 %v5342, %v5387
      %v5389 = vpop.f32.mrb[0].mxu0
      %v5390 = vadd.f32 %v5342, %v5389
      %v5391 = vpop.f32.mrb[0].mxu0
      %v5392 = vpop.f32.mrb[0].mxu0
      %5393 = vdwg.mxu0
      %v5394 = vtanh.pop %v5388
      %v5395 = vtanh.pop %v5390
      %v5398 = vcombine.low %v5394, %v5395
      %5400 = vst [vmem:[%s1518] sm:$0xff] %v5398
      %p5401 = scmp.lt.s32.totalorder %s114, 1
      %s5402 = scalar_select %p5401, %s114, 1
      %s5403 = smul.addr %s5402, 2
      %s5404 = smul.addr %s5403, 4
      %s5405 = scalar_lea.vmem %s103, %s5404
      // Predicated region
      $region225: #{ved_forward.1} parent=223 // pred_check
        %p5406 = pneg %p1208
      $region226: #{ved_forward.1} parent=223 // pred_check_branch
        %5408 = sbr.rel (%p5406) target = $region228
      $region227: #{ved_forward.1} parent=223 // pred_region
        _
      $region228: #{ved_forward.1} parent=223 // pred_fallthru
        _
    $region224: #{ved_forward.1} parent=5 // pred_fallthru
      _
    %p5409 = scmp.le.s32.totalorder 2, %s109
    // Predicated region
    $region229: #{ved_forward.1} parent=5 // pred_check
      %p5410 = pneg %p5409
    $region230: #{ved_forward.1} parent=5 // pred_check_branch
      %5412 = sbr.rel (%p5410) target = $region232
    $region231: #{ved_forward.1} parent=5 // pred_region
      %s5413 = ssub.s32 %s109, 2
      // Predicated region
      $region233: #{ved_forward.1} parent=231 // pred_check
        %p5414 = pneg %p1214
      $region234: #{ved_forward.1} parent=231 // pred_check_branch
        %5416 = sbr.rel (%p5414) target = $region236
      $region235: #{ved_forward.1} parent=231 // pred_region
        %p5417 = scmp.lt.s32.totalorder %s115, 1
        %s5418 = scalar_select %p5417, %s115, 1
        %s5419 = smul.addr %s5418, 2
        %s5420 = smul.addr %s5419, 4
        %s5421 = scalar_lea.vmem %s103, %s5420
      $region236: #{ved_forward.1} parent=231 // pred_fallthru
        _
    $region232: #{ved_forward.1} parent=5 // pred_fallthru
      _
  $region6: #{ved_forward.1} parent=0 // loop_footer
    %s113 = sadd.s32 1, %s109
  $region7: #{ved_forward.1} parent=0 // loop_footer_branch
    %108 = sbr.rel target = $region3
  $region8: #{ved_forward.1} parent=0 // loop_exit
    _

</llo_original>
